<compile_context>
chip_gen: v6e
topology: v6e:2x2x1
jax: 0.10.0
libtpu: 0.0.40
codegen_flags: <defaults>
</compile_context>

<pallas_src>
import numpy as np

import jax
import jax.numpy as jnp
from jax import lax
from jax.experimental import pallas as pl
from jax.experimental.pallas import tpu as pltpu


# ------------------------------ fused kernel --------------------------------

def _cnn_fused_kernel(x_ref, t1_ref, sr1_ref, sc1_ref, b1_ref,
                      t2_ref, sr2_ref, sc2_ref, b2_ref,
                      wf1_ref, bf1_ref, wf2_ref, bf2_ref, o_ref):
    f32 = jnp.float32

    def bmm(a, w):
        # (bt, M, K) @ (K, N) -> (bt, M, N); bf16 operands on the MXU, f32 acc.
        wb = jnp.broadcast_to(w, (a.shape[0],) + w.shape)
        return jnp.einsum("bmk,bkn->bmn", a.astype(w.dtype), wb,
                          preferred_element_type=f32)

    def bmm_l(w, a):
        # (P, H) @ (bt, H, F) -> (bt, P, F)
        wb = jnp.broadcast_to(w, (a.shape[0],) + w.shape)
        return jnp.einsum("bph,bhf->bpf", wb, a.astype(w.dtype),
                          preferred_element_type=f32)

    def pool2x2_bias_relu(y, sr_ref, sc_ref, b_ref):
        # relu(maxpool2x2(y) + per-channel bias).  Even/odd row and column
        # phases are extracted with 0/1 selection matmuls (exact), so there are
        # no strided slices / reshapes inside Mosaic.
        rmax = jnp.maximum(bmm_l(sr_ref[0], y), bmm_l(sr_ref[1], y))
        cmax = jnp.maximum(bmm(rmax, sc_ref[0]), bmm(rmax, sc_ref[1]))
        return jnp.maximum(cmax + b_ref[...], 0.0)

    x = x_ref[...]                                        # (bt, 28, 28) f32

    # conv1 (1->10, 5x5, valid): 5 banded matmuls, one per kernel row.
    # y1[b, oh, ow*10 + oc]
    y1 = bmm(x[:, 0:24, :], t1_ref[0])
    for i in range(1, 5):
        y1 = y1 + bmm(x[:, i:i + 24, :], t1_ref[i])       # (bt, 24, 240)

    p1 = pool2x2_bias_relu(y1, sr1_ref, sc1_ref, b1_ref)  # (bt, 12, 120)

    # conv2 (10->20, 5x5, valid).  nn.Dropout() is identity at inference.
    # y2[b, oh, ow*20 + oc]
    y2 = bmm(p1[:, 0:8, :], t2_ref[0])
    for i in range(1, 5):
        y2 = y2 + bmm(p1[:, i:i + 8, :], t2_ref[i])       # (bt, 8, 160)

    p2 = pool2x2_bias_relu(y2, sr2_ref, sc2_ref, b2_ref)  # (bt, 4, 80)

    # fc1 (320->50) + relu.  The NCHW flatten is folded into the packed fc1
    # weight, so we just sum the 4 spatial-row blocks.
    h = bmm(p2[:, 0:1, :], wf1_ref[0])
    for r in range(1, 4):
        h = h + bmm(p2[:, r:r + 1, :], wf1_ref[r])        # (bt, 1, 50)
    h = jnp.maximum(h + bf1_ref[...], 0.0)
    # F.dropout(training=False) is identity.

    # fc2 (50->10) + log_softmax(dim=1), numerically stable, in f32.
    logits = bmm(h, wf2_ref[...]) + bf2_ref[...]          # (bt, 1, 10)
    m = jnp.max(logits, axis=-1, keepdims=True)
    z = logits - m
    lse = jnp.log(jnp.sum(jnp.exp(z), axis=-1, keepdims=True))
    o_ref[...] = (z - lse).astype(o_ref.dtype)


# ------------------------- init + one-time packing ---------------------------

def init_params(key):
    ks = jax.random.split(key, 8)
    return {
        # conv1: Conv2d(1, 10, kernel_size=5)
        "w1": jax.random.normal(ks[0], (10, 1, 5, 5), jnp.float32) * 0.1,
        "b1": jax.random.normal(ks[1], (10,), jnp.float32) * 0.1,
        # conv2: Conv2d(10, 20, kernel_size=5)
        "w2": jax.random.normal(ks[2], (20, 10, 5, 5), jnp.float32) * 0.05,
        "b2": jax.random.normal(ks[3], (20,), jnp.float32) * 0.05,
        # fc1: Linear(320, 50)
        "wf1": jax.random.normal(ks[4], (50, 320), jnp.float32) * 0.05,
        "bf1": jax.random.normal(ks[5], (50,), jnp.float32) * 0.05,
        # fc2: Linear(50, 10)
        "wf2": jax.random.normal(ks[6], (10, 50), jnp.float32) * 0.1,
        "bf2": jax.random.normal(ks[7], (10,), jnp.float32) * 0.1,
    }


def pack_params(p, mxu_dtype=jnp.bfloat16):
    """One-time weight packing (hoisted out of the forward path)."""
    w1 = np.asarray(p["w1"], np.float32)
    b1 = np.asarray(p["b1"], np.float32)
    w2 = np.asarray(p["w2"], np.float32)
    b2 = np.asarray(p["b2"], np.float32)
    wf1 = np.asarray(p["wf1"], np.float32)
    bf1 = np.asarray(p["bf1"], np.float32)
    wf2 = np.asarray(p["wf2"], np.float32)
    bf2 = np.asarray(p["bf2"], np.float32)

    # conv1 banded matrices: t1[i, ow + j, ow*10 + oc] = w1[oc, 0, i, j]
    t1 = np.zeros((5, 28, 240), np.float32)
    for i in range(5):
        for j in range(5):
            for ow in range(24):
                t1[i, ow + j, ow * 10:(ow + 1) * 10] = w1[:, 0, i, j]

    # conv2 banded matrices over pooled NHWC (lane = pw*10 + c):
    # t2[i, (ow + j)*10 + c, ow*20 + oc] = w2[oc, c, i, j]
    t2 = np.zeros((5, 120, 160), np.float32)
    for i in range(5):
        for j in range(5):
            for ow in range(8):
                t2[i, (ow + j) * 10:(ow + j + 1) * 10,
                   ow * 20:(ow + 1) * 20] = w2[:, :, i, j].T

    def row_sel(p_out, phase):          # picks rows 2*p + phase
        m = np.zeros((p_out, 2 * p_out), np.float32)
        m[np.arange(p_out), 2 * np.arange(p_out) + phase] = 1.0
        return m

    def col_sel(w_out, c, phase):       # picks cols (2*pw + phase)*c + ch
        m = np.zeros((2 * w_out * c, w_out * c), np.float32)
        for pw in range(w_out):
            for ch in range(c):
                m[(2 * pw + phase) * c + ch, pw * c + ch] = 1.0
        return m

    sr1 = np.stack([row_sel(12, 0), row_sel(12, 1)])          # (2, 12, 24)
    sc1 = np.stack([col_sel(12, 10, 0), col_sel(12, 10, 1)])  # (2, 240, 120)
    sr2 = np.stack([row_sel(4, 0), row_sel(4, 1)])            # (2, 4, 8)
    sc2 = np.stack([col_sel(4, 20, 0), col_sel(4, 20, 1)])    # (2, 160, 80)

    # fc1 with torch's NCHW .view(-1, 320) folded in:
    # wf1p[h, w*20 + c, o] = wf1[o, c*16 + h*4 + w]
    wf1p = wf1.reshape(50, 20, 4, 4).transpose(2, 3, 1, 0).reshape(4, 80, 50)
    wf2p = wf2.T                                              # (50, 10)

    cast = lambda a: jnp.asarray(a, mxu_dtype)
    return {
        "t1": cast(t1), "sr1": cast(sr1), "sc1": cast(sc1),
        "b1": jnp.asarray(np.tile(b1, 12).reshape(1, 1, 120)),
        "t2": cast(t2), "sr2": cast(sr2), "sc2": cast(sc2),
        "b2": jnp.asarray(np.tile(b2, 4).reshape(1, 1, 80)),
        "wf1": cast(wf1p), "bf1": jnp.asarray(bf1.reshape(1, 1, 50)),
        "wf2": cast(wf2p), "bf2": jnp.asarray(bf2.reshape(1, 1, 10)),
    }


# ------------------------------ forward wrapper ------------------------------

def cnn_classifier_forward(packed, x, *, batch_block=4):
    """Inference forward of CNNClassifier.  x: (B, 1, 28, 28) float32."""
    B = x.shape[0]
    x3 = x.reshape(B, 28, 28).astype(jnp.float32)   # squeeze channel (host, free)
    bt = batch_block if (B % batch_block == 0) else B
    grid = (B // bt,)

    def batch_spec(shape):
        nd = len(shape)
        return pl.BlockSpec((bt,) + tuple(shape[1:]),
                            lambda i, _nd=nd: (i,) + (0,) * (_nd - 1))

    def const_spec(arr):
        nd = arr.ndim
        return pl.BlockSpec(arr.shape, lambda i, _nd=nd: (0,) * _nd)

    weight_order = ("t1", "sr1", "sc1", "b1", "t2", "sr2", "sc2", "b2",
                    "wf1", "bf1", "wf2", "bf2")
    weights = [packed[k] for k in weight_order]

    out = pl.pallas_call(
        _cnn_fused_kernel,
        out_shape=jax.ShapeDtypeStruct((B, 1, 10), jnp.float32),
        grid=grid,
        in_specs=[batch_spec(x3.shape)] + [const_spec(w) for w in weights],
        out_specs=pl.BlockSpec((bt, 1, 10), lambda i: (i, 0, 0)),
        compiler_params=pltpu.CompilerParams(
            dimension_semantics=("parallel",)),   # v7x: 2 TCs split the batch
    )(x3, *weights)
    return out.reshape(B, 10)


# ------------------------- pure-JAX reference (check) ------------------------

def _maxpool2(x):
    return lax.reduce_window(x, -jnp.inf, lax.max,
                             window_dimensions=(1, 1, 2, 2),
                             window_strides=(1, 1, 2, 2), padding="VALID")


def reference_forward(p, x):
    dn = ("NCHW", "OIHW", "NCHW")
    h = lax.conv_general_dilated(x, p["w1"], (1, 1), "VALID",
                                 dimension_numbers=dn)
    h = h + p["b1"].reshape(1, -1, 1, 1)
    h = jax.nn.relu(_maxpool2(h))
    h = lax.conv_general_dilated(h, p["w2"], (1, 1), "VALID",
                                 dimension_numbers=dn)
    h = h + p["b2"].reshape(1, -1, 1, 1)
    h = jax.nn.relu(_maxpool2(h))
    h = h.reshape(h.shape[0], 320)
    h = jax.nn.relu(h @ p["wf1"].T + p["bf1"])
    logits = h @ p["wf2"].T + p["bf2"]
    return jax.nn.log_softmax(logits, axis=-1)


# ---------------------------------- main -------------------------------------

if __name__ == "__main__":
    key = jax.random.PRNGKey(0)
    pkey, xkey = jax.random.split(key)
    raw = init_params(pkey)
    packed = pack_params(raw)           # init-time packing (not in forward path)

    # MNIST-shaped input implied by fc1's 320 = 20 * 4 * 4 -> 28x28, 1 channel.
    B = 8
    x = jax.random.normal(xkey, (B, 1, 28, 28), jnp.float32)

    fwd = jax.jit(cnn_classifier_forward)
    logp = jax.block_until_ready(fwd(packed, x))

    assert logp.shape == (B, 10), logp.shape
    row_sums = jnp.exp(logp).sum(axis=-1)
    assert bool(jnp.allclose(row_sums, 1.0, atol=1e-4)), row_sums

    # Cross-check against a plain-XLA f32 reference (bf16 MXU operands in the
    # kernel => allow a small tolerance).
    ref = jax.block_until_ready(reference_forward(raw, x))
    max_err = float(jnp.max(jnp.abs(logp - ref)))
    assert max_err < 5e-2, f"mismatch vs reference: {max_err}"

    print("KERNEL_OK")
</pallas_src>

<mosaic_0001>
module attributes {stable_mosaic.version = 11 : i64} {
  func.func @_cnn_fused_kernel(%arg0: i32, %arg1: memref<4x28x28xf32, #tpu.memory_space<vmem>>, %arg2: memref<5x28x240xbf16, #tpu.memory_space<vmem>>, %arg3: memref<2x12x24xbf16, #tpu.memory_space<vmem>>, %arg4: memref<2x240x120xbf16, #tpu.memory_space<vmem>>, %arg5: memref<1x1x120xf32, #tpu.memory_space<vmem>>, %arg6: memref<5x120x160xbf16, #tpu.memory_space<vmem>>, %arg7: memref<2x4x8xbf16, #tpu.memory_space<vmem>>, %arg8: memref<2x160x80xbf16, #tpu.memory_space<vmem>>, %arg9: memref<1x1x80xf32, #tpu.memory_space<vmem>>, %arg10: memref<4x80x50xbf16, #tpu.memory_space<vmem>>, %arg11: memref<1x1x50xf32, #tpu.memory_space<vmem>>, %arg12: memref<50x10xbf16, #tpu.memory_space<vmem>>, %arg13: memref<1x1x10xf32, #tpu.memory_space<vmem>>, %arg14: memref<4x1x10xf32, #tpu.memory_space<vmem>>) attributes {dimension_semantics = [#tpu.dimension_semantics<parallel>], iteration_bounds = array<i64: 2>, scalar_prefetch = 0 : i64, scratch_operands = 0 : i64, tpu.core_type = #tpu.core_type<tc>, window_params = [{transform_indices = @transform_0, window_bounds = array<i64: 4, 28, 28>}, {pipeline_mode = #tpu.pipeline_mode<synchronous>, transform_indices = @transform_1, window_bounds = array<i64: 5, 28, 240>}, {pipeline_mode = #tpu.pipeline_mode<synchronous>, transform_indices = @transform_2, window_bounds = array<i64: 2, 12, 24>}, {pipeline_mode = #tpu.pipeline_mode<synchronous>, transform_indices = @transform_3, window_bounds = array<i64: 2, 240, 120>}, {pipeline_mode = #tpu.pipeline_mode<synchronous>, transform_indices = @transform_4, window_bounds = array<i64: 1, 1, 120>}, {pipeline_mode = #tpu.pipeline_mode<synchronous>, transform_indices = @transform_5, window_bounds = array<i64: 5, 120, 160>}, {pipeline_mode = #tpu.pipeline_mode<synchronous>, transform_indices = @transform_6, window_bounds = array<i64: 2, 4, 8>}, {pipeline_mode = #tpu.pipeline_mode<synchronous>, transform_indices = @transform_7, window_bounds = array<i64: 2, 160, 80>}, {pipeline_mode = #tpu.pipeline_mode<synchronous>, transform_indices = @transform_8, window_bounds = array<i64: 1, 1, 80>}, {pipeline_mode = #tpu.pipeline_mode<synchronous>, transform_indices = @transform_9, window_bounds = array<i64: 4, 80, 50>}, {pipeline_mode = #tpu.pipeline_mode<synchronous>, transform_indices = @transform_10, window_bounds = array<i64: 1, 1, 50>}, {pipeline_mode = #tpu.pipeline_mode<synchronous>, transform_indices = @transform_11, window_bounds = array<i64: 50, 10>}, {pipeline_mode = #tpu.pipeline_mode<synchronous>, transform_indices = @transform_12, window_bounds = array<i64: 1, 1, 10>}, {transform_indices = @transform_13, window_bounds = array<i64: 4, 1, 10>}]} {
    %c0 = arith.constant 0 : index
    %c0_0 = arith.constant 0 : index
    %c0_1 = arith.constant 0 : index
    %0 = vector.load %arg1[%c0, %c0_0, %c0_1] : memref<4x28x28xf32, #tpu.memory_space<vmem>>, vector<4x28x28xf32>
    %1 = vector.extract_strided_slice %0 {offsets = [0, 0, 0], sizes = [4, 24, 28], strides = [1, 1, 1]} : vector<4x28x28xf32> to vector<4x24x28xf32>
    %c0_2 = arith.constant 0 : index
    %c0_3 = arith.constant 0 : index
    %c0_4 = arith.constant 0 : index
    %2 = vector.load %arg2[%c0_2, %c0_3, %c0_4] : memref<5x28x240xbf16, #tpu.memory_space<vmem>>, vector<1x28x240xbf16>
    %3 = vector.shape_cast %2 : vector<1x28x240xbf16> to vector<28x240xbf16>
    %4 = vector.shape_cast %3 : vector<28x240xbf16> to vector<1x28x240xbf16>
    %5 = vector.broadcast %4 : vector<1x28x240xbf16> to vector<4x28x240xbf16>
    %6 = arith.truncf %1 : vector<4x24x28xf32> to vector<4x24x28xbf16>
    "tpu.trace_start"() <{level = 10 : i32, message = "bmk,bkn->bmn"}> : () -> ()
    %cst = arith.constant dense<0.000000e+00> : vector<4x24x240xf32>
    %7 = tpu.matmul %6, %5, %cst {dimension_numbers = #tpu.dot_dimension_numbers<[2], [1], [1], [2], [0, 0, 0, 1, 1, 2], [0], [0]>} : vector<4x24x28xbf16>, vector<4x28x240xbf16>, vector<4x24x240xf32> -> vector<4x24x240xf32>
    "tpu.trace_stop"() : () -> ()
    %8 = vector.extract_strided_slice %0 {offsets = [0, 1, 0], sizes = [4, 24, 28], strides = [1, 1, 1]} : vector<4x28x28xf32> to vector<4x24x28xf32>
    %c1 = arith.constant 1 : index
    %c0_5 = arith.constant 0 : index
    %c0_6 = arith.constant 0 : index
    %9 = vector.load %arg2[%c1, %c0_5, %c0_6] : memref<5x28x240xbf16, #tpu.memory_space<vmem>>, vector<1x28x240xbf16>
    %10 = vector.shape_cast %9 : vector<1x28x240xbf16> to vector<28x240xbf16>
    %11 = vector.shape_cast %10 : vector<28x240xbf16> to vector<1x28x240xbf16>
    %12 = vector.broadcast %11 : vector<1x28x240xbf16> to vector<4x28x240xbf16>
    %13 = arith.truncf %8 : vector<4x24x28xf32> to vector<4x24x28xbf16>
    "tpu.trace_start"() <{level = 10 : i32, message = "bmk,bkn->bmn"}> : () -> ()
    %cst_7 = arith.constant dense<0.000000e+00> : vector<4x24x240xf32>
    %14 = tpu.matmul %13, %12, %cst_7 {dimension_numbers = #tpu.dot_dimension_numbers<[2], [1], [1], [2], [0, 0, 0, 1, 1, 2], [0], [0]>} : vector<4x24x28xbf16>, vector<4x28x240xbf16>, vector<4x24x240xf32> -> vector<4x24x240xf32>
    "tpu.trace_stop"() : () -> ()
    %15 = arith.addf %7, %14 : vector<4x24x240xf32>
    %16 = vector.extract_strided_slice %0 {offsets = [0, 2, 0], sizes = [4, 24, 28], strides = [1, 1, 1]} : vector<4x28x28xf32> to vector<4x24x28xf32>
    %c2 = arith.constant 2 : index
    %c0_8 = arith.constant 0 : index
    %c0_9 = arith.constant 0 : index
    %17 = vector.load %arg2[%c2, %c0_8, %c0_9] : memref<5x28x240xbf16, #tpu.memory_space<vmem>>, vector<1x28x240xbf16>
    %18 = vector.shape_cast %17 : vector<1x28x240xbf16> to vector<28x240xbf16>
    %19 = vector.shape_cast %18 : vector<28x240xbf16> to vector<1x28x240xbf16>
    %20 = vector.broadcast %19 : vector<1x28x240xbf16> to vector<4x28x240xbf16>
    %21 = arith.truncf %16 : vector<4x24x28xf32> to vector<4x24x28xbf16>
    "tpu.trace_start"() <{level = 10 : i32, message = "bmk,bkn->bmn"}> : () -> ()
    %cst_10 = arith.constant dense<0.000000e+00> : vector<4x24x240xf32>
    %22 = tpu.matmul %21, %20, %cst_10 {dimension_numbers = #tpu.dot_dimension_numbers<[2], [1], [1], [2], [0, 0, 0, 1, 1, 2], [0], [0]>} : vector<4x24x28xbf16>, vector<4x28x240xbf16>, vector<4x24x240xf32> -> vector<4x24x240xf32>
    "tpu.trace_stop"() : () -> ()
    %23 = arith.addf %15, %22 : vector<4x24x240xf32>
    %24 = vector.extract_strided_slice %0 {offsets = [0, 3, 0], sizes = [4, 24, 28], strides = [1, 1, 1]} : vector<4x28x28xf32> to vector<4x24x28xf32>
    %c3 = arith.constant 3 : index
    %c0_11 = arith.constant 0 : index
    %c0_12 = arith.constant 0 : index
    %25 = vector.load %arg2[%c3, %c0_11, %c0_12] : memref<5x28x240xbf16, #tpu.memory_space<vmem>>, vector<1x28x240xbf16>
    %26 = vector.shape_cast %25 : vector<1x28x240xbf16> to vector<28x240xbf16>
    %27 = vector.shape_cast %26 : vector<28x240xbf16> to vector<1x28x240xbf16>
    %28 = vector.broadcast %27 : vector<1x28x240xbf16> to vector<4x28x240xbf16>
    %29 = arith.truncf %24 : vector<4x24x28xf32> to vector<4x24x28xbf16>
    "tpu.trace_start"() <{level = 10 : i32, message = "bmk,bkn->bmn"}> : () -> ()
    %cst_13 = arith.constant dense<0.000000e+00> : vector<4x24x240xf32>
    %30 = tpu.matmul %29, %28, %cst_13 {dimension_numbers = #tpu.dot_dimension_numbers<[2], [1], [1], [2], [0, 0, 0, 1, 1, 2], [0], [0]>} : vector<4x24x28xbf16>, vector<4x28x240xbf16>, vector<4x24x240xf32> -> vector<4x24x240xf32>
    "tpu.trace_stop"() : () -> ()
    %31 = arith.addf %23, %30 : vector<4x24x240xf32>
    %32 = vector.extract_strided_slice %0 {offsets = [0, 4, 0], sizes = [4, 24, 28], strides = [1, 1, 1]} : vector<4x28x28xf32> to vector<4x24x28xf32>
    %c4 = arith.constant 4 : index
    %c0_14 = arith.constant 0 : index
    %c0_15 = arith.constant 0 : index
    %33 = vector.load %arg2[%c4, %c0_14, %c0_15] : memref<5x28x240xbf16, #tpu.memory_space<vmem>>, vector<1x28x240xbf16>
    %34 = vector.shape_cast %33 : vector<1x28x240xbf16> to vector<28x240xbf16>
    %35 = vector.shape_cast %34 : vector<28x240xbf16> to vector<1x28x240xbf16>
    %36 = vector.broadcast %35 : vector<1x28x240xbf16> to vector<4x28x240xbf16>
    %37 = arith.truncf %32 : vector<4x24x28xf32> to vector<4x24x28xbf16>
    "tpu.trace_start"() <{level = 10 : i32, message = "bmk,bkn->bmn"}> : () -> ()
    %cst_16 = arith.constant dense<0.000000e+00> : vector<4x24x240xf32>
    %38 = tpu.matmul %37, %36, %cst_16 {dimension_numbers = #tpu.dot_dimension_numbers<[2], [1], [1], [2], [0, 0, 0, 1, 1, 2], [0], [0]>} : vector<4x24x28xbf16>, vector<4x28x240xbf16>, vector<4x24x240xf32> -> vector<4x24x240xf32>
    "tpu.trace_stop"() : () -> ()
    %39 = arith.addf %31, %38 : vector<4x24x240xf32>
    %c0_17 = arith.constant 0 : index
    %c0_18 = arith.constant 0 : index
    %c0_19 = arith.constant 0 : index
    %40 = vector.load %arg3[%c0_17, %c0_18, %c0_19] : memref<2x12x24xbf16, #tpu.memory_space<vmem>>, vector<1x12x24xbf16>
    %41 = vector.shape_cast %40 : vector<1x12x24xbf16> to vector<12x24xbf16>
    %42 = vector.shape_cast %41 : vector<12x24xbf16> to vector<1x12x24xbf16>
    %43 = vector.broadcast %42 : vector<1x12x24xbf16> to vector<4x12x24xbf16>
    %44 = arith.truncf %39 : vector<4x24x240xf32> to vector<4x24x240xbf16>
    "tpu.trace_start"() <{level = 10 : i32, message = "bph,bhf->bpf"}> : () -> ()
    %cst_20 = arith.constant dense<0.000000e+00> : vector<4x12x240xf32>
    %45 = tpu.matmul %43, %44, %cst_20 {dimension_numbers = #tpu.dot_dimension_numbers<[2], [1], [1], [2], [0, 0, 0, 1, 1, 2], [0], [0]>} : vector<4x12x24xbf16>, vector<4x24x240xbf16>, vector<4x12x240xf32> -> vector<4x12x240xf32>
    "tpu.trace_stop"() : () -> ()
    %c1_21 = arith.constant 1 : index
    %c0_22 = arith.constant 0 : index
    %c0_23 = arith.constant 0 : index
    %46 = vector.load %arg3[%c1_21, %c0_22, %c0_23] : memref<2x12x24xbf16, #tpu.memory_space<vmem>>, vector<1x12x24xbf16>
    %47 = vector.shape_cast %46 : vector<1x12x24xbf16> to vector<12x24xbf16>
    %48 = vector.shape_cast %47 : vector<12x24xbf16> to vector<1x12x24xbf16>
    %49 = vector.broadcast %48 : vector<1x12x24xbf16> to vector<4x12x24xbf16>
    %50 = arith.truncf %39 : vector<4x24x240xf32> to vector<4x24x240xbf16>
    "tpu.trace_start"() <{level = 10 : i32, message = "bph,bhf->bpf"}> : () -> ()
    %cst_24 = arith.constant dense<0.000000e+00> : vector<4x12x240xf32>
    %51 = tpu.matmul %49, %50, %cst_24 {dimension_numbers = #tpu.dot_dimension_numbers<[2], [1], [1], [2], [0, 0, 0, 1, 1, 2], [0], [0]>} : vector<4x12x24xbf16>, vector<4x24x240xbf16>, vector<4x12x240xf32> -> vector<4x12x240xf32>
    "tpu.trace_stop"() : () -> ()
    %52 = arith.maximumf %45, %51 : vector<4x12x240xf32>
    %c0_25 = arith.constant 0 : index
    %c0_26 = arith.constant 0 : index
    %c0_27 = arith.constant 0 : index
    %53 = vector.load %arg4[%c0_25, %c0_26, %c0_27] : memref<2x240x120xbf16, #tpu.memory_space<vmem>>, vector<1x240x120xbf16>
    %54 = vector.shape_cast %53 : vector<1x240x120xbf16> to vector<240x120xbf16>
    %55 = vector.shape_cast %54 : vector<240x120xbf16> to vector<1x240x120xbf16>
    %56 = vector.broadcast %55 : vector<1x240x120xbf16> to vector<4x240x120xbf16>
    %57 = arith.truncf %52 : vector<4x12x240xf32> to vector<4x12x240xbf16>
    "tpu.trace_start"() <{level = 10 : i32, message = "bmk,bkn->bmn"}> : () -> ()
    %cst_28 = arith.constant dense<0.000000e+00> : vector<4x12x120xf32>
    %58 = tpu.matmul %57, %56, %cst_28 {dimension_numbers = #tpu.dot_dimension_numbers<[2], [1], [1], [2], [0, 0, 0, 1, 1, 2], [0], [0]>} : vector<4x12x240xbf16>, vector<4x240x120xbf16>, vector<4x12x120xf32> -> vector<4x12x120xf32>
    "tpu.trace_stop"() : () -> ()
    %c1_29 = arith.constant 1 : index
    %c0_30 = arith.constant 0 : index
    %c0_31 = arith.constant 0 : index
    %59 = vector.load %arg4[%c1_29, %c0_30, %c0_31] : memref<2x240x120xbf16, #tpu.memory_space<vmem>>, vector<1x240x120xbf16>
    %60 = vector.shape_cast %59 : vector<1x240x120xbf16> to vector<240x120xbf16>
    %61 = vector.shape_cast %60 : vector<240x120xbf16> to vector<1x240x120xbf16>
    %62 = vector.broadcast %61 : vector<1x240x120xbf16> to vector<4x240x120xbf16>
    %63 = arith.truncf %52 : vector<4x12x240xf32> to vector<4x12x240xbf16>
    "tpu.trace_start"() <{level = 10 : i32, message = "bmk,bkn->bmn"}> : () -> ()
    %cst_32 = arith.constant dense<0.000000e+00> : vector<4x12x120xf32>
    %64 = tpu.matmul %63, %62, %cst_32 {dimension_numbers = #tpu.dot_dimension_numbers<[2], [1], [1], [2], [0, 0, 0, 1, 1, 2], [0], [0]>} : vector<4x12x240xbf16>, vector<4x240x120xbf16>, vector<4x12x120xf32> -> vector<4x12x120xf32>
    "tpu.trace_stop"() : () -> ()
    %65 = arith.maximumf %58, %64 : vector<4x12x120xf32>
    %c0_33 = arith.constant 0 : index
    %c0_34 = arith.constant 0 : index
    %c0_35 = arith.constant 0 : index
    %66 = vector.load %arg5[%c0_33, %c0_34, %c0_35] : memref<1x1x120xf32, #tpu.memory_space<vmem>>, vector<1x1x120xf32>
    %67 = vector.broadcast %66 : vector<1x1x120xf32> to vector<4x12x120xf32>
    %68 = arith.addf %65, %67 : vector<4x12x120xf32>
    %cst_36 = arith.constant 0.000000e+00 : f32
    %69 = vector.broadcast %cst_36 : f32 to vector<4x12x120xf32>
    %70 = arith.maximumf %68, %69 : vector<4x12x120xf32>
    %71 = vector.extract_strided_slice %70 {offsets = [0, 0, 0], sizes = [4, 8, 120], strides = [1, 1, 1]} : vector<4x12x120xf32> to vector<4x8x120xf32>
    %c0_37 = arith.constant 0 : index
    %c0_38 = arith.constant 0 : index
    %c0_39 = arith.constant 0 : index
    %72 = vector.load %arg6[%c0_37, %c0_38, %c0_39] : memref<5x120x160xbf16, #tpu.memory_space<vmem>>, vector<1x120x160xbf16>
    %73 = vector.shape_cast %72 : vector<1x120x160xbf16> to vector<120x160xbf16>
    %74 = vector.shape_cast %73 : vector<120x160xbf16> to vector<1x120x160xbf16>
    %75 = vector.broadcast %74 : vector<1x120x160xbf16> to vector<4x120x160xbf16>
    %76 = arith.truncf %71 : vector<4x8x120xf32> to vector<4x8x120xbf16>
    "tpu.trace_start"() <{level = 10 : i32, message = "bmk,bkn->bmn"}> : () -> ()
    %cst_40 = arith.constant dense<0.000000e+00> : vector<4x8x160xf32>
    %77 = tpu.matmul %76, %75, %cst_40 {dimension_numbers = #tpu.dot_dimension_numbers<[2], [1], [1], [2], [0, 0, 0, 1, 1, 2], [0], [0]>} : vector<4x8x120xbf16>, vector<4x120x160xbf16>, vector<4x8x160xf32> -> vector<4x8x160xf32>
    "tpu.trace_stop"() : () -> ()
    %78 = vector.extract_strided_slice %70 {offsets = [0, 1, 0], sizes = [4, 8, 120], strides = [1, 1, 1]} : vector<4x12x120xf32> to vector<4x8x120xf32>
    %c1_41 = arith.constant 1 : index
    %c0_42 = arith.constant 0 : index
    %c0_43 = arith.constant 0 : index
    %79 = vector.load %arg6[%c1_41, %c0_42, %c0_43] : memref<5x120x160xbf16, #tpu.memory_space<vmem>>, vector<1x120x160xbf16>
    %80 = vector.shape_cast %79 : vector<1x120x160xbf16> to vector<120x160xbf16>
    %81 = vector.shape_cast %80 : vector<120x160xbf16> to vector<1x120x160xbf16>
    %82 = vector.broadcast %81 : vector<1x120x160xbf16> to vector<4x120x160xbf16>
    %83 = arith.truncf %78 : vector<4x8x120xf32> to vector<4x8x120xbf16>
    "tpu.trace_start"() <{level = 10 : i32, message = "bmk,bkn->bmn"}> : () -> ()
    %cst_44 = arith.constant dense<0.000000e+00> : vector<4x8x160xf32>
    %84 = tpu.matmul %83, %82, %cst_44 {dimension_numbers = #tpu.dot_dimension_numbers<[2], [1], [1], [2], [0, 0, 0, 1, 1, 2], [0], [0]>} : vector<4x8x120xbf16>, vector<4x120x160xbf16>, vector<4x8x160xf32> -> vector<4x8x160xf32>
    "tpu.trace_stop"() : () -> ()
    %85 = arith.addf %77, %84 : vector<4x8x160xf32>
    %86 = vector.extract_strided_slice %70 {offsets = [0, 2, 0], sizes = [4, 8, 120], strides = [1, 1, 1]} : vector<4x12x120xf32> to vector<4x8x120xf32>
    %c2_45 = arith.constant 2 : index
    %c0_46 = arith.constant 0 : index
    %c0_47 = arith.constant 0 : index
    %87 = vector.load %arg6[%c2_45, %c0_46, %c0_47] : memref<5x120x160xbf16, #tpu.memory_space<vmem>>, vector<1x120x160xbf16>
    %88 = vector.shape_cast %87 : vector<1x120x160xbf16> to vector<120x160xbf16>
    %89 = vector.shape_cast %88 : vector<120x160xbf16> to vector<1x120x160xbf16>
    %90 = vector.broadcast %89 : vector<1x120x160xbf16> to vector<4x120x160xbf16>
    %91 = arith.truncf %86 : vector<4x8x120xf32> to vector<4x8x120xbf16>
    "tpu.trace_start"() <{level = 10 : i32, message = "bmk,bkn->bmn"}> : () -> ()
    %cst_48 = arith.constant dense<0.000000e+00> : vector<4x8x160xf32>
    %92 = tpu.matmul %91, %90, %cst_48 {dimension_numbers = #tpu.dot_dimension_numbers<[2], [1], [1], [2], [0, 0, 0, 1, 1, 2], [0], [0]>} : vector<4x8x120xbf16>, vector<4x120x160xbf16>, vector<4x8x160xf32> -> vector<4x8x160xf32>
    "tpu.trace_stop"() : () -> ()
    %93 = arith.addf %85, %92 : vector<4x8x160xf32>
    %94 = vector.extract_strided_slice %70 {offsets = [0, 3, 0], sizes = [4, 8, 120], strides = [1, 1, 1]} : vector<4x12x120xf32> to vector<4x8x120xf32>
    %c3_49 = arith.constant 3 : index
    %c0_50 = arith.constant 0 : index
    %c0_51 = arith.constant 0 : index
    %95 = vector.load %arg6[%c3_49, %c0_50, %c0_51] : memref<5x120x160xbf16, #tpu.memory_space<vmem>>, vector<1x120x160xbf16>
    %96 = vector.shape_cast %95 : vector<1x120x160xbf16> to vector<120x160xbf16>
    %97 = vector.shape_cast %96 : vector<120x160xbf16> to vector<1x120x160xbf16>
    %98 = vector.broadcast %97 : vector<1x120x160xbf16> to vector<4x120x160xbf16>
    %99 = arith.truncf %94 : vector<4x8x120xf32> to vector<4x8x120xbf16>
    "tpu.trace_start"() <{level = 10 : i32, message = "bmk,bkn->bmn"}> : () -> ()
    %cst_52 = arith.constant dense<0.000000e+00> : vector<4x8x160xf32>
    %100 = tpu.matmul %99, %98, %cst_52 {dimension_numbers = #tpu.dot_dimension_numbers<[2], [1], [1], [2], [0, 0, 0, 1, 1, 2], [0], [0]>} : vector<4x8x120xbf16>, vector<4x120x160xbf16>, vector<4x8x160xf32> -> vector<4x8x160xf32>
    "tpu.trace_stop"() : () -> ()
    %101 = arith.addf %93, %100 : vector<4x8x160xf32>
    %102 = vector.extract_strided_slice %70 {offsets = [0, 4, 0], sizes = [4, 8, 120], strides = [1, 1, 1]} : vector<4x12x120xf32> to vector<4x8x120xf32>
    %c4_53 = arith.constant 4 : index
    %c0_54 = arith.constant 0 : index
    %c0_55 = arith.constant 0 : index
    %103 = vector.load %arg6[%c4_53, %c0_54, %c0_55] : memref<5x120x160xbf16, #tpu.memory_space<vmem>>, vector<1x120x160xbf16>
    %104 = vector.shape_cast %103 : vector<1x120x160xbf16> to vector<120x160xbf16>
    %105 = vector.shape_cast %104 : vector<120x160xbf16> to vector<1x120x160xbf16>
    %106 = vector.broadcast %105 : vector<1x120x160xbf16> to vector<4x120x160xbf16>
    %107 = arith.truncf %102 : vector<4x8x120xf32> to vector<4x8x120xbf16>
    "tpu.trace_start"() <{level = 10 : i32, message = "bmk,bkn->bmn"}> : () -> ()
    %cst_56 = arith.constant dense<0.000000e+00> : vector<4x8x160xf32>
    %108 = tpu.matmul %107, %106, %cst_56 {dimension_numbers = #tpu.dot_dimension_numbers<[2], [1], [1], [2], [0, 0, 0, 1, 1, 2], [0], [0]>} : vector<4x8x120xbf16>, vector<4x120x160xbf16>, vector<4x8x160xf32> -> vector<4x8x160xf32>
    "tpu.trace_stop"() : () -> ()
    %109 = arith.addf %101, %108 : vector<4x8x160xf32>
    %c0_57 = arith.constant 0 : index
    %c0_58 = arith.constant 0 : index
    %c0_59 = arith.constant 0 : index
    %110 = vector.load %arg7[%c0_57, %c0_58, %c0_59] : memref<2x4x8xbf16, #tpu.memory_space<vmem>>, vector<1x4x8xbf16>
    %111 = vector.shape_cast %110 : vector<1x4x8xbf16> to vector<4x8xbf16>
    %112 = vector.shape_cast %111 : vector<4x8xbf16> to vector<1x4x8xbf16>
    %113 = vector.broadcast %112 : vector<1x4x8xbf16> to vector<4x4x8xbf16>
    %114 = arith.truncf %109 : vector<4x8x160xf32> to vector<4x8x160xbf16>
    "tpu.trace_start"() <{level = 10 : i32, message = "bph,bhf->bpf"}> : () -> ()
    %cst_60 = arith.constant dense<0.000000e+00> : vector<4x4x160xf32>
    %115 = tpu.matmul %113, %114, %cst_60 {dimension_numbers = #tpu.dot_dimension_numbers<[2], [1], [1], [2], [0, 0, 0, 1, 1, 2], [0], [0]>} : vector<4x4x8xbf16>, vector<4x8x160xbf16>, vector<4x4x160xf32> -> vector<4x4x160xf32>
    "tpu.trace_stop"() : () -> ()
    %c1_61 = arith.constant 1 : index
    %c0_62 = arith.constant 0 : index
    %c0_63 = arith.constant 0 : index
    %116 = vector.load %arg7[%c1_61, %c0_62, %c0_63] : memref<2x4x8xbf16, #tpu.memory_space<vmem>>, vector<1x4x8xbf16>
    %117 = vector.shape_cast %116 : vector<1x4x8xbf16> to vector<4x8xbf16>
    %118 = vector.shape_cast %117 : vector<4x8xbf16> to vector<1x4x8xbf16>
    %119 = vector.broadcast %118 : vector<1x4x8xbf16> to vector<4x4x8xbf16>
    %120 = arith.truncf %109 : vector<4x8x160xf32> to vector<4x8x160xbf16>
    "tpu.trace_start"() <{level = 10 : i32, message = "bph,bhf->bpf"}> : () -> ()
    %cst_64 = arith.constant dense<0.000000e+00> : vector<4x4x160xf32>
    %121 = tpu.matmul %119, %120, %cst_64 {dimension_numbers = #tpu.dot_dimension_numbers<[2], [1], [1], [2], [0, 0, 0, 1, 1, 2], [0], [0]>} : vector<4x4x8xbf16>, vector<4x8x160xbf16>, vector<4x4x160xf32> -> vector<4x4x160xf32>
    "tpu.trace_stop"() : () -> ()
    %122 = arith.maximumf %115, %121 : vector<4x4x160xf32>
    %c0_65 = arith.constant 0 : index
    %c0_66 = arith.constant 0 : index
    %c0_67 = arith.constant 0 : index
    %123 = vector.load %arg8[%c0_65, %c0_66, %c0_67] : memref<2x160x80xbf16, #tpu.memory_space<vmem>>, vector<1x160x80xbf16>
    %124 = vector.shape_cast %123 : vector<1x160x80xbf16> to vector<160x80xbf16>
    %125 = vector.shape_cast %124 : vector<160x80xbf16> to vector<1x160x80xbf16>
    %126 = vector.broadcast %125 : vector<1x160x80xbf16> to vector<4x160x80xbf16>
    %127 = arith.truncf %122 : vector<4x4x160xf32> to vector<4x4x160xbf16>
    "tpu.trace_start"() <{level = 10 : i32, message = "bmk,bkn->bmn"}> : () -> ()
    %cst_68 = arith.constant dense<0.000000e+00> : vector<4x4x80xf32>
    %128 = tpu.matmul %127, %126, %cst_68 {dimension_numbers = #tpu.dot_dimension_numbers<[2], [1], [1], [2], [0, 0, 0, 1, 1, 2], [0], [0]>} : vector<4x4x160xbf16>, vector<4x160x80xbf16>, vector<4x4x80xf32> -> vector<4x4x80xf32>
    "tpu.trace_stop"() : () -> ()
    %c1_69 = arith.constant 1 : index
    %c0_70 = arith.constant 0 : index
    %c0_71 = arith.constant 0 : index
    %129 = vector.load %arg8[%c1_69, %c0_70, %c0_71] : memref<2x160x80xbf16, #tpu.memory_space<vmem>>, vector<1x160x80xbf16>
    %130 = vector.shape_cast %129 : vector<1x160x80xbf16> to vector<160x80xbf16>
    %131 = vector.shape_cast %130 : vector<160x80xbf16> to vector<1x160x80xbf16>
    %132 = vector.broadcast %131 : vector<1x160x80xbf16> to vector<4x160x80xbf16>
    %133 = arith.truncf %122 : vector<4x4x160xf32> to vector<4x4x160xbf16>
    "tpu.trace_start"() <{level = 10 : i32, message = "bmk,bkn->bmn"}> : () -> ()
    %cst_72 = arith.constant dense<0.000000e+00> : vector<4x4x80xf32>
    %134 = tpu.matmul %133, %132, %cst_72 {dimension_numbers = #tpu.dot_dimension_numbers<[2], [1], [1], [2], [0, 0, 0, 1, 1, 2], [0], [0]>} : vector<4x4x160xbf16>, vector<4x160x80xbf16>, vector<4x4x80xf32> -> vector<4x4x80xf32>
    "tpu.trace_stop"() : () -> ()
    %135 = arith.maximumf %128, %134 : vector<4x4x80xf32>
    %c0_73 = arith.constant 0 : index
    %c0_74 = arith.constant 0 : index
    %c0_75 = arith.constant 0 : index
    %136 = vector.load %arg9[%c0_73, %c0_74, %c0_75] : memref<1x1x80xf32, #tpu.memory_space<vmem>>, vector<1x1x80xf32>
    %137 = vector.broadcast %136 : vector<1x1x80xf32> to vector<4x4x80xf32>
    %138 = arith.addf %135, %137 : vector<4x4x80xf32>
    %cst_76 = arith.constant 0.000000e+00 : f32
    %139 = vector.broadcast %cst_76 : f32 to vector<4x4x80xf32>
    %140 = arith.maximumf %138, %139 : vector<4x4x80xf32>
    %141 = vector.extract_strided_slice %140 {offsets = [0, 0, 0], sizes = [4, 1, 80], strides = [1, 1, 1]} : vector<4x4x80xf32> to vector<4x1x80xf32>
    %c0_77 = arith.constant 0 : index
    %c0_78 = arith.constant 0 : index
    %c0_79 = arith.constant 0 : index
    %142 = vector.load %arg10[%c0_77, %c0_78, %c0_79] : memref<4x80x50xbf16, #tpu.memory_space<vmem>>, vector<1x80x50xbf16>
    %143 = vector.shape_cast %142 : vector<1x80x50xbf16> to vector<80x50xbf16>
    %144 = vector.shape_cast %143 : vector<80x50xbf16> to vector<1x80x50xbf16>
    %145 = vector.broadcast %144 : vector<1x80x50xbf16> to vector<4x80x50xbf16>
    %146 = arith.truncf %141 : vector<4x1x80xf32> to vector<4x1x80xbf16>
    "tpu.trace_start"() <{level = 10 : i32, message = "bmk,bkn->bmn"}> : () -> ()
    %cst_80 = arith.constant dense<0.000000e+00> : vector<4x1x50xf32>
    %147 = tpu.matmul %146, %145, %cst_80 {dimension_numbers = #tpu.dot_dimension_numbers<[2], [1], [1], [2], [0, 0, 0, 1, 1, 2], [0], [0]>} : vector<4x1x80xbf16>, vector<4x80x50xbf16>, vector<4x1x50xf32> -> vector<4x1x50xf32>
    "tpu.trace_stop"() : () -> ()
    %148 = vector.extract_strided_slice %140 {offsets = [0, 1, 0], sizes = [4, 1, 80], strides = [1, 1, 1]} : vector<4x4x80xf32> to vector<4x1x80xf32>
    %c1_81 = arith.constant 1 : index
    %c0_82 = arith.constant 0 : index
    %c0_83 = arith.constant 0 : index
    %149 = vector.load %arg10[%c1_81, %c0_82, %c0_83] : memref<4x80x50xbf16, #tpu.memory_space<vmem>>, vector<1x80x50xbf16>
    %150 = vector.shape_cast %149 : vector<1x80x50xbf16> to vector<80x50xbf16>
    %151 = vector.shape_cast %150 : vector<80x50xbf16> to vector<1x80x50xbf16>
    %152 = vector.broadcast %151 : vector<1x80x50xbf16> to vector<4x80x50xbf16>
    %153 = arith.truncf %148 : vector<4x1x80xf32> to vector<4x1x80xbf16>
    "tpu.trace_start"() <{level = 10 : i32, message = "bmk,bkn->bmn"}> : () -> ()
    %cst_84 = arith.constant dense<0.000000e+00> : vector<4x1x50xf32>
    %154 = tpu.matmul %153, %152, %cst_84 {dimension_numbers = #tpu.dot_dimension_numbers<[2], [1], [1], [2], [0, 0, 0, 1, 1, 2], [0], [0]>} : vector<4x1x80xbf16>, vector<4x80x50xbf16>, vector<4x1x50xf32> -> vector<4x1x50xf32>
    "tpu.trace_stop"() : () -> ()
    %155 = arith.addf %147, %154 : vector<4x1x50xf32>
    %156 = vector.extract_strided_slice %140 {offsets = [0, 2, 0], sizes = [4, 1, 80], strides = [1, 1, 1]} : vector<4x4x80xf32> to vector<4x1x80xf32>
    %c2_85 = arith.constant 2 : index
    %c0_86 = arith.constant 0 : index
    %c0_87 = arith.constant 0 : index
    %157 = vector.load %arg10[%c2_85, %c0_86, %c0_87] : memref<4x80x50xbf16, #tpu.memory_space<vmem>>, vector<1x80x50xbf16>
    %158 = vector.shape_cast %157 : vector<1x80x50xbf16> to vector<80x50xbf16>
    %159 = vector.shape_cast %158 : vector<80x50xbf16> to vector<1x80x50xbf16>
    %160 = vector.broadcast %159 : vector<1x80x50xbf16> to vector<4x80x50xbf16>
    %161 = arith.truncf %156 : vector<4x1x80xf32> to vector<4x1x80xbf16>
    "tpu.trace_start"() <{level = 10 : i32, message = "bmk,bkn->bmn"}> : () -> ()
    %cst_88 = arith.constant dense<0.000000e+00> : vector<4x1x50xf32>
    %162 = tpu.matmul %161, %160, %cst_88 {dimension_numbers = #tpu.dot_dimension_numbers<[2], [1], [1], [2], [0, 0, 0, 1, 1, 2], [0], [0]>} : vector<4x1x80xbf16>, vector<4x80x50xbf16>, vector<4x1x50xf32> -> vector<4x1x50xf32>
    "tpu.trace_stop"() : () -> ()
    %163 = arith.addf %155, %162 : vector<4x1x50xf32>
    %164 = vector.extract_strided_slice %140 {offsets = [0, 3, 0], sizes = [4, 1, 80], strides = [1, 1, 1]} : vector<4x4x80xf32> to vector<4x1x80xf32>
    %c3_89 = arith.constant 3 : index
    %c0_90 = arith.constant 0 : index
    %c0_91 = arith.constant 0 : index
    %165 = vector.load %arg10[%c3_89, %c0_90, %c0_91] : memref<4x80x50xbf16, #tpu.memory_space<vmem>>, vector<1x80x50xbf16>
    %166 = vector.shape_cast %165 : vector<1x80x50xbf16> to vector<80x50xbf16>
    %167 = vector.shape_cast %166 : vector<80x50xbf16> to vector<1x80x50xbf16>
    %168 = vector.broadcast %167 : vector<1x80x50xbf16> to vector<4x80x50xbf16>
    %169 = arith.truncf %164 : vector<4x1x80xf32> to vector<4x1x80xbf16>
    "tpu.trace_start"() <{level = 10 : i32, message = "bmk,bkn->bmn"}> : () -> ()
    %cst_92 = arith.constant dense<0.000000e+00> : vector<4x1x50xf32>
    %170 = tpu.matmul %169, %168, %cst_92 {dimension_numbers = #tpu.dot_dimension_numbers<[2], [1], [1], [2], [0, 0, 0, 1, 1, 2], [0], [0]>} : vector<4x1x80xbf16>, vector<4x80x50xbf16>, vector<4x1x50xf32> -> vector<4x1x50xf32>
    "tpu.trace_stop"() : () -> ()
    %171 = arith.addf %163, %170 : vector<4x1x50xf32>
    %c0_93 = arith.constant 0 : index
    %c0_94 = arith.constant 0 : index
    %c0_95 = arith.constant 0 : index
    %172 = vector.load %arg11[%c0_93, %c0_94, %c0_95] : memref<1x1x50xf32, #tpu.memory_space<vmem>>, vector<1x1x50xf32>
    %173 = vector.broadcast %172 : vector<1x1x50xf32> to vector<4x1x50xf32>
    %174 = arith.addf %171, %173 : vector<4x1x50xf32>
    %cst_96 = arith.constant 0.000000e+00 : f32
    %175 = vector.broadcast %cst_96 : f32 to vector<4x1x50xf32>
    %176 = arith.maximumf %174, %175 : vector<4x1x50xf32>
    %c0_97 = arith.constant 0 : index
    %c0_98 = arith.constant 0 : index
    %177 = vector.load %arg12[%c0_97, %c0_98] : memref<50x10xbf16, #tpu.memory_space<vmem>>, vector<50x10xbf16>
    %178 = vector.shape_cast %177 : vector<50x10xbf16> to vector<1x50x10xbf16>
    %179 = vector.broadcast %178 : vector<1x50x10xbf16> to vector<4x50x10xbf16>
    %180 = arith.truncf %176 : vector<4x1x50xf32> to vector<4x1x50xbf16>
    "tpu.trace_start"() <{level = 10 : i32, message = "bmk,bkn->bmn"}> : () -> ()
    %cst_99 = arith.constant dense<0.000000e+00> : vector<4x1x10xf32>
    %181 = tpu.matmul %180, %179, %cst_99 {dimension_numbers = #tpu.dot_dimension_numbers<[2], [1], [1], [2], [0, 0, 0, 1, 1, 2], [0], [0]>} : vector<4x1x50xbf16>, vector<4x50x10xbf16>, vector<4x1x10xf32> -> vector<4x1x10xf32>
    "tpu.trace_stop"() : () -> ()
    %c0_100 = arith.constant 0 : index
    %c0_101 = arith.constant 0 : index
    %c0_102 = arith.constant 0 : index
    %182 = vector.load %arg13[%c0_100, %c0_101, %c0_102] : memref<1x1x10xf32, #tpu.memory_space<vmem>>, vector<1x1x10xf32>
    %183 = vector.broadcast %182 : vector<1x1x10xf32> to vector<4x1x10xf32>
    %184 = arith.addf %181, %183 : vector<4x1x10xf32>
    %cst_103 = arith.constant dense<0xFF800000> : vector<4x1xf32>
    %185 = vector.multi_reduction <maximumf>, %184, %cst_103 [2] : vector<4x1x10xf32> to vector<4x1xf32>
    %186 = vector.shape_cast %185 : vector<4x1xf32> to vector<4x1x1xf32>
    %187 = vector.broadcast %186 : vector<4x1x1xf32> to vector<4x1x10xf32>
    %188 = arith.subf %184, %187 : vector<4x1x10xf32>
    %189 = math.exp %188 : vector<4x1x10xf32>
    %cst_104 = arith.constant dense<0.000000e+00> : vector<4x1xf32>
    %190 = vector.multi_reduction <add>, %189, %cst_104 [2] : vector<4x1x10xf32> to vector<4x1xf32>
    %191 = vector.shape_cast %190 : vector<4x1xf32> to vector<4x1x1xf32>
    %192 = math.log %191 : vector<4x1x1xf32>
    %193 = vector.broadcast %192 : vector<4x1x1xf32> to vector<4x1x10xf32>
    %194 = arith.subf %188, %193 : vector<4x1x10xf32>
    %c0_105 = arith.constant 0 : index
    %c0_106 = arith.constant 0 : index
    %c0_107 = arith.constant 0 : index
    %195 = vector.load %arg14[%c0_105, %c0_106, %c0_107] : memref<4x1x10xf32, #tpu.memory_space<vmem>>, vector<4x1x10xf32>
    tpu.vector_store %arg14[%c0_105, %c0_106, %c0_107], %194 {strides = array<i32>} : memref<4x1x10xf32, #tpu.memory_space<vmem>>, vector<4x1x10xf32>,
    return
  }
  func.func @transform_0(%arg0: i32) -> (i32, i32, i32) {
    %c0_i32 = arith.constant 0 : i32
    %c0_i32_0 = arith.constant 0 : i32
    %c0_i32_1 = arith.constant 0 : i32
    return %arg0, %c0_i32, %c0_i32_0 : i32, i32, i32
  }
  func.func @transform_1(%arg0: i32) -> (i32, i32, i32) {
    %c0_i32 = arith.constant 0 : i32
    %c0_i32_0 = arith.constant 0 : i32
    %c0_i32_1 = arith.constant 0 : i32
    %c0_i32_2 = arith.constant 0 : i32
    return %c0_i32, %c0_i32_0, %c0_i32_1 : i32, i32, i32
  }
  func.func @transform_2(%arg0: i32) -> (i32, i32, i32) {
    %c0_i32 = arith.constant 0 : i32
    %c0_i32_0 = arith.constant 0 : i32
    %c0_i32_1 = arith.constant 0 : i32
    %c0_i32_2 = arith.constant 0 : i32
    return %c0_i32, %c0_i32_0, %c0_i32_1 : i32, i32, i32
  }
  func.func @transform_3(%arg0: i32) -> (i32, i32, i32) {
    %c0_i32 = arith.constant 0 : i32
    %c0_i32_0 = arith.constant 0 : i32
    %c0_i32_1 = arith.constant 0 : i32
    %c0_i32_2 = arith.constant 0 : i32
    return %c0_i32, %c0_i32_0, %c0_i32_1 : i32, i32, i32
  }
  func.func @transform_4(%arg0: i32) -> (i32, i32, i32) {
    %c0_i32 = arith.constant 0 : i32
    %c0_i32_0 = arith.constant 0 : i32
    %c0_i32_1 = arith.constant 0 : i32
    %c0_i32_2 = arith.constant 0 : i32
    return %c0_i32, %c0_i32_0, %c0_i32_1 : i32, i32, i32
  }
  func.func @transform_5(%arg0: i32) -> (i32, i32, i32) {
    %c0_i32 = arith.constant 0 : i32
    %c0_i32_0 = arith.constant 0 : i32
    %c0_i32_1 = arith.constant 0 : i32
    %c0_i32_2 = arith.constant 0 : i32
    return %c0_i32, %c0_i32_0, %c0_i32_1 : i32, i32, i32
  }
  func.func @transform_6(%arg0: i32) -> (i32, i32, i32) {
    %c0_i32 = arith.constant 0 : i32
    %c0_i32_0 = arith.constant 0 : i32
    %c0_i32_1 = arith.constant 0 : i32
    %c0_i32_2 = arith.constant 0 : i32
    return %c0_i32, %c0_i32_0, %c0_i32_1 : i32, i32, i32
  }
  func.func @transform_7(%arg0: i32) -> (i32, i32, i32) {
    %c0_i32 = arith.constant 0 : i32
    %c0_i32_0 = arith.constant 0 : i32
    %c0_i32_1 = arith.constant 0 : i32
    %c0_i32_2 = arith.constant 0 : i32
    return %c0_i32, %c0_i32_0, %c0_i32_1 : i32, i32, i32
  }
  func.func @transform_8(%arg0: i32) -> (i32, i32, i32) {
    %c0_i32 = arith.constant 0 : i32
    %c0_i32_0 = arith.constant 0 : i32
    %c0_i32_1 = arith.constant 0 : i32
    %c0_i32_2 = arith.constant 0 : i32
    return %c0_i32, %c0_i32_0, %c0_i32_1 : i32, i32, i32
  }
  func.func @transform_9(%arg0: i32) -> (i32, i32, i32) {
    %c0_i32 = arith.constant 0 : i32
    %c0_i32_0 = arith.constant 0 : i32
    %c0_i32_1 = arith.constant 0 : i32
    %c0_i32_2 = arith.constant 0 : i32
    return %c0_i32, %c0_i32_0, %c0_i32_1 : i32, i32, i32
  }
  func.func @transform_10(%arg0: i32) -> (i32, i32, i32) {
    %c0_i32 = arith.constant 0 : i32
    %c0_i32_0 = arith.constant 0 : i32
    %c0_i32_1 = arith.constant 0 : i32
    %c0_i32_2 = arith.constant 0 : i32
    return %c0_i32, %c0_i32_0, %c0_i32_1 : i32, i32, i32
  }
  func.func @transform_11(%arg0: i32) -> (i32, i32) {
    %c0_i32 = arith.constant 0 : i32
    %c0_i32_0 = arith.constant 0 : i32
    %c0_i32_1 = arith.constant 0 : i32
    return %c0_i32, %c0_i32_0 : i32, i32
  }
  func.func @transform_12(%arg0: i32) -> (i32, i32, i32) {
    %c0_i32 = arith.constant 0 : i32
    %c0_i32_0 = arith.constant 0 : i32
    %c0_i32_1 = arith.constant 0 : i32
    %c0_i32_2 = arith.constant 0 : i32
    return %c0_i32, %c0_i32_0, %c0_i32_1 : i32, i32, i32
  }
  func.func @transform_13(%arg0: i32) -> (i32, i32, i32) {
    %c0_i32 = arith.constant 0 : i32
    %c0_i32_0 = arith.constant 0 : i32
    %c0_i32_1 = arith.constant 0 : i32
    return %arg0, %c0_i32, %c0_i32_0 : i32, i32, i32
  }
}

</mosaic_0001>

<llo_original>
// kernel: cnn_classifier_forward.1
$region0: #{cnn_classifier_forward.1}
  #allocation0 [shape = 'u32[]', space=smem, size = 0x4, offset = 0x4, fixed_abs, tag = 'smem constant byte address 0x4 - core index']
  #allocation1 [shape = 'u32[144,128]{1,0:T(1,128)}', space=vmem, size = 0x12000, scoped, tag = 'internal scratch']
  %s0 = inlined_call_operand.vmem [shape: f32[8,28,28], index: 0, kind: input, shape index: {}]
  %s1 = inlined_call_operand.vmem [shape: bf16[5,28,240], index: 1, kind: input, shape index: {}]
  %s2 = inlined_call_operand.vmem [shape: bf16[2,12,24], index: 2, kind: input, shape index: {}]
  %s3 = inlined_call_operand.vmem [shape: bf16[2,240,120], index: 3, kind: input, shape index: {}]
  %s4 = inlined_call_operand.vmem [shape: f32[1,1,120], index: 4, kind: input, shape index: {}]
  %s5 = inlined_call_operand.vmem [shape: bf16[5,120,160], index: 5, kind: input, shape index: {}]
  %s6 = inlined_call_operand.vmem [shape: bf16[2,4,8], index: 6, kind: input, shape index: {}]
  %s7 = inlined_call_operand.vmem [shape: bf16[2,160,80], index: 7, kind: input, shape index: {}]
  %s8 = inlined_call_operand.vmem [shape: f32[1,1,80], index: 8, kind: input, shape index: {}]
  %s9 = inlined_call_operand.vmem [shape: bf16[4,80,50], index: 9, kind: input, shape index: {}]
  %s10 = inlined_call_operand.vmem [shape: f32[1,1,50], index: 10, kind: input, shape index: {}]
  %s11 = inlined_call_operand.vmem [shape: bf16[50,10], index: 11, kind: input, shape index: {}]
  %s12 = inlined_call_operand.vmem [shape: f32[1,1,10], index: 12, kind: input, shape index: {}]
  %s13 = inlined_call_operand.hbm [shape: f32[8,1,10], index: 13, kind: output, shape index: {}]
  %s14 = sld [smem:[#allocation0]]
  $region85: #{cnn_classifier_forward.1} parent=0
    _
  %s16 = ssub.s32 1, %s14
  %s17 = scalar_select 0, %s16, %s14
  $region1: #{cnn_classifier_forward.1} parent=0
    #allocation2 [shape = 'u8[4096]{0}', space=vmem, size = 0x1000, scoped, tag = 'output window, operand 0']
    #allocation3 [shape = 's32[2]{0}', space=sflag, size = 0x8, scoped, tag = 'scoped memory for cnn_classifier_forward.1']
    %18 = vsyncpa [#allocation3], 0
    %s19 = scalar_lea.sflag [#allocation3], 1
    %20 = vsyncpa %s19, 0
    loop: start=0, step=1, limit=4
    $region2: #{cnn_classifier_forward.1} parent=1 // loop_pre_header
      _
    $region3: #{cnn_classifier_forward.1} parent=1 // loop_header
      %s22 = sphi 0, %s26
      %p23 = scmp.ge.s32.totalorder %s22, 4
      %s32 = sphi 0, %s34
      %s35 = sphi 0, %s32
      %s36 = sphi 0, %s35
      %s52 = sphi 0, %s36
      %s56 = sphi 0, %s56
      %s58 = sphi 0, %s56
      %s59 = sphi 0, %s58
      %s73 = sphi 0, %s59
      %s77 = sphi 0, %s77
      %s79 = sphi 0, %s77
      %s80 = sphi 0, %s79
      %s94 = sphi 0, %s80
      %s98 = sphi 0, %s98
      %s100 = sphi 0, %s98
      %s101 = sphi 0, %s100
      %s115 = sphi 0, %s101
      %s119 = sphi 0, %s119
      %s121 = sphi 0, %s119
      %s122 = sphi 0, %s121
      %s136 = sphi 0, %s122
      %s140 = sphi 0, %s140
      %s142 = sphi 0, %s140
      %s143 = sphi 0, %s142
      %s157 = sphi 0, %s143
      %s161 = sphi 0, %s161
      %s163 = sphi 0, %s161
      %s164 = sphi 0, %s163
      %s178 = sphi 0, %s164
      %s182 = sphi 0, %s182
      %s184 = sphi 0, %s182
      %s185 = sphi 0, %s184
      %s199 = sphi 0, %s185
      %s203 = sphi 0, %s203
      %s205 = sphi 0, %s203
      %s206 = sphi 0, %s205
      %s220 = sphi 0, %s206
      %s224 = sphi 0, %s224
      %s226 = sphi 0, %s224
      %s227 = sphi 0, %s226
      %s241 = sphi 0, %s227
      %s245 = sphi 0, %s245
      %s247 = sphi 0, %s245
      %s248 = sphi 0, %s247
      %s262 = sphi 0, %s248
      %s266 = sphi 0, %s266
      %s268 = sphi 0, %s266
      %s269 = sphi 0, %s268
      %s283 = sphi 0, %s269
      %s287 = sphi 0, %s287
      %s289 = sphi 0, %s287
      %s290 = sphi 0, %s289
      %s304 = sphi 0, %s290
      %s310 = sphi 0, %s312
      %s313 = sphi 0, %s310
      %s314 = sphi 0, %s313
      %s330 = sphi 0, %s314
    $region4: #{cnn_classifier_forward.1} parent=1 // loop_header_branch
      %25 = sbr.rel (%p23) target = $region8
    $region5: #{cnn_classifier_forward.1} parent=1 // loop_body
      %s27 = ssub.s32 %s22, 1
      %s28 = ssub.s32 %s22, 2
      %s29 = sadd.s32 %s22, 1
      %s30 = ssub.s32 %s22, %s29
      %p31 = scmp.eq.s32.totalorder %s30, 0
      %s33 = sadd.s32 %s32, 1
      %s34 = scalar_select %p31, %s32, %s33
      %p37 = pneg %p31
      %p38 = scmp.eq.s32.totalorder %s22, 1
      %p39 = por %p37, %p38
      %p40 = scmp.ne.s32.totalorder %s32, %s35
      %p41 = scmp.eq.s32.totalorder %s22, 0
      %p42 = por %p40, %p41
      %p43 = scmp.ne.s32.totalorder %s32, %s35
      %p44 = scmp.eq.s32.totalorder %s27, 1
      %p45 = por %p43, %p44
      %p46 = scmp.ne.s32.totalorder %s35, %s36
      %p47 = scmp.eq.s32.totalorder %s27, 0
      %p48 = por %p46, %p47
      %p49 = scmp.ne.s32.totalorder %s35, %s36
      %p50 = scmp.eq.s32.totalorder %s28, 1
      %p51 = por %p49, %p50
      %p53 = scmp.ne.s32.totalorder %s36, %s52
      %p54 = scmp.eq.s32.totalorder %s28, 0
      %p55 = por %p53, %p54
      %s57 = sadd.s32 %s56, 1
      %p60 = scmp.eq.s32.totalorder %s22, 1
      %p61 = scmp.ne.s32.totalorder %s56, %s58
      %p62 = scmp.eq.s32.totalorder %s22, 0
      %p63 = por %p61, %p62
      %p64 = scmp.ne.s32.totalorder %s56, %s58
      %p65 = scmp.eq.s32.totalorder %s27, 1
      %p66 = por %p64, %p65
      %p67 = scmp.ne.s32.totalorder %s58, %s59
      %p68 = scmp.eq.s32.totalorder %s27, 0
      %p69 = por %p67, %p68
      %p70 = scmp.ne.s32.totalorder %s58, %s59
      %p71 = scmp.eq.s32.totalorder %s28, 1
      %p72 = por %p70, %p71
      %p74 = scmp.ne.s32.totalorder %s59, %s73
      %p75 = scmp.eq.s32.totalorder %s28, 0
      %p76 = por %p74, %p75
      %s78 = sadd.s32 %s77, 1
      %p81 = scmp.eq.s32.totalorder %s22, 1
      %p82 = scmp.ne.s32.totalorder %s77, %s79
      %p83 = scmp.eq.s32.totalorder %s22, 0
      %p84 = por %p82, %p83
      %p85 = scmp.ne.s32.totalorder %s77, %s79
      %p86 = scmp.eq.s32.totalorder %s27, 1
      %p87 = por %p85, %p86
      %p88 = scmp.ne.s32.totalorder %s79, %s80
      %p89 = scmp.eq.s32.totalorder %s27, 0
      %p90 = por %p88, %p89
      %p91 = scmp.ne.s32.totalorder %s79, %s80
      %p92 = scmp.eq.s32.totalorder %s28, 1
      %p93 = por %p91, %p92
      %p95 = scmp.ne.s32.totalorder %s80, %s94
      %p96 = scmp.eq.s32.totalorder %s28, 0
      %p97 = por %p95, %p96
      %s99 = sadd.s32 %s98, 1
      %p102 = scmp.eq.s32.totalorder %s22, 1
      %p103 = scmp.ne.s32.totalorder %s98, %s100
      %p104 = scmp.eq.s32.totalorder %s22, 0
      %p105 = por %p103, %p104
      %p106 = scmp.ne.s32.totalorder %s98, %s100
      %p107 = scmp.eq.s32.totalorder %s27, 1
      %p108 = por %p106, %p107
      %p109 = scmp.ne.s32.totalorder %s100, %s101
      %p110 = scmp.eq.s32.totalorder %s27, 0
      %p111 = por %p109, %p110
      %p112 = scmp.ne.s32.totalorder %s100, %s101
      %p113 = scmp.eq.s32.totalorder %s28, 1
      %p114 = por %p112, %p113
      %p116 = scmp.ne.s32.totalorder %s101, %s115
      %p117 = scmp.eq.s32.totalorder %s28, 0
      %p118 = por %p116, %p117
      %s120 = sadd.s32 %s119, 1
      %p123 = scmp.eq.s32.totalorder %s22, 1
      %p124 = scmp.ne.s32.totalorder %s119, %s121
      %p125 = scmp.eq.s32.totalorder %s22, 0
      %p126 = por %p124, %p125
      %p127 = scmp.ne.s32.totalorder %s119, %s121
      %p128 = scmp.eq.s32.totalorder %s27, 1
      %p129 = por %p127, %p128
      %p130 = scmp.ne.s32.totalorder %s121, %s122
      %p131 = scmp.eq.s32.totalorder %s27, 0
      %p132 = por %p130, %p131
      %p133 = scmp.ne.s32.totalorder %s121, %s122
      %p134 = scmp.eq.s32.totalorder %s28, 1
      %p135 = por %p133, %p134
      %p137 = scmp.ne.s32.totalorder %s122, %s136
      %p138 = scmp.eq.s32.totalorder %s28, 0
      %p139 = por %p137, %p138
      %s141 = sadd.s32 %s140, 1
      %p144 = scmp.eq.s32.totalorder %s22, 1
      %p145 = scmp.ne.s32.totalorder %s140, %s142
      %p146 = scmp.eq.s32.totalorder %s22, 0
      %p147 = por %p145, %p146
      %p148 = scmp.ne.s32.totalorder %s140, %s142
      %p149 = scmp.eq.s32.totalorder %s27, 1
      %p150 = por %p148, %p149
      %p151 = scmp.ne.s32.totalorder %s142, %s143
      %p152 = scmp.eq.s32.totalorder %s27, 0
      %p153 = por %p151, %p152
      %p154 = scmp.ne.s32.totalorder %s142, %s143
      %p155 = scmp.eq.s32.totalorder %s28, 1
      %p156 = por %p154, %p155
      %p158 = scmp.ne.s32.totalorder %s143, %s157
      %p159 = scmp.eq.s32.totalorder %s28, 0
      %p160 = por %p158, %p159
      %s162 = sadd.s32 %s161, 1
      %p165 = scmp.eq.s32.totalorder %s22, 1
      %p166 = scmp.ne.s32.totalorder %s161, %s163
      %p167 = scmp.eq.s32.totalorder %s22, 0
      %p168 = por %p166, %p167
      %p169 = scmp.ne.s32.totalorder %s161, %s163
      %p170 = scmp.eq.s32.totalorder %s27, 1
      %p171 = por %p169, %p170
      %p172 = scmp.ne.s32.totalorder %s163, %s164
      %p173 = scmp.eq.s32.totalorder %s27, 0
      %p174 = por %p172, %p173
      %p175 = scmp.ne.s32.totalorder %s163, %s164
      %p176 = scmp.eq.s32.totalorder %s28, 1
      %p177 = por %p175, %p176
      %p179 = scmp.ne.s32.totalorder %s164, %s178
      %p180 = scmp.eq.s32.totalorder %s28, 0
      %p181 = por %p179, %p180
      %s183 = sadd.s32 %s182, 1
      %p186 = scmp.eq.s32.totalorder %s22, 1
      %p187 = scmp.ne.s32.totalorder %s182, %s184
      %p188 = scmp.eq.s32.totalorder %s22, 0
      %p189 = por %p187, %p188
      %p190 = scmp.ne.s32.totalorder %s182, %s184
      %p191 = scmp.eq.s32.totalorder %s27, 1
      %p192 = por %p190, %p191
      %p193 = scmp.ne.s32.totalorder %s184, %s185
      %p194 = scmp.eq.s32.totalorder %s27, 0
      %p195 = por %p193, %p194
      %p196 = scmp.ne.s32.totalorder %s184, %s185
      %p197 = scmp.eq.s32.totalorder %s28, 1
      %p198 = por %p196, %p197
      %p200 = scmp.ne.s32.totalorder %s185, %s199
      %p201 = scmp.eq.s32.totalorder %s28, 0
      %p202 = por %p200, %p201
      %s204 = sadd.s32 %s203, 1
      %p207 = scmp.eq.s32.totalorder %s22, 1
      %p208 = scmp.ne.s32.totalorder %s203, %s205
      %p209 = scmp.eq.s32.totalorder %s22, 0
      %p210 = por %p208, %p209
      %p211 = scmp.ne.s32.totalorder %s203, %s205
      %p212 = scmp.eq.s32.totalorder %s27, 1
      %p213 = por %p211, %p212
      %p214 = scmp.ne.s32.totalorder %s205, %s206
      %p215 = scmp.eq.s32.totalorder %s27, 0
      %p216 = por %p214, %p215
      %p217 = scmp.ne.s32.totalorder %s205, %s206
      %p218 = scmp.eq.s32.totalorder %s28, 1
      %p219 = por %p217, %p218
      %p221 = scmp.ne.s32.totalorder %s206, %s220
      %p222 = scmp.eq.s32.totalorder %s28, 0
      %p223 = por %p221, %p222
      %s225 = sadd.s32 %s224, 1
      %p228 = scmp.eq.s32.totalorder %s22, 1
      %p229 = scmp.ne.s32.totalorder %s224, %s226
      %p230 = scmp.eq.s32.totalorder %s22, 0
      %p231 = por %p229, %p230
      %p232 = scmp.ne.s32.totalorder %s224, %s226
      %p233 = scmp.eq.s32.totalorder %s27, 1
      %p234 = por %p232, %p233
      %p235 = scmp.ne.s32.totalorder %s226, %s227
      %p236 = scmp.eq.s32.totalorder %s27, 0
      %p237 = por %p235, %p236
      %p238 = scmp.ne.s32.totalorder %s226, %s227
      %p239 = scmp.eq.s32.totalorder %s28, 1
      %p240 = por %p238, %p239
      %p242 = scmp.ne.s32.totalorder %s227, %s241
      %p243 = scmp.eq.s32.totalorder %s28, 0
      %p244 = por %p242, %p243
      %s246 = sadd.s32 %s245, 1
      %p249 = scmp.eq.s32.totalorder %s22, 1
      %p250 = scmp.ne.s32.totalorder %s245, %s247
      %p251 = scmp.eq.s32.totalorder %s22, 0
      %p252 = por %p250, %p251
      %p253 = scmp.ne.s32.totalorder %s245, %s247
      %p254 = scmp.eq.s32.totalorder %s27, 1
      %p255 = por %p253, %p254
      %p256 = scmp.ne.s32.totalorder %s247, %s248
      %p257 = scmp.eq.s32.totalorder %s27, 0
      %p258 = por %p256, %p257
      %p259 = scmp.ne.s32.totalorder %s247, %s248
      %p260 = scmp.eq.s32.totalorder %s28, 1
      %p261 = por %p259, %p260
      %p263 = scmp.ne.s32.totalorder %s248, %s262
      %p264 = scmp.eq.s32.totalorder %s28, 0
      %p265 = por %p263, %p264
      %s267 = sadd.s32 %s266, 1
      %p270 = scmp.eq.s32.totalorder %s22, 1
      %p271 = scmp.ne.s32.totalorder %s266, %s268
      %p272 = scmp.eq.s32.totalorder %s22, 0
      %p273 = por %p271, %p272
      %p274 = scmp.ne.s32.totalorder %s266, %s268
      %p275 = scmp.eq.s32.totalorder %s27, 1
      %p276 = por %p274, %p275
      %p277 = scmp.ne.s32.totalorder %s268, %s269
      %p278 = scmp.eq.s32.totalorder %s27, 0
      %p279 = por %p277, %p278
      %p280 = scmp.ne.s32.totalorder %s268, %s269
      %p281 = scmp.eq.s32.totalorder %s28, 1
      %p282 = por %p280, %p281
      %p284 = scmp.ne.s32.totalorder %s269, %s283
      %p285 = scmp.eq.s32.totalorder %s28, 0
      %p286 = por %p284, %p285
      %s288 = sadd.s32 %s287, 1
      %p291 = scmp.eq.s32.totalorder %s22, 1
      %p292 = scmp.ne.s32.totalorder %s287, %s289
      %p293 = scmp.eq.s32.totalorder %s22, 0
      %p294 = por %p292, %p293
      %p295 = scmp.ne.s32.totalorder %s287, %s289
      %p296 = scmp.eq.s32.totalorder %s27, 1
      %p297 = por %p295, %p296
      %p298 = scmp.ne.s32.totalorder %s289, %s290
      %p299 = scmp.eq.s32.totalorder %s27, 0
      %p300 = por %p298, %p299
      %p301 = scmp.ne.s32.totalorder %s289, %s290
      %p302 = scmp.eq.s32.totalorder %s28, 1
      %p303 = por %p301, %p302
      %p305 = scmp.ne.s32.totalorder %s290, %s304
      %p306 = scmp.eq.s32.totalorder %s28, 0
      %p307 = por %p305, %p306
      %s308 = ssub.s32 %s22, %s29
      %p309 = scmp.eq.s32.totalorder %s308, 0
      %s311 = sadd.s32 %s310, 1
      %s312 = scalar_select %p309, %s310, %s311
      %p315 = pneg %p309
      %p316 = scmp.eq.s32.totalorder %s22, 1
      %p317 = por %p315, %p316
      %p318 = scmp.ne.s32.totalorder %s310, %s313
      %p319 = scmp.eq.s32.totalorder %s22, 0
      %p320 = por %p318, %p319
      %p321 = scmp.ne.s32.totalorder %s310, %s313
      %p322 = scmp.eq.s32.totalorder %s27, 1
      %p323 = por %p321, %p322
      %p324 = scmp.ne.s32.totalorder %s313, %s314
      %p325 = scmp.eq.s32.totalorder %s27, 0
      %p326 = por %p324, %p325
      %p327 = scmp.ne.s32.totalorder %s313, %s314
      %p328 = scmp.eq.s32.totalorder %s28, 1
      %p329 = por %p327, %p328
      %p331 = scmp.ne.s32.totalorder %s314, %s330
      %p332 = scmp.eq.s32.totalorder %s28, 0
      %p333 = por %p331, %p332
      %p334 = scmp.le.s32.totalorder 1, %s22
      %p335 = scmp.lt.s32.totalorder %s22, 3
      %p336 = pnand %p334, %p335
      %p337 = pneg %p336
      // Predicated region
      $region9: #{cnn_classifier_forward.1} parent=5 // pred_check
        _
      $region10: #{cnn_classifier_forward.1} parent=5 // pred_check_branch
        %339 = sbr.rel (%p336) target = $region12
      $region11: #{cnn_classifier_forward.1} parent=5 // pred_region
        %s340 = ssub.s32 %s22, 1
        // Predicated region
        $region13: #{cnn_classifier_forward.1} parent=11 // pred_check
          %p341 = pneg %p69
        $region14: #{cnn_classifier_forward.1} parent=11 // pred_check_branch
          %343 = sbr.rel (%p341) target = $region16
        $region15: #{cnn_classifier_forward.1} parent=11 // pred_region
          _
        $region16: #{cnn_classifier_forward.1} parent=11 // pred_fallthru
          _
        // Predicated region
        $region17: #{cnn_classifier_forward.1} parent=11 // pred_check
          %p344 = pneg %p90
        $region18: #{cnn_classifier_forward.1} parent=11 // pred_check_branch
          %346 = sbr.rel (%p344) target = $region20
        $region19: #{cnn_classifier_forward.1} parent=11 // pred_region
          _
        $region20: #{cnn_classifier_forward.1} parent=11 // pred_fallthru
          _
        // Predicated region
        $region21: #{cnn_classifier_forward.1} parent=11 // pred_check
          %p347 = pneg %p111
        $region22: #{cnn_classifier_forward.1} parent=11 // pred_check_branch
          %349 = sbr.rel (%p347) target = $region24
        $region23: #{cnn_classifier_forward.1} parent=11 // pred_region
          _
        $region24: #{cnn_classifier_forward.1} parent=11 // pred_fallthru
          _
        // Predicated region
        $region25: #{cnn_classifier_forward.1} parent=11 // pred_check
          %p350 = pneg %p132
        $region26: #{cnn_classifier_forward.1} parent=11 // pred_check_branch
          %352 = sbr.rel (%p350) target = $region28
        $region27: #{cnn_classifier_forward.1} parent=11 // pred_region
          _
        $region28: #{cnn_classifier_forward.1} parent=11 // pred_fallthru
          _
        // Predicated region
        $region29: #{cnn_classifier_forward.1} parent=11 // pred_check
          %p353 = pneg %p153
        $region30: #{cnn_classifier_forward.1} parent=11 // pred_check_branch
          %355 = sbr.rel (%p353) target = $region32
        $region31: #{cnn_classifier_forward.1} parent=11 // pred_region
          _
        $region32: #{cnn_classifier_forward.1} parent=11 // pred_fallthru
          _
        // Predicated region
        $region33: #{cnn_classifier_forward.1} parent=11 // pred_check
          %p356 = pneg %p174
        $region34: #{cnn_classifier_forward.1} parent=11 // pred_check_branch
          %358 = sbr.rel (%p356) target = $region36
        $region35: #{cnn_classifier_forward.1} parent=11 // pred_region
          _
        $region36: #{cnn_classifier_forward.1} parent=11 // pred_fallthru
          _
        // Predicated region
        $region37: #{cnn_classifier_forward.1} parent=11 // pred_check
          %p359 = pneg %p195
        $region38: #{cnn_classifier_forward.1} parent=11 // pred_check_branch
          %361 = sbr.rel (%p359) target = $region40
        $region39: #{cnn_classifier_forward.1} parent=11 // pred_region
          _
        $region40: #{cnn_classifier_forward.1} parent=11 // pred_fallthru
          _
        // Predicated region
        $region41: #{cnn_classifier_forward.1} parent=11 // pred_check
          %p362 = pneg %p216
        $region42: #{cnn_classifier_forward.1} parent=11 // pred_check_branch
          %364 = sbr.rel (%p362) target = $region44
        $region43: #{cnn_classifier_forward.1} parent=11 // pred_region
          _
        $region44: #{cnn_classifier_forward.1} parent=11 // pred_fallthru
          _
        // Predicated region
        $region45: #{cnn_classifier_forward.1} parent=11 // pred_check
          %p365 = pneg %p237
        $region46: #{cnn_classifier_forward.1} parent=11 // pred_check_branch
          %367 = sbr.rel (%p365) target = $region48
        $region47: #{cnn_classifier_forward.1} parent=11 // pred_region
          _
        $region48: #{cnn_classifier_forward.1} parent=11 // pred_fallthru
          _
        // Predicated region
        $region49: #{cnn_classifier_forward.1} parent=11 // pred_check
          %p368 = pneg %p258
        $region50: #{cnn_classifier_forward.1} parent=11 // pred_check_branch
          %370 = sbr.rel (%p368) target = $region52
        $region51: #{cnn_classifier_forward.1} parent=11 // pred_region
          _
        $region52: #{cnn_classifier_forward.1} parent=11 // pred_fallthru
          _
        // Predicated region
        $region53: #{cnn_classifier_forward.1} parent=11 // pred_check
          %p371 = pneg %p279
        $region54: #{cnn_classifier_forward.1} parent=11 // pred_check_branch
          %373 = sbr.rel (%p371) target = $region56
        $region55: #{cnn_classifier_forward.1} parent=11 // pred_region
          _
        $region56: #{cnn_classifier_forward.1} parent=11 // pred_fallthru
          _
        // Predicated region
        $region57: #{cnn_classifier_forward.1} parent=11 // pred_check
          %p374 = pneg %p300
        $region58: #{cnn_classifier_forward.1} parent=11 // pred_check_branch
          %376 = sbr.rel (%p374) target = $region60
        $region59: #{cnn_classifier_forward.1} parent=11 // pred_region
          _
        $region60: #{cnn_classifier_forward.1} parent=11 // pred_fallthru
          _
      $region12: #{cnn_classifier_forward.1} parent=5 // pred_fallthru
        _
      %p377 = scmp.lt.s32.totalorder %s22, 2
      // Predicated region
      $region61: #{cnn_classifier_forward.1} parent=5 // pred_check
        %p378 = pneg %p377
      $region62: #{cnn_classifier_forward.1} parent=5 // pred_check_branch
        %380 = sbr.rel (%p378) target = $region64
      $region63: #{cnn_classifier_forward.1} parent=5 // pred_region
        // Predicated region
        $region65: #{cnn_classifier_forward.1} parent=63 // pred_check
          %p381 = pneg %p42
        $region66: #{cnn_classifier_forward.1} parent=63 // pred_check_branch
          %383 = sbr.rel (%p381) target = $region68
        $region67: #{cnn_classifier_forward.1} parent=63 // pred_region
          %s384 = smul.u32 4, %s22
          %p385 = scmp.lt.s32.totalorder %s384, 7
          %s386 = scalar_select %p385, %s384, 7
          %s387 = smul.addr %s386, 4
          %s388 = smul.addr %s387, 8
          %s389 = scalar_lea.vmem %s0, %s388
          %s390 = smul.u32 4, %s22
        $region68: #{cnn_classifier_forward.1} parent=63 // pred_fallthru
          _
      $region64: #{cnn_classifier_forward.1} parent=5 // pred_fallthru
        _
      %p391 = scmp.le.s32.totalorder 1, %s22
      %p392 = scmp.lt.s32.totalorder %s22, 3
      %p393 = pnand %p391, %p392
      %p394 = pneg %p393
      // Predicated region
      $region69: #{cnn_classifier_forward.1} parent=5 // pred_check
        _
      $region70: #{cnn_classifier_forward.1} parent=5 // pred_check_branch
        %396 = sbr.rel (%p393) target = $region72
      $region71: #{cnn_classifier_forward.1} parent=5 // pred_region
        %s397 = ssub.s32 %s22, 1
        %s398 = smul.u32 4, %s27
        %p399 = scmp.lt.s32.totalorder %s398, 7
        %s400 = scalar_select %p399, %s398, 7
        %s401 = smul.addr %s400, 4
        %s402 = smul.addr %s401, 8
        %s403 = scalar_lea.vmem %s0, %s402
        %p404 = pneg %p48
        %p405 = pneg %p45
        %p406 = pneg %p69
        %p407 = pneg %p66
        %p408 = pneg %p90
        %p409 = pneg %p87
        %p410 = pneg %p111
        %p411 = pneg %p108
        %p412 = pneg %p132
        %p413 = pneg %p129
        %p414 = pneg %p153
        %p415 = pneg %p150
        %p416 = pneg %p174
        %p417 = pneg %p171
        %p418 = pneg %p195
        %p419 = pneg %p192
        %p420 = pneg %p216
        %p421 = pneg %p213
        %p422 = pneg %p237
        %p423 = pneg %p234
        %p424 = pneg %p258
        %p425 = pneg %p255
        %p426 = pneg %p279
        %p427 = pneg %p276
        %p428 = pneg %p300
        %p429 = pneg %p297
        %p430 = pneg %p326
        %p431 = pneg %p323
        %s432 = sand.u32 %s313, 1
        %s433 = scalar_lea.sflag [#allocation3], %s432
        %s434 = sand.u32 %s313, 1
        %s435 = smul.addr %s434, 4
        %s436 = scalar_lea.vmem [#allocation2], %s435
        %s437 = smul.u32 4, %s27
        %p438 = scmp.lt.s32.totalorder %s437, 7
        %s439 = scalar_select %p438, %s437, 7
        %s440 = smul.addr %s439, 4
        %s441 = smul.addr %s440, 8
        %s442 = scalar_lea.vmem %s0, %s441
        %s443 = smul.u32 4, %s27
        %s444 = smul.u32 4, %s27
        %v446 = vld [vmem:[%s442] sm:$0xff]
        %v447 = vld [vmem:[%s442 + $0x8] sm:$0xff]
        %v448 = vld [vmem:[%s442 + $0x10] sm:$0xff]
        %v449 = vld [vmem:[%s442 + $0x18] sm:$0xf]
        %v450 = vld [vmem:[%s442 + $0x20] sm:$0xff]
        %v451 = vld [vmem:[%s442 + $0x28] sm:$0xff]
        %v452 = vld [vmem:[%s442 + $0x30] sm:$0xff]
        %v453 = vld [vmem:[%s442 + $0x38] sm:$0xf]
        %v454 = vld [vmem:[%s442 + $0x40] sm:$0xff]
        %v455 = vld [vmem:[%s442 + $0x48] sm:$0xff]
        %v456 = vld [vmem:[%s442 + $0x50] sm:$0xff]
        %v457 = vld [vmem:[%s442 + $0x58] sm:$0xf]
        %v458 = vld [vmem:[%s442 + $0x60] sm:$0xff]
        %v459 = vld [vmem:[%s442 + $0x68] sm:$0xff]
        %v460 = vld [vmem:[%s442 + $0x70] sm:$0xff]
        %v461 = vld [vmem:[%s442 + $0x78] sm:$0xf]
        %v462 = vld [vmem:[%s1] sm:$0xff]
        %v463 = vld [vmem:[%s1 + $0x8] sm:$0xff]
        %v464 = vld [vmem:[%s1 + $0x10] sm:$0xff]
        %v465 = vld [vmem:[%s1 + $0x18] sm:$0x33]
        %v466 = vpack.c.bf16 %v447, %v446
        %v467 = vpack.c.bf16 %v448, %v448
        %v468 = vpack.c.bf16 %v451, %v450
        %v469 = vpack.c.bf16 %v452, %v452
        %v470 = vpack.c.bf16 %v455, %v454
        %v471 = vpack.c.bf16 %v456, %v456
        %v472 = vpack.c.bf16 %v459, %v458
        %v473 = vpack.c.bf16 %v460, %v460
        %s474 = scalar_lea.vmem %s1, 32
        %v475 = vld [vmem:[%s474] sm:$0xff]
        %v476 = vld [vmem:[%s474 + $0x8] sm:$0xff]
        %v477 = vld [vmem:[%s474 + $0x10] sm:$0xff]
        %v478 = vld [vmem:[%s474 + $0x18] sm:$0x33]
        %v479 = vpack.c.bf16 %v449, %v448
        %v480 = vpack.c.bf16 %v453, %v452
        %v481 = vpack.c.bf16 %v457, %v456
        %v482 = vpack.c.bf16 %v461, %v460
        %vm483 = vsmask.f32 7424
        %v485 = vshrl.u32 %v466, 16
        %v487 = vshll.u32 %v466, 16
        %v489 = vrot.slane %v487, 1
        %v490 = vor.u32 %v485, %v489
        %v492 = vshll.u32 %v479, 16
        %v494 = vrot.slane %v492, 1
        %v495 = vsel %vm483, %v490, %v494
        %v496 = vshrl.u32 %v479, 16
        %v498 = vor.u32 %v496, %v494
        %v503 = vunpack.c.l.b16 %v475
        %v504 = vunpack.c.h.b16 %v475
        %v505 = vunpack.c.l.b16 %v476
        %v506 = vunpack.c.h.b16 %v476
        %v507 = vunpack.c.l.b16 %v477
        %v508 = vunpack.c.h.b16 %v477
        %v509 = vunpack.c.l.b16 %v478
        %v510 = vunpack.c.h.b16 %v478
        %v511 = vpack.c.b16 %v505, %v503
        %v512 = vpack.c.b16 %v506, %v504
        %v513 = vpack.c.b16 %v509, %v507
        %v514 = vpack.c.b16 %v510, %v508
        %vm517 = vcmask 228352
        %v519 = vsel %vm517, %v495, 0
        %v522 = vsel %vm517, %v498, 0
        %vm524 = vcmask 1045504
        %v526 = vsel %vm524, %v513, 0
        %v529 = vsel %vm524, %v514, 0
        %531 = vmatprep.subr.bf16.mxu0 0
        %532 = vmatpush1.bf16.msra.mxu0 0
        %533 = vmatprep.subr.bf16.mxu0 0
        %534 = vmatpush1.bf16.msra.mxu0 0
        %535 = vmatprep.subr.bf16.mxu0 0
        %536 = vmatpush1.bf16.msra.mxu0 0
        %537 = vmatprep.subr.bf16.mxu0 0
        %538 = vmatpush1.bf16.msra.mxu0 0
        %539 = vmatprep.subr.bf16.mxu0 0
        %540 = vmatpush1.bf16.msra.mxu0 0
        %541 = vmatprep.subr.bf16.mxu0 0
        %542 = vmatpush1.bf16.msra.mxu0 0
        %543 = vmatprep.subr.bf16.mxu0 %v529
        %544 = vmatpush1.bf16.msra.mxu0 %v526
        %545 = vmatprep.subr.bf16.mxu0 %v512
        %546 = vmatpush1.bf16.msra.mxu0 %v511
        %547 = vmatprep.subr.bf16.mxu0 0
        %548 = vmatpush2.bf16.msra.mxu0 0
        %549 = vmatprep.subr.bf16.mxu0 0
        %550 = vmatpush2.bf16.msra.mxu0 0
        %551 = vmatprep.subr.bf16.mxu0 0
        %552 = vmatpush2.bf16.msra.mxu0 0
        %553 = vmatprep.subr.bf16.mxu0 0
        %554 = vmatpush2.bf16.msra.mxu0 0
        %555 = vmatprep.subr.bf16.mxu0 0
        %556 = vmatpush2.bf16.msra.mxu0 0
        %557 = vmatprep.subr.bf16.mxu0 0
        %558 = vmatpush2.bf16.msra.mxu0 0
        %559 = vmatprep.subr.bf16.mxu0 0
        %560 = vmatpush2.bf16.msra.mxu0 0
        %561 = vmatprep.subr.bf16.mxu0 0
        %562 = vmatpush2.bf16.msra.mxu0 0
        %563 = vmatprep.mubr.bf16.mxu0 0
        %564 = vmatmul.mubr.bf16.gmra.mxu0 %v519
        %v565 = vpop.f32.mrf.mxu0
        %v566 = vadd.f32 0.0, %v565
        %v567 = vpop.f32.mrf.mxu0
        %v568 = vadd.f32 0.0, %v567
        %v569 = vpop.f32.mrf.mxu0
        %v570 = vadd.f32 0.0, %v569
        %v571 = vpop.f32.mrf.mxu0
        %v572 = vadd.f32 0.0, %v571
        %573 = vmatprep.mubr.bf16.mxu0 0
        %574 = vmatmul.mubr.bf16.gmra.mxu0 %v522
        %v575 = vpop.f32.mrf.mxu0
        %v576 = vadd.f32 0.0, %v575
        %v577 = vpop.f32.mrf.mxu0
        %v578 = vadd.f32 0.0, %v577
        %v579 = vpop.f32.mrf.mxu0
        %v580 = vpop.f32.mrf.mxu0
        %581 = vdwg.mxu0
        %v583 = vshrl.u32 %v468, 16
        %v585 = vshll.u32 %v468, 16
        %v587 = vrot.slane %v585, 1
        %v588 = vor.u32 %v583, %v587
        %v590 = vshll.u32 %v480, 16
        %v592 = vrot.slane %v590, 1
        %v593 = vsel %vm483, %v588, %v592
        %v594 = vshrl.u32 %v480, 16
        %v596 = vor.u32 %v594, %v592
        %v598 = vsel %vm517, %v593, 0
        %v601 = vsel %vm517, %v596, 0
        %603 = vmatprep.subr.bf16.mxu0 0
        %604 = vmatpush1.bf16.msra.mxu0 0
        %605 = vmatprep.subr.bf16.mxu0 0
        %606 = vmatpush1.bf16.msra.mxu0 0
        %607 = vmatprep.subr.bf16.mxu0 0
        %608 = vmatpush1.bf16.msra.mxu0 0
        %609 = vmatprep.subr.bf16.mxu0 0
        %610 = vmatpush1.bf16.msra.mxu0 0
        %611 = vmatprep.subr.bf16.mxu0 0
        %612 = vmatpush1.bf16.msra.mxu0 0
        %613 = vmatprep.subr.bf16.mxu0 0
        %614 = vmatpush1.bf16.msra.mxu0 0
        %615 = vmatprep.subr.bf16.mxu0 %v529
        %616 = vmatpush1.bf16.msra.mxu0 %v526
        %617 = vmatprep.subr.bf16.mxu0 %v512
        %618 = vmatpush1.bf16.msra.mxu0 %v511
        %619 = vmatprep.subr.bf16.mxu0 0
        %620 = vmatpush2.bf16.msra.mxu0 0
        %621 = vmatprep.subr.bf16.mxu0 0
        %622 = vmatpush2.bf16.msra.mxu0 0
        %623 = vmatprep.subr.bf16.mxu0 0
        %624 = vmatpush2.bf16.msra.mxu0 0
        %625 = vmatprep.subr.bf16.mxu0 0
        %626 = vmatpush2.bf16.msra.mxu0 0
        %627 = vmatprep.subr.bf16.mxu0 0
        %628 = vmatpush2.bf16.msra.mxu0 0
        %629 = vmatprep.subr.bf16.mxu0 0
        %630 = vmatpush2.bf16.msra.mxu0 0
        %631 = vmatprep.subr.bf16.mxu0 0
        %632 = vmatpush2.bf16.msra.mxu0 0
        %633 = vmatprep.subr.bf16.mxu0 0
        %634 = vmatpush2.bf16.msra.mxu0 0
        %635 = vmatprep.mubr.bf16.mxu0 0
        %636 = vmatmul.mubr.bf16.gmra.mxu0 %v598
        %v637 = vpop.f32.mrf.mxu0
        %v638 = vadd.f32 0.0, %v637
        %v639 = vpop.f32.mrf.mxu0
        %v640 = vadd.f32 0.0, %v639
        %v641 = vpop.f32.mrf.mxu0
        %v642 = vadd.f32 0.0, %v641
        %v643 = vpop.f32.mrf.mxu0
        %v644 = vadd.f32 0.0, %v643
        %645 = vmatprep.mubr.bf16.mxu0 0
        %646 = vmatmul.mubr.bf16.gmra.mxu0 %v601
        %v647 = vpop.f32.mrf.mxu0
        %v648 = vadd.f32 0.0, %v647
        %v649 = vpop.f32.mrf.mxu0
        %v650 = vadd.f32 0.0, %v649
        %v651 = vpop.f32.mrf.mxu0
        %v652 = vpop.f32.mrf.mxu0
        %653 = vdwg.mxu0
        %v655 = vshrl.u32 %v470, 16
        %v657 = vshll.u32 %v470, 16
        %v659 = vrot.slane %v657, 1
        %v660 = vor.u32 %v655, %v659
        %v662 = vshll.u32 %v481, 16
        %v664 = vrot.slane %v662, 1
        %v665 = vsel %vm483, %v660, %v664
        %v666 = vshrl.u32 %v481, 16
        %v668 = vor.u32 %v666, %v664
        %v670 = vsel %vm517, %v665, 0
        %v673 = vsel %vm517, %v668, 0
        %675 = vmatprep.subr.bf16.mxu0 0
        %676 = vmatpush1.bf16.msra.mxu0 0
        %677 = vmatprep.subr.bf16.mxu0 0
        %678 = vmatpush1.bf16.msra.mxu0 0
        %679 = vmatprep.subr.bf16.mxu0 0
        %680 = vmatpush1.bf16.msra.mxu0 0
        %681 = vmatprep.subr.bf16.mxu0 0
        %682 = vmatpush1.bf16.msra.mxu0 0
        %683 = vmatprep.subr.bf16.mxu0 0
        %684 = vmatpush1.bf16.msra.mxu0 0
        %685 = vmatprep.subr.bf16.mxu0 0
        %686 = vmatpush1.bf16.msra.mxu0 0
        %687 = vmatprep.subr.bf16.mxu0 %v529
        %688 = vmatpush1.bf16.msra.mxu0 %v526
        %689 = vmatprep.subr.bf16.mxu0 %v512
        %690 = vmatpush1.bf16.msra.mxu0 %v511
        %691 = vmatprep.subr.bf16.mxu0 0
        %692 = vmatpush2.bf16.msra.mxu0 0
        %693 = vmatprep.subr.bf16.mxu0 0
        %694 = vmatpush2.bf16.msra.mxu0 0
        %695 = vmatprep.subr.bf16.mxu0 0
        %696 = vmatpush2.bf16.msra.mxu0 0
        %697 = vmatprep.subr.bf16.mxu0 0
        %698 = vmatpush2.bf16.msra.mxu0 0
        %699 = vmatprep.subr.bf16.mxu0 0
        %700 = vmatpush2.bf16.msra.mxu0 0
        %701 = vmatprep.subr.bf16.mxu0 0
        %702 = vmatpush2.bf16.msra.mxu0 0
        %703 = vmatprep.subr.bf16.mxu0 0
        %704 = vmatpush2.bf16.msra.mxu0 0
        %705 = vmatprep.subr.bf16.mxu0 0
        %706 = vmatpush2.bf16.msra.mxu0 0
        %707 = vmatprep.mubr.bf16.mxu0 0
        %708 = vmatmul.mubr.bf16.gmra.mxu0 %v670
        %v709 = vpop.f32.mrf.mxu0
        %v710 = vadd.f32 0.0, %v709
        %v711 = vpop.f32.mrf.mxu0
        %v712 = vadd.f32 0.0, %v711
        %v713 = vpop.f32.mrf.mxu0
        %v714 = vadd.f32 0.0, %v713
        %v715 = vpop.f32.mrf.mxu0
        %v716 = vadd.f32 0.0, %v715
        %717 = vmatprep.mubr.bf16.mxu0 0
        %718 = vmatmul.mubr.bf16.gmra.mxu0 %v673
        %v719 = vpop.f32.mrf.mxu0
        %v720 = vadd.f32 0.0, %v719
        %v721 = vpop.f32.mrf.mxu0
        %v722 = vadd.f32 0.0, %v721
        %v723 = vpop.f32.mrf.mxu0
        %v724 = vpop.f32.mrf.mxu0
        %725 = vdwg.mxu0
        %v727 = vshrl.u32 %v472, 16
        %v729 = vshll.u32 %v472, 16
        %v731 = vrot.slane %v729, 1
        %v732 = vor.u32 %v727, %v731
        %v734 = vshll.u32 %v482, 16
        %v736 = vrot.slane %v734, 1
        %v737 = vsel %vm483, %v732, %v736
        %v738 = vshrl.u32 %v482, 16
        %v740 = vor.u32 %v738, %v736
        %v742 = vsel %vm517, %v737, 0
        %v745 = vsel %vm517, %v740, 0
        %747 = vmatprep.subr.bf16.mxu0 0
        %748 = vmatpush1.bf16.msra.mxu0 0
        %749 = vmatprep.subr.bf16.mxu0 0
        %750 = vmatpush1.bf16.msra.mxu0 0
        %751 = vmatprep.subr.bf16.mxu0 0
        %752 = vmatpush1.bf16.msra.mxu0 0
        %753 = vmatprep.subr.bf16.mxu0 0
        %754 = vmatpush1.bf16.msra.mxu0 0
        %755 = vmatprep.subr.bf16.mxu0 0
        %756 = vmatpush1.bf16.msra.mxu0 0
        %757 = vmatprep.subr.bf16.mxu0 0
        %758 = vmatpush1.bf16.msra.mxu0 0
        %759 = vmatprep.subr.bf16.mxu0 %v529
        %760 = vmatpush1.bf16.msra.mxu0 %v526
        %761 = vmatprep.subr.bf16.mxu0 %v512
        %762 = vmatpush1.bf16.msra.mxu0 %v511
        %763 = vmatprep.subr.bf16.mxu0 0
        %764 = vmatpush2.bf16.msra.mxu0 0
        %765 = vmatprep.subr.bf16.mxu0 0
        %766 = vmatpush2.bf16.msra.mxu0 0
        %767 = vmatprep.subr.bf16.mxu0 0
        %768 = vmatpush2.bf16.msra.mxu0 0
        %769 = vmatprep.subr.bf16.mxu0 0
        %770 = vmatpush2.bf16.msra.mxu0 0
        %771 = vmatprep.subr.bf16.mxu0 0
        %772 = vmatpush2.bf16.msra.mxu0 0
        %773 = vmatprep.subr.bf16.mxu0 0
        %774 = vmatpush2.bf16.msra.mxu0 0
        %775 = vmatprep.subr.bf16.mxu0 0
        %776 = vmatpush2.bf16.msra.mxu0 0
        %777 = vmatprep.subr.bf16.mxu0 0
        %778 = vmatpush2.bf16.msra.mxu0 0
        %779 = vmatprep.mubr.bf16.mxu0 0
        %780 = vmatmul.mubr.bf16.gmra.mxu0 %v742
        %v781 = vpop.f32.mrf.mxu0
        %v782 = vadd.f32 0.0, %v781
        %v783 = vpop.f32.mrf.mxu0
        %v784 = vadd.f32 0.0, %v783
        %v785 = vpop.f32.mrf.mxu0
        %v786 = vadd.f32 0.0, %v785
        %v787 = vpop.f32.mrf.mxu0
        %v788 = vadd.f32 0.0, %v787
        %789 = vmatprep.mubr.bf16.mxu0 0
        %790 = vmatmul.mubr.bf16.gmra.mxu0 %v745
        %v791 = vpop.f32.mrf.mxu0
        %v792 = vadd.f32 0.0, %v791
        %v793 = vpop.f32.mrf.mxu0
        %v794 = vadd.f32 0.0, %v793
        %v795 = vpop.f32.mrf.mxu0
        %v796 = vpop.f32.mrf.mxu0
        %797 = vdwg.mxu0
        %v802 = vunpack.c.l.b16 %v462
        %v803 = vunpack.c.h.b16 %v462
        %v804 = vunpack.c.l.b16 %v463
        %v805 = vunpack.c.h.b16 %v463
        %v806 = vunpack.c.l.b16 %v464
        %v807 = vunpack.c.h.b16 %v464
        %v808 = vunpack.c.l.b16 %v465
        %v809 = vunpack.c.h.b16 %v465
        %v810 = vpack.c.b16 %v804, %v802
        %v811 = vpack.c.b16 %v805, %v803
        %v812 = vpack.c.b16 %v808, %v806
        %v813 = vpack.c.b16 %v809, %v807
        %v816 = vsel %vm517, %v466, 0
        %v819 = vsel %vm517, %v467, 0
        %v822 = vsel %vm524, %v812, 0
        %v825 = vsel %vm524, %v813, 0
        %827 = vmatprep.subr.bf16.mxu0 0
        %828 = vmatpush1.bf16.msra.mxu0 0
        %829 = vmatprep.subr.bf16.mxu0 0
        %830 = vmatpush1.bf16.msra.mxu0 0
        %831 = vmatprep.subr.bf16.mxu0 0
        %832 = vmatpush1.bf16.msra.mxu0 0
        %833 = vmatprep.subr.bf16.mxu0 0
        %834 = vmatpush1.bf16.msra.mxu0 0
        %835 = vmatprep.subr.bf16.mxu0 0
        %836 = vmatpush1.bf16.msra.mxu0 0
        %837 = vmatprep.subr.bf16.mxu0 0
        %838 = vmatpush1.bf16.msra.mxu0 0
        %839 = vmatprep.subr.bf16.mxu0 %v825
        %840 = vmatpush1.bf16.msra.mxu0 %v822
        %841 = vmatprep.subr.bf16.mxu0 %v811
        %842 = vmatpush1.bf16.msra.mxu0 %v810
        %843 = vmatprep.subr.bf16.mxu0 0
        %844 = vmatpush2.bf16.msra.mxu0 0
        %845 = vmatprep.subr.bf16.mxu0 0
        %846 = vmatpush2.bf16.msra.mxu0 0
        %847 = vmatprep.subr.bf16.mxu0 0
        %848 = vmatpush2.bf16.msra.mxu0 0
        %849 = vmatprep.subr.bf16.mxu0 0
        %850 = vmatpush2.bf16.msra.mxu0 0
        %851 = vmatprep.subr.bf16.mxu0 0
        %852 = vmatpush2.bf16.msra.mxu0 0
        %853 = vmatprep.subr.bf16.mxu0 0
        %854 = vmatpush2.bf16.msra.mxu0 0
        %855 = vmatprep.subr.bf16.mxu0 0
        %856 = vmatpush2.bf16.msra.mxu0 0
        %857 = vmatprep.subr.bf16.mxu0 0
        %858 = vmatpush2.bf16.msra.mxu0 0
        %859 = vmatprep.mubr.bf16.mxu0 0
        %860 = vmatmul.mubr.bf16.gmra.mxu0 %v816
        %v861 = vpop.f32.mrf.mxu0
        %v862 = vadd.f32 %v566, %v861
        %v863 = vpop.f32.mrf.mxu0
        %v864 = vadd.f32 %v568, %v863
        %v865 = vpop.f32.mrf.mxu0
        %v866 = vadd.f32 %v570, %v865
        %v867 = vpop.f32.mrf.mxu0
        %v868 = vadd.f32 %v572, %v867
        %869 = vmatprep.mubr.bf16.mxu0 0
        %870 = vmatmul.mubr.bf16.gmra.mxu0 %v819
        %v871 = vpop.f32.mrf.mxu0
        %v872 = vadd.f32 %v576, %v871
        %v873 = vpop.f32.mrf.mxu0
        %v874 = vadd.f32 %v578, %v873
        %v875 = vpop.f32.mrf.mxu0
        %v876 = vpop.f32.mrf.mxu0
        %877 = vdwg.mxu0
        %v878 = vsel %vm517, %v468, 0
        %v881 = vsel %vm517, %v469, 0
        %883 = vmatprep.subr.bf16.mxu0 0
        %884 = vmatpush1.bf16.msra.mxu0 0
        %885 = vmatprep.subr.bf16.mxu0 0
        %886 = vmatpush1.bf16.msra.mxu0 0
        %887 = vmatprep.subr.bf16.mxu0 0
        %888 = vmatpush1.bf16.msra.mxu0 0
        %889 = vmatprep.subr.bf16.mxu0 0
        %890 = vmatpush1.bf16.msra.mxu0 0
        %891 = vmatprep.subr.bf16.mxu0 0
        %892 = vmatpush1.bf16.msra.mxu0 0
        %893 = vmatprep.subr.bf16.mxu0 0
        %894 = vmatpush1.bf16.msra.mxu0 0
        %895 = vmatprep.subr.bf16.mxu0 %v825
        %896 = vmatpush1.bf16.msra.mxu0 %v822
        %897 = vmatprep.subr.bf16.mxu0 %v811
        %898 = vmatpush1.bf16.msra.mxu0 %v810
        %899 = vmatprep.subr.bf16.mxu0 0
        %900 = vmatpush2.bf16.msra.mxu0 0
        %901 = vmatprep.subr.bf16.mxu0 0
        %902 = vmatpush2.bf16.msra.mxu0 0
        %903 = vmatprep.subr.bf16.mxu0 0
        %904 = vmatpush2.bf16.msra.mxu0 0
        %905 = vmatprep.subr.bf16.mxu0 0
        %906 = vmatpush2.bf16.msra.mxu0 0
        %907 = vmatprep.subr.bf16.mxu0 0
        %908 = vmatpush2.bf16.msra.mxu0 0
        %909 = vmatprep.subr.bf16.mxu0 0
        %910 = vmatpush2.bf16.msra.mxu0 0
        %911 = vmatprep.subr.bf16.mxu0 0
        %912 = vmatpush2.bf16.msra.mxu0 0
        %913 = vmatprep.subr.bf16.mxu0 0
        %914 = vmatpush2.bf16.msra.mxu0 0
        %915 = vmatprep.mubr.bf16.mxu0 0
        %916 = vmatmul.mubr.bf16.gmra.mxu0 %v878
        %v917 = vpop.f32.mrf.mxu0
        %v918 = vadd.f32 %v638, %v917
        %v919 = vpop.f32.mrf.mxu0
        %v920 = vadd.f32 %v640, %v919
        %v921 = vpop.f32.mrf.mxu0
        %v922 = vadd.f32 %v642, %v921
        %v923 = vpop.f32.mrf.mxu0
        %v924 = vadd.f32 %v644, %v923
        %925 = vmatprep.mubr.bf16.mxu0 0
        %926 = vmatmul.mubr.bf16.gmra.mxu0 %v881
        %v927 = vpop.f32.mrf.mxu0
        %v928 = vadd.f32 %v648, %v927
        %v929 = vpop.f32.mrf.mxu0
        %v930 = vadd.f32 %v650, %v929
        %v931 = vpop.f32.mrf.mxu0
        %v932 = vpop.f32.mrf.mxu0
        %933 = vdwg.mxu0
        %v934 = vsel %vm517, %v470, 0
        %v937 = vsel %vm517, %v471, 0
        %939 = vmatprep.subr.bf16.mxu0 0
        %940 = vmatpush1.bf16.msra.mxu0 0
        %941 = vmatprep.subr.bf16.mxu0 0
        %942 = vmatpush1.bf16.msra.mxu0 0
        %943 = vmatprep.subr.bf16.mxu0 0
        %944 = vmatpush1.bf16.msra.mxu0 0
        %945 = vmatprep.subr.bf16.mxu0 0
        %946 = vmatpush1.bf16.msra.mxu0 0
        %947 = vmatprep.subr.bf16.mxu0 0
        %948 = vmatpush1.bf16.msra.mxu0 0
        %949 = vmatprep.subr.bf16.mxu0 0
        %950 = vmatpush1.bf16.msra.mxu0 0
        %951 = vmatprep.subr.bf16.mxu0 %v825
        %952 = vmatpush1.bf16.msra.mxu0 %v822
        %953 = vmatprep.subr.bf16.mxu0 %v811
        %954 = vmatpush1.bf16.msra.mxu0 %v810
        %955 = vmatprep.subr.bf16.mxu0 0
        %956 = vmatpush2.bf16.msra.mxu0 0
        %957 = vmatprep.subr.bf16.mxu0 0
        %958 = vmatpush2.bf16.msra.mxu0 0
        %959 = vmatprep.subr.bf16.mxu0 0
        %960 = vmatpush2.bf16.msra.mxu0 0
        %961 = vmatprep.subr.bf16.mxu0 0
        %962 = vmatpush2.bf16.msra.mxu0 0
        %963 = vmatprep.subr.bf16.mxu0 0
        %964 = vmatpush2.bf16.msra.mxu0 0
        %965 = vmatprep.subr.bf16.mxu0 0
        %966 = vmatpush2.bf16.msra.mxu0 0
        %967 = vmatprep.subr.bf16.mxu0 0
        %968 = vmatpush2.bf16.msra.mxu0 0
        %969 = vmatprep.subr.bf16.mxu0 0
        %970 = vmatpush2.bf16.msra.mxu0 0
        %971 = vmatprep.mubr.bf16.mxu0 0
        %972 = vmatmul.mubr.bf16.gmra.mxu0 %v934
        %v973 = vpop.f32.mrf.mxu0
        %v974 = vadd.f32 %v710, %v973
        %v975 = vpop.f32.mrf.mxu0
        %v976 = vadd.f32 %v712, %v975
        %v977 = vpop.f32.mrf.mxu0
        %v978 = vadd.f32 %v714, %v977
        %v979 = vpop.f32.mrf.mxu0
        %v980 = vadd.f32 %v716, %v979
        %981 = vmatprep.mubr.bf16.mxu0 0
        %982 = vmatmul.mubr.bf16.gmra.mxu0 %v937
        %v983 = vpop.f32.mrf.mxu0
        %v984 = vadd.f32 %v720, %v983
        %v985 = vpop.f32.mrf.mxu0
        %v986 = vadd.f32 %v722, %v985
        %v987 = vpop.f32.mrf.mxu0
        %v988 = vpop.f32.mrf.mxu0
        %989 = vdwg.mxu0
        %v990 = vsel %vm517, %v472, 0
        %v993 = vsel %vm517, %v473, 0
        %995 = vmatprep.subr.bf16.mxu0 0
        %996 = vmatpush1.bf16.msra.mxu0 0
        %997 = vmatprep.subr.bf16.mxu0 0
        %998 = vmatpush1.bf16.msra.mxu0 0
        %999 = vmatprep.subr.bf16.mxu0 0
        %1000 = vmatpush1.bf16.msra.mxu0 0
        %1001 = vmatprep.subr.bf16.mxu0 0
        %1002 = vmatpush1.bf16.msra.mxu0 0
        %1003 = vmatprep.subr.bf16.mxu0 0
        %1004 = vmatpush1.bf16.msra.mxu0 0
        %1005 = vmatprep.subr.bf16.mxu0 0
        %1006 = vmatpush1.bf16.msra.mxu0 0
        %1007 = vmatprep.subr.bf16.mxu0 %v825
        %1008 = vmatpush1.bf16.msra.mxu0 %v822
        %1009 = vmatprep.subr.bf16.mxu0 %v811
        %1010 = vmatpush1.bf16.msra.mxu0 %v810
        %1011 = vmatprep.subr.bf16.mxu0 0
        %1012 = vmatpush2.bf16.msra.mxu0 0
        %1013 = vmatprep.subr.bf16.mxu0 0
        %1014 = vmatpush2.bf16.msra.mxu0 0
        %1015 = vmatprep.subr.bf16.mxu0 0
        %1016 = vmatpush2.bf16.msra.mxu0 0
        %1017 = vmatprep.subr.bf16.mxu0 0
        %1018 = vmatpush2.bf16.msra.mxu0 0
        %1019 = vmatprep.subr.bf16.mxu0 0
        %1020 = vmatpush2.bf16.msra.mxu0 0
        %1021 = vmatprep.subr.bf16.mxu0 0
        %1022 = vmatpush2.bf16.msra.mxu0 0
        %1023 = vmatprep.subr.bf16.mxu0 0
        %1024 = vmatpush2.bf16.msra.mxu0 0
        %1025 = vmatprep.subr.bf16.mxu0 0
        %1026 = vmatpush2.bf16.msra.mxu0 0
        %1027 = vmatprep.mubr.bf16.mxu0 0
        %1028 = vmatmul.mubr.bf16.gmra.mxu0 %v990
        %v1029 = vpop.f32.mrf.mxu0
        %v1030 = vadd.f32 %v782, %v1029
        %v1031 = vpop.f32.mrf.mxu0
        %v1032 = vadd.f32 %v784, %v1031
        %v1033 = vpop.f32.mrf.mxu0
        %v1034 = vadd.f32 %v786, %v1033
        %v1035 = vpop.f32.mrf.mxu0
        %v1036 = vadd.f32 %v788, %v1035
        %1037 = vmatprep.mubr.bf16.mxu0 0
        %1038 = vmatmul.mubr.bf16.gmra.mxu0 %v993
        %v1039 = vpop.f32.mrf.mxu0
        %v1040 = vadd.f32 %v792, %v1039
        %v1041 = vpop.f32.mrf.mxu0
        %v1042 = vadd.f32 %v794, %v1041
        %v1043 = vpop.f32.mrf.mxu0
        %v1044 = vpop.f32.mrf.mxu0
        %1045 = vdwg.mxu0
        %s1046 = scalar_lea.vmem %s1, 64
        %v1047 = vld [vmem:[%s1046] sm:$0xff]
        %v1048 = vld [vmem:[%s1046 + $0x8] sm:$0xff]
        %v1049 = vld [vmem:[%s1046 + $0x10] sm:$0xff]
        %v1050 = vld [vmem:[%s1046 + $0x18] sm:$0x33]
        %vm1053 = vcmask 1046528
        %v1054 = vrot.slane %v466, 1
        %v1055 = vrot.slane %v479, 1
        %v1056 = vsel %vm1053, %v1054, %v1055
        %v1061 = vunpack.c.l.b16 %v1047
        %v1062 = vunpack.c.h.b16 %v1047
        %v1063 = vunpack.c.l.b16 %v1048
        %v1064 = vunpack.c.h.b16 %v1048
        %v1065 = vunpack.c.l.b16 %v1049
        %v1066 = vunpack.c.h.b16 %v1049
        %v1067 = vunpack.c.l.b16 %v1050
        %v1068 = vunpack.c.h.b16 %v1050
        %v1069 = vpack.c.b16 %v1063, %v1061
        %v1070 = vpack.c.b16 %v1064, %v1062
        %v1071 = vpack.c.b16 %v1067, %v1065
        %v1072 = vpack.c.b16 %v1068, %v1066
        %v1076 = vsel %vm517, %v1056, 0
        %v1079 = vsel %vm517, %v1055, 0
        %v1082 = vsel %vm524, %v1071, 0
        %v1085 = vsel %vm524, %v1072, 0
        %1087 = vmatprep.subr.bf16.mxu0 0
        %1088 = vmatpush1.bf16.msra.mxu0 0
        %1089 = vmatprep.subr.bf16.mxu0 0
        %1090 = vmatpush1.bf16.msra.mxu0 0
        %1091 = vmatprep.subr.bf16.mxu0 0
        %1092 = vmatpush1.bf16.msra.mxu0 0
        %1093 = vmatprep.subr.bf16.mxu0 0
        %1094 = vmatpush1.bf16.msra.mxu0 0
        %1095 = vmatprep.subr.bf16.mxu0 0
        %1096 = vmatpush1.bf16.msra.mxu0 0
        %1097 = vmatprep.subr.bf16.mxu0 0
        %1098 = vmatpush1.bf16.msra.mxu0 0
        %1099 = vmatprep.subr.bf16.mxu0 %v1085
        %1100 = vmatpush1.bf16.msra.mxu0 %v1082
        %1101 = vmatprep.subr.bf16.mxu0 %v1070
        %1102 = vmatpush1.bf16.msra.mxu0 %v1069
        %1103 = vmatprep.subr.bf16.mxu0 0
        %1104 = vmatpush2.bf16.msra.mxu0 0
        %1105 = vmatprep.subr.bf16.mxu0 0
        %1106 = vmatpush2.bf16.msra.mxu0 0
        %1107 = vmatprep.subr.bf16.mxu0 0
        %1108 = vmatpush2.bf16.msra.mxu0 0
        %1109 = vmatprep.subr.bf16.mxu0 0
        %1110 = vmatpush2.bf16.msra.mxu0 0
        %1111 = vmatprep.subr.bf16.mxu0 0
        %1112 = vmatpush2.bf16.msra.mxu0 0
        %1113 = vmatprep.subr.bf16.mxu0 0
        %1114 = vmatpush2.bf16.msra.mxu0 0
        %1115 = vmatprep.subr.bf16.mxu0 0
        %1116 = vmatpush2.bf16.msra.mxu0 0
        %1117 = vmatprep.subr.bf16.mxu0 0
        %1118 = vmatpush2.bf16.msra.mxu0 0
        %1119 = vmatprep.mubr.bf16.mxu0 0
        %1120 = vmatmul.mubr.bf16.gmra.mxu0 %v1076
        %v1121 = vpop.f32.mrf.mxu0
        %v1122 = vadd.f32 0.0, %v1121
        %v1123 = vpop.f32.mrf.mxu0
        %v1124 = vadd.f32 0.0, %v1123
        %v1125 = vpop.f32.mrf.mxu0
        %v1126 = vadd.f32 0.0, %v1125
        %v1127 = vpop.f32.mrf.mxu0
        %v1128 = vadd.f32 0.0, %v1127
        %1129 = vmatprep.mubr.bf16.mxu0 0
        %1130 = vmatmul.mubr.bf16.gmra.mxu0 %v1079
        %v1131 = vpop.f32.mrf.mxu0
        %v1132 = vadd.f32 0.0, %v1131
        %v1133 = vpop.f32.mrf.mxu0
        %v1134 = vadd.f32 0.0, %v1133
        %v1135 = vpop.f32.mrf.mxu0
        %v1136 = vpop.f32.mrf.mxu0
        %1137 = vdwg.mxu0
        %v1140 = vrot.slane %v468, 1
        %v1141 = vrot.slane %v480, 1
        %v1142 = vsel %vm1053, %v1140, %v1141
        %v1144 = vsel %vm517, %v1142, 0
        %v1147 = vsel %vm517, %v1141, 0
        %1149 = vmatprep.subr.bf16.mxu0 0
        %1150 = vmatpush1.bf16.msra.mxu0 0
        %1151 = vmatprep.subr.bf16.mxu0 0
        %1152 = vmatpush1.bf16.msra.mxu0 0
        %1153 = vmatprep.subr.bf16.mxu0 0
        %1154 = vmatpush1.bf16.msra.mxu0 0
        %1155 = vmatprep.subr.bf16.mxu0 0
        %1156 = vmatpush1.bf16.msra.mxu0 0
        %1157 = vmatprep.subr.bf16.mxu0 0
        %1158 = vmatpush1.bf16.msra.mxu0 0
        %1159 = vmatprep.subr.bf16.mxu0 0
        %1160 = vmatpush1.bf16.msra.mxu0 0
        %1161 = vmatprep.subr.bf16.mxu0 %v1085
        %1162 = vmatpush1.bf16.msra.mxu0 %v1082
        %1163 = vmatprep.subr.bf16.mxu0 %v1070
        %1164 = vmatpush1.bf16.msra.mxu0 %v1069
        %1165 = vmatprep.subr.bf16.mxu0 0
        %1166 = vmatpush2.bf16.msra.mxu0 0
        %1167 = vmatprep.subr.bf16.mxu0 0
        %1168 = vmatpush2.bf16.msra.mxu0 0
        %1169 = vmatprep.subr.bf16.mxu0 0
        %1170 = vmatpush2.bf16.msra.mxu0 0
        %1171 = vmatprep.subr.bf16.mxu0 0
        %1172 = vmatpush2.bf16.msra.mxu0 0
        %1173 = vmatprep.subr.bf16.mxu0 0
        %1174 = vmatpush2.bf16.msra.mxu0 0
        %1175 = vmatprep.subr.bf16.mxu0 0
        %1176 = vmatpush2.bf16.msra.mxu0 0
        %1177 = vmatprep.subr.bf16.mxu0 0
        %1178 = vmatpush2.bf16.msra.mxu0 0
        %1179 = vmatprep.subr.bf16.mxu0 0
        %1180 = vmatpush2.bf16.msra.mxu0 0
        %1181 = vmatprep.mubr.bf16.mxu0 0
        %1182 = vmatmul.mubr.bf16.gmra.mxu0 %v1144
        %v1183 = vpop.f32.mrf.mxu0
        %v1184 = vadd.f32 0.0, %v1183
        %v1185 = vpop.f32.mrf.mxu0
        %v1186 = vadd.f32 0.0, %v1185
        %v1187 = vpop.f32.mrf.mxu0
        %v1188 = vadd.f32 0.0, %v1187
        %v1189 = vpop.f32.mrf.mxu0
        %v1190 = vadd.f32 0.0, %v1189
        %1191 = vmatprep.mubr.bf16.mxu0 0
        %1192 = vmatmul.mubr.bf16.gmra.mxu0 %v1147
        %v1193 = vpop.f32.mrf.mxu0
        %v1194 = vadd.f32 0.0, %v1193
        %v1195 = vpop.f32.mrf.mxu0
        %v1196 = vadd.f32 0.0, %v1195
        %v1197 = vpop.f32.mrf.mxu0
        %v1198 = vpop.f32.mrf.mxu0
        %1199 = vdwg.mxu0
        %v1202 = vrot.slane %v470, 1
        %v1203 = vrot.slane %v481, 1
        %v1204 = vsel %vm1053, %v1202, %v1203
        %v1206 = vsel %vm517, %v1204, 0
        %v1209 = vsel %vm517, %v1203, 0
        %1211 = vmatprep.subr.bf16.mxu0 0
        %1212 = vmatpush1.bf16.msra.mxu0 0
        %1213 = vmatprep.subr.bf16.mxu0 0
        %1214 = vmatpush1.bf16.msra.mxu0 0
        %1215 = vmatprep.subr.bf16.mxu0 0
        %1216 = vmatpush1.bf16.msra.mxu0 0
        %1217 = vmatprep.subr.bf16.mxu0 0
        %1218 = vmatpush1.bf16.msra.mxu0 0
        %1219 = vmatprep.subr.bf16.mxu0 0
        %1220 = vmatpush1.bf16.msra.mxu0 0
        %1221 = vmatprep.subr.bf16.mxu0 0
        %1222 = vmatpush1.bf16.msra.mxu0 0
        %1223 = vmatprep.subr.bf16.mxu0 %v1085
        %1224 = vmatpush1.bf16.msra.mxu0 %v1082
        %1225 = vmatprep.subr.bf16.mxu0 %v1070
        %1226 = vmatpush1.bf16.msra.mxu0 %v1069
        %1227 = vmatprep.subr.bf16.mxu0 0
        %1228 = vmatpush2.bf16.msra.mxu0 0
        %1229 = vmatprep.subr.bf16.mxu0 0
        %1230 = vmatpush2.bf16.msra.mxu0 0
        %1231 = vmatprep.subr.bf16.mxu0 0
        %1232 = vmatpush2.bf16.msra.mxu0 0
        %1233 = vmatprep.subr.bf16.mxu0 0
        %1234 = vmatpush2.bf16.msra.mxu0 0
        %1235 = vmatprep.subr.bf16.mxu0 0
        %1236 = vmatpush2.bf16.msra.mxu0 0
        %1237 = vmatprep.subr.bf16.mxu0 0
        %1238 = vmatpush2.bf16.msra.mxu0 0
        %1239 = vmatprep.subr.bf16.mxu0 0
        %1240 = vmatpush2.bf16.msra.mxu0 0
        %1241 = vmatprep.subr.bf16.mxu0 0
        %1242 = vmatpush2.bf16.msra.mxu0 0
        %1243 = vmatprep.mubr.bf16.mxu0 0
        %1244 = vmatmul.mubr.bf16.gmra.mxu0 %v1206
        %v1245 = vpop.f32.mrf.mxu0
        %v1246 = vadd.f32 0.0, %v1245
        %v1247 = vpop.f32.mrf.mxu0
        %v1248 = vadd.f32 0.0, %v1247
        %v1249 = vpop.f32.mrf.mxu0
        %v1250 = vadd.f32 0.0, %v1249
        %v1251 = vpop.f32.mrf.mxu0
        %v1252 = vadd.f32 0.0, %v1251
        %1253 = vmatprep.mubr.bf16.mxu0 0
        %1254 = vmatmul.mubr.bf16.gmra.mxu0 %v1209
        %v1255 = vpop.f32.mrf.mxu0
        %v1256 = vadd.f32 0.0, %v1255
        %v1257 = vpop.f32.mrf.mxu0
        %v1258 = vadd.f32 0.0, %v1257
        %v1259 = vpop.f32.mrf.mxu0
        %v1260 = vpop.f32.mrf.mxu0
        %1261 = vdwg.mxu0
        %v1264 = vrot.slane %v472, 1
        %v1265 = vrot.slane %v482, 1
        %v1266 = vsel %vm1053, %v1264, %v1265
        %v1268 = vsel %vm517, %v1266, 0
        %v1271 = vsel %vm517, %v1265, 0
        %1273 = vmatprep.subr.bf16.mxu0 0
        %1274 = vmatpush1.bf16.msra.mxu0 0
        %1275 = vmatprep.subr.bf16.mxu0 0
        %1276 = vmatpush1.bf16.msra.mxu0 0
        %1277 = vmatprep.subr.bf16.mxu0 0
        %1278 = vmatpush1.bf16.msra.mxu0 0
        %1279 = vmatprep.subr.bf16.mxu0 0
        %1280 = vmatpush1.bf16.msra.mxu0 0
        %1281 = vmatprep.subr.bf16.mxu0 0
        %1282 = vmatpush1.bf16.msra.mxu0 0
        %1283 = vmatprep.subr.bf16.mxu0 0
        %1284 = vmatpush1.bf16.msra.mxu0 0
        %1285 = vmatprep.subr.bf16.mxu0 %v1085
        %1286 = vmatpush1.bf16.msra.mxu0 %v1082
        %1287 = vmatprep.subr.bf16.mxu0 %v1070
        %1288 = vmatpush1.bf16.msra.mxu0 %v1069
        %1289 = vmatprep.subr.bf16.mxu0 0
        %1290 = vmatpush2.bf16.msra.mxu0 0
        %1291 = vmatprep.subr.bf16.mxu0 0
        %1292 = vmatpush2.bf16.msra.mxu0 0
        %1293 = vmatprep.subr.bf16.mxu0 0
        %1294 = vmatpush2.bf16.msra.mxu0 0
        %1295 = vmatprep.subr.bf16.mxu0 0
        %1296 = vmatpush2.bf16.msra.mxu0 0
        %1297 = vmatprep.subr.bf16.mxu0 0
        %1298 = vmatpush2.bf16.msra.mxu0 0
        %1299 = vmatprep.subr.bf16.mxu0 0
        %1300 = vmatpush2.bf16.msra.mxu0 0
        %1301 = vmatprep.subr.bf16.mxu0 0
        %1302 = vmatpush2.bf16.msra.mxu0 0
        %1303 = vmatprep.subr.bf16.mxu0 0
        %1304 = vmatpush2.bf16.msra.mxu0 0
        %1305 = vmatprep.mubr.bf16.mxu0 0
        %1306 = vmatmul.mubr.bf16.gmra.mxu0 %v1268
        %v1307 = vpop.f32.mrf.mxu0
        %v1308 = vadd.f32 0.0, %v1307
        %v1309 = vpop.f32.mrf.mxu0
        %v1310 = vadd.f32 0.0, %v1309
        %v1311 = vpop.f32.mrf.mxu0
        %v1312 = vadd.f32 0.0, %v1311
        %v1313 = vpop.f32.mrf.mxu0
        %v1314 = vadd.f32 0.0, %v1313
        %1315 = vmatprep.mubr.bf16.mxu0 0
        %1316 = vmatmul.mubr.bf16.gmra.mxu0 %v1271
        %v1317 = vpop.f32.mrf.mxu0
        %v1318 = vadd.f32 0.0, %v1317
        %v1319 = vpop.f32.mrf.mxu0
        %v1320 = vadd.f32 0.0, %v1319
        %v1321 = vpop.f32.mrf.mxu0
        %v1322 = vpop.f32.mrf.mxu0
        %1323 = vdwg.mxu0
        %v1324 = vadd.f32 %v862, %v1122
        %v1325 = vadd.f32 %v864, %v1124
        %v1326 = vadd.f32 %v866, %v1126
        %v1327 = vadd.f32 %v868, %v1128
        %v1328 = vadd.f32 %v872, %v1132
        %v1329 = vadd.f32 %v874, %v1134
        %v1330 = vadd.f32 %v918, %v1184
        %v1331 = vadd.f32 %v920, %v1186
        %v1332 = vadd.f32 %v922, %v1188
        %v1333 = vadd.f32 %v924, %v1190
        %v1334 = vadd.f32 %v928, %v1194
        %v1335 = vadd.f32 %v930, %v1196
        %v1336 = vadd.f32 %v974, %v1246
        %v1337 = vadd.f32 %v976, %v1248
        %v1338 = vadd.f32 %v978, %v1250
        %v1339 = vadd.f32 %v980, %v1252
        %v1340 = vadd.f32 %v984, %v1256
        %v1341 = vadd.f32 %v986, %v1258
        %v1342 = vadd.f32 %v1030, %v1308
        %v1343 = vadd.f32 %v1032, %v1310
        %v1344 = vadd.f32 %v1034, %v1312
        %v1345 = vadd.f32 %v1036, %v1314
        %v1346 = vadd.f32 %v1040, %v1318
        %v1347 = vadd.f32 %v1042, %v1320
        %s1348 = scalar_lea.vmem %s1, 96
        %v1349 = vld [vmem:[%s1348] sm:$0xff]
        %v1350 = vld [vmem:[%s1348 + $0x8] sm:$0xff]
        %v1351 = vld [vmem:[%s1348 + $0x10] sm:$0xff]
        %v1352 = vld [vmem:[%s1348 + $0x18] sm:$0x33]
        %vm1353 = vsmask.f32 6400
        %v1354 = vrot.slane %v485, 1
        %v1355 = vrot.slane %v487, 2
        %v1356 = vor.u32 %v1354, %v1355
        %v1357 = vrot.slane %v496, 1
        %v1358 = vrot.slane %v492, 2
        %v1359 = vor.u32 %v1357, %v1358
        %v1360 = vsel %vm1353, %v1356, %v1359
        %v1365 = vunpack.c.l.b16 %v1349
        %v1366 = vunpack.c.h.b16 %v1349
        %v1367 = vunpack.c.l.b16 %v1350
        %v1368 = vunpack.c.h.b16 %v1350
        %v1369 = vunpack.c.l.b16 %v1351
        %v1370 = vunpack.c.h.b16 %v1351
        %v1371 = vunpack.c.l.b16 %v1352
        %v1372 = vunpack.c.h.b16 %v1352
        %v1373 = vpack.c.b16 %v1367, %v1365
        %v1374 = vpack.c.b16 %v1368, %v1366
        %v1375 = vpack.c.b16 %v1371, %v1369
        %v1376 = vpack.c.b16 %v1372, %v1370
        %v1380 = vsel %vm517, %v1360, 0
        %v1383 = vsel %vm517, %v1359, 0
        %v1386 = vsel %vm524, %v1375, 0
        %v1389 = vsel %vm524, %v1376, 0
        %1391 = vmatprep.subr.bf16.mxu0 0
        %1392 = vmatpush1.bf16.msra.mxu0 0
        %1393 = vmatprep.subr.bf16.mxu0 0
        %1394 = vmatpush1.bf16.msra.mxu0 0
        %1395 = vmatprep.subr.bf16.mxu0 0
        %1396 = vmatpush1.bf16.msra.mxu0 0
        %1397 = vmatprep.subr.bf16.mxu0 0
        %1398 = vmatpush1.bf16.msra.mxu0 0
        %1399 = vmatprep.subr.bf16.mxu0 0
        %1400 = vmatpush1.bf16.msra.mxu0 0
        %1401 = vmatprep.subr.bf16.mxu0 0
        %1402 = vmatpush1.bf16.msra.mxu0 0
        %1403 = vmatprep.subr.bf16.mxu0 %v1389
        %1404 = vmatpush1.bf16.msra.mxu0 %v1386
        %1405 = vmatprep.subr.bf16.mxu0 %v1374
        %1406 = vmatpush1.bf16.msra.mxu0 %v1373
        %1407 = vmatprep.subr.bf16.mxu0 0
        %1408 = vmatpush2.bf16.msra.mxu0 0
        %1409 = vmatprep.subr.bf16.mxu0 0
        %1410 = vmatpush2.bf16.msra.mxu0 0
        %1411 = vmatprep.subr.bf16.mxu0 0
        %1412 = vmatpush2.bf16.msra.mxu0 0
        %1413 = vmatprep.subr.bf16.mxu0 0
        %1414 = vmatpush2.bf16.msra.mxu0 0
        %1415 = vmatprep.subr.bf16.mxu0 0
        %1416 = vmatpush2.bf16.msra.mxu0 0
        %1417 = vmatprep.subr.bf16.mxu0 0
        %1418 = vmatpush2.bf16.msra.mxu0 0
        %1419 = vmatprep.subr.bf16.mxu0 0
        %1420 = vmatpush2.bf16.msra.mxu0 0
        %1421 = vmatprep.subr.bf16.mxu0 0
        %1422 = vmatpush2.bf16.msra.mxu0 0
        %1423 = vmatprep.mubr.bf16.mxu0 0
        %1424 = vmatmul.mubr.bf16.gmra.mxu0 %v1380
        %v1425 = vpop.f32.mrf.mxu0
        %v1426 = vadd.f32 0.0, %v1425
        %v1427 = vpop.f32.mrf.mxu0
        %v1428 = vadd.f32 0.0, %v1427
        %v1429 = vpop.f32.mrf.mxu0
        %v1430 = vadd.f32 0.0, %v1429
        %v1431 = vpop.f32.mrf.mxu0
        %v1432 = vadd.f32 0.0, %v1431
        %1433 = vmatprep.mubr.bf16.mxu0 0
        %1434 = vmatmul.mubr.bf16.gmra.mxu0 %v1383
        %v1435 = vpop.f32.mrf.mxu0
        %v1436 = vadd.f32 0.0, %v1435
        %v1437 = vpop.f32.mrf.mxu0
        %v1438 = vadd.f32 0.0, %v1437
        %v1439 = vpop.f32.mrf.mxu0
        %v1440 = vpop.f32.mrf.mxu0
        %1441 = vdwg.mxu0
        %v1442 = vrot.slane %v583, 1
        %v1443 = vrot.slane %v585, 2
        %v1444 = vor.u32 %v1442, %v1443
        %v1445 = vrot.slane %v594, 1
        %v1446 = vrot.slane %v590, 2
        %v1447 = vor.u32 %v1445, %v1446
        %v1448 = vsel %vm1353, %v1444, %v1447
        %v1450 = vsel %vm517, %v1448, 0
        %v1453 = vsel %vm517, %v1447, 0
        %1455 = vmatprep.subr.bf16.mxu0 0
        %1456 = vmatpush1.bf16.msra.mxu0 0
        %1457 = vmatprep.subr.bf16.mxu0 0
        %1458 = vmatpush1.bf16.msra.mxu0 0
        %1459 = vmatprep.subr.bf16.mxu0 0
        %1460 = vmatpush1.bf16.msra.mxu0 0
        %1461 = vmatprep.subr.bf16.mxu0 0
        %1462 = vmatpush1.bf16.msra.mxu0 0
        %1463 = vmatprep.subr.bf16.mxu0 0
        %1464 = vmatpush1.bf16.msra.mxu0 0
        %1465 = vmatprep.subr.bf16.mxu0 0
        %1466 = vmatpush1.bf16.msra.mxu0 0
        %1467 = vmatprep.subr.bf16.mxu0 %v1389
        %1468 = vmatpush1.bf16.msra.mxu0 %v1386
        %1469 = vmatprep.subr.bf16.mxu0 %v1374
        %1470 = vmatpush1.bf16.msra.mxu0 %v1373
        %1471 = vmatprep.subr.bf16.mxu0 0
        %1472 = vmatpush2.bf16.msra.mxu0 0
        %1473 = vmatprep.subr.bf16.mxu0 0
        %1474 = vmatpush2.bf16.msra.mxu0 0
        %1475 = vmatprep.subr.bf16.mxu0 0
        %1476 = vmatpush2.bf16.msra.mxu0 0
        %1477 = vmatprep.subr.bf16.mxu0 0
        %1478 = vmatpush2.bf16.msra.mxu0 0
        %1479 = vmatprep.subr.bf16.mxu0 0
        %1480 = vmatpush2.bf16.msra.mxu0 0
        %1481 = vmatprep.subr.bf16.mxu0 0
        %1482 = vmatpush2.bf16.msra.mxu0 0
        %1483 = vmatprep.subr.bf16.mxu0 0
        %1484 = vmatpush2.bf16.msra.mxu0 0
        %1485 = vmatprep.subr.bf16.mxu0 0
        %1486 = vmatpush2.bf16.msra.mxu0 0
        %1487 = vmatprep.mubr.bf16.mxu0 0
        %1488 = vmatmul.mubr.bf16.gmra.mxu0 %v1450
        %v1489 = vpop.f32.mrf.mxu0
        %v1490 = vadd.f32 0.0, %v1489
        %v1491 = vpop.f32.mrf.mxu0
        %v1492 = vadd.f32 0.0, %v1491
        %v1493 = vpop.f32.mrf.mxu0
        %v1494 = vadd.f32 0.0, %v1493
        %v1495 = vpop.f32.mrf.mxu0
        %v1496 = vadd.f32 0.0, %v1495
        %1497 = vmatprep.mubr.bf16.mxu0 0
        %1498 = vmatmul.mubr.bf16.gmra.mxu0 %v1453
        %v1499 = vpop.f32.mrf.mxu0
        %v1500 = vadd.f32 0.0, %v1499
        %v1501 = vpop.f32.mrf.mxu0
        %v1502 = vadd.f32 0.0, %v1501
        %v1503 = vpop.f32.mrf.mxu0
        %v1504 = vpop.f32.mrf.mxu0
        %1505 = vdwg.mxu0
        %v1506 = vrot.slane %v655, 1
        %v1507 = vrot.slane %v657, 2
        %v1508 = vor.u32 %v1506, %v1507
        %v1509 = vrot.slane %v666, 1
        %v1510 = vrot.slane %v662, 2
        %v1511 = vor.u32 %v1509, %v1510
        %v1512 = vsel %vm1353, %v1508, %v1511
        %v1514 = vsel %vm517, %v1512, 0
        %v1517 = vsel %vm517, %v1511, 0
        %1519 = vmatprep.subr.bf16.mxu0 0
        %1520 = vmatpush1.bf16.msra.mxu0 0
        %1521 = vmatprep.subr.bf16.mxu0 0
        %1522 = vmatpush1.bf16.msra.mxu0 0
        %1523 = vmatprep.subr.bf16.mxu0 0
        %1524 = vmatpush1.bf16.msra.mxu0 0
        %1525 = vmatprep.subr.bf16.mxu0 0
        %1526 = vmatpush1.bf16.msra.mxu0 0
        %1527 = vmatprep.subr.bf16.mxu0 0
        %1528 = vmatpush1.bf16.msra.mxu0 0
        %1529 = vmatprep.subr.bf16.mxu0 0
        %1530 = vmatpush1.bf16.msra.mxu0 0
        %1531 = vmatprep.subr.bf16.mxu0 %v1389
        %1532 = vmatpush1.bf16.msra.mxu0 %v1386
        %1533 = vmatprep.subr.bf16.mxu0 %v1374
        %1534 = vmatpush1.bf16.msra.mxu0 %v1373
        %1535 = vmatprep.subr.bf16.mxu0 0
        %1536 = vmatpush2.bf16.msra.mxu0 0
        %1537 = vmatprep.subr.bf16.mxu0 0
        %1538 = vmatpush2.bf16.msra.mxu0 0
        %1539 = vmatprep.subr.bf16.mxu0 0
        %1540 = vmatpush2.bf16.msra.mxu0 0
        %1541 = vmatprep.subr.bf16.mxu0 0
        %1542 = vmatpush2.bf16.msra.mxu0 0
        %1543 = vmatprep.subr.bf16.mxu0 0
        %1544 = vmatpush2.bf16.msra.mxu0 0
        %1545 = vmatprep.subr.bf16.mxu0 0
        %1546 = vmatpush2.bf16.msra.mxu0 0
        %1547 = vmatprep.subr.bf16.mxu0 0
        %1548 = vmatpush2.bf16.msra.mxu0 0
        %1549 = vmatprep.subr.bf16.mxu0 0
        %1550 = vmatpush2.bf16.msra.mxu0 0
        %1551 = vmatprep.mubr.bf16.mxu0 0
        %1552 = vmatmul.mubr.bf16.gmra.mxu0 %v1514
        %v1553 = vpop.f32.mrf.mxu0
        %v1554 = vadd.f32 0.0, %v1553
        %v1555 = vpop.f32.mrf.mxu0
        %v1556 = vadd.f32 0.0, %v1555
        %v1557 = vpop.f32.mrf.mxu0
        %v1558 = vadd.f32 0.0, %v1557
        %v1559 = vpop.f32.mrf.mxu0
        %v1560 = vadd.f32 0.0, %v1559
        %1561 = vmatprep.mubr.bf16.mxu0 0
        %1562 = vmatmul.mubr.bf16.gmra.mxu0 %v1517
        %v1563 = vpop.f32.mrf.mxu0
        %v1564 = vadd.f32 0.0, %v1563
        %v1565 = vpop.f32.mrf.mxu0
        %v1566 = vadd.f32 0.0, %v1565
        %v1567 = vpop.f32.mrf.mxu0
        %v1568 = vpop.f32.mrf.mxu0
        %1569 = vdwg.mxu0
        %v1570 = vrot.slane %v727, 1
        %v1571 = vrot.slane %v729, 2
        %v1572 = vor.u32 %v1570, %v1571
        %v1573 = vrot.slane %v738, 1
        %v1574 = vrot.slane %v734, 2
        %v1575 = vor.u32 %v1573, %v1574
        %v1576 = vsel %vm1353, %v1572, %v1575
        %v1578 = vsel %vm517, %v1576, 0
        %v1581 = vsel %vm517, %v1575, 0
        %1583 = vmatprep.subr.bf16.mxu0 0
        %1584 = vmatpush1.bf16.msra.mxu0 0
        %1585 = vmatprep.subr.bf16.mxu0 0
        %1586 = vmatpush1.bf16.msra.mxu0 0
        %1587 = vmatprep.subr.bf16.mxu0 0
        %1588 = vmatpush1.bf16.msra.mxu0 0
        %1589 = vmatprep.subr.bf16.mxu0 0
        %1590 = vmatpush1.bf16.msra.mxu0 0
        %1591 = vmatprep.subr.bf16.mxu0 0
        %1592 = vmatpush1.bf16.msra.mxu0 0
        %1593 = vmatprep.subr.bf16.mxu0 0
        %1594 = vmatpush1.bf16.msra.mxu0 0
        %1595 = vmatprep.subr.bf16.mxu0 %v1389
        %1596 = vmatpush1.bf16.msra.mxu0 %v1386
        %1597 = vmatprep.subr.bf16.mxu0 %v1374
        %1598 = vmatpush1.bf16.msra.mxu0 %v1373
        %1599 = vmatprep.subr.bf16.mxu0 0
        %1600 = vmatpush2.bf16.msra.mxu0 0
        %1601 = vmatprep.subr.bf16.mxu0 0
        %1602 = vmatpush2.bf16.msra.mxu0 0
        %1603 = vmatprep.subr.bf16.mxu0 0
        %1604 = vmatpush2.bf16.msra.mxu0 0
        %1605 = vmatprep.subr.bf16.mxu0 0
        %1606 = vmatpush2.bf16.msra.mxu0 0
        %1607 = vmatprep.subr.bf16.mxu0 0
        %1608 = vmatpush2.bf16.msra.mxu0 0
        %1609 = vmatprep.subr.bf16.mxu0 0
        %1610 = vmatpush2.bf16.msra.mxu0 0
        %1611 = vmatprep.subr.bf16.mxu0 0
        %1612 = vmatpush2.bf16.msra.mxu0 0
        %1613 = vmatprep.subr.bf16.mxu0 0
        %1614 = vmatpush2.bf16.msra.mxu0 0
        %1615 = vmatprep.mubr.bf16.mxu0 0
        %1616 = vmatmul.mubr.bf16.gmra.mxu0 %v1578
        %v1617 = vpop.f32.mrf.mxu0
        %v1618 = vadd.f32 0.0, %v1617
        %v1619 = vpop.f32.mrf.mxu0
        %v1620 = vadd.f32 0.0, %v1619
        %v1621 = vpop.f32.mrf.mxu0
        %v1622 = vadd.f32 0.0, %v1621
        %v1623 = vpop.f32.mrf.mxu0
        %v1624 = vadd.f32 0.0, %v1623
        %1625 = vmatprep.mubr.bf16.mxu0 0
        %1626 = vmatmul.mubr.bf16.gmra.mxu0 %v1581
        %v1627 = vpop.f32.mrf.mxu0
        %v1628 = vadd.f32 0.0, %v1627
        %v1629 = vpop.f32.mrf.mxu0
        %v1630 = vadd.f32 0.0, %v1629
        %v1631 = vpop.f32.mrf.mxu0
        %v1632 = vpop.f32.mrf.mxu0
        %1633 = vdwg.mxu0
        %v1634 = vadd.f32 %v1324, %v1426
        %v1635 = vadd.f32 %v1325, %v1428
        %v1636 = vadd.f32 %v1326, %v1430
        %v1637 = vadd.f32 %v1327, %v1432
        %v1638 = vadd.f32 %v1328, %v1436
        %v1639 = vadd.f32 %v1329, %v1438
        %v1640 = vadd.f32 %v1330, %v1490
        %v1641 = vadd.f32 %v1331, %v1492
        %v1642 = vadd.f32 %v1332, %v1494
        %v1643 = vadd.f32 %v1333, %v1496
        %v1644 = vadd.f32 %v1334, %v1500
        %v1645 = vadd.f32 %v1335, %v1502
        %v1646 = vadd.f32 %v1336, %v1554
        %v1647 = vadd.f32 %v1337, %v1556
        %v1648 = vadd.f32 %v1338, %v1558
        %v1649 = vadd.f32 %v1339, %v1560
        %v1650 = vadd.f32 %v1340, %v1564
        %v1651 = vadd.f32 %v1341, %v1566
        %v1652 = vadd.f32 %v1342, %v1618
        %v1653 = vadd.f32 %v1343, %v1620
        %v1654 = vadd.f32 %v1344, %v1622
        %v1655 = vadd.f32 %v1345, %v1624
        %v1656 = vadd.f32 %v1346, %v1628
        %v1657 = vadd.f32 %v1347, %v1630
        %s1658 = scalar_lea.vmem %s1, 128
        %v1659 = vld [vmem:[%s1658] sm:$0xff]
        %v1660 = vld [vmem:[%s1658 + $0x8] sm:$0xff]
        %v1661 = vld [vmem:[%s1658 + $0x10] sm:$0xff]
        %v1662 = vld [vmem:[%s1658 + $0x18] sm:$0x33]
        %vm1663 = vcmask 1045504
        %v1664 = vrot.slane %v466, 2
        %v1665 = vrot.slane %v479, 2
        %v1666 = vsel %vm1663, %v1664, %v1665
        %v1671 = vunpack.c.l.b16 %v1659
        %v1672 = vunpack.c.h.b16 %v1659
        %v1673 = vunpack.c.l.b16 %v1660
        %v1674 = vunpack.c.h.b16 %v1660
        %v1675 = vunpack.c.l.b16 %v1661
        %v1676 = vunpack.c.h.b16 %v1661
        %v1677 = vunpack.c.l.b16 %v1662
        %v1678 = vunpack.c.h.b16 %v1662
        %v1679 = vpack.c.b16 %v1673, %v1671
        %v1680 = vpack.c.b16 %v1674, %v1672
        %v1681 = vpack.c.b16 %v1677, %v1675
        %v1682 = vpack.c.b16 %v1678, %v1676
        %v1686 = vsel %vm517, %v1666, 0
        %v1689 = vsel %vm517, %v1665, 0
        %v1692 = vsel %vm524, %v1681, 0
        %v1695 = vsel %vm524, %v1682, 0
        %1697 = vmatprep.subr.bf16.mxu0 0
        %1698 = vmatpush1.bf16.msra.mxu0 0
        %1699 = vmatprep.subr.bf16.mxu0 0
        %1700 = vmatpush1.bf16.msra.mxu0 0
        %1701 = vmatprep.subr.bf16.mxu0 0
        %1702 = vmatpush1.bf16.msra.mxu0 0
        %1703 = vmatprep.subr.bf16.mxu0 0
        %1704 = vmatpush1.bf16.msra.mxu0 0
        %1705 = vmatprep.subr.bf16.mxu0 0
        %1706 = vmatpush1.bf16.msra.mxu0 0
        %1707 = vmatprep.subr.bf16.mxu0 0
        %1708 = vmatpush1.bf16.msra.mxu0 0
        %1709 = vmatprep.subr.bf16.mxu0 %v1695
        %1710 = vmatpush1.bf16.msra.mxu0 %v1692
        %1711 = vmatprep.subr.bf16.mxu0 %v1680
        %1712 = vmatpush1.bf16.msra.mxu0 %v1679
        %1713 = vmatprep.subr.bf16.mxu0 0
        %1714 = vmatpush2.bf16.msra.mxu0 0
        %1715 = vmatprep.subr.bf16.mxu0 0
        %1716 = vmatpush2.bf16.msra.mxu0 0
        %1717 = vmatprep.subr.bf16.mxu0 0
        %1718 = vmatpush2.bf16.msra.mxu0 0
        %1719 = vmatprep.subr.bf16.mxu0 0
        %1720 = vmatpush2.bf16.msra.mxu0 0
        %1721 = vmatprep.subr.bf16.mxu0 0
        %1722 = vmatpush2.bf16.msra.mxu0 0
        %1723 = vmatprep.subr.bf16.mxu0 0
        %1724 = vmatpush2.bf16.msra.mxu0 0
        %1725 = vmatprep.subr.bf16.mxu0 0
        %1726 = vmatpush2.bf16.msra.mxu0 0
        %1727 = vmatprep.subr.bf16.mxu0 0
        %1728 = vmatpush2.bf16.msra.mxu0 0
        %1729 = vmatprep.mubr.bf16.mxu0 0
        %1730 = vmatmul.mubr.bf16.gmra.mxu0 %v1686
        %v1731 = vpop.f32.mrf.mxu0
        %v1732 = vadd.f32 0.0, %v1731
        %v1733 = vpop.f32.mrf.mxu0
        %v1734 = vadd.f32 0.0, %v1733
        %v1735 = vpop.f32.mrf.mxu0
        %v1736 = vadd.f32 0.0, %v1735
        %v1737 = vpop.f32.mrf.mxu0
        %v1738 = vadd.f32 0.0, %v1737
        %1739 = vmatprep.mubr.bf16.mxu0 0
        %1740 = vmatmul.mubr.bf16.gmra.mxu0 %v1689
        %v1741 = vpop.f32.mrf.mxu0
        %v1742 = vadd.f32 0.0, %v1741
        %v1743 = vpop.f32.mrf.mxu0
        %v1744 = vadd.f32 0.0, %v1743
        %v1745 = vpop.f32.mrf.mxu0
        %v1746 = vpop.f32.mrf.mxu0
        %1747 = vdwg.mxu0
        %v1748 = vrot.slane %v468, 2
        %v1749 = vrot.slane %v480, 2
        %v1750 = vsel %vm1663, %v1748, %v1749
        %v1752 = vsel %vm517, %v1750, 0
        %v1755 = vsel %vm517, %v1749, 0
        %1757 = vmatprep.subr.bf16.mxu0 0
        %1758 = vmatpush1.bf16.msra.mxu0 0
        %1759 = vmatprep.subr.bf16.mxu0 0
        %1760 = vmatpush1.bf16.msra.mxu0 0
        %1761 = vmatprep.subr.bf16.mxu0 0
        %1762 = vmatpush1.bf16.msra.mxu0 0
        %1763 = vmatprep.subr.bf16.mxu0 0
        %1764 = vmatpush1.bf16.msra.mxu0 0
        %1765 = vmatprep.subr.bf16.mxu0 0
        %1766 = vmatpush1.bf16.msra.mxu0 0
        %1767 = vmatprep.subr.bf16.mxu0 0
        %1768 = vmatpush1.bf16.msra.mxu0 0
        %1769 = vmatprep.subr.bf16.mxu0 %v1695
        %1770 = vmatpush1.bf16.msra.mxu0 %v1692
        %1771 = vmatprep.subr.bf16.mxu0 %v1680
        %1772 = vmatpush1.bf16.msra.mxu0 %v1679
        %1773 = vmatprep.subr.bf16.mxu0 0
        %1774 = vmatpush2.bf16.msra.mxu0 0
        %1775 = vmatprep.subr.bf16.mxu0 0
        %1776 = vmatpush2.bf16.msra.mxu0 0
        %1777 = vmatprep.subr.bf16.mxu0 0
        %1778 = vmatpush2.bf16.msra.mxu0 0
        %1779 = vmatprep.subr.bf16.mxu0 0
        %1780 = vmatpush2.bf16.msra.mxu0 0
        %1781 = vmatprep.subr.bf16.mxu0 0
        %1782 = vmatpush2.bf16.msra.mxu0 0
        %1783 = vmatprep.subr.bf16.mxu0 0
        %1784 = vmatpush2.bf16.msra.mxu0 0
        %1785 = vmatprep.subr.bf16.mxu0 0
        %1786 = vmatpush2.bf16.msra.mxu0 0
        %1787 = vmatprep.subr.bf16.mxu0 0
        %1788 = vmatpush2.bf16.msra.mxu0 0
        %1789 = vmatprep.mubr.bf16.mxu0 0
        %1790 = vmatmul.mubr.bf16.gmra.mxu0 %v1752
        %v1791 = vpop.f32.mrf.mxu0
        %v1792 = vadd.f32 0.0, %v1791
        %v1793 = vpop.f32.mrf.mxu0
        %v1794 = vadd.f32 0.0, %v1793
        %v1795 = vpop.f32.mrf.mxu0
        %v1796 = vadd.f32 0.0, %v1795
        %v1797 = vpop.f32.mrf.mxu0
        %v1798 = vadd.f32 0.0, %v1797
        %1799 = vmatprep.mubr.bf16.mxu0 0
        %1800 = vmatmul.mubr.bf16.gmra.mxu0 %v1755
        %v1801 = vpop.f32.mrf.mxu0
        %v1802 = vadd.f32 0.0, %v1801
        %v1803 = vpop.f32.mrf.mxu0
        %v1804 = vadd.f32 0.0, %v1803
        %v1805 = vpop.f32.mrf.mxu0
        %v1806 = vpop.f32.mrf.mxu0
        %1807 = vdwg.mxu0
        %v1808 = vrot.slane %v470, 2
        %v1809 = vrot.slane %v481, 2
        %v1810 = vsel %vm1663, %v1808, %v1809
        %v1812 = vsel %vm517, %v1810, 0
        %v1815 = vsel %vm517, %v1809, 0
        %1817 = vmatprep.subr.bf16.mxu0 0
        %1818 = vmatpush1.bf16.msra.mxu0 0
        %1819 = vmatprep.subr.bf16.mxu0 0
        %1820 = vmatpush1.bf16.msra.mxu0 0
        %1821 = vmatprep.subr.bf16.mxu0 0
        %1822 = vmatpush1.bf16.msra.mxu0 0
        %1823 = vmatprep.subr.bf16.mxu0 0
        %1824 = vmatpush1.bf16.msra.mxu0 0
        %1825 = vmatprep.subr.bf16.mxu0 0
        %1826 = vmatpush1.bf16.msra.mxu0 0
        %1827 = vmatprep.subr.bf16.mxu0 0
        %1828 = vmatpush1.bf16.msra.mxu0 0
        %1829 = vmatprep.subr.bf16.mxu0 %v1695
        %1830 = vmatpush1.bf16.msra.mxu0 %v1692
        %1831 = vmatprep.subr.bf16.mxu0 %v1680
        %1832 = vmatpush1.bf16.msra.mxu0 %v1679
        %1833 = vmatprep.subr.bf16.mxu0 0
        %1834 = vmatpush2.bf16.msra.mxu0 0
        %1835 = vmatprep.subr.bf16.mxu0 0
        %1836 = vmatpush2.bf16.msra.mxu0 0
        %1837 = vmatprep.subr.bf16.mxu0 0
        %1838 = vmatpush2.bf16.msra.mxu0 0
        %1839 = vmatprep.subr.bf16.mxu0 0
        %1840 = vmatpush2.bf16.msra.mxu0 0
        %1841 = vmatprep.subr.bf16.mxu0 0
        %1842 = vmatpush2.bf16.msra.mxu0 0
        %1843 = vmatprep.subr.bf16.mxu0 0
        %1844 = vmatpush2.bf16.msra.mxu0 0
        %1845 = vmatprep.subr.bf16.mxu0 0
        %1846 = vmatpush2.bf16.msra.mxu0 0
        %1847 = vmatprep.subr.bf16.mxu0 0
        %1848 = vmatpush2.bf16.msra.mxu0 0
        %1849 = vmatprep.mubr.bf16.mxu0 0
        %1850 = vmatmul.mubr.bf16.gmra.mxu0 %v1812
        %v1851 = vpop.f32.mrf.mxu0
        %v1852 = vadd.f32 0.0, %v1851
        %v1853 = vpop.f32.mrf.mxu0
        %v1854 = vadd.f32 0.0, %v1853
        %v1855 = vpop.f32.mrf.mxu0
        %v1856 = vadd.f32 0.0, %v1855
        %v1857 = vpop.f32.mrf.mxu0
        %v1858 = vadd.f32 0.0, %v1857
        %1859 = vmatprep.mubr.bf16.mxu0 0
        %1860 = vmatmul.mubr.bf16.gmra.mxu0 %v1815
        %v1861 = vpop.f32.mrf.mxu0
        %v1862 = vadd.f32 0.0, %v1861
        %v1863 = vpop.f32.mrf.mxu0
        %v1864 = vadd.f32 0.0, %v1863
        %v1865 = vpop.f32.mrf.mxu0
        %v1866 = vpop.f32.mrf.mxu0
        %1867 = vdwg.mxu0
        %v1868 = vrot.slane %v472, 2
        %v1869 = vrot.slane %v482, 2
        %v1870 = vsel %vm1663, %v1868, %v1869
        %v1872 = vsel %vm517, %v1870, 0
        %v1875 = vsel %vm517, %v1869, 0
        %1877 = vmatprep.subr.bf16.mxu0 0
        %1878 = vmatpush1.bf16.msra.mxu0 0
        %1879 = vmatprep.subr.bf16.mxu0 0
        %1880 = vmatpush1.bf16.msra.mxu0 0
        %1881 = vmatprep.subr.bf16.mxu0 0
        %1882 = vmatpush1.bf16.msra.mxu0 0
        %1883 = vmatprep.subr.bf16.mxu0 0
        %1884 = vmatpush1.bf16.msra.mxu0 0
        %1885 = vmatprep.subr.bf16.mxu0 0
        %1886 = vmatpush1.bf16.msra.mxu0 0
        %1887 = vmatprep.subr.bf16.mxu0 0
        %1888 = vmatpush1.bf16.msra.mxu0 0
        %1889 = vmatprep.subr.bf16.mxu0 %v1695
        %1890 = vmatpush1.bf16.msra.mxu0 %v1692
        %1891 = vmatprep.subr.bf16.mxu0 %v1680
        %1892 = vmatpush1.bf16.msra.mxu0 %v1679
        %1893 = vmatprep.subr.bf16.mxu0 0
        %1894 = vmatpush2.bf16.msra.mxu0 0
        %1895 = vmatprep.subr.bf16.mxu0 0
        %1896 = vmatpush2.bf16.msra.mxu0 0
        %1897 = vmatprep.subr.bf16.mxu0 0
        %1898 = vmatpush2.bf16.msra.mxu0 0
        %1899 = vmatprep.subr.bf16.mxu0 0
        %1900 = vmatpush2.bf16.msra.mxu0 0
        %1901 = vmatprep.subr.bf16.mxu0 0
        %1902 = vmatpush2.bf16.msra.mxu0 0
        %1903 = vmatprep.subr.bf16.mxu0 0
        %1904 = vmatpush2.bf16.msra.mxu0 0
        %1905 = vmatprep.subr.bf16.mxu0 0
        %1906 = vmatpush2.bf16.msra.mxu0 0
        %1907 = vmatprep.subr.bf16.mxu0 0
        %1908 = vmatpush2.bf16.msra.mxu0 0
        %1909 = vmatprep.mubr.bf16.mxu0 0
        %1910 = vmatmul.mubr.bf16.gmra.mxu0 %v1872
        %v1911 = vpop.f32.mrf.mxu0
        %v1912 = vadd.f32 0.0, %v1911
        %v1913 = vpop.f32.mrf.mxu0
        %v1914 = vadd.f32 0.0, %v1913
        %v1915 = vpop.f32.mrf.mxu0
        %v1916 = vadd.f32 0.0, %v1915
        %v1917 = vpop.f32.mrf.mxu0
        %v1918 = vadd.f32 0.0, %v1917
        %1919 = vmatprep.mubr.bf16.mxu0 0
        %1920 = vmatmul.mubr.bf16.gmra.mxu0 %v1875
        %v1921 = vpop.f32.mrf.mxu0
        %v1922 = vadd.f32 0.0, %v1921
        %v1923 = vpop.f32.mrf.mxu0
        %v1924 = vadd.f32 0.0, %v1923
        %v1925 = vpop.f32.mrf.mxu0
        %v1926 = vpop.f32.mrf.mxu0
        %1927 = vdwg.mxu0
        %v1928 = vadd.f32 %v1634, %v1732
        %v1929 = vadd.f32 %v1635, %v1734
        %v1930 = vadd.f32 %v1636, %v1736
        %v1931 = vadd.f32 %v1637, %v1738
        %v1932 = vadd.f32 %v1638, %v1742
        %v1933 = vadd.f32 %v1639, %v1744
        %v1934 = vadd.f32 %v1640, %v1792
        %v1935 = vadd.f32 %v1641, %v1794
        %v1936 = vadd.f32 %v1642, %v1796
        %v1937 = vadd.f32 %v1643, %v1798
        %v1938 = vadd.f32 %v1644, %v1802
        %v1939 = vadd.f32 %v1645, %v1804
        %v1940 = vadd.f32 %v1646, %v1852
        %v1941 = vadd.f32 %v1647, %v1854
        %v1942 = vadd.f32 %v1648, %v1856
        %v1943 = vadd.f32 %v1649, %v1858
        %v1944 = vadd.f32 %v1650, %v1862
        %v1945 = vadd.f32 %v1651, %v1864
        %v1946 = vadd.f32 %v1652, %v1912
        %v1947 = vadd.f32 %v1653, %v1914
        %v1948 = vadd.f32 %v1654, %v1916
        %v1949 = vadd.f32 %v1655, %v1918
        %v1950 = vadd.f32 %v1656, %v1922
        %v1951 = vadd.f32 %v1657, %v1924
        %v1952 = vld [vmem:[%s2] sm:$0xf]
        %v1953 = vld [vmem:[%s2 + $0x4] sm:$0x3]
        %v1954 = vpack.c.bf16 %v1930, %v1928
        %v1955 = vpack.c.bf16 %v1931, %v1929
        %v1956 = vpack.c.bf16 %v1932, %v1932
        %v1957 = vpack.c.bf16 %v1933, %v1933
        %v1958 = vpack.c.bf16 %v1936, %v1934
        %v1959 = vpack.c.bf16 %v1937, %v1935
        %v1960 = vpack.c.bf16 %v1938, %v1938
        %v1961 = vpack.c.bf16 %v1939, %v1939
        %v1962 = vpack.c.bf16 %v1942, %v1940
        %v1963 = vpack.c.bf16 %v1943, %v1941
        %v1964 = vpack.c.bf16 %v1944, %v1944
        %v1965 = vpack.c.bf16 %v1945, %v1945
        %v1966 = vpack.c.bf16 %v1948, %v1946
        %v1967 = vpack.c.bf16 %v1949, %v1947
        %v1968 = vpack.c.bf16 %v1950, %v1950
        %v1969 = vpack.c.bf16 %v1951, %v1951
        %v1972 = vunpack.c.l.b16 %v1952
        %v1973 = vunpack.c.l.b16 %v1953
        %v1974 = vpack.c.b16 %v1973, %v1972
        %vm1975 = vcmask 195584
        %v1977 = vsel %vm1975, %v1974, 0
        %vm1979 = vcmask 1043456
        %v1981 = vsel %vm1979, %v1956, 0
        %v1984 = vsel %vm1979, %v1957, 0
        %1986 = vmatprep.subr.bf16.mxu0 0
        %1987 = vmatpush1.bf16.msra.mxu0 0
        %1988 = vmatprep.subr.bf16.mxu0 0
        %1989 = vmatpush1.bf16.msra.mxu0 0
        %1990 = vmatprep.subr.bf16.mxu0 0
        %1991 = vmatpush1.bf16.msra.mxu0 0
        %1992 = vmatprep.subr.bf16.mxu0 0
        %1993 = vmatpush1.bf16.msra.mxu0 0
        %1994 = vmatprep.subr.bf16.mxu0 0
        %1995 = vmatpush1.bf16.msra.mxu0 0
        %1996 = vmatprep.subr.bf16.mxu0 0
        %1997 = vmatpush1.bf16.msra.mxu0 0
        %1998 = vmatprep.subr.bf16.mxu0 %v1984
        %1999 = vmatpush1.bf16.msra.mxu0 %v1981
        %2000 = vmatprep.subr.bf16.mxu0 %v1955
        %2001 = vmatpush1.bf16.msra.mxu0 %v1954
        %2002 = vmatprep.subr.bf16.mxu0 0
        %2003 = vmatpush2.bf16.msra.mxu0 0
        %2004 = vmatprep.subr.bf16.mxu0 0
        %2005 = vmatpush2.bf16.msra.mxu0 0
        %2006 = vmatprep.subr.bf16.mxu0 0
        %2007 = vmatpush2.bf16.msra.mxu0 0
        %2008 = vmatprep.subr.bf16.mxu0 0
        %2009 = vmatpush2.bf16.msra.mxu0 0
        %2010 = vmatprep.subr.bf16.mxu0 0
        %2011 = vmatpush2.bf16.msra.mxu0 0
        %2012 = vmatprep.subr.bf16.mxu0 0
        %2013 = vmatpush2.bf16.msra.mxu0 0
        %2014 = vmatprep.subr.bf16.mxu0 0
        %2015 = vmatpush2.bf16.msra.mxu0 0
        %2016 = vmatprep.subr.bf16.mxu0 0
        %2017 = vmatpush2.bf16.msra.mxu0 0
        %2018 = vmatprep.mubr.bf16.mxu0 0
        %2019 = vmatmul.mubr.bf16.gmra.mxu0 %v1977
        %v2020 = vpop.f32.mrf.mxu0
        %v2021 = vadd.f32 0.0, %v2020
        %v2022 = vpop.f32.mrf.mxu0
        %v2023 = vadd.f32 0.0, %v2022
        %v2024 = vpop.f32.mrf.mxu0
        %v2025 = vadd.f32 0.0, %v2024
        %v2026 = vpop.f32.mrf.mxu0
        %v2027 = vadd.f32 0.0, %v2026
        %2028 = vdwg.mxu0
        %v2030 = vsel %vm1979, %v1960, 0
        %v2033 = vsel %vm1979, %v1961, 0
        %2035 = vmatprep.subr.bf16.mxu0 0
        %2036 = vmatpush1.bf16.msra.mxu0 0
        %2037 = vmatprep.subr.bf16.mxu0 0
        %2038 = vmatpush1.bf16.msra.mxu0 0
        %2039 = vmatprep.subr.bf16.mxu0 0
        %2040 = vmatpush1.bf16.msra.mxu0 0
        %2041 = vmatprep.subr.bf16.mxu0 0
        %2042 = vmatpush1.bf16.msra.mxu0 0
        %2043 = vmatprep.subr.bf16.mxu0 0
        %2044 = vmatpush1.bf16.msra.mxu0 0
        %2045 = vmatprep.subr.bf16.mxu0 0
        %2046 = vmatpush1.bf16.msra.mxu0 0
        %2047 = vmatprep.subr.bf16.mxu0 %v2033
        %2048 = vmatpush1.bf16.msra.mxu0 %v2030
        %2049 = vmatprep.subr.bf16.mxu0 %v1959
        %2050 = vmatpush1.bf16.msra.mxu0 %v1958
        %2051 = vmatprep.subr.bf16.mxu0 0
        %2052 = vmatpush2.bf16.msra.mxu0 0
        %2053 = vmatprep.subr.bf16.mxu0 0
        %2054 = vmatpush2.bf16.msra.mxu0 0
        %2055 = vmatprep.subr.bf16.mxu0 0
        %2056 = vmatpush2.bf16.msra.mxu0 0
        %2057 = vmatprep.subr.bf16.mxu0 0
        %2058 = vmatpush2.bf16.msra.mxu0 0
        %2059 = vmatprep.subr.bf16.mxu0 0
        %2060 = vmatpush2.bf16.msra.mxu0 0
        %2061 = vmatprep.subr.bf16.mxu0 0
        %2062 = vmatpush2.bf16.msra.mxu0 0
        %2063 = vmatprep.subr.bf16.mxu0 0
        %2064 = vmatpush2.bf16.msra.mxu0 0
        %2065 = vmatprep.subr.bf16.mxu0 0
        %2066 = vmatpush2.bf16.msra.mxu0 0
        %2067 = vmatprep.mubr.bf16.mxu0 0
        %2068 = vmatmul.mubr.bf16.gmra.mxu0 %v1977
        %v2069 = vpop.f32.mrf.mxu0
        %v2070 = vadd.f32 0.0, %v2069
        %v2071 = vpop.f32.mrf.mxu0
        %v2072 = vadd.f32 0.0, %v2071
        %v2073 = vpop.f32.mrf.mxu0
        %v2074 = vadd.f32 0.0, %v2073
        %v2075 = vpop.f32.mrf.mxu0
        %v2076 = vadd.f32 0.0, %v2075
        %2077 = vdwg.mxu0
        %v2079 = vsel %vm1979, %v1964, 0
        %v2082 = vsel %vm1979, %v1965, 0
        %2084 = vmatprep.subr.bf16.mxu0 0
        %2085 = vmatpush1.bf16.msra.mxu0 0
        %2086 = vmatprep.subr.bf16.mxu0 0
        %2087 = vmatpush1.bf16.msra.mxu0 0
        %2088 = vmatprep.subr.bf16.mxu0 0
        %2089 = vmatpush1.bf16.msra.mxu0 0
        %2090 = vmatprep.subr.bf16.mxu0 0
        %2091 = vmatpush1.bf16.msra.mxu0 0
        %2092 = vmatprep.subr.bf16.mxu0 0
        %2093 = vmatpush1.bf16.msra.mxu0 0
        %2094 = vmatprep.subr.bf16.mxu0 0
        %2095 = vmatpush1.bf16.msra.mxu0 0
        %2096 = vmatprep.subr.bf16.mxu0 %v2082
        %2097 = vmatpush1.bf16.msra.mxu0 %v2079
        %2098 = vmatprep.subr.bf16.mxu0 %v1963
        %2099 = vmatpush1.bf16.msra.mxu0 %v1962
        %2100 = vmatprep.subr.bf16.mxu0 0
        %2101 = vmatpush2.bf16.msra.mxu0 0
        %2102 = vmatprep.subr.bf16.mxu0 0
        %2103 = vmatpush2.bf16.msra.mxu0 0
        %2104 = vmatprep.subr.bf16.mxu0 0
        %2105 = vmatpush2.bf16.msra.mxu0 0
        %2106 = vmatprep.subr.bf16.mxu0 0
        %2107 = vmatpush2.bf16.msra.mxu0 0
        %2108 = vmatprep.subr.bf16.mxu0 0
        %2109 = vmatpush2.bf16.msra.mxu0 0
        %2110 = vmatprep.subr.bf16.mxu0 0
        %2111 = vmatpush2.bf16.msra.mxu0 0
        %2112 = vmatprep.subr.bf16.mxu0 0
        %2113 = vmatpush2.bf16.msra.mxu0 0
        %2114 = vmatprep.subr.bf16.mxu0 0
        %2115 = vmatpush2.bf16.msra.mxu0 0
        %2116 = vmatprep.mubr.bf16.mxu0 0
        %2117 = vmatmul.mubr.bf16.gmra.mxu0 %v1977
        %v2118 = vpop.f32.mrf.mxu0
        %v2119 = vadd.f32 0.0, %v2118
        %v2120 = vpop.f32.mrf.mxu0
        %v2121 = vadd.f32 0.0, %v2120
        %v2122 = vpop.f32.mrf.mxu0
        %v2123 = vadd.f32 0.0, %v2122
        %v2124 = vpop.f32.mrf.mxu0
        %v2125 = vadd.f32 0.0, %v2124
        %2126 = vdwg.mxu0
        %v2128 = vsel %vm1979, %v1968, 0
        %v2131 = vsel %vm1979, %v1969, 0
        %2133 = vmatprep.subr.bf16.mxu0 0
        %2134 = vmatpush1.bf16.msra.mxu0 0
        %2135 = vmatprep.subr.bf16.mxu0 0
        %2136 = vmatpush1.bf16.msra.mxu0 0
        %2137 = vmatprep.subr.bf16.mxu0 0
        %2138 = vmatpush1.bf16.msra.mxu0 0
        %2139 = vmatprep.subr.bf16.mxu0 0
        %2140 = vmatpush1.bf16.msra.mxu0 0
        %2141 = vmatprep.subr.bf16.mxu0 0
        %2142 = vmatpush1.bf16.msra.mxu0 0
        %2143 = vmatprep.subr.bf16.mxu0 0
        %2144 = vmatpush1.bf16.msra.mxu0 0
        %2145 = vmatprep.subr.bf16.mxu0 %v2131
        %2146 = vmatpush1.bf16.msra.mxu0 %v2128
        %2147 = vmatprep.subr.bf16.mxu0 %v1967
        %2148 = vmatpush1.bf16.msra.mxu0 %v1966
        %2149 = vmatprep.subr.bf16.mxu0 0
        %2150 = vmatpush2.bf16.msra.mxu0 0
        %2151 = vmatprep.subr.bf16.mxu0 0
        %2152 = vmatpush2.bf16.msra.mxu0 0
        %2153 = vmatprep.subr.bf16.mxu0 0
        %2154 = vmatpush2.bf16.msra.mxu0 0
        %2155 = vmatprep.subr.bf16.mxu0 0
        %2156 = vmatpush2.bf16.msra.mxu0 0
        %2157 = vmatprep.subr.bf16.mxu0 0
        %2158 = vmatpush2.bf16.msra.mxu0 0
        %2159 = vmatprep.subr.bf16.mxu0 0
        %2160 = vmatpush2.bf16.msra.mxu0 0
        %2161 = vmatprep.subr.bf16.mxu0 0
        %2162 = vmatpush2.bf16.msra.mxu0 0
        %2163 = vmatprep.subr.bf16.mxu0 0
        %2164 = vmatpush2.bf16.msra.mxu0 0
        %2165 = vmatprep.mubr.bf16.mxu0 0
        %2166 = vmatmul.mubr.bf16.gmra.mxu0 %v1977
        %v2167 = vpop.f32.mrf.mxu0
        %v2168 = vadd.f32 0.0, %v2167
        %v2169 = vpop.f32.mrf.mxu0
        %v2170 = vadd.f32 0.0, %v2169
        %v2171 = vpop.f32.mrf.mxu0
        %v2172 = vadd.f32 0.0, %v2171
        %v2173 = vpop.f32.mrf.mxu0
        %v2174 = vadd.f32 0.0, %v2173
        %2175 = vdwg.mxu0
        %s2176 = scalar_lea.vmem %s2, 8
        %v2177 = vld [vmem:[%s2176] sm:$0xf]
        %v2178 = vld [vmem:[%s2176 + $0x4] sm:$0x3]
        %v2181 = vunpack.c.l.b16 %v2177
        %v2182 = vunpack.c.l.b16 %v2178
        %v2183 = vpack.c.b16 %v2182, %v2181
        %v2185 = vsel %vm1975, %v2183, 0
        %2187 = vmatprep.subr.bf16.mxu0 0
        %2188 = vmatpush1.bf16.msra.mxu0 0
        %2189 = vmatprep.subr.bf16.mxu0 0
        %2190 = vmatpush1.bf16.msra.mxu0 0
        %2191 = vmatprep.subr.bf16.mxu0 0
        %2192 = vmatpush1.bf16.msra.mxu0 0
        %2193 = vmatprep.subr.bf16.mxu0 0
        %2194 = vmatpush1.bf16.msra.mxu0 0
        %2195 = vmatprep.subr.bf16.mxu0 0
        %2196 = vmatpush1.bf16.msra.mxu0 0
        %2197 = vmatprep.subr.bf16.mxu0 0
        %2198 = vmatpush1.bf16.msra.mxu0 0
        %2199 = vmatprep.subr.bf16.mxu0 %v1984
        %2200 = vmatpush1.bf16.msra.mxu0 %v1981
        %2201 = vmatprep.subr.bf16.mxu0 %v1955
        %2202 = vmatpush1.bf16.msra.mxu0 %v1954
        %2203 = vmatprep.subr.bf16.mxu0 0
        %2204 = vmatpush2.bf16.msra.mxu0 0
        %2205 = vmatprep.subr.bf16.mxu0 0
        %2206 = vmatpush2.bf16.msra.mxu0 0
        %2207 = vmatprep.subr.bf16.mxu0 0
        %2208 = vmatpush2.bf16.msra.mxu0 0
        %2209 = vmatprep.subr.bf16.mxu0 0
        %2210 = vmatpush2.bf16.msra.mxu0 0
        %2211 = vmatprep.subr.bf16.mxu0 0
        %2212 = vmatpush2.bf16.msra.mxu0 0
        %2213 = vmatprep.subr.bf16.mxu0 0
        %2214 = vmatpush2.bf16.msra.mxu0 0
        %2215 = vmatprep.subr.bf16.mxu0 0
        %2216 = vmatpush2.bf16.msra.mxu0 0
        %2217 = vmatprep.subr.bf16.mxu0 0
        %2218 = vmatpush2.bf16.msra.mxu0 0
        %2219 = vmatprep.mubr.bf16.mxu0 0
        %2220 = vmatmul.mubr.bf16.gmra.mxu0 %v2185
        %v2221 = vpop.f32.mrf.mxu0
        %v2222 = vadd.f32 0.0, %v2221
        %v2223 = vpop.f32.mrf.mxu0
        %v2224 = vadd.f32 0.0, %v2223
        %v2225 = vpop.f32.mrf.mxu0
        %v2226 = vadd.f32 0.0, %v2225
        %v2227 = vpop.f32.mrf.mxu0
        %v2228 = vadd.f32 0.0, %v2227
        %2229 = vdwg.mxu0
        %2230 = vmatprep.subr.bf16.mxu0 0
        %2231 = vmatpush1.bf16.msra.mxu0 0
        %2232 = vmatprep.subr.bf16.mxu0 0
        %2233 = vmatpush1.bf16.msra.mxu0 0
        %2234 = vmatprep.subr.bf16.mxu0 0
        %2235 = vmatpush1.bf16.msra.mxu0 0
        %2236 = vmatprep.subr.bf16.mxu0 0
        %2237 = vmatpush1.bf16.msra.mxu0 0
        %2238 = vmatprep.subr.bf16.mxu0 0
        %2239 = vmatpush1.bf16.msra.mxu0 0
        %2240 = vmatprep.subr.bf16.mxu0 0
        %2241 = vmatpush1.bf16.msra.mxu0 0
        %2242 = vmatprep.subr.bf16.mxu0 %v2033
        %2243 = vmatpush1.bf16.msra.mxu0 %v2030
        %2244 = vmatprep.subr.bf16.mxu0 %v1959
        %2245 = vmatpush1.bf16.msra.mxu0 %v1958
        %2246 = vmatprep.subr.bf16.mxu0 0
        %2247 = vmatpush2.bf16.msra.mxu0 0
        %2248 = vmatprep.subr.bf16.mxu0 0
        %2249 = vmatpush2.bf16.msra.mxu0 0
        %2250 = vmatprep.subr.bf16.mxu0 0
        %2251 = vmatpush2.bf16.msra.mxu0 0
        %2252 = vmatprep.subr.bf16.mxu0 0
        %2253 = vmatpush2.bf16.msra.mxu0 0
        %2254 = vmatprep.subr.bf16.mxu0 0
        %2255 = vmatpush2.bf16.msra.mxu0 0
        %2256 = vmatprep.subr.bf16.mxu0 0
        %2257 = vmatpush2.bf16.msra.mxu0 0
        %2258 = vmatprep.subr.bf16.mxu0 0
        %2259 = vmatpush2.bf16.msra.mxu0 0
        %2260 = vmatprep.subr.bf16.mxu0 0
        %2261 = vmatpush2.bf16.msra.mxu0 0
        %2262 = vmatprep.mubr.bf16.mxu0 0
        %2263 = vmatmul.mubr.bf16.gmra.mxu0 %v2185
        %v2264 = vpop.f32.mrf.mxu0
        %v2265 = vadd.f32 0.0, %v2264
        %v2266 = vpop.f32.mrf.mxu0
        %v2267 = vadd.f32 0.0, %v2266
        %v2268 = vpop.f32.mrf.mxu0
        %v2269 = vadd.f32 0.0, %v2268
        %v2270 = vpop.f32.mrf.mxu0
        %v2271 = vadd.f32 0.0, %v2270
        %2272 = vdwg.mxu0
        %2273 = vmatprep.subr.bf16.mxu0 0
        %2274 = vmatpush1.bf16.msra.mxu0 0
        %2275 = vmatprep.subr.bf16.mxu0 0
        %2276 = vmatpush1.bf16.msra.mxu0 0
        %2277 = vmatprep.subr.bf16.mxu0 0
        %2278 = vmatpush1.bf16.msra.mxu0 0
        %2279 = vmatprep.subr.bf16.mxu0 0
        %2280 = vmatpush1.bf16.msra.mxu0 0
        %2281 = vmatprep.subr.bf16.mxu0 0
        %2282 = vmatpush1.bf16.msra.mxu0 0
        %2283 = vmatprep.subr.bf16.mxu0 0
        %2284 = vmatpush1.bf16.msra.mxu0 0
        %2285 = vmatprep.subr.bf16.mxu0 %v2082
        %2286 = vmatpush1.bf16.msra.mxu0 %v2079
        %2287 = vmatprep.subr.bf16.mxu0 %v1963
        %2288 = vmatpush1.bf16.msra.mxu0 %v1962
        %2289 = vmatprep.subr.bf16.mxu0 0
        %2290 = vmatpush2.bf16.msra.mxu0 0
        %2291 = vmatprep.subr.bf16.mxu0 0
        %2292 = vmatpush2.bf16.msra.mxu0 0
        %2293 = vmatprep.subr.bf16.mxu0 0
        %2294 = vmatpush2.bf16.msra.mxu0 0
        %2295 = vmatprep.subr.bf16.mxu0 0
        %2296 = vmatpush2.bf16.msra.mxu0 0
        %2297 = vmatprep.subr.bf16.mxu0 0
        %2298 = vmatpush2.bf16.msra.mxu0 0
        %2299 = vmatprep.subr.bf16.mxu0 0
        %2300 = vmatpush2.bf16.msra.mxu0 0
        %2301 = vmatprep.subr.bf16.mxu0 0
        %2302 = vmatpush2.bf16.msra.mxu0 0
        %2303 = vmatprep.subr.bf16.mxu0 0
        %2304 = vmatpush2.bf16.msra.mxu0 0
        %2305 = vmatprep.mubr.bf16.mxu0 0
        %2306 = vmatmul.mubr.bf16.gmra.mxu0 %v2185
        %v2307 = vpop.f32.mrf.mxu0
        %v2308 = vadd.f32 0.0, %v2307
        %v2309 = vpop.f32.mrf.mxu0
        %v2310 = vadd.f32 0.0, %v2309
        %v2311 = vpop.f32.mrf.mxu0
        %v2312 = vadd.f32 0.0, %v2311
        %v2313 = vpop.f32.mrf.mxu0
        %v2314 = vadd.f32 0.0, %v2313
        %2315 = vdwg.mxu0
        %2316 = vmatprep.subr.bf16.mxu0 0
        %2317 = vmatpush1.bf16.msra.mxu0 0
        %2318 = vmatprep.subr.bf16.mxu0 0
        %2319 = vmatpush1.bf16.msra.mxu0 0
        %2320 = vmatprep.subr.bf16.mxu0 0
        %2321 = vmatpush1.bf16.msra.mxu0 0
        %2322 = vmatprep.subr.bf16.mxu0 0
        %2323 = vmatpush1.bf16.msra.mxu0 0
        %2324 = vmatprep.subr.bf16.mxu0 0
        %2325 = vmatpush1.bf16.msra.mxu0 0
        %2326 = vmatprep.subr.bf16.mxu0 0
        %2327 = vmatpush1.bf16.msra.mxu0 0
        %2328 = vmatprep.subr.bf16.mxu0 %v2131
        %2329 = vmatpush1.bf16.msra.mxu0 %v2128
        %2330 = vmatprep.subr.bf16.mxu0 %v1967
        %2331 = vmatpush1.bf16.msra.mxu0 %v1966
        %2332 = vmatprep.subr.bf16.mxu0 0
        %2333 = vmatpush2.bf16.msra.mxu0 0
        %2334 = vmatprep.subr.bf16.mxu0 0
        %2335 = vmatpush2.bf16.msra.mxu0 0
        %2336 = vmatprep.subr.bf16.mxu0 0
        %2337 = vmatpush2.bf16.msra.mxu0 0
        %2338 = vmatprep.subr.bf16.mxu0 0
        %2339 = vmatpush2.bf16.msra.mxu0 0
        %2340 = vmatprep.subr.bf16.mxu0 0
        %2341 = vmatpush2.bf16.msra.mxu0 0
        %2342 = vmatprep.subr.bf16.mxu0 0
        %2343 = vmatpush2.bf16.msra.mxu0 0
        %2344 = vmatprep.subr.bf16.mxu0 0
        %2345 = vmatpush2.bf16.msra.mxu0 0
        %2346 = vmatprep.subr.bf16.mxu0 0
        %2347 = vmatpush2.bf16.msra.mxu0 0
        %2348 = vmatprep.mubr.bf16.mxu0 0
        %2349 = vmatmul.mubr.bf16.gmra.mxu0 %v2185
        %v2350 = vpop.f32.mrf.mxu0
        %v2351 = vadd.f32 0.0, %v2350
        %v2352 = vpop.f32.mrf.mxu0
        %v2353 = vadd.f32 0.0, %v2352
        %v2354 = vpop.f32.mrf.mxu0
        %v2355 = vadd.f32 0.0, %v2354
        %v2356 = vpop.f32.mrf.mxu0
        %v2357 = vadd.f32 0.0, %v2356
        %2358 = vdwg.mxu0
        %v2359 = vmax.f32 %v2021, %v2222
        %v2360 = vmax.f32 %v2023, %v2224
        %v2361 = vmax.f32 %v2025, %v2226
        %v2362 = vmax.f32 %v2027, %v2228
        %v2363 = vmax.f32 %v2070, %v2265
        %v2364 = vmax.f32 %v2072, %v2267
        %v2365 = vmax.f32 %v2074, %v2269
        %v2366 = vmax.f32 %v2076, %v2271
        %v2367 = vmax.f32 %v2119, %v2308
        %v2368 = vmax.f32 %v2121, %v2310
        %v2369 = vmax.f32 %v2123, %v2312
        %v2370 = vmax.f32 %v2125, %v2314
        %v2371 = vmax.f32 %v2168, %v2351
        %v2372 = vmax.f32 %v2170, %v2353
        %v2373 = vmax.f32 %v2172, %v2355
        %v2374 = vmax.f32 %v2174, %v2357
        %v2375 = vld [vmem:[%s3] sm:$0xf]
        %v2376 = vld [vmem:[%s3 + $0x4] sm:$0xf]
        %v2377 = vld [vmem:[%s3 + $0x8] sm:$0xf]
        %v2378 = vld [vmem:[%s3 + $0xc] sm:$0xf]
        %v2379 = vld [vmem:[%s3 + $0x10] sm:$0xf]
        %v2380 = vld [vmem:[%s3 + $0x14] sm:$0xf]
        %v2381 = vld [vmem:[%s3 + $0x18] sm:$0xf]
        %v2382 = vld [vmem:[%s3 + $0x1c] sm:$0xf]
        %v2383 = vld [vmem:[%s3 + $0x20] sm:$0xf]
        %v2384 = vld [vmem:[%s3 + $0x24] sm:$0xf]
        %v2385 = vld [vmem:[%s3 + $0x28] sm:$0xf]
        %v2386 = vld [vmem:[%s3 + $0x2c] sm:$0xf]
        %v2387 = vld [vmem:[%s3 + $0x30] sm:$0xf]
        %v2388 = vld [vmem:[%s3 + $0x34] sm:$0xf]
        %v2389 = vld [vmem:[%s3 + $0x38] sm:$0xf]
        %v2390 = vld [vmem:[%s3 + $0x3c] sm:$0xf]
        %v2391 = vld [vmem:[%s3 + $0x40] sm:$0xf]
        %v2392 = vld [vmem:[%s3 + $0x44] sm:$0xf]
        %v2393 = vld [vmem:[%s3 + $0x48] sm:$0xf]
        %v2394 = vld [vmem:[%s3 + $0x4c] sm:$0xf]
        %v2395 = vld [vmem:[%s3 + $0x50] sm:$0xf]
        %v2396 = vld [vmem:[%s3 + $0x54] sm:$0xf]
        %v2397 = vld [vmem:[%s3 + $0x58] sm:$0xf]
        %v2398 = vld [vmem:[%s3 + $0x5c] sm:$0xf]
        %v2399 = vld [vmem:[%s3 + $0x60] sm:$0xf]
        %v2400 = vld [vmem:[%s3 + $0x64] sm:$0xf]
        %v2401 = vld [vmem:[%s3 + $0x68] sm:$0xf]
        %v2402 = vld [vmem:[%s3 + $0x6c] sm:$0xf]
        %v2403 = vld [vmem:[%s3 + $0x70] sm:$0xf]
        %v2404 = vld [vmem:[%s3 + $0x74] sm:$0xf]
        %v2405 = vpack.c.bf16 %v2361, %v2359
        %v2406 = vpack.c.bf16 %v2362, %v2360
        %v2407 = vpack.c.bf16 %v2365, %v2363
        %v2408 = vpack.c.bf16 %v2366, %v2364
        %v2409 = vpack.c.bf16 %v2369, %v2367
        %v2410 = vpack.c.bf16 %v2370, %v2368
        %v2411 = vpack.c.bf16 %v2373, %v2371
        %v2412 = vpack.c.bf16 %v2374, %v2372
        %v2443 = vunpack.c.l.b16 %v2375
        %v2444 = vunpack.c.l.b16 %v2376
        %v2445 = vunpack.c.l.b16 %v2377
        %v2446 = vunpack.c.l.b16 %v2378
        %v2447 = vunpack.c.l.b16 %v2379
        %v2448 = vunpack.c.l.b16 %v2380
        %v2449 = vunpack.c.l.b16 %v2381
        %v2450 = vunpack.c.l.b16 %v2382
        %v2451 = vunpack.c.l.b16 %v2383
        %v2452 = vunpack.c.l.b16 %v2384
        %v2453 = vunpack.c.l.b16 %v2385
        %v2454 = vunpack.c.l.b16 %v2386
        %v2455 = vunpack.c.l.b16 %v2387
        %v2456 = vunpack.c.l.b16 %v2388
        %v2457 = vunpack.c.l.b16 %v2389
        %v2458 = vunpack.c.l.b16 %v2390
        %v2459 = vunpack.c.l.b16 %v2391
        %v2460 = vunpack.c.l.b16 %v2392
        %v2461 = vunpack.c.l.b16 %v2393
        %v2462 = vunpack.c.l.b16 %v2394
        %v2463 = vunpack.c.l.b16 %v2395
        %v2464 = vunpack.c.l.b16 %v2396
        %v2465 = vunpack.c.l.b16 %v2397
        %v2466 = vunpack.c.l.b16 %v2398
        %v2467 = vunpack.c.l.b16 %v2399
        %v2468 = vunpack.c.l.b16 %v2400
        %v2469 = vunpack.c.l.b16 %v2401
        %v2470 = vunpack.c.l.b16 %v2402
        %v2471 = vunpack.c.l.b16 %v2403
        %v2472 = vunpack.c.l.b16 %v2404
        %v2473 = vpack.c.b16 %v2444, %v2443
        %v2474 = vpack.c.b16 %v2446, %v2445
        %v2475 = vpack.c.b16 %v2448, %v2447
        %v2476 = vpack.c.b16 %v2450, %v2449
        %v2477 = vpack.c.b16 %v2452, %v2451
        %v2478 = vpack.c.b16 %v2454, %v2453
        %v2479 = vpack.c.b16 %v2456, %v2455
        %v2480 = vpack.c.b16 %v2458, %v2457
        %v2481 = vpack.c.b16 %v2460, %v2459
        %v2482 = vpack.c.b16 %v2462, %v2461
        %v2483 = vpack.c.b16 %v2464, %v2463
        %v2484 = vpack.c.b16 %v2466, %v2465
        %v2485 = vpack.c.b16 %v2468, %v2467
        %v2486 = vpack.c.b16 %v2470, %v2469
        %v2487 = vpack.c.b16 %v2472, %v2471
        %vm2503 = vcmask 916480
        %v2505 = vsel %vm2503, %v2406, 0
        %2507 = vmatprep.subr.bf16.mxu0 0
        %2508 = vmatpush1.bf16.msra.mxu0 %v2480
        %2509 = vmatprep.subr.bf16.mxu0 0
        %2510 = vmatpush1.bf16.msra.mxu0 %v2479
        %2511 = vmatprep.subr.bf16.mxu0 0
        %2512 = vmatpush1.bf16.msra.mxu0 %v2478
        %2513 = vmatprep.subr.bf16.mxu0 0
        %2514 = vmatpush1.bf16.msra.mxu0 %v2477
        %2515 = vmatprep.subr.bf16.mxu0 0
        %2516 = vmatpush1.bf16.msra.mxu0 %v2476
        %2517 = vmatprep.subr.bf16.mxu0 0
        %2518 = vmatpush1.bf16.msra.mxu0 %v2475
        %2519 = vmatprep.subr.bf16.mxu0 0
        %2520 = vmatpush1.bf16.msra.mxu0 %v2474
        %2521 = vmatprep.subr.bf16.mxu0 0
        %2522 = vmatpush1.bf16.msra.mxu0 %v2473
        %2523 = vmatprep.subr.bf16.mxu0 0
        %2524 = vmatpush2.bf16.msra.mxu0 0
        %2525 = vmatprep.subr.bf16.mxu0 0
        %2526 = vmatpush2.bf16.msra.mxu0 %v2487
        %2527 = vmatprep.subr.bf16.mxu0 0
        %2528 = vmatpush2.bf16.msra.mxu0 %v2486
        %2529 = vmatprep.subr.bf16.mxu0 0
        %2530 = vmatpush2.bf16.msra.mxu0 %v2485
        %2531 = vmatprep.subr.bf16.mxu0 0
        %2532 = vmatpush2.bf16.msra.mxu0 %v2484
        %2533 = vmatprep.subr.bf16.mxu0 0
        %2534 = vmatpush2.bf16.msra.mxu0 %v2483
        %2535 = vmatprep.subr.bf16.mxu0 0
        %2536 = vmatpush2.bf16.msra.mxu0 %v2482
        %2537 = vmatprep.subr.bf16.mxu0 0
        %2538 = vmatpush2.bf16.msra.mxu0 %v2481
        %2539 = vmatprep.mubr.bf16.mxu0 %v2505
        %2540 = vmatmul.mubr.bf16.gmra.mxu0 %v2405
        %v2541 = vpop.f32.mrf.mxu0
        %v2542 = vadd.f32 0.0, %v2541
        %v2543 = vpop.f32.mrf.mxu0
        %v2544 = vpop.f32.mrf.mxu0
        %v2545 = vadd.f32 0.0, %v2544
        %v2546 = vpop.f32.mrf.mxu0
        %2547 = vdwg.mxu0
        %v2549 = vsel %vm2503, %v2408, 0
        %2551 = vmatprep.subr.bf16.mxu0 0
        %2552 = vmatpush1.bf16.msra.mxu0 %v2480
        %2553 = vmatprep.subr.bf16.mxu0 0
        %2554 = vmatpush1.bf16.msra.mxu0 %v2479
        %2555 = vmatprep.subr.bf16.mxu0 0
        %2556 = vmatpush1.bf16.msra.mxu0 %v2478
        %2557 = vmatprep.subr.bf16.mxu0 0
        %2558 = vmatpush1.bf16.msra.mxu0 %v2477
        %2559 = vmatprep.subr.bf16.mxu0 0
        %2560 = vmatpush1.bf16.msra.mxu0 %v2476
        %2561 = vmatprep.subr.bf16.mxu0 0
        %2562 = vmatpush1.bf16.msra.mxu0 %v2475
        %2563 = vmatprep.subr.bf16.mxu0 0
        %2564 = vmatpush1.bf16.msra.mxu0 %v2474
        %2565 = vmatprep.subr.bf16.mxu0 0
        %2566 = vmatpush1.bf16.msra.mxu0 %v2473
        %2567 = vmatprep.subr.bf16.mxu0 0
        %2568 = vmatpush2.bf16.msra.mxu0 0
        %2569 = vmatprep.subr.bf16.mxu0 0
        %2570 = vmatpush2.bf16.msra.mxu0 %v2487
        %2571 = vmatprep.subr.bf16.mxu0 0
        %2572 = vmatpush2.bf16.msra.mxu0 %v2486
        %2573 = vmatprep.subr.bf16.mxu0 0
        %2574 = vmatpush2.bf16.msra.mxu0 %v2485
        %2575 = vmatprep.subr.bf16.mxu0 0
        %2576 = vmatpush2.bf16.msra.mxu0 %v2484
        %2577 = vmatprep.subr.bf16.mxu0 0
        %2578 = vmatpush2.bf16.msra.mxu0 %v2483
        %2579 = vmatprep.subr.bf16.mxu0 0
        %2580 = vmatpush2.bf16.msra.mxu0 %v2482
        %2581 = vmatprep.subr.bf16.mxu0 0
        %2582 = vmatpush2.bf16.msra.mxu0 %v2481
        %2583 = vmatprep.mubr.bf16.mxu0 %v2549
        %2584 = vmatmul.mubr.bf16.gmra.mxu0 %v2407
        %v2585 = vpop.f32.mrf.mxu0
        %v2586 = vadd.f32 0.0, %v2585
        %v2587 = vpop.f32.mrf.mxu0
        %v2588 = vpop.f32.mrf.mxu0
        %v2589 = vadd.f32 0.0, %v2588
        %v2590 = vpop.f32.mrf.mxu0
        %2591 = vdwg.mxu0
        %v2593 = vsel %vm2503, %v2410, 0
        %2595 = vmatprep.subr.bf16.mxu0 0
        %2596 = vmatpush1.bf16.msra.mxu0 %v2480
        %2597 = vmatprep.subr.bf16.mxu0 0
        %2598 = vmatpush1.bf16.msra.mxu0 %v2479
        %2599 = vmatprep.subr.bf16.mxu0 0
        %2600 = vmatpush1.bf16.msra.mxu0 %v2478
        %2601 = vmatprep.subr.bf16.mxu0 0
        %2602 = vmatpush1.bf16.msra.mxu0 %v2477
        %2603 = vmatprep.subr.bf16.mxu0 0
        %2604 = vmatpush1.bf16.msra.mxu0 %v2476
        %2605 = vmatprep.subr.bf16.mxu0 0
        %2606 = vmatpush1.bf16.msra.mxu0 %v2475
        %2607 = vmatprep.subr.bf16.mxu0 0
        %2608 = vmatpush1.bf16.msra.mxu0 %v2474
        %2609 = vmatprep.subr.bf16.mxu0 0
        %2610 = vmatpush1.bf16.msra.mxu0 %v2473
        %2611 = vmatprep.subr.bf16.mxu0 0
        %2612 = vmatpush2.bf16.msra.mxu0 0
        %2613 = vmatprep.subr.bf16.mxu0 0
        %2614 = vmatpush2.bf16.msra.mxu0 %v2487
        %2615 = vmatprep.subr.bf16.mxu0 0
        %2616 = vmatpush2.bf16.msra.mxu0 %v2486
        %2617 = vmatprep.subr.bf16.mxu0 0
        %2618 = vmatpush2.bf16.msra.mxu0 %v2485
        %2619 = vmatprep.subr.bf16.mxu0 0
        %2620 = vmatpush2.bf16.msra.mxu0 %v2484
        %2621 = vmatprep.subr.bf16.mxu0 0
        %2622 = vmatpush2.bf16.msra.mxu0 %v2483
        %2623 = vmatprep.subr.bf16.mxu0 0
        %2624 = vmatpush2.bf16.msra.mxu0 %v2482
        %2625 = vmatprep.subr.bf16.mxu0 0
        %2626 = vmatpush2.bf16.msra.mxu0 %v2481
        %2627 = vmatprep.mubr.bf16.mxu0 %v2593
        %2628 = vmatmul.mubr.bf16.gmra.mxu0 %v2409
        %v2629 = vpop.f32.mrf.mxu0
        %v2630 = vadd.f32 0.0, %v2629
        %v2631 = vpop.f32.mrf.mxu0
        %v2632 = vpop.f32.mrf.mxu0
        %v2633 = vadd.f32 0.0, %v2632
        %v2634 = vpop.f32.mrf.mxu0
        %2635 = vdwg.mxu0
        %v2637 = vsel %vm2503, %v2412, 0
        %2639 = vmatprep.subr.bf16.mxu0 0
        %2640 = vmatpush1.bf16.msra.mxu0 %v2480
        %2641 = vmatprep.subr.bf16.mxu0 0
        %2642 = vmatpush1.bf16.msra.mxu0 %v2479
        %2643 = vmatprep.subr.bf16.mxu0 0
        %2644 = vmatpush1.bf16.msra.mxu0 %v2478
        %2645 = vmatprep.subr.bf16.mxu0 0
        %2646 = vmatpush1.bf16.msra.mxu0 %v2477
        %2647 = vmatprep.subr.bf16.mxu0 0
        %2648 = vmatpush1.bf16.msra.mxu0 %v2476
        %2649 = vmatprep.subr.bf16.mxu0 0
        %2650 = vmatpush1.bf16.msra.mxu0 %v2475
        %2651 = vmatprep.subr.bf16.mxu0 0
        %2652 = vmatpush1.bf16.msra.mxu0 %v2474
        %2653 = vmatprep.subr.bf16.mxu0 0
        %2654 = vmatpush1.bf16.msra.mxu0 %v2473
        %2655 = vmatprep.subr.bf16.mxu0 0
        %2656 = vmatpush2.bf16.msra.mxu0 0
        %2657 = vmatprep.subr.bf16.mxu0 0
        %2658 = vmatpush2.bf16.msra.mxu0 %v2487
        %2659 = vmatprep.subr.bf16.mxu0 0
        %2660 = vmatpush2.bf16.msra.mxu0 %v2486
        %2661 = vmatprep.subr.bf16.mxu0 0
        %2662 = vmatpush2.bf16.msra.mxu0 %v2485
        %2663 = vmatprep.subr.bf16.mxu0 0
        %2664 = vmatpush2.bf16.msra.mxu0 %v2484
        %2665 = vmatprep.subr.bf16.mxu0 0
        %2666 = vmatpush2.bf16.msra.mxu0 %v2483
        %2667 = vmatprep.subr.bf16.mxu0 0
        %2668 = vmatpush2.bf16.msra.mxu0 %v2482
        %2669 = vmatprep.subr.bf16.mxu0 0
        %2670 = vmatpush2.bf16.msra.mxu0 %v2481
        %2671 = vmatprep.mubr.bf16.mxu0 %v2637
        %2672 = vmatmul.mubr.bf16.gmra.mxu0 %v2411
        %v2673 = vpop.f32.mrf.mxu0
        %v2674 = vadd.f32 0.0, %v2673
        %v2675 = vpop.f32.mrf.mxu0
        %v2676 = vpop.f32.mrf.mxu0
        %v2677 = vadd.f32 0.0, %v2676
        %v2678 = vpop.f32.mrf.mxu0
        %2679 = vdwg.mxu0
        %s2680 = scalar_lea.vmem %s3, 120
        %v2681 = vld [vmem:[%s2680] sm:$0xf]
        %v2682 = vld [vmem:[%s2680 + $0x4] sm:$0xf]
        %v2683 = vld [vmem:[%s2680 + $0x8] sm:$0xf]
        %v2684 = vld [vmem:[%s2680 + $0xc] sm:$0xf]
        %v2685 = vld [vmem:[%s2680 + $0x10] sm:$0xf]
        %v2686 = vld [vmem:[%s2680 + $0x14] sm:$0xf]
        %v2687 = vld [vmem:[%s2680 + $0x18] sm:$0xf]
        %v2688 = vld [vmem:[%s2680 + $0x1c] sm:$0xf]
        %v2689 = vld [vmem:[%s2680 + $0x20] sm:$0xf]
        %v2690 = vld [vmem:[%s2680 + $0x24] sm:$0xf]
        %v2691 = vld [vmem:[%s2680 + $0x28] sm:$0xf]
        %v2692 = vld [vmem:[%s2680 + $0x2c] sm:$0xf]
        %v2693 = vld [vmem:[%s2680 + $0x30] sm:$0xf]
        %v2694 = vld [vmem:[%s2680 + $0x34] sm:$0xf]
        %v2695 = vld [vmem:[%s2680 + $0x38] sm:$0xf]
        %v2696 = vld [vmem:[%s2680 + $0x3c] sm:$0xf]
        %v2697 = vld [vmem:[%s2680 + $0x40] sm:$0xf]
        %v2698 = vld [vmem:[%s2680 + $0x44] sm:$0xf]
        %v2699 = vld [vmem:[%s2680 + $0x48] sm:$0xf]
        %v2700 = vld [vmem:[%s2680 + $0x4c] sm:$0xf]
        %v2701 = vld [vmem:[%s2680 + $0x50] sm:$0xf]
        %v2702 = vld [vmem:[%s2680 + $0x54] sm:$0xf]
        %v2703 = vld [vmem:[%s2680 + $0x58] sm:$0xf]
        %v2704 = vld [vmem:[%s2680 + $0x5c] sm:$0xf]
        %v2705 = vld [vmem:[%s2680 + $0x60] sm:$0xf]
        %v2706 = vld [vmem:[%s2680 + $0x64] sm:$0xf]
        %v2707 = vld [vmem:[%s2680 + $0x68] sm:$0xf]
        %v2708 = vld [vmem:[%s2680 + $0x6c] sm:$0xf]
        %v2709 = vld [vmem:[%s2680 + $0x70] sm:$0xf]
        %v2710 = vld [vmem:[%s2680 + $0x74] sm:$0xf]
        %v2741 = vunpack.c.l.b16 %v2681
        %v2742 = vunpack.c.l.b16 %v2682
        %v2743 = vunpack.c.l.b16 %v2683
        %v2744 = vunpack.c.l.b16 %v2684
        %v2745 = vunpack.c.l.b16 %v2685
        %v2746 = vunpack.c.l.b16 %v2686
        %v2747 = vunpack.c.l.b16 %v2687
        %v2748 = vunpack.c.l.b16 %v2688
        %v2749 = vunpack.c.l.b16 %v2689
        %v2750 = vunpack.c.l.b16 %v2690
        %v2751 = vunpack.c.l.b16 %v2691
        %v2752 = vunpack.c.l.b16 %v2692
        %v2753 = vunpack.c.l.b16 %v2693
        %v2754 = vunpack.c.l.b16 %v2694
        %v2755 = vunpack.c.l.b16 %v2695
        %v2756 = vunpack.c.l.b16 %v2696
        %v2757 = vunpack.c.l.b16 %v2697
        %v2758 = vunpack.c.l.b16 %v2698
        %v2759 = vunpack.c.l.b16 %v2699
        %v2760 = vunpack.c.l.b16 %v2700
        %v2761 = vunpack.c.l.b16 %v2701
        %v2762 = vunpack.c.l.b16 %v2702
        %v2763 = vunpack.c.l.b16 %v2703
        %v2764 = vunpack.c.l.b16 %v2704
        %v2765 = vunpack.c.l.b16 %v2705
        %v2766 = vunpack.c.l.b16 %v2706
        %v2767 = vunpack.c.l.b16 %v2707
        %v2768 = vunpack.c.l.b16 %v2708
        %v2769 = vunpack.c.l.b16 %v2709
        %v2770 = vunpack.c.l.b16 %v2710
        %v2771 = vpack.c.b16 %v2742, %v2741
        %v2772 = vpack.c.b16 %v2744, %v2743
        %v2773 = vpack.c.b16 %v2746, %v2745
        %v2774 = vpack.c.b16 %v2748, %v2747
        %v2775 = vpack.c.b16 %v2750, %v2749
        %v2776 = vpack.c.b16 %v2752, %v2751
        %v2777 = vpack.c.b16 %v2754, %v2753
        %v2778 = vpack.c.b16 %v2756, %v2755
        %v2779 = vpack.c.b16 %v2758, %v2757
        %v2780 = vpack.c.b16 %v2760, %v2759
        %v2781 = vpack.c.b16 %v2762, %v2761
        %v2782 = vpack.c.b16 %v2764, %v2763
        %v2783 = vpack.c.b16 %v2766, %v2765
        %v2784 = vpack.c.b16 %v2768, %v2767
        %v2785 = vpack.c.b16 %v2770, %v2769
        %2801 = vmatprep.subr.bf16.mxu0 0
        %2802 = vmatpush1.bf16.msra.mxu0 %v2778
        %2803 = vmatprep.subr.bf16.mxu0 0
        %2804 = vmatpush1.bf16.msra.mxu0 %v2777
        %2805 = vmatprep.subr.bf16.mxu0 0
        %2806 = vmatpush1.bf16.msra.mxu0 %v2776
        %2807 = vmatprep.subr.bf16.mxu0 0
        %2808 = vmatpush1.bf16.msra.mxu0 %v2775
        %2809 = vmatprep.subr.bf16.mxu0 0
        %2810 = vmatpush1.bf16.msra.mxu0 %v2774
        %2811 = vmatprep.subr.bf16.mxu0 0
        %2812 = vmatpush1.bf16.msra.mxu0 %v2773
        %2813 = vmatprep.subr.bf16.mxu0 0
        %2814 = vmatpush1.bf16.msra.mxu0 %v2772
        %2815 = vmatprep.subr.bf16.mxu0 0
        %2816 = vmatpush1.bf16.msra.mxu0 %v2771
        %2817 = vmatprep.subr.bf16.mxu0 0
        %2818 = vmatpush2.bf16.msra.mxu0 0
        %2819 = vmatprep.subr.bf16.mxu0 0
        %2820 = vmatpush2.bf16.msra.mxu0 %v2785
        %2821 = vmatprep.subr.bf16.mxu0 0
        %2822 = vmatpush2.bf16.msra.mxu0 %v2784
        %2823 = vmatprep.subr.bf16.mxu0 0
        %2824 = vmatpush2.bf16.msra.mxu0 %v2783
        %2825 = vmatprep.subr.bf16.mxu0 0
        %2826 = vmatpush2.bf16.msra.mxu0 %v2782
        %2827 = vmatprep.subr.bf16.mxu0 0
        %2828 = vmatpush2.bf16.msra.mxu0 %v2781
        %2829 = vmatprep.subr.bf16.mxu0 0
        %2830 = vmatpush2.bf16.msra.mxu0 %v2780
        %2831 = vmatprep.subr.bf16.mxu0 0
        %2832 = vmatpush2.bf16.msra.mxu0 %v2779
        %2833 = vmatprep.mubr.bf16.mxu0 %v2505
        %2834 = vmatmul.mubr.bf16.gmra.mxu0 %v2405
        %v2835 = vpop.f32.mrf.mxu0
        %v2836 = vadd.f32 0.0, %v2835
        %v2837 = vpop.f32.mrf.mxu0
        %v2838 = vpop.f32.mrf.mxu0
        %v2839 = vadd.f32 0.0, %v2838
        %v2840 = vpop.f32.mrf.mxu0
        %2841 = vdwg.mxu0
        %2842 = vmatprep.subr.bf16.mxu0 0
        %2843 = vmatpush1.bf16.msra.mxu0 %v2778
        %2844 = vmatprep.subr.bf16.mxu0 0
        %2845 = vmatpush1.bf16.msra.mxu0 %v2777
        %2846 = vmatprep.subr.bf16.mxu0 0
        %2847 = vmatpush1.bf16.msra.mxu0 %v2776
        %2848 = vmatprep.subr.bf16.mxu0 0
        %2849 = vmatpush1.bf16.msra.mxu0 %v2775
        %2850 = vmatprep.subr.bf16.mxu0 0
        %2851 = vmatpush1.bf16.msra.mxu0 %v2774
        %2852 = vmatprep.subr.bf16.mxu0 0
        %2853 = vmatpush1.bf16.msra.mxu0 %v2773
        %2854 = vmatprep.subr.bf16.mxu0 0
        %2855 = vmatpush1.bf16.msra.mxu0 %v2772
        %2856 = vmatprep.subr.bf16.mxu0 0
        %2857 = vmatpush1.bf16.msra.mxu0 %v2771
        %2858 = vmatprep.subr.bf16.mxu0 0
        %2859 = vmatpush2.bf16.msra.mxu0 0
        %2860 = vmatprep.subr.bf16.mxu0 0
        %2861 = vmatpush2.bf16.msra.mxu0 %v2785
        %2862 = vmatprep.subr.bf16.mxu0 0
        %2863 = vmatpush2.bf16.msra.mxu0 %v2784
        %2864 = vmatprep.subr.bf16.mxu0 0
        %2865 = vmatpush2.bf16.msra.mxu0 %v2783
        %2866 = vmatprep.subr.bf16.mxu0 0
        %2867 = vmatpush2.bf16.msra.mxu0 %v2782
        %2868 = vmatprep.subr.bf16.mxu0 0
        %2869 = vmatpush2.bf16.msra.mxu0 %v2781
        %2870 = vmatprep.subr.bf16.mxu0 0
        %2871 = vmatpush2.bf16.msra.mxu0 %v2780
        %2872 = vmatprep.subr.bf16.mxu0 0
        %2873 = vmatpush2.bf16.msra.mxu0 %v2779
        %2874 = vmatprep.mubr.bf16.mxu0 %v2549
        %2875 = vmatmul.mubr.bf16.gmra.mxu0 %v2407
        %v2876 = vpop.f32.mrf.mxu0
        %v2877 = vadd.f32 0.0, %v2876
        %v2878 = vpop.f32.mrf.mxu0
        %v2879 = vpop.f32.mrf.mxu0
        %v2880 = vadd.f32 0.0, %v2879
        %v2881 = vpop.f32.mrf.mxu0
        %2882 = vdwg.mxu0
        %2883 = vmatprep.subr.bf16.mxu0 0
        %2884 = vmatpush1.bf16.msra.mxu0 %v2778
        %2885 = vmatprep.subr.bf16.mxu0 0
        %2886 = vmatpush1.bf16.msra.mxu0 %v2777
        %2887 = vmatprep.subr.bf16.mxu0 0
        %2888 = vmatpush1.bf16.msra.mxu0 %v2776
        %2889 = vmatprep.subr.bf16.mxu0 0
        %2890 = vmatpush1.bf16.msra.mxu0 %v2775
        %2891 = vmatprep.subr.bf16.mxu0 0
        %2892 = vmatpush1.bf16.msra.mxu0 %v2774
        %2893 = vmatprep.subr.bf16.mxu0 0
        %2894 = vmatpush1.bf16.msra.mxu0 %v2773
        %2895 = vmatprep.subr.bf16.mxu0 0
        %2896 = vmatpush1.bf16.msra.mxu0 %v2772
        %2897 = vmatprep.subr.bf16.mxu0 0
        %2898 = vmatpush1.bf16.msra.mxu0 %v2771
        %2899 = vmatprep.subr.bf16.mxu0 0
        %2900 = vmatpush2.bf16.msra.mxu0 0
        %2901 = vmatprep.subr.bf16.mxu0 0
        %2902 = vmatpush2.bf16.msra.mxu0 %v2785
        %2903 = vmatprep.subr.bf16.mxu0 0
        %2904 = vmatpush2.bf16.msra.mxu0 %v2784
        %2905 = vmatprep.subr.bf16.mxu0 0
        %2906 = vmatpush2.bf16.msra.mxu0 %v2783
        %2907 = vmatprep.subr.bf16.mxu0 0
        %2908 = vmatpush2.bf16.msra.mxu0 %v2782
        %2909 = vmatprep.subr.bf16.mxu0 0
        %2910 = vmatpush2.bf16.msra.mxu0 %v2781
        %2911 = vmatprep.subr.bf16.mxu0 0
        %2912 = vmatpush2.bf16.msra.mxu0 %v2780
        %2913 = vmatprep.subr.bf16.mxu0 0
        %2914 = vmatpush2.bf16.msra.mxu0 %v2779
        %2915 = vmatprep.mubr.bf16.mxu0 %v2593
        %2916 = vmatmul.mubr.bf16.gmra.mxu0 %v2409
        %v2917 = vpop.f32.mrf.mxu0
        %v2918 = vadd.f32 0.0, %v2917
        %v2919 = vpop.f32.mrf.mxu0
        %v2920 = vpop.f32.mrf.mxu0
        %v2921 = vadd.f32 0.0, %v2920
        %v2922 = vpop.f32.mrf.mxu0
        %2923 = vdwg.mxu0
        %2924 = vmatprep.subr.bf16.mxu0 0
        %2925 = vmatpush1.bf16.msra.mxu0 %v2778
        %2926 = vmatprep.subr.bf16.mxu0 0
        %2927 = vmatpush1.bf16.msra.mxu0 %v2777
        %2928 = vmatprep.subr.bf16.mxu0 0
        %2929 = vmatpush1.bf16.msra.mxu0 %v2776
        %2930 = vmatprep.subr.bf16.mxu0 0
        %2931 = vmatpush1.bf16.msra.mxu0 %v2775
        %2932 = vmatprep.subr.bf16.mxu0 0
        %2933 = vmatpush1.bf16.msra.mxu0 %v2774
        %2934 = vmatprep.subr.bf16.mxu0 0
        %2935 = vmatpush1.bf16.msra.mxu0 %v2773
        %2936 = vmatprep.subr.bf16.mxu0 0
        %2937 = vmatpush1.bf16.msra.mxu0 %v2772
        %2938 = vmatprep.subr.bf16.mxu0 0
        %2939 = vmatpush1.bf16.msra.mxu0 %v2771
        %2940 = vmatprep.subr.bf16.mxu0 0
        %2941 = vmatpush2.bf16.msra.mxu0 0
        %2942 = vmatprep.subr.bf16.mxu0 0
        %2943 = vmatpush2.bf16.msra.mxu0 %v2785
        %2944 = vmatprep.subr.bf16.mxu0 0
        %2945 = vmatpush2.bf16.msra.mxu0 %v2784
        %2946 = vmatprep.subr.bf16.mxu0 0
        %2947 = vmatpush2.bf16.msra.mxu0 %v2783
        %2948 = vmatprep.subr.bf16.mxu0 0
        %2949 = vmatpush2.bf16.msra.mxu0 %v2782
        %2950 = vmatprep.subr.bf16.mxu0 0
        %2951 = vmatpush2.bf16.msra.mxu0 %v2781
        %2952 = vmatprep.subr.bf16.mxu0 0
        %2953 = vmatpush2.bf16.msra.mxu0 %v2780
        %2954 = vmatprep.subr.bf16.mxu0 0
        %2955 = vmatpush2.bf16.msra.mxu0 %v2779
        %2956 = vmatprep.mubr.bf16.mxu0 %v2637
        %2957 = vmatmul.mubr.bf16.gmra.mxu0 %v2411
        %v2958 = vpop.f32.mrf.mxu0
        %v2959 = vadd.f32 0.0, %v2958
        %v2960 = vpop.f32.mrf.mxu0
        %v2961 = vpop.f32.mrf.mxu0
        %v2962 = vadd.f32 0.0, %v2961
        %v2963 = vpop.f32.mrf.mxu0
        %2964 = vdwg.mxu0
        %v2965 = vmax.f32 %v2542, %v2836
        %v2966 = vmax.f32 %v2545, %v2839
        %v2967 = vmax.f32 %v2586, %v2877
        %v2968 = vmax.f32 %v2589, %v2880
        %v2969 = vmax.f32 %v2630, %v2918
        %v2970 = vmax.f32 %v2633, %v2921
        %v2971 = vmax.f32 %v2674, %v2959
        %v2972 = vmax.f32 %v2677, %v2962
        %v2973 = vld [vmem:[%s4] sm:$0x1]
        %v2975 = vlaneseq
        %v2976 = vshrl.u32 %v2975, 7
        %v2977 = vsub.s32 0, %v2976
        %v2978 = vrot.slane %v2973, %v2977
        %v2980 = vadd.f32 %v2965, %v2978
        %v2981 = vadd.f32 %v2966, %v2978
        %v2982 = vadd.f32 %v2967, %v2978
        %v2983 = vadd.f32 %v2968, %v2978
        %v2984 = vadd.f32 %v2969, %v2978
        %v2985 = vadd.f32 %v2970, %v2978
        %v2986 = vadd.f32 %v2971, %v2978
        %v2987 = vadd.f32 %v2972, %v2978
        %v2988 = vmax.f32 %v2980, 0.0
        %v2989 = vmax.f32 %v2981, 0.0
        %v2990 = vmax.f32 %v2982, 0.0
        %v2991 = vmax.f32 %v2983, 0.0
        %v2992 = vmax.f32 %v2984, 0.0
        %v2993 = vmax.f32 %v2985, 0.0
        %v2994 = vmax.f32 %v2986, 0.0
        %v2995 = vmax.f32 %v2987, 0.0
        %v2996 = vld [vmem:[%s5] sm:$0xff]
        %v2997 = vld [vmem:[%s5 + $0x8] sm:$0xff]
        %v2998 = vld [vmem:[%s5 + $0x10] sm:$0xff]
        %v2999 = vld [vmem:[%s5 + $0x18] sm:$0xff]
        %v3000 = vld [vmem:[%s5 + $0x20] sm:$0xff]
        %v3001 = vld [vmem:[%s5 + $0x28] sm:$0xff]
        %v3002 = vld [vmem:[%s5 + $0x30] sm:$0xff]
        %v3003 = vld [vmem:[%s5 + $0x38] sm:$0xff]
        %v3004 = vld [vmem:[%s5 + $0x40] sm:$0xff]
        %v3005 = vld [vmem:[%s5 + $0x48] sm:$0xff]
        %v3006 = vld [vmem:[%s5 + $0x50] sm:$0xff]
        %v3007 = vld [vmem:[%s5 + $0x58] sm:$0xff]
        %v3008 = vld [vmem:[%s5 + $0x60] sm:$0xff]
        %v3009 = vld [vmem:[%s5 + $0x68] sm:$0xff]
        %v3010 = vld [vmem:[%s5 + $0x70] sm:$0xff]
        %v3011 = vpack.c.bf16 %v2988, %v2988
        %v3012 = vpack.c.bf16 %v2990, %v2990
        %v3013 = vpack.c.bf16 %v2992, %v2992
        %v3014 = vpack.c.bf16 %v2994, %v2994
        %s3015 = scalar_lea.vmem %s5, 120
        %v3016 = vld [vmem:[%s3015] sm:$0xff]
        %v3017 = vld [vmem:[%s3015 + $0x8] sm:$0xff]
        %v3018 = vld [vmem:[%s3015 + $0x10] sm:$0xff]
        %v3019 = vld [vmem:[%s3015 + $0x18] sm:$0xff]
        %v3020 = vld [vmem:[%s3015 + $0x20] sm:$0xff]
        %v3021 = vld [vmem:[%s3015 + $0x28] sm:$0xff]
        %v3022 = vld [vmem:[%s3015 + $0x30] sm:$0xff]
        %v3023 = vld [vmem:[%s3015 + $0x38] sm:$0xff]
        %v3024 = vld [vmem:[%s3015 + $0x40] sm:$0xff]
        %v3025 = vld [vmem:[%s3015 + $0x48] sm:$0xff]
        %v3026 = vld [vmem:[%s3015 + $0x50] sm:$0xff]
        %v3027 = vld [vmem:[%s3015 + $0x58] sm:$0xff]
        %v3028 = vld [vmem:[%s3015 + $0x60] sm:$0xff]
        %v3029 = vld [vmem:[%s3015 + $0x68] sm:$0xff]
        %v3030 = vld [vmem:[%s3015 + $0x70] sm:$0xff]
        %v3031 = vpack.c.bf16 %v2989, %v2988
        %v3032 = vpack.c.bf16 %v2991, %v2990
        %v3033 = vpack.c.bf16 %v2993, %v2992
        %v3034 = vpack.c.bf16 %v2995, %v2994
        %v3036 = vshrl.u32 %v3031, 16
        %v3038 = vshll.u32 %v3031, 16
        %v3040 = vrot.slane %v3038, 1
        %v3041 = vor.u32 %v3036, %v3040
        %v3057 = vunpack.c.l.b16 %v3016
        %v3058 = vunpack.c.h.b16 %v3016
        %v3059 = vunpack.c.l.b16 %v3017
        %v3060 = vunpack.c.h.b16 %v3017
        %v3061 = vunpack.c.l.b16 %v3018
        %v3062 = vunpack.c.h.b16 %v3018
        %v3063 = vunpack.c.l.b16 %v3019
        %v3064 = vunpack.c.h.b16 %v3019
        %v3065 = vunpack.c.l.b16 %v3020
        %v3066 = vunpack.c.h.b16 %v3020
        %v3067 = vunpack.c.l.b16 %v3021
        %v3068 = vunpack.c.h.b16 %v3021
        %v3069 = vunpack.c.l.b16 %v3022
        %v3070 = vunpack.c.h.b16 %v3022
        %v3071 = vunpack.c.l.b16 %v3023
        %v3072 = vunpack.c.h.b16 %v3023
        %v3073 = vunpack.c.l.b16 %v3024
        %v3074 = vunpack.c.h.b16 %v3024
        %v3075 = vunpack.c.l.b16 %v3025
        %v3076 = vunpack.c.h.b16 %v3025
        %v3077 = vunpack.c.l.b16 %v3026
        %v3078 = vunpack.c.h.b16 %v3026
        %v3079 = vunpack.c.l.b16 %v3027
        %v3080 = vunpack.c.h.b16 %v3027
        %v3081 = vunpack.c.l.b16 %v3028
        %v3082 = vunpack.c.h.b16 %v3028
        %v3083 = vunpack.c.l.b16 %v3029
        %v3084 = vunpack.c.h.b16 %v3029
        %v3085 = vunpack.c.l.b16 %v3030
        %v3086 = vunpack.c.h.b16 %v3030
        %v3087 = vpack.c.b16 %v3059, %v3057
        %v3088 = vpack.c.b16 %v3060, %v3058
        %v3089 = vpack.c.b16 %v3063, %v3061
        %v3090 = vpack.c.b16 %v3064, %v3062
        %v3091 = vpack.c.b16 %v3067, %v3065
        %v3092 = vpack.c.b16 %v3068, %v3066
        %v3093 = vpack.c.b16 %v3071, %v3069
        %v3094 = vpack.c.b16 %v3072, %v3070
        %v3095 = vpack.c.b16 %v3075, %v3073
        %v3096 = vpack.c.b16 %v3076, %v3074
        %v3097 = vpack.c.b16 %v3079, %v3077
        %v3098 = vpack.c.b16 %v3080, %v3078
        %v3099 = vpack.c.b16 %v3083, %v3081
        %v3100 = vpack.c.b16 %v3084, %v3082
        %v3101 = vpack.c.b16 %v3085, %v3085
        %v3102 = vpack.c.b16 %v3086, %v3086
        %vm3117 = vcmask 982016
        %v3119 = vsel %vm3117, %v3041, 0
        %v3122 = vsel %vm1979, %v3101, 0
        %v3125 = vsel %vm1979, %v3102, 0
        %3127 = vmatprep.subr.bf16.mxu0 %v3125
        %3128 = vmatpush1.bf16.msra.mxu0 %v3122
        %3129 = vmatprep.subr.bf16.mxu0 %v3100
        %3130 = vmatpush1.bf16.msra.mxu0 %v3099
        %3131 = vmatprep.subr.bf16.mxu0 %v3098
        %3132 = vmatpush1.bf16.msra.mxu0 %v3097
        %3133 = vmatprep.subr.bf16.mxu0 %v3096
        %3134 = vmatpush1.bf16.msra.mxu0 %v3095
        %3135 = vmatprep.subr.bf16.mxu0 %v3094
        %3136 = vmatpush1.bf16.msra.mxu0 %v3093
        %3137 = vmatprep.subr.bf16.mxu0 %v3092
        %3138 = vmatpush1.bf16.msra.mxu0 %v3091
        %3139 = vmatprep.subr.bf16.mxu0 %v3090
        %3140 = vmatpush1.bf16.msra.mxu0 %v3089
        %3141 = vmatprep.subr.bf16.mxu0 %v3088
        %3142 = vmatpush1.bf16.msra.mxu0 %v3087
        %3143 = vmatprep.subr.bf16.mxu0 0
        %3144 = vmatpush2.bf16.msra.mxu0 0
        %3145 = vmatprep.subr.bf16.mxu0 0
        %3146 = vmatpush2.bf16.msra.mxu0 0
        %3147 = vmatprep.subr.bf16.mxu0 0
        %3148 = vmatpush2.bf16.msra.mxu0 0
        %3149 = vmatprep.subr.bf16.mxu0 0
        %3150 = vmatpush2.bf16.msra.mxu0 0
        %3151 = vmatprep.subr.bf16.mxu0 0
        %3152 = vmatpush2.bf16.msra.mxu0 0
        %3153 = vmatprep.subr.bf16.mxu0 0
        %3154 = vmatpush2.bf16.msra.mxu0 0
        %3155 = vmatprep.subr.bf16.mxu0 0
        %3156 = vmatpush2.bf16.msra.mxu0 0
        %3157 = vmatprep.subr.bf16.mxu0 0
        %3158 = vmatpush2.bf16.msra.mxu0 0
        %3159 = vmatprep.mubr.bf16.mxu0 0
        %3160 = vmatmul.mubr.bf16.gmra.mxu0 %v3119
        %v3161 = vpop.f32.mrf.mxu0
        %v3162 = vadd.f32 0.0, %v3161
        %v3163 = vpop.f32.mrf.mxu0
        %v3164 = vadd.f32 0.0, %v3163
        %v3165 = vpop.f32.mrf.mxu0
        %v3166 = vpop.f32.mrf.mxu0
        %3167 = vdwg.mxu0
        %v3169 = vshrl.u32 %v3032, 16
        %v3171 = vshll.u32 %v3032, 16
        %v3173 = vrot.slane %v3171, 1
        %v3174 = vor.u32 %v3169, %v3173
        %v3176 = vsel %vm3117, %v3174, 0
        %3178 = vmatprep.subr.bf16.mxu0 %v3125
        %3179 = vmatpush1.bf16.msra.mxu0 %v3122
        %3180 = vmatprep.subr.bf16.mxu0 %v3100
        %3181 = vmatpush1.bf16.msra.mxu0 %v3099
        %3182 = vmatprep.subr.bf16.mxu0 %v3098
        %3183 = vmatpush1.bf16.msra.mxu0 %v3097
        %3184 = vmatprep.subr.bf16.mxu0 %v3096
        %3185 = vmatpush1.bf16.msra.mxu0 %v3095
        %3186 = vmatprep.subr.bf16.mxu0 %v3094
        %3187 = vmatpush1.bf16.msra.mxu0 %v3093
        %3188 = vmatprep.subr.bf16.mxu0 %v3092
        %3189 = vmatpush1.bf16.msra.mxu0 %v3091
        %3190 = vmatprep.subr.bf16.mxu0 %v3090
        %3191 = vmatpush1.bf16.msra.mxu0 %v3089
        %3192 = vmatprep.subr.bf16.mxu0 %v3088
        %3193 = vmatpush1.bf16.msra.mxu0 %v3087
        %3194 = vmatprep.subr.bf16.mxu0 0
        %3195 = vmatpush2.bf16.msra.mxu0 0
        %3196 = vmatprep.subr.bf16.mxu0 0
        %3197 = vmatpush2.bf16.msra.mxu0 0
        %3198 = vmatprep.subr.bf16.mxu0 0
        %3199 = vmatpush2.bf16.msra.mxu0 0
        %3200 = vmatprep.subr.bf16.mxu0 0
        %3201 = vmatpush2.bf16.msra.mxu0 0
        %3202 = vmatprep.subr.bf16.mxu0 0
        %3203 = vmatpush2.bf16.msra.mxu0 0
        %3204 = vmatprep.subr.bf16.mxu0 0
        %3205 = vmatpush2.bf16.msra.mxu0 0
        %3206 = vmatprep.subr.bf16.mxu0 0
        %3207 = vmatpush2.bf16.msra.mxu0 0
        %3208 = vmatprep.subr.bf16.mxu0 0
        %3209 = vmatpush2.bf16.msra.mxu0 0
        %3210 = vmatprep.mubr.bf16.mxu0 0
        %3211 = vmatmul.mubr.bf16.gmra.mxu0 %v3176
        %v3212 = vpop.f32.mrf.mxu0
        %v3213 = vadd.f32 0.0, %v3212
        %v3214 = vpop.f32.mrf.mxu0
        %v3215 = vadd.f32 0.0, %v3214
        %v3216 = vpop.f32.mrf.mxu0
        %v3217 = vpop.f32.mrf.mxu0
        %3218 = vdwg.mxu0
        %v3220 = vshrl.u32 %v3033, 16
        %v3222 = vshll.u32 %v3033, 16
        %v3224 = vrot.slane %v3222, 1
        %v3225 = vor.u32 %v3220, %v3224
        %v3227 = vsel %vm3117, %v3225, 0
        %3229 = vmatprep.subr.bf16.mxu0 %v3125
        %3230 = vmatpush1.bf16.msra.mxu0 %v3122
        %3231 = vmatprep.subr.bf16.mxu0 %v3100
        %3232 = vmatpush1.bf16.msra.mxu0 %v3099
        %3233 = vmatprep.subr.bf16.mxu0 %v3098
        %3234 = vmatpush1.bf16.msra.mxu0 %v3097
        %3235 = vmatprep.subr.bf16.mxu0 %v3096
        %3236 = vmatpush1.bf16.msra.mxu0 %v3095
        %3237 = vmatprep.subr.bf16.mxu0 %v3094
        %3238 = vmatpush1.bf16.msra.mxu0 %v3093
        %3239 = vmatprep.subr.bf16.mxu0 %v3092
        %3240 = vmatpush1.bf16.msra.mxu0 %v3091
        %3241 = vmatprep.subr.bf16.mxu0 %v3090
        %3242 = vmatpush1.bf16.msra.mxu0 %v3089
        %3243 = vmatprep.subr.bf16.mxu0 %v3088
        %3244 = vmatpush1.bf16.msra.mxu0 %v3087
        %3245 = vmatprep.subr.bf16.mxu0 0
        %3246 = vmatpush2.bf16.msra.mxu0 0
        %3247 = vmatprep.subr.bf16.mxu0 0
        %3248 = vmatpush2.bf16.msra.mxu0 0
        %3249 = vmatprep.subr.bf16.mxu0 0
        %3250 = vmatpush2.bf16.msra.mxu0 0
        %3251 = vmatprep.subr.bf16.mxu0 0
        %3252 = vmatpush2.bf16.msra.mxu0 0
        %3253 = vmatprep.subr.bf16.mxu0 0
        %3254 = vmatpush2.bf16.msra.mxu0 0
        %3255 = vmatprep.subr.bf16.mxu0 0
        %3256 = vmatpush2.bf16.msra.mxu0 0
        %3257 = vmatprep.subr.bf16.mxu0 0
        %3258 = vmatpush2.bf16.msra.mxu0 0
        %3259 = vmatprep.subr.bf16.mxu0 0
        %3260 = vmatpush2.bf16.msra.mxu0 0
        %3261 = vmatprep.mubr.bf16.mxu0 0
        %3262 = vmatmul.mubr.bf16.gmra.mxu0 %v3227
        %v3263 = vpop.f32.mrf.mxu0
        %v3264 = vadd.f32 0.0, %v3263
        %v3265 = vpop.f32.mrf.mxu0
        %v3266 = vadd.f32 0.0, %v3265
        %v3267 = vpop.f32.mrf.mxu0
        %v3268 = vpop.f32.mrf.mxu0
        %3269 = vdwg.mxu0
        %v3271 = vshrl.u32 %v3034, 16
        %v3273 = vshll.u32 %v3034, 16
        %v3275 = vrot.slane %v3273, 1
        %v3276 = vor.u32 %v3271, %v3275
        %v3278 = vsel %vm3117, %v3276, 0
        %3280 = vmatprep.subr.bf16.mxu0 %v3125
        %3281 = vmatpush1.bf16.msra.mxu0 %v3122
        %3282 = vmatprep.subr.bf16.mxu0 %v3100
        %3283 = vmatpush1.bf16.msra.mxu0 %v3099
        %3284 = vmatprep.subr.bf16.mxu0 %v3098
        %3285 = vmatpush1.bf16.msra.mxu0 %v3097
        %3286 = vmatprep.subr.bf16.mxu0 %v3096
        %3287 = vmatpush1.bf16.msra.mxu0 %v3095
        %3288 = vmatprep.subr.bf16.mxu0 %v3094
        %3289 = vmatpush1.bf16.msra.mxu0 %v3093
        %3290 = vmatprep.subr.bf16.mxu0 %v3092
        %3291 = vmatpush1.bf16.msra.mxu0 %v3091
        %3292 = vmatprep.subr.bf16.mxu0 %v3090
        %3293 = vmatpush1.bf16.msra.mxu0 %v3089
        %3294 = vmatprep.subr.bf16.mxu0 %v3088
        %3295 = vmatpush1.bf16.msra.mxu0 %v3087
        %3296 = vmatprep.subr.bf16.mxu0 0
        %3297 = vmatpush2.bf16.msra.mxu0 0
        %3298 = vmatprep.subr.bf16.mxu0 0
        %3299 = vmatpush2.bf16.msra.mxu0 0
        %3300 = vmatprep.subr.bf16.mxu0 0
        %3301 = vmatpush2.bf16.msra.mxu0 0
        %3302 = vmatprep.subr.bf16.mxu0 0
        %3303 = vmatpush2.bf16.msra.mxu0 0
        %3304 = vmatprep.subr.bf16.mxu0 0
        %3305 = vmatpush2.bf16.msra.mxu0 0
        %3306 = vmatprep.subr.bf16.mxu0 0
        %3307 = vmatpush2.bf16.msra.mxu0 0
        %3308 = vmatprep.subr.bf16.mxu0 0
        %3309 = vmatpush2.bf16.msra.mxu0 0
        %3310 = vmatprep.subr.bf16.mxu0 0
        %3311 = vmatpush2.bf16.msra.mxu0 0
        %3312 = vmatprep.mubr.bf16.mxu0 0
        %3313 = vmatmul.mubr.bf16.gmra.mxu0 %v3278
        %v3314 = vpop.f32.mrf.mxu0
        %v3315 = vadd.f32 0.0, %v3314
        %v3316 = vpop.f32.mrf.mxu0
        %v3317 = vadd.f32 0.0, %v3316
        %v3318 = vpop.f32.mrf.mxu0
        %v3319 = vpop.f32.mrf.mxu0
        %3320 = vdwg.mxu0
        %v3336 = vunpack.c.l.b16 %v2996
        %v3337 = vunpack.c.h.b16 %v2996
        %v3338 = vunpack.c.l.b16 %v2997
        %v3339 = vunpack.c.h.b16 %v2997
        %v3340 = vunpack.c.l.b16 %v2998
        %v3341 = vunpack.c.h.b16 %v2998
        %v3342 = vunpack.c.l.b16 %v2999
        %v3343 = vunpack.c.h.b16 %v2999
        %v3344 = vunpack.c.l.b16 %v3000
        %v3345 = vunpack.c.h.b16 %v3000
        %v3346 = vunpack.c.l.b16 %v3001
        %v3347 = vunpack.c.h.b16 %v3001
        %v3348 = vunpack.c.l.b16 %v3002
        %v3349 = vunpack.c.h.b16 %v3002
        %v3350 = vunpack.c.l.b16 %v3003
        %v3351 = vunpack.c.h.b16 %v3003
        %v3352 = vunpack.c.l.b16 %v3004
        %v3353 = vunpack.c.h.b16 %v3004
        %v3354 = vunpack.c.l.b16 %v3005
        %v3355 = vunpack.c.h.b16 %v3005
        %v3356 = vunpack.c.l.b16 %v3006
        %v3357 = vunpack.c.h.b16 %v3006
        %v3358 = vunpack.c.l.b16 %v3007
        %v3359 = vunpack.c.h.b16 %v3007
        %v3360 = vunpack.c.l.b16 %v3008
        %v3361 = vunpack.c.h.b16 %v3008
        %v3362 = vunpack.c.l.b16 %v3009
        %v3363 = vunpack.c.h.b16 %v3009
        %v3364 = vunpack.c.l.b16 %v3010
        %v3365 = vunpack.c.h.b16 %v3010
        %v3366 = vpack.c.b16 %v3338, %v3336
        %v3367 = vpack.c.b16 %v3339, %v3337
        %v3368 = vpack.c.b16 %v3342, %v3340
        %v3369 = vpack.c.b16 %v3343, %v3341
        %v3370 = vpack.c.b16 %v3346, %v3344
        %v3371 = vpack.c.b16 %v3347, %v3345
        %v3372 = vpack.c.b16 %v3350, %v3348
        %v3373 = vpack.c.b16 %v3351, %v3349
        %v3374 = vpack.c.b16 %v3354, %v3352
        %v3375 = vpack.c.b16 %v3355, %v3353
        %v3376 = vpack.c.b16 %v3358, %v3356
        %v3377 = vpack.c.b16 %v3359, %v3357
        %v3378 = vpack.c.b16 %v3362, %v3360
        %v3379 = vpack.c.b16 %v3363, %v3361
        %v3380 = vpack.c.b16 %v3364, %v3364
        %v3381 = vpack.c.b16 %v3365, %v3365
        %v3397 = vsel %vm3117, %v3011, 0
        %v3400 = vsel %vm1979, %v3380, 0
        %v3403 = vsel %vm1979, %v3381, 0
        %3405 = vmatprep.subr.bf16.mxu0 %v3403
        %3406 = vmatpush1.bf16.msra.mxu0 %v3400
        %3407 = vmatprep.subr.bf16.mxu0 %v3379
        %3408 = vmatpush1.bf16.msra.mxu0 %v3378
        %3409 = vmatprep.subr.bf16.mxu0 %v3377
        %3410 = vmatpush1.bf16.msra.mxu0 %v3376
        %3411 = vmatprep.subr.bf16.mxu0 %v3375
        %3412 = vmatpush1.bf16.msra.mxu0 %v3374
        %3413 = vmatprep.subr.bf16.mxu0 %v3373
        %3414 = vmatpush1.bf16.msra.mxu0 %v3372
        %3415 = vmatprep.subr.bf16.mxu0 %v3371
        %3416 = vmatpush1.bf16.msra.mxu0 %v3370
        %3417 = vmatprep.subr.bf16.mxu0 %v3369
        %3418 = vmatpush1.bf16.msra.mxu0 %v3368
        %3419 = vmatprep.subr.bf16.mxu0 %v3367
        %3420 = vmatpush1.bf16.msra.mxu0 %v3366
        %3421 = vmatprep.subr.bf16.mxu0 0
        %3422 = vmatpush2.bf16.msra.mxu0 0
        %3423 = vmatprep.subr.bf16.mxu0 0
        %3424 = vmatpush2.bf16.msra.mxu0 0
        %3425 = vmatprep.subr.bf16.mxu0 0
        %3426 = vmatpush2.bf16.msra.mxu0 0
        %3427 = vmatprep.subr.bf16.mxu0 0
        %3428 = vmatpush2.bf16.msra.mxu0 0
        %3429 = vmatprep.subr.bf16.mxu0 0
        %3430 = vmatpush2.bf16.msra.mxu0 0
        %3431 = vmatprep.subr.bf16.mxu0 0
        %3432 = vmatpush2.bf16.msra.mxu0 0
        %3433 = vmatprep.subr.bf16.mxu0 0
        %3434 = vmatpush2.bf16.msra.mxu0 0
        %3435 = vmatprep.subr.bf16.mxu0 0
        %3436 = vmatpush2.bf16.msra.mxu0 0
        %3437 = vmatprep.mubr.bf16.mxu0 0
        %3438 = vmatmul.mubr.bf16.gmra.mxu0 %v3397
        %v3439 = vpop.f32.mrf.mxu0
        %v3440 = vadd.f32 %v3162, %v3439
        %v3441 = vpop.f32.mrf.mxu0
        %v3442 = vadd.f32 %v3164, %v3441
        %v3443 = vpop.f32.mrf.mxu0
        %v3444 = vpop.f32.mrf.mxu0
        %3445 = vdwg.mxu0
        %v3447 = vsel %vm3117, %v3012, 0
        %3449 = vmatprep.subr.bf16.mxu0 %v3403
        %3450 = vmatpush1.bf16.msra.mxu0 %v3400
        %3451 = vmatprep.subr.bf16.mxu0 %v3379
        %3452 = vmatpush1.bf16.msra.mxu0 %v3378
        %3453 = vmatprep.subr.bf16.mxu0 %v3377
        %3454 = vmatpush1.bf16.msra.mxu0 %v3376
        %3455 = vmatprep.subr.bf16.mxu0 %v3375
        %3456 = vmatpush1.bf16.msra.mxu0 %v3374
        %3457 = vmatprep.subr.bf16.mxu0 %v3373
        %3458 = vmatpush1.bf16.msra.mxu0 %v3372
        %3459 = vmatprep.subr.bf16.mxu0 %v3371
        %3460 = vmatpush1.bf16.msra.mxu0 %v3370
        %3461 = vmatprep.subr.bf16.mxu0 %v3369
        %3462 = vmatpush1.bf16.msra.mxu0 %v3368
        %3463 = vmatprep.subr.bf16.mxu0 %v3367
        %3464 = vmatpush1.bf16.msra.mxu0 %v3366
        %3465 = vmatprep.subr.bf16.mxu0 0
        %3466 = vmatpush2.bf16.msra.mxu0 0
        %3467 = vmatprep.subr.bf16.mxu0 0
        %3468 = vmatpush2.bf16.msra.mxu0 0
        %3469 = vmatprep.subr.bf16.mxu0 0
        %3470 = vmatpush2.bf16.msra.mxu0 0
        %3471 = vmatprep.subr.bf16.mxu0 0
        %3472 = vmatpush2.bf16.msra.mxu0 0
        %3473 = vmatprep.subr.bf16.mxu0 0
        %3474 = vmatpush2.bf16.msra.mxu0 0
        %3475 = vmatprep.subr.bf16.mxu0 0
        %3476 = vmatpush2.bf16.msra.mxu0 0
        %3477 = vmatprep.subr.bf16.mxu0 0
        %3478 = vmatpush2.bf16.msra.mxu0 0
        %3479 = vmatprep.subr.bf16.mxu0 0
        %3480 = vmatpush2.bf16.msra.mxu0 0
        %3481 = vmatprep.mubr.bf16.mxu0 0
        %3482 = vmatmul.mubr.bf16.gmra.mxu0 %v3447
        %v3483 = vpop.f32.mrf.mxu0
        %v3484 = vadd.f32 %v3213, %v3483
        %v3485 = vpop.f32.mrf.mxu0
        %v3486 = vadd.f32 %v3215, %v3485
        %v3487 = vpop.f32.mrf.mxu0
        %v3488 = vpop.f32.mrf.mxu0
        %3489 = vdwg.mxu0
        %v3491 = vsel %vm3117, %v3013, 0
        %3493 = vmatprep.subr.bf16.mxu0 %v3403
        %3494 = vmatpush1.bf16.msra.mxu0 %v3400
        %3495 = vmatprep.subr.bf16.mxu0 %v3379
        %3496 = vmatpush1.bf16.msra.mxu0 %v3378
        %3497 = vmatprep.subr.bf16.mxu0 %v3377
        %3498 = vmatpush1.bf16.msra.mxu0 %v3376
        %3499 = vmatprep.subr.bf16.mxu0 %v3375
        %3500 = vmatpush1.bf16.msra.mxu0 %v3374
        %3501 = vmatprep.subr.bf16.mxu0 %v3373
        %3502 = vmatpush1.bf16.msra.mxu0 %v3372
        %3503 = vmatprep.subr.bf16.mxu0 %v3371
        %3504 = vmatpush1.bf16.msra.mxu0 %v3370
        %3505 = vmatprep.subr.bf16.mxu0 %v3369
        %3506 = vmatpush1.bf16.msra.mxu0 %v3368
        %3507 = vmatprep.subr.bf16.mxu0 %v3367
        %3508 = vmatpush1.bf16.msra.mxu0 %v3366
        %3509 = vmatprep.subr.bf16.mxu0 0
        %3510 = vmatpush2.bf16.msra.mxu0 0
        %3511 = vmatprep.subr.bf16.mxu0 0
        %3512 = vmatpush2.bf16.msra.mxu0 0
        %3513 = vmatprep.subr.bf16.mxu0 0
        %3514 = vmatpush2.bf16.msra.mxu0 0
        %3515 = vmatprep.subr.bf16.mxu0 0
        %3516 = vmatpush2.bf16.msra.mxu0 0
        %3517 = vmatprep.subr.bf16.mxu0 0
        %3518 = vmatpush2.bf16.msra.mxu0 0
        %3519 = vmatprep.subr.bf16.mxu0 0
        %3520 = vmatpush2.bf16.msra.mxu0 0
        %3521 = vmatprep.subr.bf16.mxu0 0
        %3522 = vmatpush2.bf16.msra.mxu0 0
        %3523 = vmatprep.subr.bf16.mxu0 0
        %3524 = vmatpush2.bf16.msra.mxu0 0
        %3525 = vmatprep.mubr.bf16.mxu0 0
        %3526 = vmatmul.mubr.bf16.gmra.mxu0 %v3491
        %v3527 = vpop.f32.mrf.mxu0
        %v3528 = vadd.f32 %v3264, %v3527
        %v3529 = vpop.f32.mrf.mxu0
        %v3530 = vadd.f32 %v3266, %v3529
        %v3531 = vpop.f32.mrf.mxu0
        %v3532 = vpop.f32.mrf.mxu0
        %3533 = vdwg.mxu0
        %v3535 = vsel %vm3117, %v3014, 0
        %3537 = vmatprep.subr.bf16.mxu0 %v3403
        %3538 = vmatpush1.bf16.msra.mxu0 %v3400
        %3539 = vmatprep.subr.bf16.mxu0 %v3379
        %3540 = vmatpush1.bf16.msra.mxu0 %v3378
        %3541 = vmatprep.subr.bf16.mxu0 %v3377
        %3542 = vmatpush1.bf16.msra.mxu0 %v3376
        %3543 = vmatprep.subr.bf16.mxu0 %v3375
        %3544 = vmatpush1.bf16.msra.mxu0 %v3374
        %3545 = vmatprep.subr.bf16.mxu0 %v3373
        %3546 = vmatpush1.bf16.msra.mxu0 %v3372
        %3547 = vmatprep.subr.bf16.mxu0 %v3371
        %3548 = vmatpush1.bf16.msra.mxu0 %v3370
        %3549 = vmatprep.subr.bf16.mxu0 %v3369
        %3550 = vmatpush1.bf16.msra.mxu0 %v3368
        %3551 = vmatprep.subr.bf16.mxu0 %v3367
        %3552 = vmatpush1.bf16.msra.mxu0 %v3366
        %3553 = vmatprep.subr.bf16.mxu0 0
        %3554 = vmatpush2.bf16.msra.mxu0 0
        %3555 = vmatprep.subr.bf16.mxu0 0
        %3556 = vmatpush2.bf16.msra.mxu0 0
        %3557 = vmatprep.subr.bf16.mxu0 0
        %3558 = vmatpush2.bf16.msra.mxu0 0
        %3559 = vmatprep.subr.bf16.mxu0 0
        %3560 = vmatpush2.bf16.msra.mxu0 0
        %3561 = vmatprep.subr.bf16.mxu0 0
        %3562 = vmatpush2.bf16.msra.mxu0 0
        %3563 = vmatprep.subr.bf16.mxu0 0
        %3564 = vmatpush2.bf16.msra.mxu0 0
        %3565 = vmatprep.subr.bf16.mxu0 0
        %3566 = vmatpush2.bf16.msra.mxu0 0
        %3567 = vmatprep.subr.bf16.mxu0 0
        %3568 = vmatpush2.bf16.msra.mxu0 0
        %3569 = vmatprep.mubr.bf16.mxu0 0
        %3570 = vmatmul.mubr.bf16.gmra.mxu0 %v3535
        %v3571 = vpop.f32.mrf.mxu0
        %v3572 = vadd.f32 %v3315, %v3571
        %v3573 = vpop.f32.mrf.mxu0
        %v3574 = vadd.f32 %v3317, %v3573
        %v3575 = vpop.f32.mrf.mxu0
        %v3576 = vpop.f32.mrf.mxu0
        %3577 = vdwg.mxu0
        %s3578 = scalar_lea.vmem %s5, 240
        %v3579 = vld [vmem:[%s3578] sm:$0xff]
        %v3580 = vld [vmem:[%s3578 + $0x8] sm:$0xff]
        %v3581 = vld [vmem:[%s3578 + $0x10] sm:$0xff]
        %v3582 = vld [vmem:[%s3578 + $0x18] sm:$0xff]
        %v3583 = vld [vmem:[%s3578 + $0x20] sm:$0xff]
        %v3584 = vld [vmem:[%s3578 + $0x28] sm:$0xff]
        %v3585 = vld [vmem:[%s3578 + $0x30] sm:$0xff]
        %v3586 = vld [vmem:[%s3578 + $0x38] sm:$0xff]
        %v3587 = vld [vmem:[%s3578 + $0x40] sm:$0xff]
        %v3588 = vld [vmem:[%s3578 + $0x48] sm:$0xff]
        %v3589 = vld [vmem:[%s3578 + $0x50] sm:$0xff]
        %v3590 = vld [vmem:[%s3578 + $0x58] sm:$0xff]
        %v3591 = vld [vmem:[%s3578 + $0x60] sm:$0xff]
        %v3592 = vld [vmem:[%s3578 + $0x68] sm:$0xff]
        %v3593 = vld [vmem:[%s3578 + $0x70] sm:$0xff]
        %v3595 = vrot.slane %v3031, 1
        %v3611 = vunpack.c.l.b16 %v3579
        %v3612 = vunpack.c.h.b16 %v3579
        %v3613 = vunpack.c.l.b16 %v3580
        %v3614 = vunpack.c.h.b16 %v3580
        %v3615 = vunpack.c.l.b16 %v3581
        %v3616 = vunpack.c.h.b16 %v3581
        %v3617 = vunpack.c.l.b16 %v3582
        %v3618 = vunpack.c.h.b16 %v3582
        %v3619 = vunpack.c.l.b16 %v3583
        %v3620 = vunpack.c.h.b16 %v3583
        %v3621 = vunpack.c.l.b16 %v3584
        %v3622 = vunpack.c.h.b16 %v3584
        %v3623 = vunpack.c.l.b16 %v3585
        %v3624 = vunpack.c.h.b16 %v3585
        %v3625 = vunpack.c.l.b16 %v3586
        %v3626 = vunpack.c.h.b16 %v3586
        %v3627 = vunpack.c.l.b16 %v3587
        %v3628 = vunpack.c.h.b16 %v3587
        %v3629 = vunpack.c.l.b16 %v3588
        %v3630 = vunpack.c.h.b16 %v3588
        %v3631 = vunpack.c.l.b16 %v3589
        %v3632 = vunpack.c.h.b16 %v3589
        %v3633 = vunpack.c.l.b16 %v3590
        %v3634 = vunpack.c.h.b16 %v3590
        %v3635 = vunpack.c.l.b16 %v3591
        %v3636 = vunpack.c.h.b16 %v3591
        %v3637 = vunpack.c.l.b16 %v3592
        %v3638 = vunpack.c.h.b16 %v3592
        %v3639 = vunpack.c.l.b16 %v3593
        %v3640 = vunpack.c.h.b16 %v3593
        %v3641 = vpack.c.b16 %v3613, %v3611
        %v3642 = vpack.c.b16 %v3614, %v3612
        %v3643 = vpack.c.b16 %v3617, %v3615
        %v3644 = vpack.c.b16 %v3618, %v3616
        %v3645 = vpack.c.b16 %v3621, %v3619
        %v3646 = vpack.c.b16 %v3622, %v3620
        %v3647 = vpack.c.b16 %v3625, %v3623
        %v3648 = vpack.c.b16 %v3626, %v3624
        %v3649 = vpack.c.b16 %v3629, %v3627
        %v3650 = vpack.c.b16 %v3630, %v3628
        %v3651 = vpack.c.b16 %v3633, %v3631
        %v3652 = vpack.c.b16 %v3634, %v3632
        %v3653 = vpack.c.b16 %v3637, %v3635
        %v3654 = vpack.c.b16 %v3638, %v3636
        %v3655 = vpack.c.b16 %v3639, %v3639
        %v3656 = vpack.c.b16 %v3640, %v3640
        %v3672 = vsel %vm3117, %v3595, 0
        %v3675 = vsel %vm1979, %v3655, 0
        %v3678 = vsel %vm1979, %v3656, 0
        %3680 = vmatprep.subr.bf16.mxu0 %v3678
        %3681 = vmatpush1.bf16.msra.mxu0 %v3675
        %3682 = vmatprep.subr.bf16.mxu0 %v3654
        %3683 = vmatpush1.bf16.msra.mxu0 %v3653
        %3684 = vmatprep.subr.bf16.mxu0 %v3652
        %3685 = vmatpush1.bf16.msra.mxu0 %v3651
        %3686 = vmatprep.subr.bf16.mxu0 %v3650
        %3687 = vmatpush1.bf16.msra.mxu0 %v3649
        %3688 = vmatprep.subr.bf16.mxu0 %v3648
        %3689 = vmatpush1.bf16.msra.mxu0 %v3647
        %3690 = vmatprep.subr.bf16.mxu0 %v3646
        %3691 = vmatpush1.bf16.msra.mxu0 %v3645
        %3692 = vmatprep.subr.bf16.mxu0 %v3644
        %3693 = vmatpush1.bf16.msra.mxu0 %v3643
        %3694 = vmatprep.subr.bf16.mxu0 %v3642
        %3695 = vmatpush1.bf16.msra.mxu0 %v3641
        %3696 = vmatprep.subr.bf16.mxu0 0
        %3697 = vmatpush2.bf16.msra.mxu0 0
        %3698 = vmatprep.subr.bf16.mxu0 0
        %3699 = vmatpush2.bf16.msra.mxu0 0
        %3700 = vmatprep.subr.bf16.mxu0 0
        %3701 = vmatpush2.bf16.msra.mxu0 0
        %3702 = vmatprep.subr.bf16.mxu0 0
        %3703 = vmatpush2.bf16.msra.mxu0 0
        %3704 = vmatprep.subr.bf16.mxu0 0
        %3705 = vmatpush2.bf16.msra.mxu0 0
        %3706 = vmatprep.subr.bf16.mxu0 0
        %3707 = vmatpush2.bf16.msra.mxu0 0
        %3708 = vmatprep.subr.bf16.mxu0 0
        %3709 = vmatpush2.bf16.msra.mxu0 0
        %3710 = vmatprep.subr.bf16.mxu0 0
        %3711 = vmatpush2.bf16.msra.mxu0 0
        %3712 = vmatprep.mubr.bf16.mxu0 0
        %3713 = vmatmul.mubr.bf16.gmra.mxu0 %v3672
        %v3714 = vpop.f32.mrf.mxu0
        %v3715 = vadd.f32 0.0, %v3714
        %v3716 = vpop.f32.mrf.mxu0
        %v3717 = vadd.f32 0.0, %v3716
        %v3718 = vpop.f32.mrf.mxu0
        %v3719 = vpop.f32.mrf.mxu0
        %3720 = vdwg.mxu0
        %v3722 = vrot.slane %v3032, 1
        %v3724 = vsel %vm3117, %v3722, 0
        %3726 = vmatprep.subr.bf16.mxu0 %v3678
        %3727 = vmatpush1.bf16.msra.mxu0 %v3675
        %3728 = vmatprep.subr.bf16.mxu0 %v3654
        %3729 = vmatpush1.bf16.msra.mxu0 %v3653
        %3730 = vmatprep.subr.bf16.mxu0 %v3652
        %3731 = vmatpush1.bf16.msra.mxu0 %v3651
        %3732 = vmatprep.subr.bf16.mxu0 %v3650
        %3733 = vmatpush1.bf16.msra.mxu0 %v3649
        %3734 = vmatprep.subr.bf16.mxu0 %v3648
        %3735 = vmatpush1.bf16.msra.mxu0 %v3647
        %3736 = vmatprep.subr.bf16.mxu0 %v3646
        %3737 = vmatpush1.bf16.msra.mxu0 %v3645
        %3738 = vmatprep.subr.bf16.mxu0 %v3644
        %3739 = vmatpush1.bf16.msra.mxu0 %v3643
        %3740 = vmatprep.subr.bf16.mxu0 %v3642
        %3741 = vmatpush1.bf16.msra.mxu0 %v3641
        %3742 = vmatprep.subr.bf16.mxu0 0
        %3743 = vmatpush2.bf16.msra.mxu0 0
        %3744 = vmatprep.subr.bf16.mxu0 0
        %3745 = vmatpush2.bf16.msra.mxu0 0
        %3746 = vmatprep.subr.bf16.mxu0 0
        %3747 = vmatpush2.bf16.msra.mxu0 0
        %3748 = vmatprep.subr.bf16.mxu0 0
        %3749 = vmatpush2.bf16.msra.mxu0 0
        %3750 = vmatprep.subr.bf16.mxu0 0
        %3751 = vmatpush2.bf16.msra.mxu0 0
        %3752 = vmatprep.subr.bf16.mxu0 0
        %3753 = vmatpush2.bf16.msra.mxu0 0
        %3754 = vmatprep.subr.bf16.mxu0 0
        %3755 = vmatpush2.bf16.msra.mxu0 0
        %3756 = vmatprep.subr.bf16.mxu0 0
        %3757 = vmatpush2.bf16.msra.mxu0 0
        %3758 = vmatprep.mubr.bf16.mxu0 0
        %3759 = vmatmul.mubr.bf16.gmra.mxu0 %v3724
        %v3760 = vpop.f32.mrf.mxu0
        %v3761 = vadd.f32 0.0, %v3760
        %v3762 = vpop.f32.mrf.mxu0
        %v3763 = vadd.f32 0.0, %v3762
        %v3764 = vpop.f32.mrf.mxu0
        %v3765 = vpop.f32.mrf.mxu0
        %3766 = vdwg.mxu0
        %v3768 = vrot.slane %v3033, 1
        %v3770 = vsel %vm3117, %v3768, 0
        %3772 = vmatprep.subr.bf16.mxu0 %v3678
        %3773 = vmatpush1.bf16.msra.mxu0 %v3675
        %3774 = vmatprep.subr.bf16.mxu0 %v3654
        %3775 = vmatpush1.bf16.msra.mxu0 %v3653
        %3776 = vmatprep.subr.bf16.mxu0 %v3652
        %3777 = vmatpush1.bf16.msra.mxu0 %v3651
        %3778 = vmatprep.subr.bf16.mxu0 %v3650
        %3779 = vmatpush1.bf16.msra.mxu0 %v3649
        %3780 = vmatprep.subr.bf16.mxu0 %v3648
        %3781 = vmatpush1.bf16.msra.mxu0 %v3647
        %3782 = vmatprep.subr.bf16.mxu0 %v3646
        %3783 = vmatpush1.bf16.msra.mxu0 %v3645
        %3784 = vmatprep.subr.bf16.mxu0 %v3644
        %3785 = vmatpush1.bf16.msra.mxu0 %v3643
        %3786 = vmatprep.subr.bf16.mxu0 %v3642
        %3787 = vmatpush1.bf16.msra.mxu0 %v3641
        %3788 = vmatprep.subr.bf16.mxu0 0
        %3789 = vmatpush2.bf16.msra.mxu0 0
        %3790 = vmatprep.subr.bf16.mxu0 0
        %3791 = vmatpush2.bf16.msra.mxu0 0
        %3792 = vmatprep.subr.bf16.mxu0 0
        %3793 = vmatpush2.bf16.msra.mxu0 0
        %3794 = vmatprep.subr.bf16.mxu0 0
        %3795 = vmatpush2.bf16.msra.mxu0 0
        %3796 = vmatprep.subr.bf16.mxu0 0
        %3797 = vmatpush2.bf16.msra.mxu0 0
        %3798 = vmatprep.subr.bf16.mxu0 0
        %3799 = vmatpush2.bf16.msra.mxu0 0
        %3800 = vmatprep.subr.bf16.mxu0 0
        %3801 = vmatpush2.bf16.msra.mxu0 0
        %3802 = vmatprep.subr.bf16.mxu0 0
        %3803 = vmatpush2.bf16.msra.mxu0 0
        %3804 = vmatprep.mubr.bf16.mxu0 0
        %3805 = vmatmul.mubr.bf16.gmra.mxu0 %v3770
        %v3806 = vpop.f32.mrf.mxu0
        %v3807 = vadd.f32 0.0, %v3806
        %v3808 = vpop.f32.mrf.mxu0
        %v3809 = vadd.f32 0.0, %v3808
        %v3810 = vpop.f32.mrf.mxu0
        %v3811 = vpop.f32.mrf.mxu0
        %3812 = vdwg.mxu0
        %v3814 = vrot.slane %v3034, 1
        %v3816 = vsel %vm3117, %v3814, 0
        %3818 = vmatprep.subr.bf16.mxu0 %v3678
        %3819 = vmatpush1.bf16.msra.mxu0 %v3675
        %3820 = vmatprep.subr.bf16.mxu0 %v3654
        %3821 = vmatpush1.bf16.msra.mxu0 %v3653
        %3822 = vmatprep.subr.bf16.mxu0 %v3652
        %3823 = vmatpush1.bf16.msra.mxu0 %v3651
        %3824 = vmatprep.subr.bf16.mxu0 %v3650
        %3825 = vmatpush1.bf16.msra.mxu0 %v3649
        %3826 = vmatprep.subr.bf16.mxu0 %v3648
        %3827 = vmatpush1.bf16.msra.mxu0 %v3647
        %3828 = vmatprep.subr.bf16.mxu0 %v3646
        %3829 = vmatpush1.bf16.msra.mxu0 %v3645
        %3830 = vmatprep.subr.bf16.mxu0 %v3644
        %3831 = vmatpush1.bf16.msra.mxu0 %v3643
        %3832 = vmatprep.subr.bf16.mxu0 %v3642
        %3833 = vmatpush1.bf16.msra.mxu0 %v3641
        %3834 = vmatprep.subr.bf16.mxu0 0
        %3835 = vmatpush2.bf16.msra.mxu0 0
        %3836 = vmatprep.subr.bf16.mxu0 0
        %3837 = vmatpush2.bf16.msra.mxu0 0
        %3838 = vmatprep.subr.bf16.mxu0 0
        %3839 = vmatpush2.bf16.msra.mxu0 0
        %3840 = vmatprep.subr.bf16.mxu0 0
        %3841 = vmatpush2.bf16.msra.mxu0 0
        %3842 = vmatprep.subr.bf16.mxu0 0
        %3843 = vmatpush2.bf16.msra.mxu0 0
        %3844 = vmatprep.subr.bf16.mxu0 0
        %3845 = vmatpush2.bf16.msra.mxu0 0
        %3846 = vmatprep.subr.bf16.mxu0 0
        %3847 = vmatpush2.bf16.msra.mxu0 0
        %3848 = vmatprep.subr.bf16.mxu0 0
        %3849 = vmatpush2.bf16.msra.mxu0 0
        %3850 = vmatprep.mubr.bf16.mxu0 0
        %3851 = vmatmul.mubr.bf16.gmra.mxu0 %v3816
        %v3852 = vpop.f32.mrf.mxu0
        %v3853 = vadd.f32 0.0, %v3852
        %v3854 = vpop.f32.mrf.mxu0
        %v3855 = vadd.f32 0.0, %v3854
        %v3856 = vpop.f32.mrf.mxu0
        %v3857 = vpop.f32.mrf.mxu0
        %3858 = vdwg.mxu0
        %v3859 = vadd.f32 %v3440, %v3715
        %v3860 = vadd.f32 %v3442, %v3717
        %v3861 = vadd.f32 %v3484, %v3761
        %v3862 = vadd.f32 %v3486, %v3763
        %v3863 = vadd.f32 %v3528, %v3807
        %v3864 = vadd.f32 %v3530, %v3809
        %v3865 = vadd.f32 %v3572, %v3853
        %v3866 = vadd.f32 %v3574, %v3855
        %s3867 = scalar_lea.vmem %s5, 360
        %v3868 = vld [vmem:[%s3867] sm:$0xff]
        %v3869 = vld [vmem:[%s3867 + $0x8] sm:$0xff]
        %v3870 = vld [vmem:[%s3867 + $0x10] sm:$0xff]
        %v3871 = vld [vmem:[%s3867 + $0x18] sm:$0xff]
        %v3872 = vld [vmem:[%s3867 + $0x20] sm:$0xff]
        %v3873 = vld [vmem:[%s3867 + $0x28] sm:$0xff]
        %v3874 = vld [vmem:[%s3867 + $0x30] sm:$0xff]
        %v3875 = vld [vmem:[%s3867 + $0x38] sm:$0xff]
        %v3876 = vld [vmem:[%s3867 + $0x40] sm:$0xff]
        %v3877 = vld [vmem:[%s3867 + $0x48] sm:$0xff]
        %v3878 = vld [vmem:[%s3867 + $0x50] sm:$0xff]
        %v3879 = vld [vmem:[%s3867 + $0x58] sm:$0xff]
        %v3880 = vld [vmem:[%s3867 + $0x60] sm:$0xff]
        %v3881 = vld [vmem:[%s3867 + $0x68] sm:$0xff]
        %v3882 = vld [vmem:[%s3867 + $0x70] sm:$0xff]
        %v3883 = vrot.slane %v3036, 1
        %v3884 = vrot.slane %v3038, 2
        %v3885 = vor.u32 %v3883, %v3884
        %v3901 = vunpack.c.l.b16 %v3868
        %v3902 = vunpack.c.h.b16 %v3868
        %v3903 = vunpack.c.l.b16 %v3869
        %v3904 = vunpack.c.h.b16 %v3869
        %v3905 = vunpack.c.l.b16 %v3870
        %v3906 = vunpack.c.h.b16 %v3870
        %v3907 = vunpack.c.l.b16 %v3871
        %v3908 = vunpack.c.h.b16 %v3871
        %v3909 = vunpack.c.l.b16 %v3872
        %v3910 = vunpack.c.h.b16 %v3872
        %v3911 = vunpack.c.l.b16 %v3873
        %v3912 = vunpack.c.h.b16 %v3873
        %v3913 = vunpack.c.l.b16 %v3874
        %v3914 = vunpack.c.h.b16 %v3874
        %v3915 = vunpack.c.l.b16 %v3875
        %v3916 = vunpack.c.h.b16 %v3875
        %v3917 = vunpack.c.l.b16 %v3876
        %v3918 = vunpack.c.h.b16 %v3876
        %v3919 = vunpack.c.l.b16 %v3877
        %v3920 = vunpack.c.h.b16 %v3877
        %v3921 = vunpack.c.l.b16 %v3878
        %v3922 = vunpack.c.h.b16 %v3878
        %v3923 = vunpack.c.l.b16 %v3879
        %v3924 = vunpack.c.h.b16 %v3879
        %v3925 = vunpack.c.l.b16 %v3880
        %v3926 = vunpack.c.h.b16 %v3880
        %v3927 = vunpack.c.l.b16 %v3881
        %v3928 = vunpack.c.h.b16 %v3881
        %v3929 = vunpack.c.l.b16 %v3882
        %v3930 = vunpack.c.h.b16 %v3882
        %v3931 = vpack.c.b16 %v3903, %v3901
        %v3932 = vpack.c.b16 %v3904, %v3902
        %v3933 = vpack.c.b16 %v3907, %v3905
        %v3934 = vpack.c.b16 %v3908, %v3906
        %v3935 = vpack.c.b16 %v3911, %v3909
        %v3936 = vpack.c.b16 %v3912, %v3910
        %v3937 = vpack.c.b16 %v3915, %v3913
        %v3938 = vpack.c.b16 %v3916, %v3914
        %v3939 = vpack.c.b16 %v3919, %v3917
        %v3940 = vpack.c.b16 %v3920, %v3918
        %v3941 = vpack.c.b16 %v3923, %v3921
        %v3942 = vpack.c.b16 %v3924, %v3922
        %v3943 = vpack.c.b16 %v3927, %v3925
        %v3944 = vpack.c.b16 %v3928, %v3926
        %v3945 = vpack.c.b16 %v3929, %v3929
        %v3946 = vpack.c.b16 %v3930, %v3930
        %v3962 = vsel %vm3117, %v3885, 0
        %v3965 = vsel %vm1979, %v3945, 0
        %v3968 = vsel %vm1979, %v3946, 0
        %3970 = vmatprep.subr.bf16.mxu0 %v3968
        %3971 = vmatpush1.bf16.msra.mxu0 %v3965
        %3972 = vmatprep.subr.bf16.mxu0 %v3944
        %3973 = vmatpush1.bf16.msra.mxu0 %v3943
        %3974 = vmatprep.subr.bf16.mxu0 %v3942
        %3975 = vmatpush1.bf16.msra.mxu0 %v3941
        %3976 = vmatprep.subr.bf16.mxu0 %v3940
        %3977 = vmatpush1.bf16.msra.mxu0 %v3939
        %3978 = vmatprep.subr.bf16.mxu0 %v3938
        %3979 = vmatpush1.bf16.msra.mxu0 %v3937
        %3980 = vmatprep.subr.bf16.mxu0 %v3936
        %3981 = vmatpush1.bf16.msra.mxu0 %v3935
        %3982 = vmatprep.subr.bf16.mxu0 %v3934
        %3983 = vmatpush1.bf16.msra.mxu0 %v3933
        %3984 = vmatprep.subr.bf16.mxu0 %v3932
        %3985 = vmatpush1.bf16.msra.mxu0 %v3931
        %3986 = vmatprep.subr.bf16.mxu0 0
        %3987 = vmatpush2.bf16.msra.mxu0 0
        %3988 = vmatprep.subr.bf16.mxu0 0
        %3989 = vmatpush2.bf16.msra.mxu0 0
        %3990 = vmatprep.subr.bf16.mxu0 0
        %3991 = vmatpush2.bf16.msra.mxu0 0
        %3992 = vmatprep.subr.bf16.mxu0 0
        %3993 = vmatpush2.bf16.msra.mxu0 0
        %3994 = vmatprep.subr.bf16.mxu0 0
        %3995 = vmatpush2.bf16.msra.mxu0 0
        %3996 = vmatprep.subr.bf16.mxu0 0
        %3997 = vmatpush2.bf16.msra.mxu0 0
        %3998 = vmatprep.subr.bf16.mxu0 0
        %3999 = vmatpush2.bf16.msra.mxu0 0
        %4000 = vmatprep.subr.bf16.mxu0 0
        %4001 = vmatpush2.bf16.msra.mxu0 0
        %4002 = vmatprep.mubr.bf16.mxu0 0
        %4003 = vmatmul.mubr.bf16.gmra.mxu0 %v3962
        %v4004 = vpop.f32.mrf.mxu0
        %v4005 = vadd.f32 0.0, %v4004
        %v4006 = vpop.f32.mrf.mxu0
        %v4007 = vadd.f32 0.0, %v4006
        %v4008 = vpop.f32.mrf.mxu0
        %v4009 = vpop.f32.mrf.mxu0
        %4010 = vdwg.mxu0
        %v4011 = vrot.slane %v3169, 1
        %v4012 = vrot.slane %v3171, 2
        %v4013 = vor.u32 %v4011, %v4012
        %v4015 = vsel %vm3117, %v4013, 0
        %4017 = vmatprep.subr.bf16.mxu0 %v3968
        %4018 = vmatpush1.bf16.msra.mxu0 %v3965
        %4019 = vmatprep.subr.bf16.mxu0 %v3944
        %4020 = vmatpush1.bf16.msra.mxu0 %v3943
        %4021 = vmatprep.subr.bf16.mxu0 %v3942
        %4022 = vmatpush1.bf16.msra.mxu0 %v3941
        %4023 = vmatprep.subr.bf16.mxu0 %v3940
        %4024 = vmatpush1.bf16.msra.mxu0 %v3939
        %4025 = vmatprep.subr.bf16.mxu0 %v3938
        %4026 = vmatpush1.bf16.msra.mxu0 %v3937
        %4027 = vmatprep.subr.bf16.mxu0 %v3936
        %4028 = vmatpush1.bf16.msra.mxu0 %v3935
        %4029 = vmatprep.subr.bf16.mxu0 %v3934
        %4030 = vmatpush1.bf16.msra.mxu0 %v3933
        %4031 = vmatprep.subr.bf16.mxu0 %v3932
        %4032 = vmatpush1.bf16.msra.mxu0 %v3931
        %4033 = vmatprep.subr.bf16.mxu0 0
        %4034 = vmatpush2.bf16.msra.mxu0 0
        %4035 = vmatprep.subr.bf16.mxu0 0
        %4036 = vmatpush2.bf16.msra.mxu0 0
        %4037 = vmatprep.subr.bf16.mxu0 0
        %4038 = vmatpush2.bf16.msra.mxu0 0
        %4039 = vmatprep.subr.bf16.mxu0 0
        %4040 = vmatpush2.bf16.msra.mxu0 0
        %4041 = vmatprep.subr.bf16.mxu0 0
        %4042 = vmatpush2.bf16.msra.mxu0 0
        %4043 = vmatprep.subr.bf16.mxu0 0
        %4044 = vmatpush2.bf16.msra.mxu0 0
        %4045 = vmatprep.subr.bf16.mxu0 0
        %4046 = vmatpush2.bf16.msra.mxu0 0
        %4047 = vmatprep.subr.bf16.mxu0 0
        %4048 = vmatpush2.bf16.msra.mxu0 0
        %4049 = vmatprep.mubr.bf16.mxu0 0
        %4050 = vmatmul.mubr.bf16.gmra.mxu0 %v4015
        %v4051 = vpop.f32.mrf.mxu0
        %v4052 = vadd.f32 0.0, %v4051
        %v4053 = vpop.f32.mrf.mxu0
        %v4054 = vadd.f32 0.0, %v4053
        %v4055 = vpop.f32.mrf.mxu0
        %v4056 = vpop.f32.mrf.mxu0
        %4057 = vdwg.mxu0
        %v4058 = vrot.slane %v3220, 1
        %v4059 = vrot.slane %v3222, 2
        %v4060 = vor.u32 %v4058, %v4059
        %v4062 = vsel %vm3117, %v4060, 0
        %4064 = vmatprep.subr.bf16.mxu0 %v3968
        %4065 = vmatpush1.bf16.msra.mxu0 %v3965
        %4066 = vmatprep.subr.bf16.mxu0 %v3944
        %4067 = vmatpush1.bf16.msra.mxu0 %v3943
        %4068 = vmatprep.subr.bf16.mxu0 %v3942
        %4069 = vmatpush1.bf16.msra.mxu0 %v3941
        %4070 = vmatprep.subr.bf16.mxu0 %v3940
        %4071 = vmatpush1.bf16.msra.mxu0 %v3939
        %4072 = vmatprep.subr.bf16.mxu0 %v3938
        %4073 = vmatpush1.bf16.msra.mxu0 %v3937
        %4074 = vmatprep.subr.bf16.mxu0 %v3936
        %4075 = vmatpush1.bf16.msra.mxu0 %v3935
        %4076 = vmatprep.subr.bf16.mxu0 %v3934
        %4077 = vmatpush1.bf16.msra.mxu0 %v3933
        %4078 = vmatprep.subr.bf16.mxu0 %v3932
        %4079 = vmatpush1.bf16.msra.mxu0 %v3931
        %4080 = vmatprep.subr.bf16.mxu0 0
        %4081 = vmatpush2.bf16.msra.mxu0 0
        %4082 = vmatprep.subr.bf16.mxu0 0
        %4083 = vmatpush2.bf16.msra.mxu0 0
        %4084 = vmatprep.subr.bf16.mxu0 0
        %4085 = vmatpush2.bf16.msra.mxu0 0
        %4086 = vmatprep.subr.bf16.mxu0 0
        %4087 = vmatpush2.bf16.msra.mxu0 0
        %4088 = vmatprep.subr.bf16.mxu0 0
        %4089 = vmatpush2.bf16.msra.mxu0 0
        %4090 = vmatprep.subr.bf16.mxu0 0
        %4091 = vmatpush2.bf16.msra.mxu0 0
        %4092 = vmatprep.subr.bf16.mxu0 0
        %4093 = vmatpush2.bf16.msra.mxu0 0
        %4094 = vmatprep.subr.bf16.mxu0 0
        %4095 = vmatpush2.bf16.msra.mxu0 0
        %4096 = vmatprep.mubr.bf16.mxu0 0
        %4097 = vmatmul.mubr.bf16.gmra.mxu0 %v4062
        %v4098 = vpop.f32.mrf.mxu0
        %v4099 = vadd.f32 0.0, %v4098
        %v4100 = vpop.f32.mrf.mxu0
        %v4101 = vadd.f32 0.0, %v4100
        %v4102 = vpop.f32.mrf.mxu0
        %v4103 = vpop.f32.mrf.mxu0
        %4104 = vdwg.mxu0
        %v4105 = vrot.slane %v3271, 1
        %v4106 = vrot.slane %v3273, 2
        %v4107 = vor.u32 %v4105, %v4106
        %v4109 = vsel %vm3117, %v4107, 0
        %4111 = vmatprep.subr.bf16.mxu0 %v3968
        %4112 = vmatpush1.bf16.msra.mxu0 %v3965
        %4113 = vmatprep.subr.bf16.mxu0 %v3944
        %4114 = vmatpush1.bf16.msra.mxu0 %v3943
        %4115 = vmatprep.subr.bf16.mxu0 %v3942
        %4116 = vmatpush1.bf16.msra.mxu0 %v3941
        %4117 = vmatprep.subr.bf16.mxu0 %v3940
        %4118 = vmatpush1.bf16.msra.mxu0 %v3939
        %4119 = vmatprep.subr.bf16.mxu0 %v3938
        %4120 = vmatpush1.bf16.msra.mxu0 %v3937
        %4121 = vmatprep.subr.bf16.mxu0 %v3936
        %4122 = vmatpush1.bf16.msra.mxu0 %v3935
        %4123 = vmatprep.subr.bf16.mxu0 %v3934
        %4124 = vmatpush1.bf16.msra.mxu0 %v3933
        %4125 = vmatprep.subr.bf16.mxu0 %v3932
        %4126 = vmatpush1.bf16.msra.mxu0 %v3931
        %4127 = vmatprep.subr.bf16.mxu0 0
        %4128 = vmatpush2.bf16.msra.mxu0 0
        %4129 = vmatprep.subr.bf16.mxu0 0
        %4130 = vmatpush2.bf16.msra.mxu0 0
        %4131 = vmatprep.subr.bf16.mxu0 0
        %4132 = vmatpush2.bf16.msra.mxu0 0
        %4133 = vmatprep.subr.bf16.mxu0 0
        %4134 = vmatpush2.bf16.msra.mxu0 0
        %4135 = vmatprep.subr.bf16.mxu0 0
        %4136 = vmatpush2.bf16.msra.mxu0 0
        %4137 = vmatprep.subr.bf16.mxu0 0
        %4138 = vmatpush2.bf16.msra.mxu0 0
        %4139 = vmatprep.subr.bf16.mxu0 0
        %4140 = vmatpush2.bf16.msra.mxu0 0
        %4141 = vmatprep.subr.bf16.mxu0 0
        %4142 = vmatpush2.bf16.msra.mxu0 0
        %4143 = vmatprep.mubr.bf16.mxu0 0
        %4144 = vmatmul.mubr.bf16.gmra.mxu0 %v4109
        %v4145 = vpop.f32.mrf.mxu0
        %v4146 = vadd.f32 0.0, %v4145
        %v4147 = vpop.f32.mrf.mxu0
        %v4148 = vadd.f32 0.0, %v4147
        %v4149 = vpop.f32.mrf.mxu0
        %v4150 = vpop.f32.mrf.mxu0
        %4151 = vdwg.mxu0
        %v4152 = vadd.f32 %v3859, %v4005
        %v4153 = vadd.f32 %v3860, %v4007
        %v4154 = vadd.f32 %v3861, %v4052
        %v4155 = vadd.f32 %v3862, %v4054
        %v4156 = vadd.f32 %v3863, %v4099
        %v4157 = vadd.f32 %v3864, %v4101
        %v4158 = vadd.f32 %v3865, %v4146
        %v4159 = vadd.f32 %v3866, %v4148
        %s4160 = scalar_lea.vmem %s5, 480
        %v4161 = vld [vmem:[%s4160] sm:$0xff]
        %v4162 = vld [vmem:[%s4160 + $0x8] sm:$0xff]
        %v4163 = vld [vmem:[%s4160 + $0x10] sm:$0xff]
        %v4164 = vld [vmem:[%s4160 + $0x18] sm:$0xff]
        %v4165 = vld [vmem:[%s4160 + $0x20] sm:$0xff]
        %v4166 = vld [vmem:[%s4160 + $0x28] sm:$0xff]
        %v4167 = vld [vmem:[%s4160 + $0x30] sm:$0xff]
        %v4168 = vld [vmem:[%s4160 + $0x38] sm:$0xff]
        %v4169 = vld [vmem:[%s4160 + $0x40] sm:$0xff]
        %v4170 = vld [vmem:[%s4160 + $0x48] sm:$0xff]
        %v4171 = vld [vmem:[%s4160 + $0x50] sm:$0xff]
        %v4172 = vld [vmem:[%s4160 + $0x58] sm:$0xff]
        %v4173 = vld [vmem:[%s4160 + $0x60] sm:$0xff]
        %v4174 = vld [vmem:[%s4160 + $0x68] sm:$0xff]
        %v4175 = vld [vmem:[%s4160 + $0x70] sm:$0xff]
        %v4176 = vrot.slane %v3031, 2
        %v4192 = vunpack.c.l.b16 %v4161
        %v4193 = vunpack.c.h.b16 %v4161
        %v4194 = vunpack.c.l.b16 %v4162
        %v4195 = vunpack.c.h.b16 %v4162
        %v4196 = vunpack.c.l.b16 %v4163
        %v4197 = vunpack.c.h.b16 %v4163
        %v4198 = vunpack.c.l.b16 %v4164
        %v4199 = vunpack.c.h.b16 %v4164
        %v4200 = vunpack.c.l.b16 %v4165
        %v4201 = vunpack.c.h.b16 %v4165
        %v4202 = vunpack.c.l.b16 %v4166
        %v4203 = vunpack.c.h.b16 %v4166
        %v4204 = vunpack.c.l.b16 %v4167
        %v4205 = vunpack.c.h.b16 %v4167
        %v4206 = vunpack.c.l.b16 %v4168
        %v4207 = vunpack.c.h.b16 %v4168
        %v4208 = vunpack.c.l.b16 %v4169
        %v4209 = vunpack.c.h.b16 %v4169
        %v4210 = vunpack.c.l.b16 %v4170
        %v4211 = vunpack.c.h.b16 %v4170
        %v4212 = vunpack.c.l.b16 %v4171
        %v4213 = vunpack.c.h.b16 %v4171
        %v4214 = vunpack.c.l.b16 %v4172
        %v4215 = vunpack.c.h.b16 %v4172
        %v4216 = vunpack.c.l.b16 %v4173
        %v4217 = vunpack.c.h.b16 %v4173
        %v4218 = vunpack.c.l.b16 %v4174
        %v4219 = vunpack.c.h.b16 %v4174
        %v4220 = vunpack.c.l.b16 %v4175
        %v4221 = vunpack.c.h.b16 %v4175
        %v4222 = vpack.c.b16 %v4194, %v4192
        %v4223 = vpack.c.b16 %v4195, %v4193
        %v4224 = vpack.c.b16 %v4198, %v4196
        %v4225 = vpack.c.b16 %v4199, %v4197
        %v4226 = vpack.c.b16 %v4202, %v4200
        %v4227 = vpack.c.b16 %v4203, %v4201
        %v4228 = vpack.c.b16 %v4206, %v4204
        %v4229 = vpack.c.b16 %v4207, %v4205
        %v4230 = vpack.c.b16 %v4210, %v4208
        %v4231 = vpack.c.b16 %v4211, %v4209
        %v4232 = vpack.c.b16 %v4214, %v4212
        %v4233 = vpack.c.b16 %v4215, %v4213
        %v4234 = vpack.c.b16 %v4218, %v4216
        %v4235 = vpack.c.b16 %v4219, %v4217
        %v4236 = vpack.c.b16 %v4220, %v4220
        %v4237 = vpack.c.b16 %v4221, %v4221
        %v4253 = vsel %vm3117, %v4176, 0
        %v4256 = vsel %vm1979, %v4236, 0
        %v4259 = vsel %vm1979, %v4237, 0
        %4261 = vmatprep.subr.bf16.mxu0 %v4259
        %4262 = vmatpush1.bf16.msra.mxu0 %v4256
        %4263 = vmatprep.subr.bf16.mxu0 %v4235
        %4264 = vmatpush1.bf16.msra.mxu0 %v4234
        %4265 = vmatprep.subr.bf16.mxu0 %v4233
        %4266 = vmatpush1.bf16.msra.mxu0 %v4232
        %4267 = vmatprep.subr.bf16.mxu0 %v4231
        %4268 = vmatpush1.bf16.msra.mxu0 %v4230
        %4269 = vmatprep.subr.bf16.mxu0 %v4229
        %4270 = vmatpush1.bf16.msra.mxu0 %v4228
        %4271 = vmatprep.subr.bf16.mxu0 %v4227
        %4272 = vmatpush1.bf16.msra.mxu0 %v4226
        %4273 = vmatprep.subr.bf16.mxu0 %v4225
        %4274 = vmatpush1.bf16.msra.mxu0 %v4224
        %4275 = vmatprep.subr.bf16.mxu0 %v4223
        %4276 = vmatpush1.bf16.msra.mxu0 %v4222
        %4277 = vmatprep.subr.bf16.mxu0 0
        %4278 = vmatpush2.bf16.msra.mxu0 0
        %4279 = vmatprep.subr.bf16.mxu0 0
        %4280 = vmatpush2.bf16.msra.mxu0 0
        %4281 = vmatprep.subr.bf16.mxu0 0
        %4282 = vmatpush2.bf16.msra.mxu0 0
        %4283 = vmatprep.subr.bf16.mxu0 0
        %4284 = vmatpush2.bf16.msra.mxu0 0
        %4285 = vmatprep.subr.bf16.mxu0 0
        %4286 = vmatpush2.bf16.msra.mxu0 0
        %4287 = vmatprep.subr.bf16.mxu0 0
        %4288 = vmatpush2.bf16.msra.mxu0 0
        %4289 = vmatprep.subr.bf16.mxu0 0
        %4290 = vmatpush2.bf16.msra.mxu0 0
        %4291 = vmatprep.subr.bf16.mxu0 0
        %4292 = vmatpush2.bf16.msra.mxu0 0
        %4293 = vmatprep.mubr.bf16.mxu0 0
        %4294 = vmatmul.mubr.bf16.gmra.mxu0 %v4253
        %v4295 = vpop.f32.mrf.mxu0
        %v4296 = vadd.f32 0.0, %v4295
        %v4297 = vpop.f32.mrf.mxu0
        %v4298 = vadd.f32 0.0, %v4297
        %v4299 = vpop.f32.mrf.mxu0
        %v4300 = vpop.f32.mrf.mxu0
        %4301 = vdwg.mxu0
        %v4302 = vrot.slane %v3032, 2
        %v4304 = vsel %vm3117, %v4302, 0
        %4306 = vmatprep.subr.bf16.mxu0 %v4259
        %4307 = vmatpush1.bf16.msra.mxu0 %v4256
        %4308 = vmatprep.subr.bf16.mxu0 %v4235
        %4309 = vmatpush1.bf16.msra.mxu0 %v4234
        %4310 = vmatprep.subr.bf16.mxu0 %v4233
        %4311 = vmatpush1.bf16.msra.mxu0 %v4232
        %4312 = vmatprep.subr.bf16.mxu0 %v4231
        %4313 = vmatpush1.bf16.msra.mxu0 %v4230
        %4314 = vmatprep.subr.bf16.mxu0 %v4229
        %4315 = vmatpush1.bf16.msra.mxu0 %v4228
        %4316 = vmatprep.subr.bf16.mxu0 %v4227
        %4317 = vmatpush1.bf16.msra.mxu0 %v4226
        %4318 = vmatprep.subr.bf16.mxu0 %v4225
        %4319 = vmatpush1.bf16.msra.mxu0 %v4224
        %4320 = vmatprep.subr.bf16.mxu0 %v4223
        %4321 = vmatpush1.bf16.msra.mxu0 %v4222
        %4322 = vmatprep.subr.bf16.mxu0 0
        %4323 = vmatpush2.bf16.msra.mxu0 0
        %4324 = vmatprep.subr.bf16.mxu0 0
        %4325 = vmatpush2.bf16.msra.mxu0 0
        %4326 = vmatprep.subr.bf16.mxu0 0
        %4327 = vmatpush2.bf16.msra.mxu0 0
        %4328 = vmatprep.subr.bf16.mxu0 0
        %4329 = vmatpush2.bf16.msra.mxu0 0
        %4330 = vmatprep.subr.bf16.mxu0 0
        %4331 = vmatpush2.bf16.msra.mxu0 0
        %4332 = vmatprep.subr.bf16.mxu0 0
        %4333 = vmatpush2.bf16.msra.mxu0 0
        %4334 = vmatprep.subr.bf16.mxu0 0
        %4335 = vmatpush2.bf16.msra.mxu0 0
        %4336 = vmatprep.subr.bf16.mxu0 0
        %4337 = vmatpush2.bf16.msra.mxu0 0
        %4338 = vmatprep.mubr.bf16.mxu0 0
        %4339 = vmatmul.mubr.bf16.gmra.mxu0 %v4304
        %v4340 = vpop.f32.mrf.mxu0
        %v4341 = vadd.f32 0.0, %v4340
        %v4342 = vpop.f32.mrf.mxu0
        %v4343 = vadd.f32 0.0, %v4342
        %v4344 = vpop.f32.mrf.mxu0
        %v4345 = vpop.f32.mrf.mxu0
        %4346 = vdwg.mxu0
        %v4347 = vrot.slane %v3033, 2
        %v4349 = vsel %vm3117, %v4347, 0
        %4351 = vmatprep.subr.bf16.mxu0 %v4259
        %4352 = vmatpush1.bf16.msra.mxu0 %v4256
        %4353 = vmatprep.subr.bf16.mxu0 %v4235
        %4354 = vmatpush1.bf16.msra.mxu0 %v4234
        %4355 = vmatprep.subr.bf16.mxu0 %v4233
        %4356 = vmatpush1.bf16.msra.mxu0 %v4232
        %4357 = vmatprep.subr.bf16.mxu0 %v4231
        %4358 = vmatpush1.bf16.msra.mxu0 %v4230
        %4359 = vmatprep.subr.bf16.mxu0 %v4229
        %4360 = vmatpush1.bf16.msra.mxu0 %v4228
        %4361 = vmatprep.subr.bf16.mxu0 %v4227
        %4362 = vmatpush1.bf16.msra.mxu0 %v4226
        %4363 = vmatprep.subr.bf16.mxu0 %v4225
        %4364 = vmatpush1.bf16.msra.mxu0 %v4224
        %4365 = vmatprep.subr.bf16.mxu0 %v4223
        %4366 = vmatpush1.bf16.msra.mxu0 %v4222
        %4367 = vmatprep.subr.bf16.mxu0 0
        %4368 = vmatpush2.bf16.msra.mxu0 0
        %4369 = vmatprep.subr.bf16.mxu0 0
        %4370 = vmatpush2.bf16.msra.mxu0 0
        %4371 = vmatprep.subr.bf16.mxu0 0
        %4372 = vmatpush2.bf16.msra.mxu0 0
        %4373 = vmatprep.subr.bf16.mxu0 0
        %4374 = vmatpush2.bf16.msra.mxu0 0
        %4375 = vmatprep.subr.bf16.mxu0 0
        %4376 = vmatpush2.bf16.msra.mxu0 0
        %4377 = vmatprep.subr.bf16.mxu0 0
        %4378 = vmatpush2.bf16.msra.mxu0 0
        %4379 = vmatprep.subr.bf16.mxu0 0
        %4380 = vmatpush2.bf16.msra.mxu0 0
        %4381 = vmatprep.subr.bf16.mxu0 0
        %4382 = vmatpush2.bf16.msra.mxu0 0
        %4383 = vmatprep.mubr.bf16.mxu0 0
        %4384 = vmatmul.mubr.bf16.gmra.mxu0 %v4349
        %v4385 = vpop.f32.mrf.mxu0
        %v4386 = vadd.f32 0.0, %v4385
        %v4387 = vpop.f32.mrf.mxu0
        %v4388 = vadd.f32 0.0, %v4387
        %v4389 = vpop.f32.mrf.mxu0
        %v4390 = vpop.f32.mrf.mxu0
        %4391 = vdwg.mxu0
        %v4392 = vrot.slane %v3034, 2
        %v4394 = vsel %vm3117, %v4392, 0
        %4396 = vmatprep.subr.bf16.mxu0 %v4259
        %4397 = vmatpush1.bf16.msra.mxu0 %v4256
        %4398 = vmatprep.subr.bf16.mxu0 %v4235
        %4399 = vmatpush1.bf16.msra.mxu0 %v4234
        %4400 = vmatprep.subr.bf16.mxu0 %v4233
        %4401 = vmatpush1.bf16.msra.mxu0 %v4232
        %4402 = vmatprep.subr.bf16.mxu0 %v4231
        %4403 = vmatpush1.bf16.msra.mxu0 %v4230
        %4404 = vmatprep.subr.bf16.mxu0 %v4229
        %4405 = vmatpush1.bf16.msra.mxu0 %v4228
        %4406 = vmatprep.subr.bf16.mxu0 %v4227
        %4407 = vmatpush1.bf16.msra.mxu0 %v4226
        %4408 = vmatprep.subr.bf16.mxu0 %v4225
        %4409 = vmatpush1.bf16.msra.mxu0 %v4224
        %4410 = vmatprep.subr.bf16.mxu0 %v4223
        %4411 = vmatpush1.bf16.msra.mxu0 %v4222
        %4412 = vmatprep.subr.bf16.mxu0 0
        %4413 = vmatpush2.bf16.msra.mxu0 0
        %4414 = vmatprep.subr.bf16.mxu0 0
        %4415 = vmatpush2.bf16.msra.mxu0 0
        %4416 = vmatprep.subr.bf16.mxu0 0
        %4417 = vmatpush2.bf16.msra.mxu0 0
        %4418 = vmatprep.subr.bf16.mxu0 0
        %4419 = vmatpush2.bf16.msra.mxu0 0
        %4420 = vmatprep.subr.bf16.mxu0 0
        %4421 = vmatpush2.bf16.msra.mxu0 0
        %4422 = vmatprep.subr.bf16.mxu0 0
        %4423 = vmatpush2.bf16.msra.mxu0 0
        %4424 = vmatprep.subr.bf16.mxu0 0
        %4425 = vmatpush2.bf16.msra.mxu0 0
        %4426 = vmatprep.subr.bf16.mxu0 0
        %4427 = vmatpush2.bf16.msra.mxu0 0
        %4428 = vmatprep.mubr.bf16.mxu0 0
        %4429 = vmatmul.mubr.bf16.gmra.mxu0 %v4394
        %v4430 = vpop.f32.mrf.mxu0
        %v4431 = vadd.f32 0.0, %v4430
        %v4432 = vpop.f32.mrf.mxu0
        %v4433 = vadd.f32 0.0, %v4432
        %v4434 = vpop.f32.mrf.mxu0
        %v4435 = vpop.f32.mrf.mxu0
        %4436 = vdwg.mxu0
        %v4437 = vadd.f32 %v4152, %v4296
        %v4438 = vadd.f32 %v4153, %v4298
        %v4439 = vadd.f32 %v4154, %v4341
        %v4440 = vadd.f32 %v4155, %v4343
        %v4441 = vadd.f32 %v4156, %v4386
        %v4442 = vadd.f32 %v4157, %v4388
        %v4443 = vadd.f32 %v4158, %v4431
        %v4444 = vadd.f32 %v4159, %v4433
        %v4445 = vld [vmem:[%s6] sm:$0x3]
        %v4446 = vpack.c.bf16 %v4437, %v4437
        %v4447 = vpack.c.bf16 %v4438, %v4438
        %v4448 = vpack.c.bf16 %v4439, %v4439
        %v4449 = vpack.c.bf16 %v4440, %v4440
        %v4450 = vpack.c.bf16 %v4441, %v4441
        %v4451 = vpack.c.bf16 %v4442, %v4442
        %v4452 = vpack.c.bf16 %v4443, %v4443
        %v4453 = vpack.c.bf16 %v4444, %v4444
        %vm4454 = vcmask 64512
        %v4456 = vsel %vm4454, %v4445, 0
        %v4459 = vsel %vm1979, %v4446, 0
        %v4462 = vsel %vm1979, %v4447, 0
        %4464 = vmatprep.subr.bf16.mxu0 0
        %4465 = vmatpush1.bf16.msra.mxu0 0
        %4466 = vmatprep.subr.bf16.mxu0 0
        %4467 = vmatpush1.bf16.msra.mxu0 0
        %4468 = vmatprep.subr.bf16.mxu0 0
        %4469 = vmatpush1.bf16.msra.mxu0 0
        %4470 = vmatprep.subr.bf16.mxu0 0
        %4471 = vmatpush1.bf16.msra.mxu0 0
        %4472 = vmatprep.subr.bf16.mxu0 0
        %4473 = vmatpush1.bf16.msra.mxu0 0
        %4474 = vmatprep.subr.bf16.mxu0 0
        %4475 = vmatpush1.bf16.msra.mxu0 0
        %4476 = vmatprep.subr.bf16.mxu0 0
        %4477 = vmatpush1.bf16.msra.mxu0 0
        %4478 = vmatprep.subr.bf16.mxu0 %v4462
        %4479 = vmatpush1.bf16.msra.mxu0 %v4459
        %4480 = vmatprep.subr.bf16.mxu0 0
        %4481 = vmatpush2.bf16.msra.mxu0 0
        %4482 = vmatprep.subr.bf16.mxu0 0
        %4483 = vmatpush2.bf16.msra.mxu0 0
        %4484 = vmatprep.subr.bf16.mxu0 0
        %4485 = vmatpush2.bf16.msra.mxu0 0
        %4486 = vmatprep.subr.bf16.mxu0 0
        %4487 = vmatpush2.bf16.msra.mxu0 0
        %4488 = vmatprep.subr.bf16.mxu0 0
        %4489 = vmatpush2.bf16.msra.mxu0 0
        %4490 = vmatprep.subr.bf16.mxu0 0
        %4491 = vmatpush2.bf16.msra.mxu0 0
        %4492 = vmatprep.subr.bf16.mxu0 0
        %4493 = vmatpush2.bf16.msra.mxu0 0
        %4494 = vmatprep.subr.bf16.mxu0 0
        %4495 = vmatpush2.bf16.msra.mxu0 0
        %4496 = vmatprep.mubr.bf16.mxu0 0
        %4497 = vmatmul.mubr.bf16.gmra.mxu0 %v4456
        %v4498 = vpop.f32.mrf.mxu0
        %v4499 = vadd.f32 0.0, %v4498
        %v4500 = vpop.f32.mrf.mxu0
        %v4501 = vadd.f32 0.0, %v4500
        %v4502 = vpop.f32.mrf.mxu0
        %v4503 = vpop.f32.mrf.mxu0
        %4504 = vdwg.mxu0
        %v4506 = vsel %vm1979, %v4448, 0
        %v4509 = vsel %vm1979, %v4449, 0
        %4511 = vmatprep.subr.bf16.mxu0 0
        %4512 = vmatpush1.bf16.msra.mxu0 0
        %4513 = vmatprep.subr.bf16.mxu0 0
        %4514 = vmatpush1.bf16.msra.mxu0 0
        %4515 = vmatprep.subr.bf16.mxu0 0
        %4516 = vmatpush1.bf16.msra.mxu0 0
        %4517 = vmatprep.subr.bf16.mxu0 0
        %4518 = vmatpush1.bf16.msra.mxu0 0
        %4519 = vmatprep.subr.bf16.mxu0 0
        %4520 = vmatpush1.bf16.msra.mxu0 0
        %4521 = vmatprep.subr.bf16.mxu0 0
        %4522 = vmatpush1.bf16.msra.mxu0 0
        %4523 = vmatprep.subr.bf16.mxu0 0
        %4524 = vmatpush1.bf16.msra.mxu0 0
        %4525 = vmatprep.subr.bf16.mxu0 %v4509
        %4526 = vmatpush1.bf16.msra.mxu0 %v4506
        %4527 = vmatprep.subr.bf16.mxu0 0
        %4528 = vmatpush2.bf16.msra.mxu0 0
        %4529 = vmatprep.subr.bf16.mxu0 0
        %4530 = vmatpush2.bf16.msra.mxu0 0
        %4531 = vmatprep.subr.bf16.mxu0 0
        %4532 = vmatpush2.bf16.msra.mxu0 0
        %4533 = vmatprep.subr.bf16.mxu0 0
        %4534 = vmatpush2.bf16.msra.mxu0 0
        %4535 = vmatprep.subr.bf16.mxu0 0
        %4536 = vmatpush2.bf16.msra.mxu0 0
        %4537 = vmatprep.subr.bf16.mxu0 0
        %4538 = vmatpush2.bf16.msra.mxu0 0
        %4539 = vmatprep.subr.bf16.mxu0 0
        %4540 = vmatpush2.bf16.msra.mxu0 0
        %4541 = vmatprep.subr.bf16.mxu0 0
        %4542 = vmatpush2.bf16.msra.mxu0 0
        %4543 = vmatprep.mubr.bf16.mxu0 0
        %4544 = vmatmul.mubr.bf16.gmra.mxu0 %v4456
        %v4545 = vpop.f32.mrf.mxu0
        %v4546 = vadd.f32 0.0, %v4545
        %v4547 = vpop.f32.mrf.mxu0
        %v4548 = vadd.f32 0.0, %v4547
        %v4549 = vpop.f32.mrf.mxu0
        %v4550 = vpop.f32.mrf.mxu0
        %4551 = vdwg.mxu0
        %v4553 = vsel %vm1979, %v4450, 0
        %v4556 = vsel %vm1979, %v4451, 0
        %4558 = vmatprep.subr.bf16.mxu0 0
        %4559 = vmatpush1.bf16.msra.mxu0 0
        %4560 = vmatprep.subr.bf16.mxu0 0
        %4561 = vmatpush1.bf16.msra.mxu0 0
        %4562 = vmatprep.subr.bf16.mxu0 0
        %4563 = vmatpush1.bf16.msra.mxu0 0
        %4564 = vmatprep.subr.bf16.mxu0 0
        %4565 = vmatpush1.bf16.msra.mxu0 0
        %4566 = vmatprep.subr.bf16.mxu0 0
        %4567 = vmatpush1.bf16.msra.mxu0 0
        %4568 = vmatprep.subr.bf16.mxu0 0
        %4569 = vmatpush1.bf16.msra.mxu0 0
        %4570 = vmatprep.subr.bf16.mxu0 0
        %4571 = vmatpush1.bf16.msra.mxu0 0
        %4572 = vmatprep.subr.bf16.mxu0 %v4556
        %4573 = vmatpush1.bf16.msra.mxu0 %v4553
        %4574 = vmatprep.subr.bf16.mxu0 0
        %4575 = vmatpush2.bf16.msra.mxu0 0
        %4576 = vmatprep.subr.bf16.mxu0 0
        %4577 = vmatpush2.bf16.msra.mxu0 0
        %4578 = vmatprep.subr.bf16.mxu0 0
        %4579 = vmatpush2.bf16.msra.mxu0 0
        %4580 = vmatprep.subr.bf16.mxu0 0
        %4581 = vmatpush2.bf16.msra.mxu0 0
        %4582 = vmatprep.subr.bf16.mxu0 0
        %4583 = vmatpush2.bf16.msra.mxu0 0
        %4584 = vmatprep.subr.bf16.mxu0 0
        %4585 = vmatpush2.bf16.msra.mxu0 0
        %4586 = vmatprep.subr.bf16.mxu0 0
        %4587 = vmatpush2.bf16.msra.mxu0 0
        %4588 = vmatprep.subr.bf16.mxu0 0
        %4589 = vmatpush2.bf16.msra.mxu0 0
        %4590 = vmatprep.mubr.bf16.mxu0 0
        %4591 = vmatmul.mubr.bf16.gmra.mxu0 %v4456
        %v4592 = vpop.f32.mrf.mxu0
        %v4593 = vadd.f32 0.0, %v4592
        %v4594 = vpop.f32.mrf.mxu0
        %v4595 = vadd.f32 0.0, %v4594
        %v4596 = vpop.f32.mrf.mxu0
        %v4597 = vpop.f32.mrf.mxu0
        %4598 = vdwg.mxu0
        %v4600 = vsel %vm1979, %v4452, 0
        %v4603 = vsel %vm1979, %v4453, 0
        %4605 = vmatprep.subr.bf16.mxu0 0
        %4606 = vmatpush1.bf16.msra.mxu0 0
        %4607 = vmatprep.subr.bf16.mxu0 0
        %4608 = vmatpush1.bf16.msra.mxu0 0
        %4609 = vmatprep.subr.bf16.mxu0 0
        %4610 = vmatpush1.bf16.msra.mxu0 0
        %4611 = vmatprep.subr.bf16.mxu0 0
        %4612 = vmatpush1.bf16.msra.mxu0 0
        %4613 = vmatprep.subr.bf16.mxu0 0
        %4614 = vmatpush1.bf16.msra.mxu0 0
        %4615 = vmatprep.subr.bf16.mxu0 0
        %4616 = vmatpush1.bf16.msra.mxu0 0
        %4617 = vmatprep.subr.bf16.mxu0 0
        %4618 = vmatpush1.bf16.msra.mxu0 0
        %4619 = vmatprep.subr.bf16.mxu0 %v4603
        %4620 = vmatpush1.bf16.msra.mxu0 %v4600
        %4621 = vmatprep.subr.bf16.mxu0 0
        %4622 = vmatpush2.bf16.msra.mxu0 0
        %4623 = vmatprep.subr.bf16.mxu0 0
        %4624 = vmatpush2.bf16.msra.mxu0 0
        %4625 = vmatprep.subr.bf16.mxu0 0
        %4626 = vmatpush2.bf16.msra.mxu0 0
        %4627 = vmatprep.subr.bf16.mxu0 0
        %4628 = vmatpush2.bf16.msra.mxu0 0
        %4629 = vmatprep.subr.bf16.mxu0 0
        %4630 = vmatpush2.bf16.msra.mxu0 0
        %4631 = vmatprep.subr.bf16.mxu0 0
        %4632 = vmatpush2.bf16.msra.mxu0 0
        %4633 = vmatprep.subr.bf16.mxu0 0
        %4634 = vmatpush2.bf16.msra.mxu0 0
        %4635 = vmatprep.subr.bf16.mxu0 0
        %4636 = vmatpush2.bf16.msra.mxu0 0
        %4637 = vmatprep.mubr.bf16.mxu0 0
        %4638 = vmatmul.mubr.bf16.gmra.mxu0 %v4456
        %v4639 = vpop.f32.mrf.mxu0
        %v4640 = vadd.f32 0.0, %v4639
        %v4641 = vpop.f32.mrf.mxu0
        %v4642 = vadd.f32 0.0, %v4641
        %v4643 = vpop.f32.mrf.mxu0
        %v4644 = vpop.f32.mrf.mxu0
        %4645 = vdwg.mxu0
        %s4646 = scalar_lea.vmem %s6, 2
        %v4647 = vld [vmem:[%s4646] sm:$0x3]
        %v4649 = vsel %vm4454, %v4647, 0
        %4651 = vmatprep.subr.bf16.mxu0 0
        %4652 = vmatpush1.bf16.msra.mxu0 0
        %4653 = vmatprep.subr.bf16.mxu0 0
        %4654 = vmatpush1.bf16.msra.mxu0 0
        %4655 = vmatprep.subr.bf16.mxu0 0
        %4656 = vmatpush1.bf16.msra.mxu0 0
        %4657 = vmatprep.subr.bf16.mxu0 0
        %4658 = vmatpush1.bf16.msra.mxu0 0
        %4659 = vmatprep.subr.bf16.mxu0 0
        %4660 = vmatpush1.bf16.msra.mxu0 0
        %4661 = vmatprep.subr.bf16.mxu0 0
        %4662 = vmatpush1.bf16.msra.mxu0 0
        %4663 = vmatprep.subr.bf16.mxu0 0
        %4664 = vmatpush1.bf16.msra.mxu0 0
        %4665 = vmatprep.subr.bf16.mxu0 %v4462
        %4666 = vmatpush1.bf16.msra.mxu0 %v4459
        %4667 = vmatprep.subr.bf16.mxu0 0
        %4668 = vmatpush2.bf16.msra.mxu0 0
        %4669 = vmatprep.subr.bf16.mxu0 0
        %4670 = vmatpush2.bf16.msra.mxu0 0
        %4671 = vmatprep.subr.bf16.mxu0 0
        %4672 = vmatpush2.bf16.msra.mxu0 0
        %4673 = vmatprep.subr.bf16.mxu0 0
        %4674 = vmatpush2.bf16.msra.mxu0 0
        %4675 = vmatprep.subr.bf16.mxu0 0
        %4676 = vmatpush2.bf16.msra.mxu0 0
        %4677 = vmatprep.subr.bf16.mxu0 0
        %4678 = vmatpush2.bf16.msra.mxu0 0
        %4679 = vmatprep.subr.bf16.mxu0 0
        %4680 = vmatpush2.bf16.msra.mxu0 0
        %4681 = vmatprep.subr.bf16.mxu0 0
        %4682 = vmatpush2.bf16.msra.mxu0 0
        %4683 = vmatprep.mubr.bf16.mxu0 0
        %4684 = vmatmul.mubr.bf16.gmra.mxu0 %v4649
        %v4685 = vpop.f32.mrf.mxu0
        %v4686 = vadd.f32 0.0, %v4685
        %v4687 = vpop.f32.mrf.mxu0
        %v4688 = vadd.f32 0.0, %v4687
        %v4689 = vpop.f32.mrf.mxu0
        %v4690 = vpop.f32.mrf.mxu0
        %4691 = vdwg.mxu0
        %4692 = vmatprep.subr.bf16.mxu0 0
        %4693 = vmatpush1.bf16.msra.mxu0 0
        %4694 = vmatprep.subr.bf16.mxu0 0
        %4695 = vmatpush1.bf16.msra.mxu0 0
        %4696 = vmatprep.subr.bf16.mxu0 0
        %4697 = vmatpush1.bf16.msra.mxu0 0
        %4698 = vmatprep.subr.bf16.mxu0 0
        %4699 = vmatpush1.bf16.msra.mxu0 0
        %4700 = vmatprep.subr.bf16.mxu0 0
        %4701 = vmatpush1.bf16.msra.mxu0 0
        %4702 = vmatprep.subr.bf16.mxu0 0
        %4703 = vmatpush1.bf16.msra.mxu0 0
        %4704 = vmatprep.subr.bf16.mxu0 0
        %4705 = vmatpush1.bf16.msra.mxu0 0
        %4706 = vmatprep.subr.bf16.mxu0 %v4509
        %4707 = vmatpush1.bf16.msra.mxu0 %v4506
        %4708 = vmatprep.subr.bf16.mxu0 0
        %4709 = vmatpush2.bf16.msra.mxu0 0
        %4710 = vmatprep.subr.bf16.mxu0 0
        %4711 = vmatpush2.bf16.msra.mxu0 0
        %4712 = vmatprep.subr.bf16.mxu0 0
        %4713 = vmatpush2.bf16.msra.mxu0 0
        %4714 = vmatprep.subr.bf16.mxu0 0
        %4715 = vmatpush2.bf16.msra.mxu0 0
        %4716 = vmatprep.subr.bf16.mxu0 0
        %4717 = vmatpush2.bf16.msra.mxu0 0
        %4718 = vmatprep.subr.bf16.mxu0 0
        %4719 = vmatpush2.bf16.msra.mxu0 0
        %4720 = vmatprep.subr.bf16.mxu0 0
        %4721 = vmatpush2.bf16.msra.mxu0 0
        %4722 = vmatprep.subr.bf16.mxu0 0
        %4723 = vmatpush2.bf16.msra.mxu0 0
        %4724 = vmatprep.mubr.bf16.mxu0 0
        %4725 = vmatmul.mubr.bf16.gmra.mxu0 %v4649
        %v4726 = vpop.f32.mrf.mxu0
        %v4727 = vadd.f32 0.0, %v4726
        %v4728 = vpop.f32.mrf.mxu0
        %v4729 = vadd.f32 0.0, %v4728
        %v4730 = vpop.f32.mrf.mxu0
        %v4731 = vpop.f32.mrf.mxu0
        %4732 = vdwg.mxu0
        %4733 = vmatprep.subr.bf16.mxu0 0
        %4734 = vmatpush1.bf16.msra.mxu0 0
        %4735 = vmatprep.subr.bf16.mxu0 0
        %4736 = vmatpush1.bf16.msra.mxu0 0
        %4737 = vmatprep.subr.bf16.mxu0 0
        %4738 = vmatpush1.bf16.msra.mxu0 0
        %4739 = vmatprep.subr.bf16.mxu0 0
        %4740 = vmatpush1.bf16.msra.mxu0 0
        %4741 = vmatprep.subr.bf16.mxu0 0
        %4742 = vmatpush1.bf16.msra.mxu0 0
        %4743 = vmatprep.subr.bf16.mxu0 0
        %4744 = vmatpush1.bf16.msra.mxu0 0
        %4745 = vmatprep.subr.bf16.mxu0 0
        %4746 = vmatpush1.bf16.msra.mxu0 0
        %4747 = vmatprep.subr.bf16.mxu0 %v4556
        %4748 = vmatpush1.bf16.msra.mxu0 %v4553
        %4749 = vmatprep.subr.bf16.mxu0 0
        %4750 = vmatpush2.bf16.msra.mxu0 0
        %4751 = vmatprep.subr.bf16.mxu0 0
        %4752 = vmatpush2.bf16.msra.mxu0 0
        %4753 = vmatprep.subr.bf16.mxu0 0
        %4754 = vmatpush2.bf16.msra.mxu0 0
        %4755 = vmatprep.subr.bf16.mxu0 0
        %4756 = vmatpush2.bf16.msra.mxu0 0
        %4757 = vmatprep.subr.bf16.mxu0 0
        %4758 = vmatpush2.bf16.msra.mxu0 0
        %4759 = vmatprep.subr.bf16.mxu0 0
        %4760 = vmatpush2.bf16.msra.mxu0 0
        %4761 = vmatprep.subr.bf16.mxu0 0
        %4762 = vmatpush2.bf16.msra.mxu0 0
        %4763 = vmatprep.subr.bf16.mxu0 0
        %4764 = vmatpush2.bf16.msra.mxu0 0
        %4765 = vmatprep.mubr.bf16.mxu0 0
        %4766 = vmatmul.mubr.bf16.gmra.mxu0 %v4649
        %v4767 = vpop.f32.mrf.mxu0
        %v4768 = vadd.f32 0.0, %v4767
        %v4769 = vpop.f32.mrf.mxu0
        %v4770 = vadd.f32 0.0, %v4769
        %v4771 = vpop.f32.mrf.mxu0
        %v4772 = vpop.f32.mrf.mxu0
        %4773 = vdwg.mxu0
        %4774 = vmatprep.subr.bf16.mxu0 0
        %4775 = vmatpush1.bf16.msra.mxu0 0
        %4776 = vmatprep.subr.bf16.mxu0 0
        %4777 = vmatpush1.bf16.msra.mxu0 0
        %4778 = vmatprep.subr.bf16.mxu0 0
        %4779 = vmatpush1.bf16.msra.mxu0 0
        %4780 = vmatprep.subr.bf16.mxu0 0
        %4781 = vmatpush1.bf16.msra.mxu0 0
        %4782 = vmatprep.subr.bf16.mxu0 0
        %4783 = vmatpush1.bf16.msra.mxu0 0
        %4784 = vmatprep.subr.bf16.mxu0 0
        %4785 = vmatpush1.bf16.msra.mxu0 0
        %4786 = vmatprep.subr.bf16.mxu0 0
        %4787 = vmatpush1.bf16.msra.mxu0 0
        %4788 = vmatprep.subr.bf16.mxu0 %v4603
        %4789 = vmatpush1.bf16.msra.mxu0 %v4600
        %4790 = vmatprep.subr.bf16.mxu0 0
        %4791 = vmatpush2.bf16.msra.mxu0 0
        %4792 = vmatprep.subr.bf16.mxu0 0
        %4793 = vmatpush2.bf16.msra.mxu0 0
        %4794 = vmatprep.subr.bf16.mxu0 0
        %4795 = vmatpush2.bf16.msra.mxu0 0
        %4796 = vmatprep.subr.bf16.mxu0 0
        %4797 = vmatpush2.bf16.msra.mxu0 0
        %4798 = vmatprep.subr.bf16.mxu0 0
        %4799 = vmatpush2.bf16.msra.mxu0 0
        %4800 = vmatprep.subr.bf16.mxu0 0
        %4801 = vmatpush2.bf16.msra.mxu0 0
        %4802 = vmatprep.subr.bf16.mxu0 0
        %4803 = vmatpush2.bf16.msra.mxu0 0
        %4804 = vmatprep.subr.bf16.mxu0 0
        %4805 = vmatpush2.bf16.msra.mxu0 0
        %4806 = vmatprep.mubr.bf16.mxu0 0
        %4807 = vmatmul.mubr.bf16.gmra.mxu0 %v4649
        %v4808 = vpop.f32.mrf.mxu0
        %v4809 = vadd.f32 0.0, %v4808
        %v4810 = vpop.f32.mrf.mxu0
        %v4811 = vadd.f32 0.0, %v4810
        %v4812 = vpop.f32.mrf.mxu0
        %v4813 = vpop.f32.mrf.mxu0
        %4814 = vdwg.mxu0
        %v4815 = vmax.f32 %v4499, %v4686
        %v4816 = vmax.f32 %v4501, %v4688
        %v4817 = vmax.f32 %v4546, %v4727
        %v4818 = vmax.f32 %v4548, %v4729
        %v4819 = vmax.f32 %v4593, %v4768
        %v4820 = vmax.f32 %v4595, %v4770
        %v4821 = vmax.f32 %v4640, %v4809
        %v4822 = vmax.f32 %v4642, %v4811
        %v4823 = vld [vmem:[%s7] sm:$0xf]
        %v4824 = vld [vmem:[%s7 + $0x4] sm:$0xf]
        %v4825 = vld [vmem:[%s7 + $0x8] sm:$0xf]
        %v4826 = vld [vmem:[%s7 + $0xc] sm:$0xf]
        %v4827 = vld [vmem:[%s7 + $0x10] sm:$0xf]
        %v4828 = vld [vmem:[%s7 + $0x14] sm:$0xf]
        %v4829 = vld [vmem:[%s7 + $0x18] sm:$0xf]
        %v4830 = vld [vmem:[%s7 + $0x1c] sm:$0xf]
        %v4831 = vld [vmem:[%s7 + $0x20] sm:$0xf]
        %v4832 = vld [vmem:[%s7 + $0x24] sm:$0xf]
        %v4833 = vld [vmem:[%s7 + $0x28] sm:$0xf]
        %v4834 = vld [vmem:[%s7 + $0x2c] sm:$0xf]
        %v4835 = vld [vmem:[%s7 + $0x30] sm:$0xf]
        %v4836 = vld [vmem:[%s7 + $0x34] sm:$0xf]
        %v4837 = vld [vmem:[%s7 + $0x38] sm:$0xf]
        %v4838 = vld [vmem:[%s7 + $0x3c] sm:$0xf]
        %v4839 = vld [vmem:[%s7 + $0x40] sm:$0xf]
        %v4840 = vld [vmem:[%s7 + $0x44] sm:$0xf]
        %v4841 = vld [vmem:[%s7 + $0x48] sm:$0xf]
        %v4842 = vld [vmem:[%s7 + $0x4c] sm:$0xf]
        %v4843 = vpack.c.bf16 %v4815, %v4815
        %v4844 = vpack.c.bf16 %v4816, %v4816
        %v4845 = vpack.c.bf16 %v4817, %v4817
        %v4846 = vpack.c.bf16 %v4818, %v4818
        %v4847 = vpack.c.bf16 %v4819, %v4819
        %v4848 = vpack.c.bf16 %v4820, %v4820
        %v4849 = vpack.c.bf16 %v4821, %v4821
        %v4850 = vpack.c.bf16 %v4822, %v4822
        %v4871 = vunpack.c.l.b16 %v4823
        %v4872 = vunpack.c.l.b16 %v4824
        %v4873 = vunpack.c.l.b16 %v4825
        %v4874 = vunpack.c.l.b16 %v4826
        %v4875 = vunpack.c.l.b16 %v4827
        %v4876 = vunpack.c.l.b16 %v4828
        %v4877 = vunpack.c.l.b16 %v4829
        %v4878 = vunpack.c.l.b16 %v4830
        %v4879 = vunpack.c.l.b16 %v4831
        %v4880 = vunpack.c.l.b16 %v4832
        %v4881 = vunpack.c.l.b16 %v4833
        %v4882 = vunpack.c.l.b16 %v4834
        %v4883 = vunpack.c.l.b16 %v4835
        %v4884 = vunpack.c.l.b16 %v4836
        %v4885 = vunpack.c.l.b16 %v4837
        %v4886 = vunpack.c.l.b16 %v4838
        %v4887 = vunpack.c.l.b16 %v4839
        %v4888 = vunpack.c.l.b16 %v4840
        %v4889 = vunpack.c.l.b16 %v4841
        %v4890 = vunpack.c.l.b16 %v4842
        %v4891 = vpack.c.b16 %v4872, %v4871
        %v4892 = vpack.c.b16 %v4874, %v4873
        %v4893 = vpack.c.b16 %v4876, %v4875
        %v4894 = vpack.c.b16 %v4878, %v4877
        %v4895 = vpack.c.b16 %v4880, %v4879
        %v4896 = vpack.c.b16 %v4882, %v4881
        %v4897 = vpack.c.b16 %v4884, %v4883
        %v4898 = vpack.c.b16 %v4886, %v4885
        %v4899 = vpack.c.b16 %v4888, %v4887
        %v4900 = vpack.c.b16 %v4890, %v4889
        %vm4911 = vcmask 261120
        %v4913 = vsel %vm4911, %v4844, 0
        %4915 = vmatprep.subr.bf16.mxu0 0
        %4916 = vmatpush1.bf16.msra.mxu0 %v4898
        %4917 = vmatprep.subr.bf16.mxu0 0
        %4918 = vmatpush1.bf16.msra.mxu0 %v4897
        %4919 = vmatprep.subr.bf16.mxu0 0
        %4920 = vmatpush1.bf16.msra.mxu0 %v4896
        %4921 = vmatprep.subr.bf16.mxu0 0
        %4922 = vmatpush1.bf16.msra.mxu0 %v4895
        %4923 = vmatprep.subr.bf16.mxu0 0
        %4924 = vmatpush1.bf16.msra.mxu0 %v4894
        %4925 = vmatprep.subr.bf16.mxu0 0
        %4926 = vmatpush1.bf16.msra.mxu0 %v4893
        %4927 = vmatprep.subr.bf16.mxu0 0
        %4928 = vmatpush1.bf16.msra.mxu0 %v4892
        %4929 = vmatprep.subr.bf16.mxu0 0
        %4930 = vmatpush1.bf16.msra.mxu0 %v4891
        %4931 = vmatprep.subr.bf16.mxu0 0
        %4932 = vmatpush2.bf16.msra.mxu0 0
        %4933 = vmatprep.subr.bf16.mxu0 0
        %4934 = vmatpush2.bf16.msra.mxu0 0
        %4935 = vmatprep.subr.bf16.mxu0 0
        %4936 = vmatpush2.bf16.msra.mxu0 0
        %4937 = vmatprep.subr.bf16.mxu0 0
        %4938 = vmatpush2.bf16.msra.mxu0 0
        %4939 = vmatprep.subr.bf16.mxu0 0
        %4940 = vmatpush2.bf16.msra.mxu0 0
        %4941 = vmatprep.subr.bf16.mxu0 0
        %4942 = vmatpush2.bf16.msra.mxu0 0
        %4943 = vmatprep.subr.bf16.mxu0 0
        %4944 = vmatpush2.bf16.msra.mxu0 %v4900
        %4945 = vmatprep.subr.bf16.mxu0 0
        %4946 = vmatpush2.bf16.msra.mxu0 %v4899
        %4947 = vmatprep.mubr.bf16.mxu0 %v4913
        %4948 = vmatmul.mubr.bf16.gmra.mxu0 %v4843
        %v4949 = vpop.f32.mrf.mxu0
        %v4950 = vadd.f32 0.0, %v4949
        %v4951 = vpop.f32.mrf.mxu0
        %v4952 = vpop.f32.mrf.mxu0
        %v4953 = vpop.f32.mrf.mxu0
        %4954 = vdwg.mxu0
        %v4956 = vsel %vm4911, %v4846, 0
        %4958 = vmatprep.subr.bf16.mxu0 0
        %4959 = vmatpush1.bf16.msra.mxu0 %v4898
        %4960 = vmatprep.subr.bf16.mxu0 0
        %4961 = vmatpush1.bf16.msra.mxu0 %v4897
        %4962 = vmatprep.subr.bf16.mxu0 0
        %4963 = vmatpush1.bf16.msra.mxu0 %v4896
        %4964 = vmatprep.subr.bf16.mxu0 0
        %4965 = vmatpush1.bf16.msra.mxu0 %v4895
        %4966 = vmatprep.subr.bf16.mxu0 0
        %4967 = vmatpush1.bf16.msra.mxu0 %v4894
        %4968 = vmatprep.subr.bf16.mxu0 0
        %4969 = vmatpush1.bf16.msra.mxu0 %v4893
        %4970 = vmatprep.subr.bf16.mxu0 0
        %4971 = vmatpush1.bf16.msra.mxu0 %v4892
        %4972 = vmatprep.subr.bf16.mxu0 0
        %4973 = vmatpush1.bf16.msra.mxu0 %v4891
        %4974 = vmatprep.subr.bf16.mxu0 0
        %4975 = vmatpush2.bf16.msra.mxu0 0
        %4976 = vmatprep.subr.bf16.mxu0 0
        %4977 = vmatpush2.bf16.msra.mxu0 0
        %4978 = vmatprep.subr.bf16.mxu0 0
        %4979 = vmatpush2.bf16.msra.mxu0 0
        %4980 = vmatprep.subr.bf16.mxu0 0
        %4981 = vmatpush2.bf16.msra.mxu0 0
        %4982 = vmatprep.subr.bf16.mxu0 0
        %4983 = vmatpush2.bf16.msra.mxu0 0
        %4984 = vmatprep.subr.bf16.mxu0 0
        %4985 = vmatpush2.bf16.msra.mxu0 0
        %4986 = vmatprep.subr.bf16.mxu0 0
        %4987 = vmatpush2.bf16.msra.mxu0 %v4900
        %4988 = vmatprep.subr.bf16.mxu0 0
        %4989 = vmatpush2.bf16.msra.mxu0 %v4899
        %4990 = vmatprep.mubr.bf16.mxu0 %v4956
        %4991 = vmatmul.mubr.bf16.gmra.mxu0 %v4845
        %v4992 = vpop.f32.mrf.mxu0
        %v4993 = vadd.f32 0.0, %v4992
        %v4994 = vpop.f32.mrf.mxu0
        %v4995 = vpop.f32.mrf.mxu0
        %v4996 = vpop.f32.mrf.mxu0
        %4997 = vdwg.mxu0
        %v4999 = vsel %vm4911, %v4848, 0
        %5001 = vmatprep.subr.bf16.mxu0 0
        %5002 = vmatpush1.bf16.msra.mxu0 %v4898
        %5003 = vmatprep.subr.bf16.mxu0 0
        %5004 = vmatpush1.bf16.msra.mxu0 %v4897
        %5005 = vmatprep.subr.bf16.mxu0 0
        %5006 = vmatpush1.bf16.msra.mxu0 %v4896
        %5007 = vmatprep.subr.bf16.mxu0 0
        %5008 = vmatpush1.bf16.msra.mxu0 %v4895
        %5009 = vmatprep.subr.bf16.mxu0 0
        %5010 = vmatpush1.bf16.msra.mxu0 %v4894
        %5011 = vmatprep.subr.bf16.mxu0 0
        %5012 = vmatpush1.bf16.msra.mxu0 %v4893
        %5013 = vmatprep.subr.bf16.mxu0 0
        %5014 = vmatpush1.bf16.msra.mxu0 %v4892
        %5015 = vmatprep.subr.bf16.mxu0 0
        %5016 = vmatpush1.bf16.msra.mxu0 %v4891
        %5017 = vmatprep.subr.bf16.mxu0 0
        %5018 = vmatpush2.bf16.msra.mxu0 0
        %5019 = vmatprep.subr.bf16.mxu0 0
        %5020 = vmatpush2.bf16.msra.mxu0 0
        %5021 = vmatprep.subr.bf16.mxu0 0
        %5022 = vmatpush2.bf16.msra.mxu0 0
        %5023 = vmatprep.subr.bf16.mxu0 0
        %5024 = vmatpush2.bf16.msra.mxu0 0
        %5025 = vmatprep.subr.bf16.mxu0 0
        %5026 = vmatpush2.bf16.msra.mxu0 0
        %5027 = vmatprep.subr.bf16.mxu0 0
        %5028 = vmatpush2.bf16.msra.mxu0 0
        %5029 = vmatprep.subr.bf16.mxu0 0
        %5030 = vmatpush2.bf16.msra.mxu0 %v4900
        %5031 = vmatprep.subr.bf16.mxu0 0
        %5032 = vmatpush2.bf16.msra.mxu0 %v4899
        %5033 = vmatprep.mubr.bf16.mxu0 %v4999
        %5034 = vmatmul.mubr.bf16.gmra.mxu0 %v4847
        %v5035 = vpop.f32.mrf.mxu0
        %v5036 = vadd.f32 0.0, %v5035
        %v5037 = vpop.f32.mrf.mxu0
        %v5038 = vpop.f32.mrf.mxu0
        %v5039 = vpop.f32.mrf.mxu0
        %5040 = vdwg.mxu0
        %v5042 = vsel %vm4911, %v4850, 0
        %5044 = vmatprep.subr.bf16.mxu0 0
        %5045 = vmatpush1.bf16.msra.mxu0 %v4898
        %5046 = vmatprep.subr.bf16.mxu0 0
        %5047 = vmatpush1.bf16.msra.mxu0 %v4897
        %5048 = vmatprep.subr.bf16.mxu0 0
        %5049 = vmatpush1.bf16.msra.mxu0 %v4896
        %5050 = vmatprep.subr.bf16.mxu0 0
        %5051 = vmatpush1.bf16.msra.mxu0 %v4895
        %5052 = vmatprep.subr.bf16.mxu0 0
        %5053 = vmatpush1.bf16.msra.mxu0 %v4894
        %5054 = vmatprep.subr.bf16.mxu0 0
        %5055 = vmatpush1.bf16.msra.mxu0 %v4893
        %5056 = vmatprep.subr.bf16.mxu0 0
        %5057 = vmatpush1.bf16.msra.mxu0 %v4892
        %5058 = vmatprep.subr.bf16.mxu0 0
        %5059 = vmatpush1.bf16.msra.mxu0 %v4891
        %5060 = vmatprep.subr.bf16.mxu0 0
        %5061 = vmatpush2.bf16.msra.mxu0 0
        %5062 = vmatprep.subr.bf16.mxu0 0
        %5063 = vmatpush2.bf16.msra.mxu0 0
        %5064 = vmatprep.subr.bf16.mxu0 0
        %5065 = vmatpush2.bf16.msra.mxu0 0
        %5066 = vmatprep.subr.bf16.mxu0 0
        %5067 = vmatpush2.bf16.msra.mxu0 0
        %5068 = vmatprep.subr.bf16.mxu0 0
        %5069 = vmatpush2.bf16.msra.mxu0 0
        %5070 = vmatprep.subr.bf16.mxu0 0
        %5071 = vmatpush2.bf16.msra.mxu0 0
        %5072 = vmatprep.subr.bf16.mxu0 0
        %5073 = vmatpush2.bf16.msra.mxu0 %v4900
        %5074 = vmatprep.subr.bf16.mxu0 0
        %5075 = vmatpush2.bf16.msra.mxu0 %v4899
        %5076 = vmatprep.mubr.bf16.mxu0 %v5042
        %5077 = vmatmul.mubr.bf16.gmra.mxu0 %v4849
        %v5078 = vpop.f32.mrf.mxu0
        %v5079 = vadd.f32 0.0, %v5078
        %v5080 = vpop.f32.mrf.mxu0
        %v5081 = vpop.f32.mrf.mxu0
        %v5082 = vpop.f32.mrf.mxu0
        %5083 = vdwg.mxu0
        %s5084 = scalar_lea.vmem %s7, 80
        %v5085 = vld [vmem:[%s5084] sm:$0xf]
        %v5086 = vld [vmem:[%s5084 + $0x4] sm:$0xf]
        %v5087 = vld [vmem:[%s5084 + $0x8] sm:$0xf]
        %v5088 = vld [vmem:[%s5084 + $0xc] sm:$0xf]
        %v5089 = vld [vmem:[%s5084 + $0x10] sm:$0xf]
        %v5090 = vld [vmem:[%s5084 + $0x14] sm:$0xf]
        %v5091 = vld [vmem:[%s5084 + $0x18] sm:$0xf]
        %v5092 = vld [vmem:[%s5084 + $0x1c] sm:$0xf]
        %v5093 = vld [vmem:[%s5084 + $0x20] sm:$0xf]
        %v5094 = vld [vmem:[%s5084 + $0x24] sm:$0xf]
        %v5095 = vld [vmem:[%s5084 + $0x28] sm:$0xf]
        %v5096 = vld [vmem:[%s5084 + $0x2c] sm:$0xf]
        %v5097 = vld [vmem:[%s5084 + $0x30] sm:$0xf]
        %v5098 = vld [vmem:[%s5084 + $0x34] sm:$0xf]
        %v5099 = vld [vmem:[%s5084 + $0x38] sm:$0xf]
        %v5100 = vld [vmem:[%s5084 + $0x3c] sm:$0xf]
        %v5101 = vld [vmem:[%s5084 + $0x40] sm:$0xf]
        %v5102 = vld [vmem:[%s5084 + $0x44] sm:$0xf]
        %v5103 = vld [vmem:[%s5084 + $0x48] sm:$0xf]
        %v5104 = vld [vmem:[%s5084 + $0x4c] sm:$0xf]
        %v5125 = vunpack.c.l.b16 %v5085
        %v5126 = vunpack.c.l.b16 %v5086
        %v5127 = vunpack.c.l.b16 %v5087
        %v5128 = vunpack.c.l.b16 %v5088
        %v5129 = vunpack.c.l.b16 %v5089
        %v5130 = vunpack.c.l.b16 %v5090
        %v5131 = vunpack.c.l.b16 %v5091
        %v5132 = vunpack.c.l.b16 %v5092
        %v5133 = vunpack.c.l.b16 %v5093
        %v5134 = vunpack.c.l.b16 %v5094
        %v5135 = vunpack.c.l.b16 %v5095
        %v5136 = vunpack.c.l.b16 %v5096
        %v5137 = vunpack.c.l.b16 %v5097
        %v5138 = vunpack.c.l.b16 %v5098
        %v5139 = vunpack.c.l.b16 %v5099
        %v5140 = vunpack.c.l.b16 %v5100
        %v5141 = vunpack.c.l.b16 %v5101
        %v5142 = vunpack.c.l.b16 %v5102
        %v5143 = vunpack.c.l.b16 %v5103
        %v5144 = vunpack.c.l.b16 %v5104
        %v5145 = vpack.c.b16 %v5126, %v5125
        %v5146 = vpack.c.b16 %v5128, %v5127
        %v5147 = vpack.c.b16 %v5130, %v5129
        %v5148 = vpack.c.b16 %v5132, %v5131
        %v5149 = vpack.c.b16 %v5134, %v5133
        %v5150 = vpack.c.b16 %v5136, %v5135
        %v5151 = vpack.c.b16 %v5138, %v5137
        %v5152 = vpack.c.b16 %v5140, %v5139
        %v5153 = vpack.c.b16 %v5142, %v5141
        %v5154 = vpack.c.b16 %v5144, %v5143
        %5165 = vmatprep.subr.bf16.mxu0 0
        %5166 = vmatpush1.bf16.msra.mxu0 %v5152
        %5167 = vmatprep.subr.bf16.mxu0 0
        %5168 = vmatpush1.bf16.msra.mxu0 %v5151
        %5169 = vmatprep.subr.bf16.mxu0 0
        %5170 = vmatpush1.bf16.msra.mxu0 %v5150
        %5171 = vmatprep.subr.bf16.mxu0 0
        %5172 = vmatpush1.bf16.msra.mxu0 %v5149
        %5173 = vmatprep.subr.bf16.mxu0 0
        %5174 = vmatpush1.bf16.msra.mxu0 %v5148
        %5175 = vmatprep.subr.bf16.mxu0 0
        %5176 = vmatpush1.bf16.msra.mxu0 %v5147
        %5177 = vmatprep.subr.bf16.mxu0 0
        %5178 = vmatpush1.bf16.msra.mxu0 %v5146
        %5179 = vmatprep.subr.bf16.mxu0 0
        %5180 = vmatpush1.bf16.msra.mxu0 %v5145
        %5181 = vmatprep.subr.bf16.mxu0 0
        %5182 = vmatpush2.bf16.msra.mxu0 0
        %5183 = vmatprep.subr.bf16.mxu0 0
        %5184 = vmatpush2.bf16.msra.mxu0 0
        %5185 = vmatprep.subr.bf16.mxu0 0
        %5186 = vmatpush2.bf16.msra.mxu0 0
        %5187 = vmatprep.subr.bf16.mxu0 0
        %5188 = vmatpush2.bf16.msra.mxu0 0
        %5189 = vmatprep.subr.bf16.mxu0 0
        %5190 = vmatpush2.bf16.msra.mxu0 0
        %5191 = vmatprep.subr.bf16.mxu0 0
        %5192 = vmatpush2.bf16.msra.mxu0 0
        %5193 = vmatprep.subr.bf16.mxu0 0
        %5194 = vmatpush2.bf16.msra.mxu0 %v5154
        %5195 = vmatprep.subr.bf16.mxu0 0
        %5196 = vmatpush2.bf16.msra.mxu0 %v5153
        %5197 = vmatprep.mubr.bf16.mxu0 %v4913
        %5198 = vmatmul.mubr.bf16.gmra.mxu0 %v4843
        %v5199 = vpop.f32.mrf.mxu0
        %v5200 = vadd.f32 0.0, %v5199
        %v5201 = vpop.f32.mrf.mxu0
        %v5202 = vpop.f32.mrf.mxu0
        %v5203 = vpop.f32.mrf.mxu0
        %5204 = vdwg.mxu0
        %5205 = vmatprep.subr.bf16.mxu0 0
        %5206 = vmatpush1.bf16.msra.mxu0 %v5152
        %5207 = vmatprep.subr.bf16.mxu0 0
        %5208 = vmatpush1.bf16.msra.mxu0 %v5151
        %5209 = vmatprep.subr.bf16.mxu0 0
        %5210 = vmatpush1.bf16.msra.mxu0 %v5150
        %5211 = vmatprep.subr.bf16.mxu0 0
        %5212 = vmatpush1.bf16.msra.mxu0 %v5149
        %5213 = vmatprep.subr.bf16.mxu0 0
        %5214 = vmatpush1.bf16.msra.mxu0 %v5148
        %5215 = vmatprep.subr.bf16.mxu0 0
        %5216 = vmatpush1.bf16.msra.mxu0 %v5147
        %5217 = vmatprep.subr.bf16.mxu0 0
        %5218 = vmatpush1.bf16.msra.mxu0 %v5146
        %5219 = vmatprep.subr.bf16.mxu0 0
        %5220 = vmatpush1.bf16.msra.mxu0 %v5145
        %5221 = vmatprep.subr.bf16.mxu0 0
        %5222 = vmatpush2.bf16.msra.mxu0 0
        %5223 = vmatprep.subr.bf16.mxu0 0
        %5224 = vmatpush2.bf16.msra.mxu0 0
        %5225 = vmatprep.subr.bf16.mxu0 0
        %5226 = vmatpush2.bf16.msra.mxu0 0
        %5227 = vmatprep.subr.bf16.mxu0 0
        %5228 = vmatpush2.bf16.msra.mxu0 0
        %5229 = vmatprep.subr.bf16.mxu0 0
        %5230 = vmatpush2.bf16.msra.mxu0 0
        %5231 = vmatprep.subr.bf16.mxu0 0
        %5232 = vmatpush2.bf16.msra.mxu0 0
        %5233 = vmatprep.subr.bf16.mxu0 0
        %5234 = vmatpush2.bf16.msra.mxu0 %v5154
        %5235 = vmatprep.subr.bf16.mxu0 0
        %5236 = vmatpush2.bf16.msra.mxu0 %v5153
        %5237 = vmatprep.mubr.bf16.mxu0 %v4956
        %5238 = vmatmul.mubr.bf16.gmra.mxu0 %v4845
        %v5239 = vpop.f32.mrf.mxu0
        %v5240 = vadd.f32 0.0, %v5239
        %v5241 = vpop.f32.mrf.mxu0
        %v5242 = vpop.f32.mrf.mxu0
        %v5243 = vpop.f32.mrf.mxu0
        %5244 = vdwg.mxu0
        %5245 = vmatprep.subr.bf16.mxu0 0
        %5246 = vmatpush1.bf16.msra.mxu0 %v5152
        %5247 = vmatprep.subr.bf16.mxu0 0
        %5248 = vmatpush1.bf16.msra.mxu0 %v5151
        %5249 = vmatprep.subr.bf16.mxu0 0
        %5250 = vmatpush1.bf16.msra.mxu0 %v5150
        %5251 = vmatprep.subr.bf16.mxu0 0
        %5252 = vmatpush1.bf16.msra.mxu0 %v5149
        %5253 = vmatprep.subr.bf16.mxu0 0
        %5254 = vmatpush1.bf16.msra.mxu0 %v5148
        %5255 = vmatprep.subr.bf16.mxu0 0
        %5256 = vmatpush1.bf16.msra.mxu0 %v5147
        %5257 = vmatprep.subr.bf16.mxu0 0
        %5258 = vmatpush1.bf16.msra.mxu0 %v5146
        %5259 = vmatprep.subr.bf16.mxu0 0
        %5260 = vmatpush1.bf16.msra.mxu0 %v5145
        %5261 = vmatprep.subr.bf16.mxu0 0
        %5262 = vmatpush2.bf16.msra.mxu0 0
        %5263 = vmatprep.subr.bf16.mxu0 0
        %5264 = vmatpush2.bf16.msra.mxu0 0
        %5265 = vmatprep.subr.bf16.mxu0 0
        %5266 = vmatpush2.bf16.msra.mxu0 0
        %5267 = vmatprep.subr.bf16.mxu0 0
        %5268 = vmatpush2.bf16.msra.mxu0 0
        %5269 = vmatprep.subr.bf16.mxu0 0
        %5270 = vmatpush2.bf16.msra.mxu0 0
        %5271 = vmatprep.subr.bf16.mxu0 0
        %5272 = vmatpush2.bf16.msra.mxu0 0
        %5273 = vmatprep.subr.bf16.mxu0 0
        %5274 = vmatpush2.bf16.msra.mxu0 %v5154
        %5275 = vmatprep.subr.bf16.mxu0 0
        %5276 = vmatpush2.bf16.msra.mxu0 %v5153
        %5277 = vmatprep.mubr.bf16.mxu0 %v4999
        %5278 = vmatmul.mubr.bf16.gmra.mxu0 %v4847
        %v5279 = vpop.f32.mrf.mxu0
        %v5280 = vadd.f32 0.0, %v5279
        %v5281 = vpop.f32.mrf.mxu0
        %v5282 = vpop.f32.mrf.mxu0
        %v5283 = vpop.f32.mrf.mxu0
        %5284 = vdwg.mxu0
        %5285 = vmatprep.subr.bf16.mxu0 0
        %5286 = vmatpush1.bf16.msra.mxu0 %v5152
        %5287 = vmatprep.subr.bf16.mxu0 0
        %5288 = vmatpush1.bf16.msra.mxu0 %v5151
        %5289 = vmatprep.subr.bf16.mxu0 0
        %5290 = vmatpush1.bf16.msra.mxu0 %v5150
        %5291 = vmatprep.subr.bf16.mxu0 0
        %5292 = vmatpush1.bf16.msra.mxu0 %v5149
        %5293 = vmatprep.subr.bf16.mxu0 0
        %5294 = vmatpush1.bf16.msra.mxu0 %v5148
        %5295 = vmatprep.subr.bf16.mxu0 0
        %5296 = vmatpush1.bf16.msra.mxu0 %v5147
        %5297 = vmatprep.subr.bf16.mxu0 0
        %5298 = vmatpush1.bf16.msra.mxu0 %v5146
        %5299 = vmatprep.subr.bf16.mxu0 0
        %5300 = vmatpush1.bf16.msra.mxu0 %v5145
        %5301 = vmatprep.subr.bf16.mxu0 0
        %5302 = vmatpush2.bf16.msra.mxu0 0
        %5303 = vmatprep.subr.bf16.mxu0 0
        %5304 = vmatpush2.bf16.msra.mxu0 0
        %5305 = vmatprep.subr.bf16.mxu0 0
        %5306 = vmatpush2.bf16.msra.mxu0 0
        %5307 = vmatprep.subr.bf16.mxu0 0
        %5308 = vmatpush2.bf16.msra.mxu0 0
        %5309 = vmatprep.subr.bf16.mxu0 0
        %5310 = vmatpush2.bf16.msra.mxu0 0
        %5311 = vmatprep.subr.bf16.mxu0 0
        %5312 = vmatpush2.bf16.msra.mxu0 0
        %5313 = vmatprep.subr.bf16.mxu0 0
        %5314 = vmatpush2.bf16.msra.mxu0 %v5154
        %5315 = vmatprep.subr.bf16.mxu0 0
        %5316 = vmatpush2.bf16.msra.mxu0 %v5153
        %5317 = vmatprep.mubr.bf16.mxu0 %v5042
        %5318 = vmatmul.mubr.bf16.gmra.mxu0 %v4849
        %v5319 = vpop.f32.mrf.mxu0
        %v5320 = vadd.f32 0.0, %v5319
        %v5321 = vpop.f32.mrf.mxu0
        %v5322 = vpop.f32.mrf.mxu0
        %v5323 = vpop.f32.mrf.mxu0
        %5324 = vdwg.mxu0
        %v5325 = vmax.f32 %v4950, %v5200
        %v5326 = vmax.f32 %v4993, %v5240
        %v5327 = vmax.f32 %v5036, %v5280
        %v5328 = vmax.f32 %v5079, %v5320
        %v5329 = vld [vmem:[%s8] sm:$0x1]
        %v5331 = vlaneseq
        %v5332 = vshrl.u32 %v5331, 7
        %v5333 = vsub.s32 0, %v5332
        %v5334 = vrot.slane %v5329, %v5333
        %v5336 = vadd.f32 %v5325, %v5334
        %v5337 = vadd.f32 %v5326, %v5334
        %v5338 = vadd.f32 %v5327, %v5334
        %v5339 = vadd.f32 %v5328, %v5334
        %v5340 = vmax.f32 %v5336, 0.0
        %v5341 = vmax.f32 %v5337, 0.0
        %v5342 = vmax.f32 %v5338, 0.0
        %v5343 = vmax.f32 %v5339, 0.0
        %v5344 = vld [vmem:[%s9] sm:$0xf]
        %v5345 = vld [vmem:[%s9 + $0x4] sm:$0xf]
        %v5346 = vld [vmem:[%s9 + $0x8] sm:$0xf]
        %v5347 = vld [vmem:[%s9 + $0xc] sm:$0xf]
        %v5348 = vld [vmem:[%s9 + $0x10] sm:$0xf]
        %v5349 = vld [vmem:[%s9 + $0x14] sm:$0xf]
        %v5350 = vld [vmem:[%s9 + $0x18] sm:$0xf]
        %v5351 = vld [vmem:[%s9 + $0x1c] sm:$0xf]
        %v5352 = vld [vmem:[%s9 + $0x20] sm:$0xf]
        %v5353 = vld [vmem:[%s9 + $0x24] sm:$0xf]
        %v5354 = vpack.c.bf16 %v5340, %v5340
        %v5355 = vpack.c.bf16 %v5341, %v5341
        %v5356 = vpack.c.bf16 %v5342, %v5342
        %v5357 = vpack.c.bf16 %v5343, %v5343
        %s5358 = scalar_lea.vmem %s9, 40
        %v5359 = vld [vmem:[%s5358] sm:$0xf]
        %v5360 = vld [vmem:[%s5358 + $0x4] sm:$0xf]
        %v5361 = vld [vmem:[%s5358 + $0x8] sm:$0xf]
        %v5362 = vld [vmem:[%s5358 + $0xc] sm:$0xf]
        %v5363 = vld [vmem:[%s5358 + $0x10] sm:$0xf]
        %v5364 = vld [vmem:[%s5358 + $0x14] sm:$0xf]
        %v5365 = vld [vmem:[%s5358 + $0x18] sm:$0xf]
        %v5366 = vld [vmem:[%s5358 + $0x1c] sm:$0xf]
        %v5367 = vld [vmem:[%s5358 + $0x20] sm:$0xf]
        %v5368 = vld [vmem:[%s5358 + $0x24] sm:$0xf]
        %v5370 = vshrl.u32 %v5354, 16
        %v5382 = vunpack.c.l.b16 %v5359
        %v5383 = vunpack.c.l.b16 %v5360
        %v5384 = vunpack.c.l.b16 %v5361
        %v5385 = vunpack.c.l.b16 %v5362
        %v5386 = vunpack.c.l.b16 %v5363
        %v5387 = vunpack.c.l.b16 %v5364
        %v5388 = vunpack.c.l.b16 %v5365
        %v5389 = vunpack.c.l.b16 %v5366
        %v5390 = vunpack.c.l.b16 %v5367
        %v5391 = vunpack.c.l.b16 %v5368
        %v5392 = vpack.c.b16 %v5383, %v5382
        %v5393 = vpack.c.b16 %v5385, %v5384
        %v5394 = vpack.c.b16 %v5387, %v5386
        %v5395 = vpack.c.b16 %v5389, %v5388
        %v5396 = vpack.c.b16 %v5391, %v5390
        %vm5402 = vcmask 654336
        %v5404 = vsel %vm5402, %v5370, 0
        %5406 = vmatprep.subr.bf16.mxu0 0
        %5407 = vmatpush1.bf16.msra.mxu0 0
        %5408 = vmatprep.subr.bf16.mxu0 0
        %5409 = vmatpush1.bf16.msra.mxu0 0
        %5410 = vmatprep.subr.bf16.mxu0 0
        %5411 = vmatpush1.bf16.msra.mxu0 0
        %5412 = vmatprep.subr.bf16.mxu0 0
        %5413 = vmatpush1.bf16.msra.mxu0 %v5396
        %5414 = vmatprep.subr.bf16.mxu0 0
        %5415 = vmatpush1.bf16.msra.mxu0 %v5395
        %5416 = vmatprep.subr.bf16.mxu0 0
        %5417 = vmatpush1.bf16.msra.mxu0 %v5394
        %5418 = vmatprep.subr.bf16.mxu0 0
        %5419 = vmatpush1.bf16.msra.mxu0 %v5393
        %5420 = vmatprep.subr.bf16.mxu0 0
        %5421 = vmatpush1.bf16.msra.mxu0 %v5392
        %5422 = vmatprep.subr.bf16.mxu0 0
        %5423 = vmatpush2.bf16.msra.mxu0 0
        %5424 = vmatprep.subr.bf16.mxu0 0
        %5425 = vmatpush2.bf16.msra.mxu0 0
        %5426 = vmatprep.subr.bf16.mxu0 0
        %5427 = vmatpush2.bf16.msra.mxu0 0
        %5428 = vmatprep.subr.bf16.mxu0 0
        %5429 = vmatpush2.bf16.msra.mxu0 0
        %5430 = vmatprep.subr.bf16.mxu0 0
        %5431 = vmatpush2.bf16.msra.mxu0 0
        %5432 = vmatprep.subr.bf16.mxu0 0
        %5433 = vmatpush2.bf16.msra.mxu0 0
        %5434 = vmatprep.subr.bf16.mxu0 0
        %5435 = vmatpush2.bf16.msra.mxu0 0
        %5436 = vmatprep.subr.bf16.mxu0 0
        %5437 = vmatpush2.bf16.msra.mxu0 0
        %5438 = vmatprep.mubr.bf16.mxu0 0
        %5439 = vmatmul.mubr.bf16.gmra.mxu0 %v5404
        %v5440 = vpop.f32.mrf.mxu0
        %v5441 = vadd.f32 0.0, %v5440
        %v5442 = vpop.f32.mrf.mxu0
        %v5443 = vpop.f32.mrf.mxu0
        %v5444 = vpop.f32.mrf.mxu0
        %5445 = vdwg.mxu0
        %v5447 = vshrl.u32 %v5355, 16
        %v5450 = vsel %vm5402, %v5447, 0
        %5452 = vmatprep.subr.bf16.mxu0 0
        %5453 = vmatpush1.bf16.msra.mxu0 0
        %5454 = vmatprep.subr.bf16.mxu0 0
        %5455 = vmatpush1.bf16.msra.mxu0 0
        %5456 = vmatprep.subr.bf16.mxu0 0
        %5457 = vmatpush1.bf16.msra.mxu0 0
        %5458 = vmatprep.subr.bf16.mxu0 0
        %5459 = vmatpush1.bf16.msra.mxu0 %v5396
        %5460 = vmatprep.subr.bf16.mxu0 0
        %5461 = vmatpush1.bf16.msra.mxu0 %v5395
        %5462 = vmatprep.subr.bf16.mxu0 0
        %5463 = vmatpush1.bf16.msra.mxu0 %v5394
        %5464 = vmatprep.subr.bf16.mxu0 0
        %5465 = vmatpush1.bf16.msra.mxu0 %v5393
        %5466 = vmatprep.subr.bf16.mxu0 0
        %5467 = vmatpush1.bf16.msra.mxu0 %v5392
        %5468 = vmatprep.subr.bf16.mxu0 0
        %5469 = vmatpush2.bf16.msra.mxu0 0
        %5470 = vmatprep.subr.bf16.mxu0 0
        %5471 = vmatpush2.bf16.msra.mxu0 0
        %5472 = vmatprep.subr.bf16.mxu0 0
        %5473 = vmatpush2.bf16.msra.mxu0 0
        %5474 = vmatprep.subr.bf16.mxu0 0
        %5475 = vmatpush2.bf16.msra.mxu0 0
        %5476 = vmatprep.subr.bf16.mxu0 0
        %5477 = vmatpush2.bf16.msra.mxu0 0
        %5478 = vmatprep.subr.bf16.mxu0 0
        %5479 = vmatpush2.bf16.msra.mxu0 0
        %5480 = vmatprep.subr.bf16.mxu0 0
        %5481 = vmatpush2.bf16.msra.mxu0 0
        %5482 = vmatprep.subr.bf16.mxu0 0
        %5483 = vmatpush2.bf16.msra.mxu0 0
        %5484 = vmatprep.mubr.bf16.mxu0 0
        %5485 = vmatmul.mubr.bf16.gmra.mxu0 %v5450
        %v5486 = vpop.f32.mrf.mxu0
        %v5487 = vadd.f32 0.0, %v5486
        %v5488 = vpop.f32.mrf.mxu0
        %v5489 = vpop.f32.mrf.mxu0
        %v5490 = vpop.f32.mrf.mxu0
        %5491 = vdwg.mxu0
        %v5493 = vshrl.u32 %v5356, 16
        %v5496 = vsel %vm5402, %v5493, 0
        %5498 = vmatprep.subr.bf16.mxu0 0
        %5499 = vmatpush1.bf16.msra.mxu0 0
        %5500 = vmatprep.subr.bf16.mxu0 0
        %5501 = vmatpush1.bf16.msra.mxu0 0
        %5502 = vmatprep.subr.bf16.mxu0 0
        %5503 = vmatpush1.bf16.msra.mxu0 0
        %5504 = vmatprep.subr.bf16.mxu0 0
        %5505 = vmatpush1.bf16.msra.mxu0 %v5396
        %5506 = vmatprep.subr.bf16.mxu0 0
        %5507 = vmatpush1.bf16.msra.mxu0 %v5395
        %5508 = vmatprep.subr.bf16.mxu0 0
        %5509 = vmatpush1.bf16.msra.mxu0 %v5394
        %5510 = vmatprep.subr.bf16.mxu0 0
        %5511 = vmatpush1.bf16.msra.mxu0 %v5393
        %5512 = vmatprep.subr.bf16.mxu0 0
        %5513 = vmatpush1.bf16.msra.mxu0 %v5392
        %5514 = vmatprep.subr.bf16.mxu0 0
        %5515 = vmatpush2.bf16.msra.mxu0 0
        %5516 = vmatprep.subr.bf16.mxu0 0
        %5517 = vmatpush2.bf16.msra.mxu0 0
        %5518 = vmatprep.subr.bf16.mxu0 0
        %5519 = vmatpush2.bf16.msra.mxu0 0
        %5520 = vmatprep.subr.bf16.mxu0 0
        %5521 = vmatpush2.bf16.msra.mxu0 0
        %5522 = vmatprep.subr.bf16.mxu0 0
        %5523 = vmatpush2.bf16.msra.mxu0 0
        %5524 = vmatprep.subr.bf16.mxu0 0
        %5525 = vmatpush2.bf16.msra.mxu0 0
        %5526 = vmatprep.subr.bf16.mxu0 0
        %5527 = vmatpush2.bf16.msra.mxu0 0
        %5528 = vmatprep.subr.bf16.mxu0 0
        %5529 = vmatpush2.bf16.msra.mxu0 0
        %5530 = vmatprep.mubr.bf16.mxu0 0
        %5531 = vmatmul.mubr.bf16.gmra.mxu0 %v5496
        %v5532 = vpop.f32.mrf.mxu0
        %v5533 = vadd.f32 0.0, %v5532
        %v5534 = vpop.f32.mrf.mxu0
        %v5535 = vpop.f32.mrf.mxu0
        %v5536 = vpop.f32.mrf.mxu0
        %5537 = vdwg.mxu0
        %v5539 = vshrl.u32 %v5357, 16
        %v5542 = vsel %vm5402, %v5539, 0
        %5544 = vmatprep.subr.bf16.mxu0 0
        %5545 = vmatpush1.bf16.msra.mxu0 0
        %5546 = vmatprep.subr.bf16.mxu0 0
        %5547 = vmatpush1.bf16.msra.mxu0 0
        %5548 = vmatprep.subr.bf16.mxu0 0
        %5549 = vmatpush1.bf16.msra.mxu0 0
        %5550 = vmatprep.subr.bf16.mxu0 0
        %5551 = vmatpush1.bf16.msra.mxu0 %v5396
        %5552 = vmatprep.subr.bf16.mxu0 0
        %5553 = vmatpush1.bf16.msra.mxu0 %v5395
        %5554 = vmatprep.subr.bf16.mxu0 0
        %5555 = vmatpush1.bf16.msra.mxu0 %v5394
        %5556 = vmatprep.subr.bf16.mxu0 0
        %5557 = vmatpush1.bf16.msra.mxu0 %v5393
        %5558 = vmatprep.subr.bf16.mxu0 0
        %5559 = vmatpush1.bf16.msra.mxu0 %v5392
        %5560 = vmatprep.subr.bf16.mxu0 0
        %5561 = vmatpush2.bf16.msra.mxu0 0
        %5562 = vmatprep.subr.bf16.mxu0 0
        %5563 = vmatpush2.bf16.msra.mxu0 0
        %5564 = vmatprep.subr.bf16.mxu0 0
        %5565 = vmatpush2.bf16.msra.mxu0 0
        %5566 = vmatprep.subr.bf16.mxu0 0
        %5567 = vmatpush2.bf16.msra.mxu0 0
        %5568 = vmatprep.subr.bf16.mxu0 0
        %5569 = vmatpush2.bf16.msra.mxu0 0
        %5570 = vmatprep.subr.bf16.mxu0 0
        %5571 = vmatpush2.bf16.msra.mxu0 0
        %5572 = vmatprep.subr.bf16.mxu0 0
        %5573 = vmatpush2.bf16.msra.mxu0 0
        %5574 = vmatprep.subr.bf16.mxu0 0
        %5575 = vmatpush2.bf16.msra.mxu0 0
        %5576 = vmatprep.mubr.bf16.mxu0 0
        %5577 = vmatmul.mubr.bf16.gmra.mxu0 %v5542
        %v5578 = vpop.f32.mrf.mxu0
        %v5579 = vadd.f32 0.0, %v5578
        %v5580 = vpop.f32.mrf.mxu0
        %v5581 = vpop.f32.mrf.mxu0
        %v5582 = vpop.f32.mrf.mxu0
        %5583 = vdwg.mxu0
        %v5594 = vunpack.c.l.b16 %v5344
        %v5595 = vunpack.c.l.b16 %v5345
        %v5596 = vunpack.c.l.b16 %v5346
        %v5597 = vunpack.c.l.b16 %v5347
        %v5598 = vunpack.c.l.b16 %v5348
        %v5599 = vunpack.c.l.b16 %v5349
        %v5600 = vunpack.c.l.b16 %v5350
        %v5601 = vunpack.c.l.b16 %v5351
        %v5602 = vunpack.c.l.b16 %v5352
        %v5603 = vunpack.c.l.b16 %v5353
        %v5604 = vpack.c.b16 %v5595, %v5594
        %v5605 = vpack.c.b16 %v5597, %v5596
        %v5606 = vpack.c.b16 %v5599, %v5598
        %v5607 = vpack.c.b16 %v5601, %v5600
        %v5608 = vpack.c.b16 %v5603, %v5602
        %v5614 = vsel %vm5402, %v5354, 0
        %5616 = vmatprep.subr.bf16.mxu0 0
        %5617 = vmatpush1.bf16.msra.mxu0 0
        %5618 = vmatprep.subr.bf16.mxu0 0
        %5619 = vmatpush1.bf16.msra.mxu0 0
        %5620 = vmatprep.subr.bf16.mxu0 0
        %5621 = vmatpush1.bf16.msra.mxu0 0
        %5622 = vmatprep.subr.bf16.mxu0 0
        %5623 = vmatpush1.bf16.msra.mxu0 %v5608
        %5624 = vmatprep.subr.bf16.mxu0 0
        %5625 = vmatpush1.bf16.msra.mxu0 %v5607
        %5626 = vmatprep.subr.bf16.mxu0 0
        %5627 = vmatpush1.bf16.msra.mxu0 %v5606
        %5628 = vmatprep.subr.bf16.mxu0 0
        %5629 = vmatpush1.bf16.msra.mxu0 %v5605
        %5630 = vmatprep.subr.bf16.mxu0 0
        %5631 = vmatpush1.bf16.msra.mxu0 %v5604
        %5632 = vmatprep.subr.bf16.mxu0 0
        %5633 = vmatpush2.bf16.msra.mxu0 0
        %5634 = vmatprep.subr.bf16.mxu0 0
        %5635 = vmatpush2.bf16.msra.mxu0 0
        %5636 = vmatprep.subr.bf16.mxu0 0
        %5637 = vmatpush2.bf16.msra.mxu0 0
        %5638 = vmatprep.subr.bf16.mxu0 0
        %5639 = vmatpush2.bf16.msra.mxu0 0
        %5640 = vmatprep.subr.bf16.mxu0 0
        %5641 = vmatpush2.bf16.msra.mxu0 0
        %5642 = vmatprep.subr.bf16.mxu0 0
        %5643 = vmatpush2.bf16.msra.mxu0 0
        %5644 = vmatprep.subr.bf16.mxu0 0
        %5645 = vmatpush2.bf16.msra.mxu0 0
        %5646 = vmatprep.subr.bf16.mxu0 0
        %5647 = vmatpush2.bf16.msra.mxu0 0
        %5648 = vmatprep.mubr.bf16.mxu0 0
        %5649 = vmatmul.mubr.bf16.gmra.mxu0 %v5614
        %v5650 = vpop.f32.mrf.mxu0
        %v5651 = vadd.f32 %v5441, %v5650
        %v5652 = vpop.f32.mrf.mxu0
        %v5653 = vpop.f32.mrf.mxu0
        %v5654 = vpop.f32.mrf.mxu0
        %5655 = vdwg.mxu0
        %v5656 = vsel %vm5402, %v5355, 0
        %5658 = vmatprep.subr.bf16.mxu0 0
        %5659 = vmatpush1.bf16.msra.mxu0 0
        %5660 = vmatprep.subr.bf16.mxu0 0
        %5661 = vmatpush1.bf16.msra.mxu0 0
        %5662 = vmatprep.subr.bf16.mxu0 0
        %5663 = vmatpush1.bf16.msra.mxu0 0
        %5664 = vmatprep.subr.bf16.mxu0 0
        %5665 = vmatpush1.bf16.msra.mxu0 %v5608
        %5666 = vmatprep.subr.bf16.mxu0 0
        %5667 = vmatpush1.bf16.msra.mxu0 %v5607
        %5668 = vmatprep.subr.bf16.mxu0 0
        %5669 = vmatpush1.bf16.msra.mxu0 %v5606
        %5670 = vmatprep.subr.bf16.mxu0 0
        %5671 = vmatpush1.bf16.msra.mxu0 %v5605
        %5672 = vmatprep.subr.bf16.mxu0 0
        %5673 = vmatpush1.bf16.msra.mxu0 %v5604
        %5674 = vmatprep.subr.bf16.mxu0 0
        %5675 = vmatpush2.bf16.msra.mxu0 0
        %5676 = vmatprep.subr.bf16.mxu0 0
        %5677 = vmatpush2.bf16.msra.mxu0 0
        %5678 = vmatprep.subr.bf16.mxu0 0
        %5679 = vmatpush2.bf16.msra.mxu0 0
        %5680 = vmatprep.subr.bf16.mxu0 0
        %5681 = vmatpush2.bf16.msra.mxu0 0
        %5682 = vmatprep.subr.bf16.mxu0 0
        %5683 = vmatpush2.bf16.msra.mxu0 0
        %5684 = vmatprep.subr.bf16.mxu0 0
        %5685 = vmatpush2.bf16.msra.mxu0 0
        %5686 = vmatprep.subr.bf16.mxu0 0
        %5687 = vmatpush2.bf16.msra.mxu0 0
        %5688 = vmatprep.subr.bf16.mxu0 0
        %5689 = vmatpush2.bf16.msra.mxu0 0
        %5690 = vmatprep.mubr.bf16.mxu0 0
        %5691 = vmatmul.mubr.bf16.gmra.mxu0 %v5656
        %v5692 = vpop.f32.mrf.mxu0
        %v5693 = vadd.f32 %v5487, %v5692
        %v5694 = vpop.f32.mrf.mxu0
        %v5695 = vpop.f32.mrf.mxu0
        %v5696 = vpop.f32.mrf.mxu0
        %5697 = vdwg.mxu0
        %v5698 = vsel %vm5402, %v5356, 0
        %5700 = vmatprep.subr.bf16.mxu0 0
        %5701 = vmatpush1.bf16.msra.mxu0 0
        %5702 = vmatprep.subr.bf16.mxu0 0
        %5703 = vmatpush1.bf16.msra.mxu0 0
        %5704 = vmatprep.subr.bf16.mxu0 0
        %5705 = vmatpush1.bf16.msra.mxu0 0
        %5706 = vmatprep.subr.bf16.mxu0 0
        %5707 = vmatpush1.bf16.msra.mxu0 %v5608
        %5708 = vmatprep.subr.bf16.mxu0 0
        %5709 = vmatpush1.bf16.msra.mxu0 %v5607
        %5710 = vmatprep.subr.bf16.mxu0 0
        %5711 = vmatpush1.bf16.msra.mxu0 %v5606
        %5712 = vmatprep.subr.bf16.mxu0 0
        %5713 = vmatpush1.bf16.msra.mxu0 %v5605
        %5714 = vmatprep.subr.bf16.mxu0 0
        %5715 = vmatpush1.bf16.msra.mxu0 %v5604
        %5716 = vmatprep.subr.bf16.mxu0 0
        %5717 = vmatpush2.bf16.msra.mxu0 0
        %5718 = vmatprep.subr.bf16.mxu0 0
        %5719 = vmatpush2.bf16.msra.mxu0 0
        %5720 = vmatprep.subr.bf16.mxu0 0
        %5721 = vmatpush2.bf16.msra.mxu0 0
        %5722 = vmatprep.subr.bf16.mxu0 0
        %5723 = vmatpush2.bf16.msra.mxu0 0
        %5724 = vmatprep.subr.bf16.mxu0 0
        %5725 = vmatpush2.bf16.msra.mxu0 0
        %5726 = vmatprep.subr.bf16.mxu0 0
        %5727 = vmatpush2.bf16.msra.mxu0 0
        %5728 = vmatprep.subr.bf16.mxu0 0
        %5729 = vmatpush2.bf16.msra.mxu0 0
        %5730 = vmatprep.subr.bf16.mxu0 0
        %5731 = vmatpush2.bf16.msra.mxu0 0
        %5732 = vmatprep.mubr.bf16.mxu0 0
        %5733 = vmatmul.mubr.bf16.gmra.mxu0 %v5698
        %v5734 = vpop.f32.mrf.mxu0
        %v5735 = vadd.f32 %v5533, %v5734
        %v5736 = vpop.f32.mrf.mxu0
        %v5737 = vpop.f32.mrf.mxu0
        %v5738 = vpop.f32.mrf.mxu0
        %5739 = vdwg.mxu0
        %v5740 = vsel %vm5402, %v5357, 0
        %5742 = vmatprep.subr.bf16.mxu0 0
        %5743 = vmatpush1.bf16.msra.mxu0 0
        %5744 = vmatprep.subr.bf16.mxu0 0
        %5745 = vmatpush1.bf16.msra.mxu0 0
        %5746 = vmatprep.subr.bf16.mxu0 0
        %5747 = vmatpush1.bf16.msra.mxu0 0
        %5748 = vmatprep.subr.bf16.mxu0 0
        %5749 = vmatpush1.bf16.msra.mxu0 %v5608
        %5750 = vmatprep.subr.bf16.mxu0 0
        %5751 = vmatpush1.bf16.msra.mxu0 %v5607
        %5752 = vmatprep.subr.bf16.mxu0 0
        %5753 = vmatpush1.bf16.msra.mxu0 %v5606
        %5754 = vmatprep.subr.bf16.mxu0 0
        %5755 = vmatpush1.bf16.msra.mxu0 %v5605
        %5756 = vmatprep.subr.bf16.mxu0 0
        %5757 = vmatpush1.bf16.msra.mxu0 %v5604
        %5758 = vmatprep.subr.bf16.mxu0 0
        %5759 = vmatpush2.bf16.msra.mxu0 0
        %5760 = vmatprep.subr.bf16.mxu0 0
        %5761 = vmatpush2.bf16.msra.mxu0 0
        %5762 = vmatprep.subr.bf16.mxu0 0
        %5763 = vmatpush2.bf16.msra.mxu0 0
        %5764 = vmatprep.subr.bf16.mxu0 0
        %5765 = vmatpush2.bf16.msra.mxu0 0
        %5766 = vmatprep.subr.bf16.mxu0 0
        %5767 = vmatpush2.bf16.msra.mxu0 0
        %5768 = vmatprep.subr.bf16.mxu0 0
        %5769 = vmatpush2.bf16.msra.mxu0 0
        %5770 = vmatprep.subr.bf16.mxu0 0
        %5771 = vmatpush2.bf16.msra.mxu0 0
        %5772 = vmatprep.subr.bf16.mxu0 0
        %5773 = vmatpush2.bf16.msra.mxu0 0
        %5774 = vmatprep.mubr.bf16.mxu0 0
        %5775 = vmatmul.mubr.bf16.gmra.mxu0 %v5740
        %v5776 = vpop.f32.mrf.mxu0
        %v5777 = vadd.f32 %v5579, %v5776
        %v5778 = vpop.f32.mrf.mxu0
        %v5779 = vpop.f32.mrf.mxu0
        %v5780 = vpop.f32.mrf.mxu0
        %5781 = vdwg.mxu0
        %s5782 = scalar_lea.vmem %s9, 80
        %v5783 = vld [vmem:[%s5782] sm:$0xf]
        %v5784 = vld [vmem:[%s5782 + $0x4] sm:$0xf]
        %v5785 = vld [vmem:[%s5782 + $0x8] sm:$0xf]
        %v5786 = vld [vmem:[%s5782 + $0xc] sm:$0xf]
        %v5787 = vld [vmem:[%s5782 + $0x10] sm:$0xf]
        %v5788 = vld [vmem:[%s5782 + $0x14] sm:$0xf]
        %v5789 = vld [vmem:[%s5782 + $0x18] sm:$0xf]
        %v5790 = vld [vmem:[%s5782 + $0x1c] sm:$0xf]
        %v5791 = vld [vmem:[%s5782 + $0x20] sm:$0xf]
        %v5792 = vld [vmem:[%s5782 + $0x24] sm:$0xf]
        %v5794 = vrot.slane %v5354, 1
        %v5805 = vunpack.c.l.b16 %v5783
        %v5806 = vunpack.c.l.b16 %v5784
        %v5807 = vunpack.c.l.b16 %v5785
        %v5808 = vunpack.c.l.b16 %v5786
        %v5809 = vunpack.c.l.b16 %v5787
        %v5810 = vunpack.c.l.b16 %v5788
        %v5811 = vunpack.c.l.b16 %v5789
        %v5812 = vunpack.c.l.b16 %v5790
        %v5813 = vunpack.c.l.b16 %v5791
        %v5814 = vunpack.c.l.b16 %v5792
        %v5815 = vpack.c.b16 %v5806, %v5805
        %v5816 = vpack.c.b16 %v5808, %v5807
        %v5817 = vpack.c.b16 %v5810, %v5809
        %v5818 = vpack.c.b16 %v5812, %v5811
        %v5819 = vpack.c.b16 %v5814, %v5813
        %v5826 = vsel %vm5402, %v5794, 0
        %5828 = vmatprep.subr.bf16.mxu0 0
        %5829 = vmatpush1.bf16.msra.mxu0 0
        %5830 = vmatprep.subr.bf16.mxu0 0
        %5831 = vmatpush1.bf16.msra.mxu0 0
        %5832 = vmatprep.subr.bf16.mxu0 0
        %5833 = vmatpush1.bf16.msra.mxu0 0
        %5834 = vmatprep.subr.bf16.mxu0 0
        %5835 = vmatpush1.bf16.msra.mxu0 %v5819
        %5836 = vmatprep.subr.bf16.mxu0 0
        %5837 = vmatpush1.bf16.msra.mxu0 %v5818
        %5838 = vmatprep.subr.bf16.mxu0 0
        %5839 = vmatpush1.bf16.msra.mxu0 %v5817
        %5840 = vmatprep.subr.bf16.mxu0 0
        %5841 = vmatpush1.bf16.msra.mxu0 %v5816
        %5842 = vmatprep.subr.bf16.mxu0 0
        %5843 = vmatpush1.bf16.msra.mxu0 %v5815
        %5844 = vmatprep.subr.bf16.mxu0 0
        %5845 = vmatpush2.bf16.msra.mxu0 0
        %5846 = vmatprep.subr.bf16.mxu0 0
        %5847 = vmatpush2.bf16.msra.mxu0 0
        %5848 = vmatprep.subr.bf16.mxu0 0
        %5849 = vmatpush2.bf16.msra.mxu0 0
        %5850 = vmatprep.subr.bf16.mxu0 0
        %5851 = vmatpush2.bf16.msra.mxu0 0
        %5852 = vmatprep.subr.bf16.mxu0 0
        %5853 = vmatpush2.bf16.msra.mxu0 0
        %5854 = vmatprep.subr.bf16.mxu0 0
        %5855 = vmatpush2.bf16.msra.mxu0 0
        %5856 = vmatprep.subr.bf16.mxu0 0
        %5857 = vmatpush2.bf16.msra.mxu0 0
        %5858 = vmatprep.subr.bf16.mxu0 0
        %5859 = vmatpush2.bf16.msra.mxu0 0
        %5860 = vmatprep.mubr.bf16.mxu0 0
        %5861 = vmatmul.mubr.bf16.gmra.mxu0 %v5826
        %v5862 = vpop.f32.mrf.mxu0
        %v5863 = vadd.f32 0.0, %v5862
        %v5864 = vpop.f32.mrf.mxu0
        %v5865 = vpop.f32.mrf.mxu0
        %v5866 = vpop.f32.mrf.mxu0
        %5867 = vdwg.mxu0
        %v5869 = vrot.slane %v5355, 1
        %v5871 = vsel %vm5402, %v5869, 0
        %5873 = vmatprep.subr.bf16.mxu0 0
        %5874 = vmatpush1.bf16.msra.mxu0 0
        %5875 = vmatprep.subr.bf16.mxu0 0
        %5876 = vmatpush1.bf16.msra.mxu0 0
        %5877 = vmatprep.subr.bf16.mxu0 0
        %5878 = vmatpush1.bf16.msra.mxu0 0
        %5879 = vmatprep.subr.bf16.mxu0 0
        %5880 = vmatpush1.bf16.msra.mxu0 %v5819
        %5881 = vmatprep.subr.bf16.mxu0 0
        %5882 = vmatpush1.bf16.msra.mxu0 %v5818
        %5883 = vmatprep.subr.bf16.mxu0 0
        %5884 = vmatpush1.bf16.msra.mxu0 %v5817
        %5885 = vmatprep.subr.bf16.mxu0 0
        %5886 = vmatpush1.bf16.msra.mxu0 %v5816
        %5887 = vmatprep.subr.bf16.mxu0 0
        %5888 = vmatpush1.bf16.msra.mxu0 %v5815
        %5889 = vmatprep.subr.bf16.mxu0 0
        %5890 = vmatpush2.bf16.msra.mxu0 0
        %5891 = vmatprep.subr.bf16.mxu0 0
        %5892 = vmatpush2.bf16.msra.mxu0 0
        %5893 = vmatprep.subr.bf16.mxu0 0
        %5894 = vmatpush2.bf16.msra.mxu0 0
        %5895 = vmatprep.subr.bf16.mxu0 0
        %5896 = vmatpush2.bf16.msra.mxu0 0
        %5897 = vmatprep.subr.bf16.mxu0 0
        %5898 = vmatpush2.bf16.msra.mxu0 0
        %5899 = vmatprep.subr.bf16.mxu0 0
        %5900 = vmatpush2.bf16.msra.mxu0 0
        %5901 = vmatprep.subr.bf16.mxu0 0
        %5902 = vmatpush2.bf16.msra.mxu0 0
        %5903 = vmatprep.subr.bf16.mxu0 0
        %5904 = vmatpush2.bf16.msra.mxu0 0
        %5905 = vmatprep.mubr.bf16.mxu0 0
        %5906 = vmatmul.mubr.bf16.gmra.mxu0 %v5871
        %v5907 = vpop.f32.mrf.mxu0
        %v5908 = vadd.f32 0.0, %v5907
        %v5909 = vpop.f32.mrf.mxu0
        %v5910 = vpop.f32.mrf.mxu0
        %v5911 = vpop.f32.mrf.mxu0
        %5912 = vdwg.mxu0
        %v5914 = vrot.slane %v5356, 1
        %v5916 = vsel %vm5402, %v5914, 0
        %5918 = vmatprep.subr.bf16.mxu0 0
        %5919 = vmatpush1.bf16.msra.mxu0 0
        %5920 = vmatprep.subr.bf16.mxu0 0
        %5921 = vmatpush1.bf16.msra.mxu0 0
        %5922 = vmatprep.subr.bf16.mxu0 0
        %5923 = vmatpush1.bf16.msra.mxu0 0
        %5924 = vmatprep.subr.bf16.mxu0 0
        %5925 = vmatpush1.bf16.msra.mxu0 %v5819
        %5926 = vmatprep.subr.bf16.mxu0 0
        %5927 = vmatpush1.bf16.msra.mxu0 %v5818
        %5928 = vmatprep.subr.bf16.mxu0 0
        %5929 = vmatpush1.bf16.msra.mxu0 %v5817
        %5930 = vmatprep.subr.bf16.mxu0 0
        %5931 = vmatpush1.bf16.msra.mxu0 %v5816
        %5932 = vmatprep.subr.bf16.mxu0 0
        %5933 = vmatpush1.bf16.msra.mxu0 %v5815
        %5934 = vmatprep.subr.bf16.mxu0 0
        %5935 = vmatpush2.bf16.msra.mxu0 0
        %5936 = vmatprep.subr.bf16.mxu0 0
        %5937 = vmatpush2.bf16.msra.mxu0 0
        %5938 = vmatprep.subr.bf16.mxu0 0
        %5939 = vmatpush2.bf16.msra.mxu0 0
        %5940 = vmatprep.subr.bf16.mxu0 0
        %5941 = vmatpush2.bf16.msra.mxu0 0
        %5942 = vmatprep.subr.bf16.mxu0 0
        %5943 = vmatpush2.bf16.msra.mxu0 0
        %5944 = vmatprep.subr.bf16.mxu0 0
        %5945 = vmatpush2.bf16.msra.mxu0 0
        %5946 = vmatprep.subr.bf16.mxu0 0
        %5947 = vmatpush2.bf16.msra.mxu0 0
        %5948 = vmatprep.subr.bf16.mxu0 0
        %5949 = vmatpush2.bf16.msra.mxu0 0
        %5950 = vmatprep.mubr.bf16.mxu0 0
        %5951 = vmatmul.mubr.bf16.gmra.mxu0 %v5916
        %v5952 = vpop.f32.mrf.mxu0
        %v5953 = vadd.f32 0.0, %v5952
        %v5954 = vpop.f32.mrf.mxu0
        %v5955 = vpop.f32.mrf.mxu0
        %v5956 = vpop.f32.mrf.mxu0
        %5957 = vdwg.mxu0
        %v5959 = vrot.slane %v5357, 1
        %v5961 = vsel %vm5402, %v5959, 0
        %5963 = vmatprep.subr.bf16.mxu0 0
        %5964 = vmatpush1.bf16.msra.mxu0 0
        %5965 = vmatprep.subr.bf16.mxu0 0
        %5966 = vmatpush1.bf16.msra.mxu0 0
        %5967 = vmatprep.subr.bf16.mxu0 0
        %5968 = vmatpush1.bf16.msra.mxu0 0
        %5969 = vmatprep.subr.bf16.mxu0 0
        %5970 = vmatpush1.bf16.msra.mxu0 %v5819
        %5971 = vmatprep.subr.bf16.mxu0 0
        %5972 = vmatpush1.bf16.msra.mxu0 %v5818
        %5973 = vmatprep.subr.bf16.mxu0 0
        %5974 = vmatpush1.bf16.msra.mxu0 %v5817
        %5975 = vmatprep.subr.bf16.mxu0 0
        %5976 = vmatpush1.bf16.msra.mxu0 %v5816
        %5977 = vmatprep.subr.bf16.mxu0 0
        %5978 = vmatpush1.bf16.msra.mxu0 %v5815
        %5979 = vmatprep.subr.bf16.mxu0 0
        %5980 = vmatpush2.bf16.msra.mxu0 0
        %5981 = vmatprep.subr.bf16.mxu0 0
        %5982 = vmatpush2.bf16.msra.mxu0 0
        %5983 = vmatprep.subr.bf16.mxu0 0
        %5984 = vmatpush2.bf16.msra.mxu0 0
        %5985 = vmatprep.subr.bf16.mxu0 0
        %5986 = vmatpush2.bf16.msra.mxu0 0
        %5987 = vmatprep.subr.bf16.mxu0 0
        %5988 = vmatpush2.bf16.msra.mxu0 0
        %5989 = vmatprep.subr.bf16.mxu0 0
        %5990 = vmatpush2.bf16.msra.mxu0 0
        %5991 = vmatprep.subr.bf16.mxu0 0
        %5992 = vmatpush2.bf16.msra.mxu0 0
        %5993 = vmatprep.subr.bf16.mxu0 0
        %5994 = vmatpush2.bf16.msra.mxu0 0
        %5995 = vmatprep.mubr.bf16.mxu0 0
        %5996 = vmatmul.mubr.bf16.gmra.mxu0 %v5961
        %v5997 = vpop.f32.mrf.mxu0
        %v5998 = vadd.f32 0.0, %v5997
        %v5999 = vpop.f32.mrf.mxu0
        %v6000 = vpop.f32.mrf.mxu0
        %v6001 = vpop.f32.mrf.mxu0
        %6002 = vdwg.mxu0
        %v6003 = vadd.f32 %v5651, %v5863
        %v6004 = vadd.f32 %v5693, %v5908
        %v6005 = vadd.f32 %v5735, %v5953
        %v6006 = vadd.f32 %v5777, %v5998
        %s6007 = scalar_lea.vmem %s9, 120
        %v6008 = vld [vmem:[%s6007] sm:$0xf]
        %v6009 = vld [vmem:[%s6007 + $0x4] sm:$0xf]
        %v6010 = vld [vmem:[%s6007 + $0x8] sm:$0xf]
        %v6011 = vld [vmem:[%s6007 + $0xc] sm:$0xf]
        %v6012 = vld [vmem:[%s6007 + $0x10] sm:$0xf]
        %v6013 = vld [vmem:[%s6007 + $0x14] sm:$0xf]
        %v6014 = vld [vmem:[%s6007 + $0x18] sm:$0xf]
        %v6015 = vld [vmem:[%s6007 + $0x1c] sm:$0xf]
        %v6016 = vld [vmem:[%s6007 + $0x20] sm:$0xf]
        %v6017 = vld [vmem:[%s6007 + $0x24] sm:$0xf]
        %v6018 = vrot.slane %v5370, 1
        %v6029 = vunpack.c.l.b16 %v6008
        %v6030 = vunpack.c.l.b16 %v6009
        %v6031 = vunpack.c.l.b16 %v6010
        %v6032 = vunpack.c.l.b16 %v6011
        %v6033 = vunpack.c.l.b16 %v6012
        %v6034 = vunpack.c.l.b16 %v6013
        %v6035 = vunpack.c.l.b16 %v6014
        %v6036 = vunpack.c.l.b16 %v6015
        %v6037 = vunpack.c.l.b16 %v6016
        %v6038 = vunpack.c.l.b16 %v6017
        %v6039 = vpack.c.b16 %v6030, %v6029
        %v6040 = vpack.c.b16 %v6032, %v6031
        %v6041 = vpack.c.b16 %v6034, %v6033
        %v6042 = vpack.c.b16 %v6036, %v6035
        %v6043 = vpack.c.b16 %v6038, %v6037
        %v6050 = vsel %vm5402, %v6018, 0
        %6052 = vmatprep.subr.bf16.mxu0 0
        %6053 = vmatpush1.bf16.msra.mxu0 0
        %6054 = vmatprep.subr.bf16.mxu0 0
        %6055 = vmatpush1.bf16.msra.mxu0 0
        %6056 = vmatprep.subr.bf16.mxu0 0
        %6057 = vmatpush1.bf16.msra.mxu0 0
        %6058 = vmatprep.subr.bf16.mxu0 0
        %6059 = vmatpush1.bf16.msra.mxu0 %v6043
        %6060 = vmatprep.subr.bf16.mxu0 0
        %6061 = vmatpush1.bf16.msra.mxu0 %v6042
        %6062 = vmatprep.subr.bf16.mxu0 0
        %6063 = vmatpush1.bf16.msra.mxu0 %v6041
        %6064 = vmatprep.subr.bf16.mxu0 0
        %6065 = vmatpush1.bf16.msra.mxu0 %v6040
        %6066 = vmatprep.subr.bf16.mxu0 0
        %6067 = vmatpush1.bf16.msra.mxu0 %v6039
        %6068 = vmatprep.subr.bf16.mxu0 0
        %6069 = vmatpush2.bf16.msra.mxu0 0
        %6070 = vmatprep.subr.bf16.mxu0 0
        %6071 = vmatpush2.bf16.msra.mxu0 0
        %6072 = vmatprep.subr.bf16.mxu0 0
        %6073 = vmatpush2.bf16.msra.mxu0 0
        %6074 = vmatprep.subr.bf16.mxu0 0
        %6075 = vmatpush2.bf16.msra.mxu0 0
        %6076 = vmatprep.subr.bf16.mxu0 0
        %6077 = vmatpush2.bf16.msra.mxu0 0
        %6078 = vmatprep.subr.bf16.mxu0 0
        %6079 = vmatpush2.bf16.msra.mxu0 0
        %6080 = vmatprep.subr.bf16.mxu0 0
        %6081 = vmatpush2.bf16.msra.mxu0 0
        %6082 = vmatprep.subr.bf16.mxu0 0
        %6083 = vmatpush2.bf16.msra.mxu0 0
        %6084 = vmatprep.mubr.bf16.mxu0 0
        %6085 = vmatmul.mubr.bf16.gmra.mxu0 %v6050
        %v6086 = vpop.f32.mrf.mxu0
        %v6087 = vadd.f32 0.0, %v6086
        %v6088 = vpop.f32.mrf.mxu0
        %v6089 = vpop.f32.mrf.mxu0
        %v6090 = vpop.f32.mrf.mxu0
        %6091 = vdwg.mxu0
        %v6092 = vrot.slane %v5447, 1
        %v6094 = vsel %vm5402, %v6092, 0
        %6096 = vmatprep.subr.bf16.mxu0 0
        %6097 = vmatpush1.bf16.msra.mxu0 0
        %6098 = vmatprep.subr.bf16.mxu0 0
        %6099 = vmatpush1.bf16.msra.mxu0 0
        %6100 = vmatprep.subr.bf16.mxu0 0
        %6101 = vmatpush1.bf16.msra.mxu0 0
        %6102 = vmatprep.subr.bf16.mxu0 0
        %6103 = vmatpush1.bf16.msra.mxu0 %v6043
        %6104 = vmatprep.subr.bf16.mxu0 0
        %6105 = vmatpush1.bf16.msra.mxu0 %v6042
        %6106 = vmatprep.subr.bf16.mxu0 0
        %6107 = vmatpush1.bf16.msra.mxu0 %v6041
        %6108 = vmatprep.subr.bf16.mxu0 0
        %6109 = vmatpush1.bf16.msra.mxu0 %v6040
        %6110 = vmatprep.subr.bf16.mxu0 0
        %6111 = vmatpush1.bf16.msra.mxu0 %v6039
        %6112 = vmatprep.subr.bf16.mxu0 0
        %6113 = vmatpush2.bf16.msra.mxu0 0
        %6114 = vmatprep.subr.bf16.mxu0 0
        %6115 = vmatpush2.bf16.msra.mxu0 0
        %6116 = vmatprep.subr.bf16.mxu0 0
        %6117 = vmatpush2.bf16.msra.mxu0 0
        %6118 = vmatprep.subr.bf16.mxu0 0
        %6119 = vmatpush2.bf16.msra.mxu0 0
        %6120 = vmatprep.subr.bf16.mxu0 0
        %6121 = vmatpush2.bf16.msra.mxu0 0
        %6122 = vmatprep.subr.bf16.mxu0 0
        %6123 = vmatpush2.bf16.msra.mxu0 0
        %6124 = vmatprep.subr.bf16.mxu0 0
        %6125 = vmatpush2.bf16.msra.mxu0 0
        %6126 = vmatprep.subr.bf16.mxu0 0
        %6127 = vmatpush2.bf16.msra.mxu0 0
        %6128 = vmatprep.mubr.bf16.mxu0 0
        %6129 = vmatmul.mubr.bf16.gmra.mxu0 %v6094
        %v6130 = vpop.f32.mrf.mxu0
        %v6131 = vadd.f32 0.0, %v6130
        %v6132 = vpop.f32.mrf.mxu0
        %v6133 = vpop.f32.mrf.mxu0
        %v6134 = vpop.f32.mrf.mxu0
        %6135 = vdwg.mxu0
        %v6136 = vrot.slane %v5493, 1
        %v6138 = vsel %vm5402, %v6136, 0
        %6140 = vmatprep.subr.bf16.mxu0 0
        %6141 = vmatpush1.bf16.msra.mxu0 0
        %6142 = vmatprep.subr.bf16.mxu0 0
        %6143 = vmatpush1.bf16.msra.mxu0 0
        %6144 = vmatprep.subr.bf16.mxu0 0
        %6145 = vmatpush1.bf16.msra.mxu0 0
        %6146 = vmatprep.subr.bf16.mxu0 0
        %6147 = vmatpush1.bf16.msra.mxu0 %v6043
        %6148 = vmatprep.subr.bf16.mxu0 0
        %6149 = vmatpush1.bf16.msra.mxu0 %v6042
        %6150 = vmatprep.subr.bf16.mxu0 0
        %6151 = vmatpush1.bf16.msra.mxu0 %v6041
        %6152 = vmatprep.subr.bf16.mxu0 0
        %6153 = vmatpush1.bf16.msra.mxu0 %v6040
        %6154 = vmatprep.subr.bf16.mxu0 0
        %6155 = vmatpush1.bf16.msra.mxu0 %v6039
        %6156 = vmatprep.subr.bf16.mxu0 0
        %6157 = vmatpush2.bf16.msra.mxu0 0
        %6158 = vmatprep.subr.bf16.mxu0 0
        %6159 = vmatpush2.bf16.msra.mxu0 0
        %6160 = vmatprep.subr.bf16.mxu0 0
        %6161 = vmatpush2.bf16.msra.mxu0 0
        %6162 = vmatprep.subr.bf16.mxu0 0
        %6163 = vmatpush2.bf16.msra.mxu0 0
        %6164 = vmatprep.subr.bf16.mxu0 0
        %6165 = vmatpush2.bf16.msra.mxu0 0
        %6166 = vmatprep.subr.bf16.mxu0 0
        %6167 = vmatpush2.bf16.msra.mxu0 0
        %6168 = vmatprep.subr.bf16.mxu0 0
        %6169 = vmatpush2.bf16.msra.mxu0 0
        %6170 = vmatprep.subr.bf16.mxu0 0
        %6171 = vmatpush2.bf16.msra.mxu0 0
        %6172 = vmatprep.mubr.bf16.mxu0 0
        %6173 = vmatmul.mubr.bf16.gmra.mxu0 %v6138
        %v6174 = vpop.f32.mrf.mxu0
        %v6175 = vadd.f32 0.0, %v6174
        %v6176 = vpop.f32.mrf.mxu0
        %v6177 = vpop.f32.mrf.mxu0
        %v6178 = vpop.f32.mrf.mxu0
        %6179 = vdwg.mxu0
        %v6180 = vrot.slane %v5539, 1
        %v6182 = vsel %vm5402, %v6180, 0
        %6184 = vmatprep.subr.bf16.mxu0 0
        %6185 = vmatpush1.bf16.msra.mxu0 0
        %6186 = vmatprep.subr.bf16.mxu0 0
        %6187 = vmatpush1.bf16.msra.mxu0 0
        %6188 = vmatprep.subr.bf16.mxu0 0
        %6189 = vmatpush1.bf16.msra.mxu0 0
        %6190 = vmatprep.subr.bf16.mxu0 0
        %6191 = vmatpush1.bf16.msra.mxu0 %v6043
        %6192 = vmatprep.subr.bf16.mxu0 0
        %6193 = vmatpush1.bf16.msra.mxu0 %v6042
        %6194 = vmatprep.subr.bf16.mxu0 0
        %6195 = vmatpush1.bf16.msra.mxu0 %v6041
        %6196 = vmatprep.subr.bf16.mxu0 0
        %6197 = vmatpush1.bf16.msra.mxu0 %v6040
        %6198 = vmatprep.subr.bf16.mxu0 0
        %6199 = vmatpush1.bf16.msra.mxu0 %v6039
        %6200 = vmatprep.subr.bf16.mxu0 0
        %6201 = vmatpush2.bf16.msra.mxu0 0
        %6202 = vmatprep.subr.bf16.mxu0 0
        %6203 = vmatpush2.bf16.msra.mxu0 0
        %6204 = vmatprep.subr.bf16.mxu0 0
        %6205 = vmatpush2.bf16.msra.mxu0 0
        %6206 = vmatprep.subr.bf16.mxu0 0
        %6207 = vmatpush2.bf16.msra.mxu0 0
        %6208 = vmatprep.subr.bf16.mxu0 0
        %6209 = vmatpush2.bf16.msra.mxu0 0
        %6210 = vmatprep.subr.bf16.mxu0 0
        %6211 = vmatpush2.bf16.msra.mxu0 0
        %6212 = vmatprep.subr.bf16.mxu0 0
        %6213 = vmatpush2.bf16.msra.mxu0 0
        %6214 = vmatprep.subr.bf16.mxu0 0
        %6215 = vmatpush2.bf16.msra.mxu0 0
        %6216 = vmatprep.mubr.bf16.mxu0 0
        %6217 = vmatmul.mubr.bf16.gmra.mxu0 %v6182
        %v6218 = vpop.f32.mrf.mxu0
        %v6219 = vadd.f32 0.0, %v6218
        %v6220 = vpop.f32.mrf.mxu0
        %v6221 = vpop.f32.mrf.mxu0
        %v6222 = vpop.f32.mrf.mxu0
        %6223 = vdwg.mxu0
        %v6224 = vadd.f32 %v6003, %v6087
        %v6225 = vadd.f32 %v6004, %v6131
        %v6226 = vadd.f32 %v6005, %v6175
        %v6227 = vadd.f32 %v6006, %v6219
        %v6228 = vld [vmem:[%s10] sm:$0x1]
        %v6229 = vadd.f32 %v6224, %v6228
        %v6230 = vadd.f32 %v6225, %v6228
        %v6231 = vadd.f32 %v6226, %v6228
        %v6232 = vadd.f32 %v6227, %v6228
        %v6233 = vmax.f32 %v6229, 0.0
        %v6234 = vmax.f32 %v6230, 0.0
        %v6235 = vmax.f32 %v6231, 0.0
        %v6236 = vmax.f32 %v6232, 0.0
        %v6237 = vld [vmem:[%s11] sm:$0xf]
        %v6238 = vld [vmem:[%s11 + $0x4] sm:$0xf]
        %v6239 = vld [vmem:[%s11 + $0x8] sm:$0xf]
        %v6240 = vld [vmem:[%s11 + $0xc] sm:$0xf]
        %v6241 = vld [vmem:[%s11 + $0x10] sm:$0xf]
        %v6242 = vld [vmem:[%s11 + $0x14] sm:$0xf]
        %v6243 = vld [vmem:[%s11 + $0x18] sm:$0x1]
        %v6244 = vpack.c.bf16 %v6233, %v6233
        %v6245 = vpack.c.bf16 %v6234, %v6234
        %v6246 = vpack.c.bf16 %v6235, %v6235
        %v6247 = vpack.c.bf16 %v6236, %v6236
        %v6248 = vld [vmem:[%s12] sm:$0x1]
        %v6256 = vunpack.c.l.b16 %v6237
        %v6257 = vunpack.c.l.b16 %v6238
        %v6258 = vunpack.c.l.b16 %v6239
        %v6259 = vunpack.c.l.b16 %v6240
        %v6260 = vunpack.c.l.b16 %v6241
        %v6261 = vunpack.c.l.b16 %v6242
        %v6262 = vunpack.c.l.b16 %v6243
        %v6263 = vpack.c.b16 %v6257, %v6256
        %v6264 = vpack.c.b16 %v6259, %v6258
        %v6265 = vpack.c.b16 %v6261, %v6260
        %v6266 = vpack.c.b16 %v6262, %v6262
        %vm6270 = vcmask 408576
        %v6272 = vsel %vm6270, %v6244, 0
        %vm6274 = vcmask 1040384
        %v6276 = vsel %vm6274, %v6266, 0
        %6278 = vmatprep.subr.bf16.mxu0 0
        %6279 = vmatpush1.bf16.msra.mxu0 0
        %6280 = vmatprep.subr.bf16.mxu0 0
        %6281 = vmatpush1.bf16.msra.mxu0 0
        %6282 = vmatprep.subr.bf16.mxu0 0
        %6283 = vmatpush1.bf16.msra.mxu0 0
        %6284 = vmatprep.subr.bf16.mxu0 0
        %6285 = vmatpush1.bf16.msra.mxu0 0
        %6286 = vmatprep.subr.bf16.mxu0 0
        %6287 = vmatpush1.bf16.msra.mxu0 %v6276
        %6288 = vmatprep.subr.bf16.mxu0 0
        %6289 = vmatpush1.bf16.msra.mxu0 %v6265
        %6290 = vmatprep.subr.bf16.mxu0 0
        %6291 = vmatpush1.bf16.msra.mxu0 %v6264
        %6292 = vmatprep.subr.bf16.mxu0 0
        %6293 = vmatpush1.bf16.msra.mxu0 %v6263
        %6294 = vmatprep.subr.bf16.mxu0 0
        %6295 = vmatpush2.bf16.msra.mxu0 0
        %6296 = vmatprep.subr.bf16.mxu0 0
        %6297 = vmatpush2.bf16.msra.mxu0 0
        %6298 = vmatprep.subr.bf16.mxu0 0
        %6299 = vmatpush2.bf16.msra.mxu0 0
        %6300 = vmatprep.subr.bf16.mxu0 0
        %6301 = vmatpush2.bf16.msra.mxu0 0
        %6302 = vmatprep.subr.bf16.mxu0 0
        %6303 = vmatpush2.bf16.msra.mxu0 0
        %6304 = vmatprep.subr.bf16.mxu0 0
        %6305 = vmatpush2.bf16.msra.mxu0 0
        %6306 = vmatprep.subr.bf16.mxu0 0
        %6307 = vmatpush2.bf16.msra.mxu0 0
        %6308 = vmatprep.subr.bf16.mxu0 0
        %6309 = vmatpush2.bf16.msra.mxu0 0
        %6310 = vmatprep.mubr.bf16.mxu0 0
        %6311 = vmatmul.mubr.bf16.gmra.mxu0 %v6272
        %v6312 = vpop.f32.mrf.mxu0
        %v6313 = vadd.f32 %v6248, %v6312
        %v6314 = vpop.f32.mrf.mxu0
        %v6315 = vpop.f32.mrf.mxu0
        %v6316 = vpop.f32.mrf.mxu0
        %6317 = vdwg.mxu0
        %v6319 = vsel %vm6270, %v6245, 0
        %6321 = vmatprep.subr.bf16.mxu0 0
        %6322 = vmatpush1.bf16.msra.mxu0 0
        %6323 = vmatprep.subr.bf16.mxu0 0
        %6324 = vmatpush1.bf16.msra.mxu0 0
        %6325 = vmatprep.subr.bf16.mxu0 0
        %6326 = vmatpush1.bf16.msra.mxu0 0
        %6327 = vmatprep.subr.bf16.mxu0 0
        %6328 = vmatpush1.bf16.msra.mxu0 0
        %6329 = vmatprep.subr.bf16.mxu0 0
        %6330 = vmatpush1.bf16.msra.mxu0 %v6276
        %6331 = vmatprep.subr.bf16.mxu0 0
        %6332 = vmatpush1.bf16.msra.mxu0 %v6265
        %6333 = vmatprep.subr.bf16.mxu0 0
        %6334 = vmatpush1.bf16.msra.mxu0 %v6264
        %6335 = vmatprep.subr.bf16.mxu0 0
        %6336 = vmatpush1.bf16.msra.mxu0 %v6263
        %6337 = vmatprep.subr.bf16.mxu0 0
        %6338 = vmatpush2.bf16.msra.mxu0 0
        %6339 = vmatprep.subr.bf16.mxu0 0
        %6340 = vmatpush2.bf16.msra.mxu0 0
        %6341 = vmatprep.subr.bf16.mxu0 0
        %6342 = vmatpush2.bf16.msra.mxu0 0
        %6343 = vmatprep.subr.bf16.mxu0 0
        %6344 = vmatpush2.bf16.msra.mxu0 0
        %6345 = vmatprep.subr.bf16.mxu0 0
        %6346 = vmatpush2.bf16.msra.mxu0 0
        %6347 = vmatprep.subr.bf16.mxu0 0
        %6348 = vmatpush2.bf16.msra.mxu0 0
        %6349 = vmatprep.subr.bf16.mxu0 0
        %6350 = vmatpush2.bf16.msra.mxu0 0
        %6351 = vmatprep.subr.bf16.mxu0 0
        %6352 = vmatpush2.bf16.msra.mxu0 0
        %6353 = vmatprep.mubr.bf16.mxu0 0
        %6354 = vmatmul.mubr.bf16.gmra.mxu0 %v6319
        %v6355 = vpop.f32.mrf.mxu0
        %v6356 = vadd.f32 %v6248, %v6355
        %v6357 = vpop.f32.mrf.mxu0
        %v6358 = vpop.f32.mrf.mxu0
        %v6359 = vpop.f32.mrf.mxu0
        %6360 = vdwg.mxu0
        %v6362 = vsel %vm6270, %v6246, 0
        %6364 = vmatprep.subr.bf16.mxu0 0
        %6365 = vmatpush1.bf16.msra.mxu0 0
        %6366 = vmatprep.subr.bf16.mxu0 0
        %6367 = vmatpush1.bf16.msra.mxu0 0
        %6368 = vmatprep.subr.bf16.mxu0 0
        %6369 = vmatpush1.bf16.msra.mxu0 0
        %6370 = vmatprep.subr.bf16.mxu0 0
        %6371 = vmatpush1.bf16.msra.mxu0 0
        %6372 = vmatprep.subr.bf16.mxu0 0
        %6373 = vmatpush1.bf16.msra.mxu0 %v6276
        %6374 = vmatprep.subr.bf16.mxu0 0
        %6375 = vmatpush1.bf16.msra.mxu0 %v6265
        %6376 = vmatprep.subr.bf16.mxu0 0
        %6377 = vmatpush1.bf16.msra.mxu0 %v6264
        %6378 = vmatprep.subr.bf16.mxu0 0
        %6379 = vmatpush1.bf16.msra.mxu0 %v6263
        %6380 = vmatprep.subr.bf16.mxu0 0
        %6381 = vmatpush2.bf16.msra.mxu0 0
        %6382 = vmatprep.subr.bf16.mxu0 0
        %6383 = vmatpush2.bf16.msra.mxu0 0
        %6384 = vmatprep.subr.bf16.mxu0 0
        %6385 = vmatpush2.bf16.msra.mxu0 0
        %6386 = vmatprep.subr.bf16.mxu0 0
        %6387 = vmatpush2.bf16.msra.mxu0 0
        %6388 = vmatprep.subr.bf16.mxu0 0
        %6389 = vmatpush2.bf16.msra.mxu0 0
        %6390 = vmatprep.subr.bf16.mxu0 0
        %6391 = vmatpush2.bf16.msra.mxu0 0
        %6392 = vmatprep.subr.bf16.mxu0 0
        %6393 = vmatpush2.bf16.msra.mxu0 0
        %6394 = vmatprep.subr.bf16.mxu0 0
        %6395 = vmatpush2.bf16.msra.mxu0 0
        %6396 = vmatprep.mubr.bf16.mxu0 0
        %6397 = vmatmul.mubr.bf16.gmra.mxu0 %v6362
        %v6398 = vpop.f32.mrf.mxu0
        %v6399 = vadd.f32 %v6248, %v6398
        %v6400 = vpop.f32.mrf.mxu0
        %v6401 = vpop.f32.mrf.mxu0
        %v6402 = vpop.f32.mrf.mxu0
        %6403 = vdwg.mxu0
        %v6405 = vsel %vm6270, %v6247, 0
        %6407 = vmatprep.subr.bf16.mxu0 0
        %6408 = vmatpush1.bf16.msra.mxu0 0
        %6409 = vmatprep.subr.bf16.mxu0 0
        %6410 = vmatpush1.bf16.msra.mxu0 0
        %6411 = vmatprep.subr.bf16.mxu0 0
        %6412 = vmatpush1.bf16.msra.mxu0 0
        %6413 = vmatprep.subr.bf16.mxu0 0
        %6414 = vmatpush1.bf16.msra.mxu0 0
        %6415 = vmatprep.subr.bf16.mxu0 0
        %6416 = vmatpush1.bf16.msra.mxu0 %v6276
        %6417 = vmatprep.subr.bf16.mxu0 0
        %6418 = vmatpush1.bf16.msra.mxu0 %v6265
        %6419 = vmatprep.subr.bf16.mxu0 0
        %6420 = vmatpush1.bf16.msra.mxu0 %v6264
        %6421 = vmatprep.subr.bf16.mxu0 0
        %6422 = vmatpush1.bf16.msra.mxu0 %v6263
        %6423 = vmatprep.subr.bf16.mxu0 0
        %6424 = vmatpush2.bf16.msra.mxu0 0
        %6425 = vmatprep.subr.bf16.mxu0 0
        %6426 = vmatpush2.bf16.msra.mxu0 0
        %6427 = vmatprep.subr.bf16.mxu0 0
        %6428 = vmatpush2.bf16.msra.mxu0 0
        %6429 = vmatprep.subr.bf16.mxu0 0
        %6430 = vmatpush2.bf16.msra.mxu0 0
        %6431 = vmatprep.subr.bf16.mxu0 0
        %6432 = vmatpush2.bf16.msra.mxu0 0
        %6433 = vmatprep.subr.bf16.mxu0 0
        %6434 = vmatpush2.bf16.msra.mxu0 0
        %6435 = vmatprep.subr.bf16.mxu0 0
        %6436 = vmatpush2.bf16.msra.mxu0 0
        %6437 = vmatprep.subr.bf16.mxu0 0
        %6438 = vmatpush2.bf16.msra.mxu0 0
        %6439 = vmatprep.mubr.bf16.mxu0 0
        %6440 = vmatmul.mubr.bf16.gmra.mxu0 %v6405
        %v6441 = vpop.f32.mrf.mxu0
        %v6442 = vadd.f32 %v6248, %v6441
        %v6443 = vpop.f32.mrf.mxu0
        %v6444 = vpop.f32.mrf.mxu0
        %v6445 = vpop.f32.mrf.mxu0
        %6446 = vdwg.mxu0
        %vm6447 = vcmask 73728
        %v6448 = vsel %vm6447, %v6313, -inf
        %6449 = vmax.xlane.f32.xlu0 %v6448
        %v6450 = vpop.xlane.xlu0 %6449
        %v6451 = vsel %vm6447, %v6356, -inf
        %6452 = vmax.xlane.f32.xlu0 %v6451
        %v6453 = vpop.xlane.xlu0 %6452
        %v6454 = vsel %vm6447, %v6399, -inf
        %6455 = vmax.xlane.f32.xlu0 %v6454
        %v6456 = vpop.xlane.xlu0 %6455
        %v6457 = vsel %vm6447, %v6442, -inf
        %6458 = vmax.xlane.f32.xlu0 %v6457
        %v6459 = vpop.xlane.xlu0 %6458
        %v6460 = vsub.f32 %v6313, %v6450
        %v6461 = vsub.f32 %v6356, %v6453
        %v6462 = vsub.f32 %v6399, %v6456
        %v6463 = vsub.f32 %v6442, %v6459
        %v6464 = vmul.f32 %v6460, 1.442695
        %v6465 = vpow.pop %v6464
        %v6466 = vmul.f32 %v6461, 1.442695
        %v6467 = vpow.pop %v6466
        %v6468 = vmul.f32 %v6462, 1.442695
        %v6469 = vpow.pop %v6468
        %v6470 = vmul.f32 %v6463, 1.442695
        %v6471 = vpow.pop %v6470
        %v6472 = vsel %vm6447, %v6465, 0.0
        %6473 = vadd.xlane.f32.xlu0 %v6472
        %v6474 = vpop.xlane.xlu0 %6473
        %v6475 = vsel %vm6447, %v6467, 0.0
        %6476 = vadd.xlane.f32.xlu0 %v6475
        %v6477 = vpop.xlane.xlu0 %6476
        %v6478 = vsel %vm6447, %v6469, 0.0
        %6479 = vadd.xlane.f32.xlu0 %v6478
        %v6480 = vpop.xlane.xlu0 %6479
        %v6481 = vsel %vm6447, %v6471, 0.0
        %6482 = vadd.xlane.f32.xlu0 %v6481
        %v6483 = vpop.xlane.xlu0 %6482
        %v6484 = vlog2.pop %v6474
        %v6485 = vmul.f32 %v6484, 0.6931472
        %v6486 = vlog2.pop %v6477
        %v6487 = vmul.f32 %v6486, 0.6931472
        %v6488 = vlog2.pop %v6480
        %v6489 = vmul.f32 %v6488, 0.6931472
        %v6490 = vlog2.pop %v6483
        %v6491 = vmul.f32 %v6490, 0.6931472
        %v6492 = vsub.f32 %v6460, %v6485
        %v6493 = vsub.f32 %v6461, %v6487
        %v6494 = vsub.f32 %v6462, %v6489
        %v6495 = vsub.f32 %v6463, %v6491
        %6496 = vst.msk [vmem:[%s436] sm:$0x1] %vm6447, %v6492
        %6497 = vst.msk [vmem:[%s436 + $0x1] sm:$0x1] %vm6447, %v6493
        %6498 = vst.msk [vmem:[%s436 + $0x2] sm:$0x1] %vm6447, %v6494
        %6499 = vst.msk [vmem:[%s436 + $0x3] sm:$0x1] %vm6447, %v6495
        %s6500 = sand.u32 %s313, 1
        %s6501 = scalar_lea.sflag [#allocation3], %s6500
        %s6502 = sand.u32 %s313, 1
        %s6503 = smul.addr %s6502, 4
        %s6504 = scalar_lea.vmem [#allocation2], %s6503
        // Predicated region
        $region73: #{cnn_classifier_forward.1} parent=71 // pred_check
          %p6505 = pneg %p323
        $region74: #{cnn_classifier_forward.1} parent=71 // pred_check_branch
          %6507 = sbr.rel (%p6505) target = $region76
        $region75: #{cnn_classifier_forward.1} parent=71 // pred_region
          %s6508 = smul.u32 4, %s27
          %s6510 = ssub.s32 64, 64
          %6511 = vsyncadd %s6501, %s6510
          %s6512 = smul.addr %s6508, 16
          %s6513 = scalar_lea.hbm %s13, %s6512
          %s6514 = sshll.u32 %s6504, 4
          %s6515 = int_to_ptr.vmem [resolvable:$true] %s6514
          %6520 = dma.vmem_to_hbm [thread:$0]  %s6515, 64, %s6513, %s6501, 16, 16, 1
        $region76: #{cnn_classifier_forward.1} parent=71 // pred_fallthru
          _
      $region72: #{cnn_classifier_forward.1} parent=5 // pred_fallthru
        _
      %p6521 = scmp.le.s32.totalorder 2, %s22
      // Predicated region
      $region77: #{cnn_classifier_forward.1} parent=5 // pred_check
        %p6522 = pneg %p6521
      $region78: #{cnn_classifier_forward.1} parent=5 // pred_check_branch
        %6524 = sbr.rel (%p6522) target = $region80
      $region79: #{cnn_classifier_forward.1} parent=5 // pred_region
        %s6525 = ssub.s32 %s22, 2
        // Predicated region
        $region81: #{cnn_classifier_forward.1} parent=79 // pred_check
          %p6526 = pneg %p329
        $region82: #{cnn_classifier_forward.1} parent=79 // pred_check_branch
          %6528 = sbr.rel (%p6526) target = $region84
        $region83: #{cnn_classifier_forward.1} parent=79 // pred_region
          %s6529 = sand.u32 %s314, 1
          %s6530 = scalar_lea.sflag [#allocation3], %s6529
          %s6531 = sand.u32 %s314, 1
          %s6532 = smul.addr %s6531, 4
          %s6533 = scalar_lea.vmem [#allocation2], %s6532
          %6534 = dma.done %s6530, 64
        $region84: #{cnn_classifier_forward.1} parent=79 // pred_fallthru
          _
      $region80: #{cnn_classifier_forward.1} parent=5 // pred_fallthru
        _
    $region6: #{cnn_classifier_forward.1} parent=1 // loop_footer
      %s26 = sadd.s32 1, %s22
    $region7: #{cnn_classifier_forward.1} parent=1 // loop_footer_branch
      %21 = sbr.rel target = $region3
    $region8: #{cnn_classifier_forward.1} parent=1 // loop_exit
      _
    %6535 = vsyncpa [#allocation3], 1
    %s6536 = scalar_lea.sflag [#allocation3], 1
    %6537 = vsyncpa %s6536, 1

</llo_original>
